<compile_context>
chip_gen: v6e
topology: v6e:2x2x1
jax: 0.10.0
libtpu: 0.0.40
codegen_flags: <defaults>
</compile_context>

<pallas_src>
import functools

import jax
import jax.numpy as jnp
from jax.experimental import pallas as pl
from jax.experimental.pallas import tpu as pltpu

# MXU input dtype. float32 preserves the PyTorch-reference numerics exactly; on
# v6e/v7x set to jnp.bfloat16 for ~2x MXU throughput and half the operand DMA
# bytes (accumulation stays f32 via preferred_element_type; epilogue is f32).
MXU_INPUT_DTYPE = jnp.float32


# ----------------------------------------------------------------------------
# Pallas kernel: matmul + fused epilogue (bias / ReLU / BatchNorm / sigmoid)
# ----------------------------------------------------------------------------

def _fused_layer_kernel(*refs, mode, has_bias, inv_m, eps):
    it = iter(refs)
    a_ref = next(it)                      # (M, K)
    w_ref = next(it)                      # (K, N)
    bias_ref = next(it) if has_bias else None   # (1, N)
    if mode == "relu_bn":
        gamma_ref = next(it)              # (1, N)
        beta_ref = next(it)               # (1, N)
    o_ref = next(it)                      # (M, N)

    # Single full-K MXU matmul, f32 accumulation.
    z = jnp.dot(a_ref[...], w_ref[...], preferred_element_type=jnp.float32)
    if has_bias:
        z = z + bias_ref[...]

    if mode == "relu_bn":
        # conv -> bias -> relu -> BatchNorm (training mode: batch mean, biased
        # variance over the M = N*H*W rows, centered second pass for stability).
        y = jnp.maximum(z, 0.0)
        mean = jnp.sum(y, axis=0, keepdims=True) * inv_m          # XLU reduce
        d = y - mean
        var = jnp.sum(d * d, axis=0, keepdims=True) * inv_m       # XLU reduce
        o_ref[...] = (d * jax.lax.rsqrt(var + eps)) * gamma_ref[...] + beta_ref[...]
    elif mode == "sigmoid":
        o_ref[...] = jax.nn.sigmoid(z)                            # EUP
    else:  # plain relu (unused by this network, kept for completeness)
        o_ref[...] = jnp.maximum(z, 0.0)


def fused_matmul_layer(a, w, bias=None, gamma=None, beta=None,
                       mode="relu_bn", eps=1e-5):
    """out = epilogue(A @ W [+ bias]) with the epilogue fused in one kernel.

    A: (M, K), W: (K, N).  Grid-free pallas_call: every operand is the full
    array resident in VMEM (single-buffered, no pipeline machinery), so no
    padding or output slicing is needed and no (8,128) constraint applies.
    """
    M, K = a.shape
    K2, N = w.shape
    assert K == K2

    vmem_spec = pl.BlockSpec(memory_space=pltpu.MemorySpace.VMEM)

    operands = [a.astype(MXU_INPUT_DTYPE), w.astype(MXU_INPUT_DTYPE)]
    in_specs = [vmem_spec, vmem_spec]

    has_bias = bias is not None
    if has_bias:
        operands.append(bias.astype(jnp.float32).reshape(1, N))
        in_specs.append(vmem_spec)
    if mode == "relu_bn":
        operands.append(gamma.astype(jnp.float32).reshape(1, N))
        operands.append(beta.astype(jnp.float32).reshape(1, N))
        in_specs += [vmem_spec, vmem_spec]

    kernel = functools.partial(_fused_layer_kernel, mode=mode,
                               has_bias=has_bias, inv_m=1.0 / M, eps=eps)
    return pl.pallas_call(
        kernel,
        out_shape=jax.ShapeDtypeStruct((M, N), jnp.float32),
        in_specs=in_specs,
        out_specs=vmem_spec,
    )(*operands)


# ----------------------------------------------------------------------------
# XLA glue: im2col and the conv / deconv layer wrappers
# ----------------------------------------------------------------------------

def _im2col(x, k, stride):
    # x: already padded/dilated (N, H, W, C) -> (N*Ho*Wo, k*k*C); channel is the
    # fastest-varying index within each (ki, kj) tap, matching the weight pack.
    n, H, W, C = x.shape
    Ho = (H - k) // stride + 1
    Wo = (W - k) // stride + 1
    cols = []
    for di in range(k):
        for dj in range(k):
            cols.append(x[:, di:di + (Ho - 1) * stride + 1:stride,
                          dj:dj + (Wo - 1) * stride + 1:stride, :])
    patches = jnp.concatenate(cols, axis=-1)
    return patches.reshape(n * Ho * Wo, k * k * C), Ho, Wo


def conv2d_layer(x_nhwc, w_oihw, bias, gamma, beta, stride, padding, mode):
    Cout, Cin, kH, kW = w_oihw.shape
    n = x_nhwc.shape[0]
    pad_cfg = [(0, 0, 0), (padding, padding, 0), (padding, padding, 0), (0, 0, 0)]
    xp = jax.lax.pad(x_nhwc, jnp.zeros((), x_nhwc.dtype), pad_cfg)
    patches, Ho, Wo = _im2col(xp, kH, stride)
    # (Cout, Cin, kH, kW) -> (kH, kW, Cin, Cout) -> (kk*Cin, Cout)
    w2 = jnp.transpose(w_oihw, (2, 3, 1, 0)).reshape(kH * kW * Cin, Cout)
    y = fused_matmul_layer(patches, w2, bias=bias, gamma=gamma, beta=beta,
                           mode=mode)
    return y.reshape(n, Ho, Wo, Cout)


def deconv2d_layer(x_nhwc, w_iohw, gamma, beta, stride=2, padding=1,
                   output_padding=1):
    # ConvTranspose2d == dilate input with zeros + asymmetric edge pad, then a
    # stride-1 forward conv with the spatially flipped, in/out-swapped kernel.
    n, H, W, Cin = x_nhwc.shape
    Cin_w, Cout, kH, kW = w_iohw.shape
    assert Cin == Cin_w
    lo = kH - 1 - padding
    hi = kH - 1 - padding + output_padding
    pad_cfg = [(0, 0, 0), (lo, hi, stride - 1), (lo, hi, stride - 1), (0, 0, 0)]
    xp = jax.lax.pad(x_nhwc, jnp.zeros((), x_nhwc.dtype), pad_cfg)
    # (Cin, Cout, kH, kW) --flip+reorder--> (kH, kW, Cin, Cout) -> (kk*Cin, Cout)
    w2 = jnp.transpose(jnp.flip(w_iohw, axis=(2, 3)),
                       (2, 3, 0, 1)).reshape(kH * kW * Cin, Cout)
    patches, Ho, Wo = _im2col(xp, kH, 1)
    y = fused_matmul_layer(patches, w2, bias=None, gamma=gamma, beta=beta,
                           mode="relu_bn")
    return y.reshape(n, Ho, Wo, Cout)


# ----------------------------------------------------------------------------
# MaskGenerator parameters and forward pass
# ----------------------------------------------------------------------------

def init_params(num_primary_color, key):
    in_dim = 3 + num_primary_color * 3
    out_dim = num_primary_color
    ks = jax.random.split(key, 10)

    def w(k, shape):
        fan_in = shape[1] * shape[2] * shape[3]
        return jax.random.normal(k, shape, jnp.float32) / jnp.sqrt(float(fan_in))

    p = {
        "conv1_w": w(ks[0], (in_dim * 2, in_dim, 3, 3)),
        "conv2_w": w(ks[1], (in_dim * 4, in_dim * 2, 3, 3)),
        "conv3_w": w(ks[2], (in_dim * 8, in_dim * 4, 3, 3)),
        # ConvTranspose2d weights are (in_ch, out_ch, kH, kW)
        "deconv1_w": w(ks[3], (in_dim * 8, in_dim * 4, 3, 3)),
        "deconv2_w": w(ks[4], (in_dim * 8, in_dim * 2, 3, 3)),
        "deconv3_w": w(ks[5], (in_dim * 4, in_dim * 2, 3, 3)),
        "conv4_w": w(ks[6], (in_dim, in_dim * 2 + 3, 3, 3)),
        "conv4_b": jnp.zeros((in_dim,), jnp.float32),
        "conv5_w": w(ks[7], (out_dim, in_dim, 3, 3)),
        "conv5_b": jnp.zeros((out_dim,), jnp.float32),
    }
    for name, c in [("bn1", in_dim * 2), ("bn2", in_dim * 4), ("bn3", in_dim * 8),
                    ("bnde1", in_dim * 4), ("bnde2", in_dim * 2),
                    ("bnde3", in_dim * 2), ("bn4", in_dim)]:
        p[name + "_gamma"] = jnp.ones((c,), jnp.float32)
        p[name + "_beta"] = jnp.zeros((c,), jnp.float32)
    return p


def mask_generator_forward(params, target_img, primary_color_pack):
    # inputs are NCHW (PyTorch convention); convert to NHWC internally
    t = jnp.transpose(target_img, (0, 2, 3, 1)).astype(jnp.float32)
    pc = jnp.transpose(primary_color_pack, (0, 2, 3, 1)).astype(jnp.float32)
    x = jnp.concatenate([t, pc], axis=-1)

    def conv_bn(h, wname, bnname, stride):
        return conv2d_layer(h, params[wname], None,
                            params[bnname + "_gamma"], params[bnname + "_beta"],
                            stride, 1, "relu_bn")

    def deconv_bn(h, wname, bnname):
        return deconv2d_layer(h, params[wname],
                              params[bnname + "_gamma"], params[bnname + "_beta"])

    h1 = conv_bn(x, "conv1_w", "bn1", 2)
    h2 = conv_bn(h1, "conv2_w", "bn2", 2)
    h3 = conv_bn(h2, "conv3_w", "bn3", 2)

    h4 = deconv_bn(h3, "deconv1_w", "bnde1")
    h4 = jnp.concatenate([h4, h2], axis=-1)
    h5 = deconv_bn(h4, "deconv2_w", "bnde2")
    h5 = jnp.concatenate([h5, h1], axis=-1)
    h6 = deconv_bn(h5, "deconv3_w", "bnde3")
    h6 = jnp.concatenate([h6, t], axis=-1)

    h7 = conv2d_layer(h6, params["conv4_w"], params["conv4_b"],
                      params["bn4_gamma"], params["bn4_beta"], 1, 1, "relu_bn")
    # final layer: conv5 + bias + sigmoid, all fused in the kernel epilogue
    y = conv2d_layer(h7, params["conv5_w"], params["conv5_b"],
                     None, None, 1, 1, "sigmoid")
    return jnp.transpose(y, (0, 3, 1, 2))  # back to NCHW


if __name__ == "__main__":
    num_primary_color = 4          # in_dim = 3 + 4*3 = 15, out_dim = 4
    N, H, W = 2, 16, 16

    key = jax.random.PRNGKey(0)
    k_param, k_t, k_p = jax.random.split(key, 3)

    params = init_params(num_primary_color, k_param)
    target_img = jax.random.uniform(k_t, (N, 3, H, W), jnp.float32)
    primary_color_pack = jax.random.uniform(
        k_p, (N, num_primary_color * 3, H, W), jnp.float32)

    fwd = jax.jit(mask_generator_forward)
    out = jax.block_until_ready(fwd(params, target_img, primary_color_pack))

    assert out.shape == (N, num_primary_color, H, W), out.shape
    assert bool(jnp.all(jnp.isfinite(out)))
    assert bool(jnp.all((out >= 0.0) & (out <= 1.0)))
    print("KERNEL_OK")
</pallas_src>

<mosaic_0001>
module attributes {stable_mosaic.version = 11 : i64} {
  func.func @_fused_layer_kernel(%arg0: memref<128x135xf32, #tpu.memory_space<vmem>>, %arg1: memref<135x30xf32, #tpu.memory_space<vmem>>, %arg2: memref<1x30xf32, #tpu.memory_space<vmem>>, %arg3: memref<1x30xf32, #tpu.memory_space<vmem>>, %arg4: memref<128x30xf32, #tpu.memory_space<vmem>>) attributes {dimension_semantics = [], scalar_prefetch = 0 : i64, scratch_operands = 0 : i64, tpu.core_type = #tpu.core_type<tc>} {
    %c0 = arith.constant 0 : index
    %c0_0 = arith.constant 0 : index
    %0 = vector.load %arg0[%c0, %c0_0] : memref<128x135xf32, #tpu.memory_space<vmem>>, vector<128x135xf32>
    %c0_1 = arith.constant 0 : index
    %c0_2 = arith.constant 0 : index
    %1 = vector.load %arg1[%c0_1, %c0_2] : memref<135x30xf32, #tpu.memory_space<vmem>>, vector<135x30xf32>
    %cst = arith.constant dense<0.000000e+00> : vector<128x30xf32>
    %2 = tpu.matmul %0, %1, %cst {dimension_numbers = #tpu.dot_dimension_numbers<[1], [0], [0], [1], [0, 0, 1, 1], [], []>} : vector<128x135xf32>, vector<135x30xf32>, vector<128x30xf32> -> vector<128x30xf32>
    %cst_3 = arith.constant 0.000000e+00 : f32
    %3 = vector.broadcast %cst_3 : f32 to vector<128x30xf32>
    %4 = arith.maximumf %2, %3 : vector<128x30xf32>
    %cst_4 = arith.constant dense<0.000000e+00> : vector<30xf32>
    %5 = vector.multi_reduction <add>, %4, %cst_4 [0] : vector<128x30xf32> to vector<30xf32>
    %6 = vector.shape_cast %5 : vector<30xf32> to vector<1x30xf32>
    %cst_5 = arith.constant 7.812500e-03 : f32
    %7 = vector.broadcast %cst_5 : f32 to vector<1x30xf32>
    %8 = arith.mulf %6, %7 : vector<1x30xf32>
    %9 = vector.broadcast %8 : vector<1x30xf32> to vector<128x30xf32>
    %10 = arith.subf %4, %9 : vector<128x30xf32>
    %11 = arith.mulf %10, %10 : vector<128x30xf32>
    %cst_6 = arith.constant dense<0.000000e+00> : vector<30xf32>
    %12 = vector.multi_reduction <add>, %11, %cst_6 [0] : vector<128x30xf32> to vector<30xf32>
    %13 = vector.shape_cast %12 : vector<30xf32> to vector<1x30xf32>
    %cst_7 = arith.constant 7.812500e-03 : f32
    %14 = vector.broadcast %cst_7 : f32 to vector<1x30xf32>
    %15 = arith.mulf %13, %14 : vector<1x30xf32>
    %cst_8 = arith.constant 9.99999974E-6 : f32
    %16 = vector.broadcast %cst_8 : f32 to vector<1x30xf32>
    %17 = arith.addf %15, %16 : vector<1x30xf32>
    %18 = math.rsqrt %17 : vector<1x30xf32>
    %19 = vector.broadcast %18 : vector<1x30xf32> to vector<128x30xf32>
    %20 = arith.mulf %10, %19 : vector<128x30xf32>
    %c0_9 = arith.constant 0 : index
    %c0_10 = arith.constant 0 : index
    %21 = vector.load %arg2[%c0_9, %c0_10] : memref<1x30xf32, #tpu.memory_space<vmem>>, vector<1x30xf32>
    %22 = vector.broadcast %21 : vector<1x30xf32> to vector<128x30xf32>
    %23 = arith.mulf %20, %22 : vector<128x30xf32>
    %c0_11 = arith.constant 0 : index
    %c0_12 = arith.constant 0 : index
    %24 = vector.load %arg3[%c0_11, %c0_12] : memref<1x30xf32, #tpu.memory_space<vmem>>, vector<1x30xf32>
    %25 = vector.broadcast %24 : vector<1x30xf32> to vector<128x30xf32>
    %26 = arith.addf %23, %25 : vector<128x30xf32>
    %c0_13 = arith.constant 0 : index
    %c0_14 = arith.constant 0 : index
    %27 = vector.load %arg4[%c0_13, %c0_14] : memref<128x30xf32, #tpu.memory_space<vmem>>, vector<128x30xf32>
    tpu.vector_store %arg4[%c0_13, %c0_14], %26 {strides = array<i32>} : memref<128x30xf32, #tpu.memory_space<vmem>>, vector<128x30xf32>,
    return
  }
}

module attributes {stable_mosaic.version = 11 : i64} {
  func.func @_fused_layer_kernel(%arg0: memref<32x270xf32, #tpu.memory_space<vmem>>, %arg1: memref<270x60xf32, #tpu.memory_space<vmem>>, %arg2: memref<1x60xf32, #tpu.memory_space<vmem>>, %arg3: memref<1x60xf32, #tpu.memory_space<vmem>>, %arg4: memref<32x60xf32, #tpu.memory_space<vmem>>) attributes {dimension_semantics = [], scalar_prefetch = 0 : i64, scratch_operands = 0 : i64, tpu.core_type = #tpu.core_type<tc>} {
    %c0 = arith.constant 0 : index
    %c0_0 = arith.constant 0 : index
    %0 = vector.load %arg0[%c0, %c0_0] : memref<32x270xf32, #tpu.memory_space<vmem>>, vector<32x270xf32>
    %c0_1 = arith.constant 0 : index
    %c0_2 = arith.constant 0 : index
    %1 = vector.load %arg1[%c0_1, %c0_2] : memref<270x60xf32, #tpu.memory_space<vmem>>, vector<270x60xf32>
    %cst = arith.constant dense<0.000000e+00> : vector<32x60xf32>
    %2 = tpu.matmul %0, %1, %cst {dimension_numbers = #tpu.dot_dimension_numbers<[1], [0], [0], [1], [0, 0, 1, 1], [], []>} : vector<32x270xf32>, vector<270x60xf32>, vector<32x60xf32> -> vector<32x60xf32>
    %cst_3 = arith.constant 0.000000e+00 : f32
    %3 = vector.broadcast %cst_3 : f32 to vector<32x60xf32>
    %4 = arith.maximumf %2, %3 : vector<32x60xf32>
    %cst_4 = arith.constant dense<0.000000e+00> : vector<60xf32>
    %5 = vector.multi_reduction <add>, %4, %cst_4 [0] : vector<32x60xf32> to vector<60xf32>
    %6 = vector.shape_cast %5 : vector<60xf32> to vector<1x60xf32>
    %cst_5 = arith.constant 3.125000e-02 : f32
    %7 = vector.broadcast %cst_5 : f32 to vector<1x60xf32>
    %8 = arith.mulf %6, %7 : vector<1x60xf32>
    %9 = vector.broadcast %8 : vector<1x60xf32> to vector<32x60xf32>
    %10 = arith.subf %4, %9 : vector<32x60xf32>
    %11 = arith.mulf %10, %10 : vector<32x60xf32>
    %cst_6 = arith.constant dense<0.000000e+00> : vector<60xf32>
    %12 = vector.multi_reduction <add>, %11, %cst_6 [0] : vector<32x60xf32> to vector<60xf32>
    %13 = vector.shape_cast %12 : vector<60xf32> to vector<1x60xf32>
    %cst_7 = arith.constant 3.125000e-02 : f32
    %14 = vector.broadcast %cst_7 : f32 to vector<1x60xf32>
    %15 = arith.mulf %13, %14 : vector<1x60xf32>
    %cst_8 = arith.constant 9.99999974E-6 : f32
    %16 = vector.broadcast %cst_8 : f32 to vector<1x60xf32>
    %17 = arith.addf %15, %16 : vector<1x60xf32>
    %18 = math.rsqrt %17 : vector<1x60xf32>
    %19 = vector.broadcast %18 : vector<1x60xf32> to vector<32x60xf32>
    %20 = arith.mulf %10, %19 : vector<32x60xf32>
    %c0_9 = arith.constant 0 : index
    %c0_10 = arith.constant 0 : index
    %21 = vector.load %arg2[%c0_9, %c0_10] : memref<1x60xf32, #tpu.memory_space<vmem>>, vector<1x60xf32>
    %22 = vector.broadcast %21 : vector<1x60xf32> to vector<32x60xf32>
    %23 = arith.mulf %20, %22 : vector<32x60xf32>
    %c0_11 = arith.constant 0 : index
    %c0_12 = arith.constant 0 : index
    %24 = vector.load %arg3[%c0_11, %c0_12] : memref<1x60xf32, #tpu.memory_space<vmem>>, vector<1x60xf32>
    %25 = vector.broadcast %24 : vector<1x60xf32> to vector<32x60xf32>
    %26 = arith.addf %23, %25 : vector<32x60xf32>
    %c0_13 = arith.constant 0 : index
    %c0_14 = arith.constant 0 : index
    %27 = vector.load %arg4[%c0_13, %c0_14] : memref<32x60xf32, #tpu.memory_space<vmem>>, vector<32x60xf32>
    tpu.vector_store %arg4[%c0_13, %c0_14], %26 {strides = array<i32>} : memref<32x60xf32, #tpu.memory_space<vmem>>, vector<32x60xf32>,
    return
  }
}

module attributes {stable_mosaic.version = 11 : i64} {
  func.func @_fused_layer_kernel(%arg0: memref<8x540xf32, #tpu.memory_space<vmem>>, %arg1: memref<540x120xf32, #tpu.memory_space<vmem>>, %arg2: memref<1x120xf32, #tpu.memory_space<vmem>>, %arg3: memref<1x120xf32, #tpu.memory_space<vmem>>, %arg4: memref<8x120xf32, #tpu.memory_space<vmem>>) attributes {dimension_semantics = [], scalar_prefetch = 0 : i64, scratch_operands = 0 : i64, tpu.core_type = #tpu.core_type<tc>} {
    %c0 = arith.constant 0 : index
    %c0_0 = arith.constant 0 : index
    %0 = vector.load %arg0[%c0, %c0_0] : memref<8x540xf32, #tpu.memory_space<vmem>>, vector<8x540xf32>
    %c0_1 = arith.constant 0 : index
    %c0_2 = arith.constant 0 : index
    %1 = vector.load %arg1[%c0_1, %c0_2] : memref<540x120xf32, #tpu.memory_space<vmem>>, vector<540x120xf32>
    %cst = arith.constant dense<0.000000e+00> : vector<8x120xf32>
    %2 = tpu.matmul %0, %1, %cst {dimension_numbers = #tpu.dot_dimension_numbers<[1], [0], [0], [1], [0, 0, 1, 1], [], []>} : vector<8x540xf32>, vector<540x120xf32>, vector<8x120xf32> -> vector<8x120xf32>
    %cst_3 = arith.constant 0.000000e+00 : f32
    %3 = vector.broadcast %cst_3 : f32 to vector<8x120xf32>
    %4 = arith.maximumf %2, %3 : vector<8x120xf32>
    %cst_4 = arith.constant dense<0.000000e+00> : vector<120xf32>
    %5 = vector.multi_reduction <add>, %4, %cst_4 [0] : vector<8x120xf32> to vector<120xf32>
    %6 = vector.shape_cast %5 : vector<120xf32> to vector<1x120xf32>
    %cst_5 = arith.constant 1.250000e-01 : f32
    %7 = vector.broadcast %cst_5 : f32 to vector<1x120xf32>
    %8 = arith.mulf %6, %7 : vector<1x120xf32>
    %9 = vector.broadcast %8 : vector<1x120xf32> to vector<8x120xf32>
    %10 = arith.subf %4, %9 : vector<8x120xf32>
    %11 = arith.mulf %10, %10 : vector<8x120xf32>
    %cst_6 = arith.constant dense<0.000000e+00> : vector<120xf32>
    %12 = vector.multi_reduction <add>, %11, %cst_6 [0] : vector<8x120xf32> to vector<120xf32>
    %13 = vector.shape_cast %12 : vector<120xf32> to vector<1x120xf32>
    %cst_7 = arith.constant 1.250000e-01 : f32
    %14 = vector.broadcast %cst_7 : f32 to vector<1x120xf32>
    %15 = arith.mulf %13, %14 : vector<1x120xf32>
    %cst_8 = arith.constant 9.99999974E-6 : f32
    %16 = vector.broadcast %cst_8 : f32 to vector<1x120xf32>
    %17 = arith.addf %15, %16 : vector<1x120xf32>
    %18 = math.rsqrt %17 : vector<1x120xf32>
    %19 = vector.broadcast %18 : vector<1x120xf32> to vector<8x120xf32>
    %20 = arith.mulf %10, %19 : vector<8x120xf32>
    %c0_9 = arith.constant 0 : index
    %c0_10 = arith.constant 0 : index
    %21 = vector.load %arg2[%c0_9, %c0_10] : memref<1x120xf32, #tpu.memory_space<vmem>>, vector<1x120xf32>
    %22 = vector.broadcast %21 : vector<1x120xf32> to vector<8x120xf32>
    %23 = arith.mulf %20, %22 : vector<8x120xf32>
    %c0_11 = arith.constant 0 : index
    %c0_12 = arith.constant 0 : index
    %24 = vector.load %arg3[%c0_11, %c0_12] : memref<1x120xf32, #tpu.memory_space<vmem>>, vector<1x120xf32>
    %25 = vector.broadcast %24 : vector<1x120xf32> to vector<8x120xf32>
    %26 = arith.addf %23, %25 : vector<8x120xf32>
    %c0_13 = arith.constant 0 : index
    %c0_14 = arith.constant 0 : index
    %27 = vector.load %arg4[%c0_13, %c0_14] : memref<8x120xf32, #tpu.memory_space<vmem>>, vector<8x120xf32>
    tpu.vector_store %arg4[%c0_13, %c0_14], %26 {strides = array<i32>} : memref<8x120xf32, #tpu.memory_space<vmem>>, vector<8x120xf32>,
    return
  }
}

module attributes {stable_mosaic.version = 11 : i64} {
  func.func @_fused_layer_kernel(%arg0: memref<32x1080xf32, #tpu.memory_space<vmem>>, %arg1: memref<1080x60xf32, #tpu.memory_space<vmem>>, %arg2: memref<1x60xf32, #tpu.memory_space<vmem>>, %arg3: memref<1x60xf32, #tpu.memory_space<vmem>>, %arg4: memref<32x60xf32, #tpu.memory_space<vmem>>) attributes {dimension_semantics = [], scalar_prefetch = 0 : i64, scratch_operands = 0 : i64, tpu.core_type = #tpu.core_type<tc>} {
    %c0 = arith.constant 0 : index
    %c0_0 = arith.constant 0 : index
    %0 = vector.load %arg0[%c0, %c0_0] : memref<32x1080xf32, #tpu.memory_space<vmem>>, vector<32x1080xf32>
    %c0_1 = arith.constant 0 : index
    %c0_2 = arith.constant 0 : index
    %1 = vector.load %arg1[%c0_1, %c0_2] : memref<1080x60xf32, #tpu.memory_space<vmem>>, vector<1080x60xf32>
    %cst = arith.constant dense<0.000000e+00> : vector<32x60xf32>
    %2 = tpu.matmul %0, %1, %cst {dimension_numbers = #tpu.dot_dimension_numbers<[1], [0], [0], [1], [0, 0, 1, 1], [], []>} : vector<32x1080xf32>, vector<1080x60xf32>, vector<32x60xf32> -> vector<32x60xf32>
    %cst_3 = arith.constant 0.000000e+00 : f32
    %3 = vector.broadcast %cst_3 : f32 to vector<32x60xf32>
    %4 = arith.maximumf %2, %3 : vector<32x60xf32>
    %cst_4 = arith.constant dense<0.000000e+00> : vector<60xf32>
    %5 = vector.multi_reduction <add>, %4, %cst_4 [0] : vector<32x60xf32> to vector<60xf32>
    %6 = vector.shape_cast %5 : vector<60xf32> to vector<1x60xf32>
    %cst_5 = arith.constant 3.125000e-02 : f32
    %7 = vector.broadcast %cst_5 : f32 to vector<1x60xf32>
    %8 = arith.mulf %6, %7 : vector<1x60xf32>
    %9 = vector.broadcast %8 : vector<1x60xf32> to vector<32x60xf32>
    %10 = arith.subf %4, %9 : vector<32x60xf32>
    %11 = arith.mulf %10, %10 : vector<32x60xf32>
    %cst_6 = arith.constant dense<0.000000e+00> : vector<60xf32>
    %12 = vector.multi_reduction <add>, %11, %cst_6 [0] : vector<32x60xf32> to vector<60xf32>
    %13 = vector.shape_cast %12 : vector<60xf32> to vector<1x60xf32>
    %cst_7 = arith.constant 3.125000e-02 : f32
    %14 = vector.broadcast %cst_7 : f32 to vector<1x60xf32>
    %15 = arith.mulf %13, %14 : vector<1x60xf32>
    %cst_8 = arith.constant 9.99999974E-6 : f32
    %16 = vector.broadcast %cst_8 : f32 to vector<1x60xf32>
    %17 = arith.addf %15, %16 : vector<1x60xf32>
    %18 = math.rsqrt %17 : vector<1x60xf32>
    %19 = vector.broadcast %18 : vector<1x60xf32> to vector<32x60xf32>
    %20 = arith.mulf %10, %19 : vector<32x60xf32>
    %c0_9 = arith.constant 0 : index
    %c0_10 = arith.constant 0 : index
    %21 = vector.load %arg2[%c0_9, %c0_10] : memref<1x60xf32, #tpu.memory_space<vmem>>, vector<1x60xf32>
    %22 = vector.broadcast %21 : vector<1x60xf32> to vector<32x60xf32>
    %23 = arith.mulf %20, %22 : vector<32x60xf32>
    %c0_11 = arith.constant 0 : index
    %c0_12 = arith.constant 0 : index
    %24 = vector.load %arg3[%c0_11, %c0_12] : memref<1x60xf32, #tpu.memory_space<vmem>>, vector<1x60xf32>
    %25 = vector.broadcast %24 : vector<1x60xf32> to vector<32x60xf32>
    %26 = arith.addf %23, %25 : vector<32x60xf32>
    %c0_13 = arith.constant 0 : index
    %c0_14 = arith.constant 0 : index
    %27 = vector.load %arg4[%c0_13, %c0_14] : memref<32x60xf32, #tpu.memory_space<vmem>>, vector<32x60xf32>
    tpu.vector_store %arg4[%c0_13, %c0_14], %26 {strides = array<i32>} : memref<32x60xf32, #tpu.memory_space<vmem>>, vector<32x60xf32>,
    return
  }
}

module attributes {stable_mosaic.version = 11 : i64} {
  func.func @_fused_layer_kernel(%arg0: memref<128x1080xf32, #tpu.memory_space<vmem>>, %arg1: memref<1080x30xf32, #tpu.memory_space<vmem>>, %arg2: memref<1x30xf32, #tpu.memory_space<vmem>>, %arg3: memref<1x30xf32, #tpu.memory_space<vmem>>, %arg4: memref<128x30xf32, #tpu.memory_space<vmem>>) attributes {dimension_semantics = [], scalar_prefetch = 0 : i64, scratch_operands = 0 : i64, tpu.core_type = #tpu.core_type<tc>} {
    %c0 = arith.constant 0 : index
    %c0_0 = arith.constant 0 : index
    %0 = vector.load %arg0[%c0, %c0_0] : memref<128x1080xf32, #tpu.memory_space<vmem>>, vector<128x1080xf32>
    %c0_1 = arith.constant 0 : index
    %c0_2 = arith.constant 0 : index
    %1 = vector.load %arg1[%c0_1, %c0_2] : memref<1080x30xf32, #tpu.memory_space<vmem>>, vector<1080x30xf32>
    %cst = arith.constant dense<0.000000e+00> : vector<128x30xf32>
    %2 = tpu.matmul %0, %1, %cst {dimension_numbers = #tpu.dot_dimension_numbers<[1], [0], [0], [1], [0, 0, 1, 1], [], []>} : vector<128x1080xf32>, vector<1080x30xf32>, vector<128x30xf32> -> vector<128x30xf32>
    %cst_3 = arith.constant 0.000000e+00 : f32
    %3 = vector.broadcast %cst_3 : f32 to vector<128x30xf32>
    %4 = arith.maximumf %2, %3 : vector<128x30xf32>
    %cst_4 = arith.constant dense<0.000000e+00> : vector<30xf32>
    %5 = vector.multi_reduction <add>, %4, %cst_4 [0] : vector<128x30xf32> to vector<30xf32>
    %6 = vector.shape_cast %5 : vector<30xf32> to vector<1x30xf32>
    %cst_5 = arith.constant 7.812500e-03 : f32
    %7 = vector.broadcast %cst_5 : f32 to vector<1x30xf32>
    %8 = arith.mulf %6, %7 : vector<1x30xf32>
    %9 = vector.broadcast %8 : vector<1x30xf32> to vector<128x30xf32>
    %10 = arith.subf %4, %9 : vector<128x30xf32>
    %11 = arith.mulf %10, %10 : vector<128x30xf32>
    %cst_6 = arith.constant dense<0.000000e+00> : vector<30xf32>
    %12 = vector.multi_reduction <add>, %11, %cst_6 [0] : vector<128x30xf32> to vector<30xf32>
    %13 = vector.shape_cast %12 : vector<30xf32> to vector<1x30xf32>
    %cst_7 = arith.constant 7.812500e-03 : f32
    %14 = vector.broadcast %cst_7 : f32 to vector<1x30xf32>
    %15 = arith.mulf %13, %14 : vector<1x30xf32>
    %cst_8 = arith.constant 9.99999974E-6 : f32
    %16 = vector.broadcast %cst_8 : f32 to vector<1x30xf32>
    %17 = arith.addf %15, %16 : vector<1x30xf32>
    %18 = math.rsqrt %17 : vector<1x30xf32>
    %19 = vector.broadcast %18 : vector<1x30xf32> to vector<128x30xf32>
    %20 = arith.mulf %10, %19 : vector<128x30xf32>
    %c0_9 = arith.constant 0 : index
    %c0_10 = arith.constant 0 : index
    %21 = vector.load %arg2[%c0_9, %c0_10] : memref<1x30xf32, #tpu.memory_space<vmem>>, vector<1x30xf32>
    %22 = vector.broadcast %21 : vector<1x30xf32> to vector<128x30xf32>
    %23 = arith.mulf %20, %22 : vector<128x30xf32>
    %c0_11 = arith.constant 0 : index
    %c0_12 = arith.constant 0 : index
    %24 = vector.load %arg3[%c0_11, %c0_12] : memref<1x30xf32, #tpu.memory_space<vmem>>, vector<1x30xf32>
    %25 = vector.broadcast %24 : vector<1x30xf32> to vector<128x30xf32>
    %26 = arith.addf %23, %25 : vector<128x30xf32>
    %c0_13 = arith.constant 0 : index
    %c0_14 = arith.constant 0 : index
    %27 = vector.load %arg4[%c0_13, %c0_14] : memref<128x30xf32, #tpu.memory_space<vmem>>, vector<128x30xf32>
    tpu.vector_store %arg4[%c0_13, %c0_14], %26 {strides = array<i32>} : memref<128x30xf32, #tpu.memory_space<vmem>>, vector<128x30xf32>,
    return
  }
}

module attributes {stable_mosaic.version = 11 : i64} {
  func.func @_fused_layer_kernel(%arg0: memref<512x540xf32, #tpu.memory_space<vmem>>, %arg1: memref<540x30xf32, #tpu.memory_space<vmem>>, %arg2: memref<1x30xf32, #tpu.memory_space<vmem>>, %arg3: memref<1x30xf32, #tpu.memory_space<vmem>>, %arg4: memref<512x30xf32, #tpu.memory_space<vmem>>) attributes {dimension_semantics = [], scalar_prefetch = 0 : i64, scratch_operands = 0 : i64, tpu.core_type = #tpu.core_type<tc>} {
    %c0 = arith.constant 0 : index
    %c0_0 = arith.constant 0 : index
    %0 = vector.load %arg0[%c0, %c0_0] : memref<512x540xf32, #tpu.memory_space<vmem>>, vector<512x540xf32>
    %c0_1 = arith.constant 0 : index
    %c0_2 = arith.constant 0 : index
    %1 = vector.load %arg1[%c0_1, %c0_2] : memref<540x30xf32, #tpu.memory_space<vmem>>, vector<540x30xf32>
    %cst = arith.constant dense<0.000000e+00> : vector<512x30xf32>
    %2 = tpu.matmul %0, %1, %cst {dimension_numbers = #tpu.dot_dimension_numbers<[1], [0], [0], [1], [0, 0, 1, 1], [], []>} : vector<512x540xf32>, vector<540x30xf32>, vector<512x30xf32> -> vector<512x30xf32>
    %cst_3 = arith.constant 0.000000e+00 : f32
    %3 = vector.broadcast %cst_3 : f32 to vector<512x30xf32>
    %4 = arith.maximumf %2, %3 : vector<512x30xf32>
    %cst_4 = arith.constant dense<0.000000e+00> : vector<30xf32>
    %5 = vector.multi_reduction <add>, %4, %cst_4 [0] : vector<512x30xf32> to vector<30xf32>
    %6 = vector.shape_cast %5 : vector<30xf32> to vector<1x30xf32>
    %cst_5 = arith.constant 0.001953125 : f32
    %7 = vector.broadcast %cst_5 : f32 to vector<1x30xf32>
    %8 = arith.mulf %6, %7 : vector<1x30xf32>
    %9 = vector.broadcast %8 : vector<1x30xf32> to vector<512x30xf32>
    %10 = arith.subf %4, %9 : vector<512x30xf32>
    %11 = arith.mulf %10, %10 : vector<512x30xf32>
    %cst_6 = arith.constant dense<0.000000e+00> : vector<30xf32>
    %12 = vector.multi_reduction <add>, %11, %cst_6 [0] : vector<512x30xf32> to vector<30xf32>
    %13 = vector.shape_cast %12 : vector<30xf32> to vector<1x30xf32>
    %cst_7 = arith.constant 0.001953125 : f32
    %14 = vector.broadcast %cst_7 : f32 to vector<1x30xf32>
    %15 = arith.mulf %13, %14 : vector<1x30xf32>
    %cst_8 = arith.constant 9.99999974E-6 : f32
    %16 = vector.broadcast %cst_8 : f32 to vector<1x30xf32>
    %17 = arith.addf %15, %16 : vector<1x30xf32>
    %18 = math.rsqrt %17 : vector<1x30xf32>
    %19 = vector.broadcast %18 : vector<1x30xf32> to vector<512x30xf32>
    %20 = arith.mulf %10, %19 : vector<512x30xf32>
    %c0_9 = arith.constant 0 : index
    %c0_10 = arith.constant 0 : index
    %21 = vector.load %arg2[%c0_9, %c0_10] : memref<1x30xf32, #tpu.memory_space<vmem>>, vector<1x30xf32>
    %22 = vector.broadcast %21 : vector<1x30xf32> to vector<512x30xf32>
    %23 = arith.mulf %20, %22 : vector<512x30xf32>
    %c0_11 = arith.constant 0 : index
    %c0_12 = arith.constant 0 : index
    %24 = vector.load %arg3[%c0_11, %c0_12] : memref<1x30xf32, #tpu.memory_space<vmem>>, vector<1x30xf32>
    %25 = vector.broadcast %24 : vector<1x30xf32> to vector<512x30xf32>
    %26 = arith.addf %23, %25 : vector<512x30xf32>
    %c0_13 = arith.constant 0 : index
    %c0_14 = arith.constant 0 : index
    %27 = vector.load %arg4[%c0_13, %c0_14] : memref<512x30xf32, #tpu.memory_space<vmem>>, vector<512x30xf32>
    tpu.vector_store %arg4[%c0_13, %c0_14], %26 {strides = array<i32>} : memref<512x30xf32, #tpu.memory_space<vmem>>, vector<512x30xf32>,
    return
  }
}

module attributes {stable_mosaic.version = 11 : i64} {
  func.func @_fused_layer_kernel(%arg0: memref<512x297xf32, #tpu.memory_space<vmem>>, %arg1: memref<297x15xf32, #tpu.memory_space<vmem>>, %arg2: memref<1x15xf32, #tpu.memory_space<vmem>>, %arg3: memref<1x15xf32, #tpu.memory_space<vmem>>, %arg4: memref<1x15xf32, #tpu.memory_space<vmem>>, %arg5: memref<512x15xf32, #tpu.memory_space<vmem>>) attributes {dimension_semantics = [], scalar_prefetch = 0 : i64, scratch_operands = 0 : i64, tpu.core_type = #tpu.core_type<tc>} {
    %c0 = arith.constant 0 : index
    %c0_0 = arith.constant 0 : index
    %0 = vector.load %arg0[%c0, %c0_0] : memref<512x297xf32, #tpu.memory_space<vmem>>, vector<512x297xf32>
    %c0_1 = arith.constant 0 : index
    %c0_2 = arith.constant 0 : index
    %1 = vector.load %arg1[%c0_1, %c0_2] : memref<297x15xf32, #tpu.memory_space<vmem>>, vector<297x15xf32>
    %cst = arith.constant dense<0.000000e+00> : vector<512x15xf32>
    %2 = tpu.matmul %0, %1, %cst {dimension_numbers = #tpu.dot_dimension_numbers<[1], [0], [0], [1], [0, 0, 1, 1], [], []>} : vector<512x297xf32>, vector<297x15xf32>, vector<512x15xf32> -> vector<512x15xf32>
    %c0_3 = arith.constant 0 : index
    %c0_4 = arith.constant 0 : index
    %3 = vector.load %arg2[%c0_3, %c0_4] : memref<1x15xf32, #tpu.memory_space<vmem>>, vector<1x15xf32>
    %4 = vector.broadcast %3 : vector<1x15xf32> to vector<512x15xf32>
    %5 = arith.addf %2, %4 : vector<512x15xf32>
    %cst_5 = arith.constant 0.000000e+00 : f32
    %6 = vector.broadcast %cst_5 : f32 to vector<512x15xf32>
    %7 = arith.maximumf %5, %6 : vector<512x15xf32>
    %cst_6 = arith.constant dense<0.000000e+00> : vector<15xf32>
    %8 = vector.multi_reduction <add>, %7, %cst_6 [0] : vector<512x15xf32> to vector<15xf32>
    %9 = vector.shape_cast %8 : vector<15xf32> to vector<1x15xf32>
    %cst_7 = arith.constant 0.001953125 : f32
    %10 = vector.broadcast %cst_7 : f32 to vector<1x15xf32>
    %11 = arith.mulf %9, %10 : vector<1x15xf32>
    %12 = vector.broadcast %11 : vector<1x15xf32> to vector<512x15xf32>
    %13 = arith.subf %7, %12 : vector<512x15xf32>
    %14 = arith.mulf %13, %13 : vector<512x15xf32>
    %cst_8 = arith.constant dense<0.000000e+00> : vector<15xf32>
    %15 = vector.multi_reduction <add>, %14, %cst_8 [0] : vector<512x15xf32> to vector<15xf32>
    %16 = vector.shape_cast %15 : vector<15xf32> to vector<1x15xf32>
    %cst_9 = arith.constant 0.001953125 : f32
    %17 = vector.broadcast %cst_9 : f32 to vector<1x15xf32>
    %18 = arith.mulf %16, %17 : vector<1x15xf32>
    %cst_10 = arith.constant 9.99999974E-6 : f32
    %19 = vector.broadcast %cst_10 : f32 to vector<1x15xf32>
    %20 = arith.addf %18, %19 : vector<1x15xf32>
    %21 = math.rsqrt %20 : vector<1x15xf32>
    %22 = vector.broadcast %21 : vector<1x15xf32> to vector<512x15xf32>
    %23 = arith.mulf %13, %22 : vector<512x15xf32>
    %c0_11 = arith.constant 0 : index
    %c0_12 = arith.constant 0 : index
    %24 = vector.load %arg3[%c0_11, %c0_12] : memref<1x15xf32, #tpu.memory_space<vmem>>, vector<1x15xf32>
    %25 = vector.broadcast %24 : vector<1x15xf32> to vector<512x15xf32>
    %26 = arith.mulf %23, %25 : vector<512x15xf32>
    %c0_13 = arith.constant 0 : index
    %c0_14 = arith.constant 0 : index
    %27 = vector.load %arg4[%c0_13, %c0_14] : memref<1x15xf32, #tpu.memory_space<vmem>>, vector<1x15xf32>
    %28 = vector.broadcast %27 : vector<1x15xf32> to vector<512x15xf32>
    %29 = arith.addf %26, %28 : vector<512x15xf32>
    %c0_15 = arith.constant 0 : index
    %c0_16 = arith.constant 0 : index
    %30 = vector.load %arg5[%c0_15, %c0_16] : memref<512x15xf32, #tpu.memory_space<vmem>>, vector<512x15xf32>
    tpu.vector_store %arg5[%c0_15, %c0_16], %29 {strides = array<i32>} : memref<512x15xf32, #tpu.memory_space<vmem>>, vector<512x15xf32>,
    return
  }
}

module attributes {stable_mosaic.version = 11 : i64} {
  func.func @_fused_layer_kernel(%arg0: memref<512x135xf32, #tpu.memory_space<vmem>>, %arg1: memref<135x4xf32, #tpu.memory_space<vmem>>, %arg2: memref<1x4xf32, #tpu.memory_space<vmem>>, %arg3: memref<512x4xf32, #tpu.memory_space<vmem>>) attributes {dimension_semantics = [], scalar_prefetch = 0 : i64, scratch_operands = 0 : i64, tpu.core_type = #tpu.core_type<tc>} {
    %c0 = arith.constant 0 : index
    %c0_0 = arith.constant 0 : index
    %0 = vector.load %arg0[%c0, %c0_0] : memref<512x135xf32, #tpu.memory_space<vmem>>, vector<512x135xf32>
    %c0_1 = arith.constant 0 : index
    %c0_2 = arith.constant 0 : index
    %1 = vector.load %arg1[%c0_1, %c0_2] : memref<135x4xf32, #tpu.memory_space<vmem>>, vector<135x4xf32>
    %cst = arith.constant dense<0.000000e+00> : vector<512x4xf32>
    %2 = tpu.matmul %0, %1, %cst {dimension_numbers = #tpu.dot_dimension_numbers<[1], [0], [0], [1], [0, 0, 1, 1], [], []>} : vector<512x135xf32>, vector<135x4xf32>, vector<512x4xf32> -> vector<512x4xf32>
    %c0_3 = arith.constant 0 : index
    %c0_4 = arith.constant 0 : index
    %3 = vector.load %arg2[%c0_3, %c0_4] : memref<1x4xf32, #tpu.memory_space<vmem>>, vector<1x4xf32>
    %4 = vector.broadcast %3 : vector<1x4xf32> to vector<512x4xf32>
    %5 = arith.addf %2, %4 : vector<512x4xf32>
    %6 = arith.negf %5 : vector<512x4xf32>
    %7 = math.exp %6 : vector<512x4xf32>
    %cst_5 = arith.constant 1.000000e+00 : f32
    %8 = vector.broadcast %cst_5 : f32 to vector<512x4xf32>
    %9 = arith.addf %8, %7 : vector<512x4xf32>
    %10 = arith.divf %8, %9 : vector<512x4xf32>
    %c0_6 = arith.constant 0 : index
    %c0_7 = arith.constant 0 : index
    %11 = vector.load %arg3[%c0_6, %c0_7] : memref<512x4xf32, #tpu.memory_space<vmem>>, vector<512x4xf32>
    tpu.vector_store %arg3[%c0_6, %c0_7], %10 {strides = array<i32>} : memref<512x4xf32, #tpu.memory_space<vmem>>, vector<512x4xf32>,
    return
  }
}

</mosaic_0001>

<llo_original>
// kernel: mask_generator_forward.8
$region0: #{mask_generator_forward.8}
  #allocation0 [shape = 'u32[]', space=smem, size = 0x4, offset = 0x4, fixed_abs, tag = 'smem constant byte address 0x4 - core index']
  #allocation1 [shape = 'u32[144,128]{1,0:T(1,128)}', space=vmem, size = 0x12000, scoped, tag = 'internal scratch']
  %s0 = inlined_call_operand.vmem [shape: f32[128,135], index: 0, kind: input, shape index: {}]
  %s1 = inlined_call_operand.vmem [shape: f32[135,30], index: 1, kind: input, shape index: {}]
  %s2 = inlined_call_operand.vmem [shape: f32[1,30], index: 2, kind: input, shape index: {}]
  %s3 = inlined_call_operand.vmem [shape: f32[1,30], index: 3, kind: input, shape index: {}]
  %s4 = inlined_call_operand.vmem [shape: f32[128,30], index: 4, kind: output, shape index: {}]
  %s5 = sld [smem:[#allocation0]]
  $region26: #{mask_generator_forward.8} parent=0
    _
  %s7 = ssub.s32 1, %s5
  %s8 = scalar_select 0, %s7, %s5
  // Predicated region
  $region2: #{mask_generator_forward.8} parent=0 // pred_check
    _
  $region3: #{mask_generator_forward.8} parent=0 // pred_check_branch
    %10 = sbr.rel (0) target = $region5
  $region4: #{mask_generator_forward.8} parent=0 // pred_region
    _
  $region5: #{mask_generator_forward.8} parent=0 // pred_fallthru
    _
  // Predicated region
  $region6: #{mask_generator_forward.8} parent=0 // pred_check
    _
  $region7: #{mask_generator_forward.8} parent=0 // pred_check_branch
    %12 = sbr.rel (0) target = $region9
  $region8: #{mask_generator_forward.8} parent=0 // pred_region
    _
  $region9: #{mask_generator_forward.8} parent=0 // pred_fallthru
    _
  // Predicated region
  $region10: #{mask_generator_forward.8} parent=0 // pred_check
    _
  $region11: #{mask_generator_forward.8} parent=0 // pred_check_branch
    %14 = sbr.rel (0) target = $region13
  $region12: #{mask_generator_forward.8} parent=0 // pred_region
    _
  $region13: #{mask_generator_forward.8} parent=0 // pred_fallthru
    _
  // Predicated region
  $region14: #{mask_generator_forward.8} parent=0 // pred_check
    _
  $region15: #{mask_generator_forward.8} parent=0 // pred_check_branch
    %16 = sbr.rel (0) target = $region17
  $region16: #{mask_generator_forward.8} parent=0 // pred_region
    _
  $region17: #{mask_generator_forward.8} parent=0 // pred_fallthru
    _
  %v17 = vld [vmem:[%s0] sm:$0xff]
  %v18 = vld [vmem:[%s0 + $0x8] sm:$0xff]
  %v19 = vld [vmem:[%s0 + $0x10] sm:$0xff]
  %v20 = vld [vmem:[%s0 + $0x18] sm:$0xff]
  %v21 = vld [vmem:[%s0 + $0x20] sm:$0xff]
  %v22 = vld [vmem:[%s0 + $0x28] sm:$0xff]
  %v23 = vld [vmem:[%s0 + $0x30] sm:$0xff]
  %v24 = vld [vmem:[%s0 + $0x38] sm:$0xff]
  %v25 = vld [vmem:[%s0 + $0x40] sm:$0xff]
  %v26 = vld [vmem:[%s0 + $0x48] sm:$0xff]
  %v27 = vld [vmem:[%s0 + $0x50] sm:$0xff]
  %v28 = vld [vmem:[%s0 + $0x58] sm:$0xff]
  %v29 = vld [vmem:[%s0 + $0x60] sm:$0xff]
  %v30 = vld [vmem:[%s0 + $0x68] sm:$0xff]
  %v31 = vld [vmem:[%s0 + $0x70] sm:$0xff]
  %v32 = vld [vmem:[%s0 + $0x78] sm:$0xff]
  %v33 = vld [vmem:[%s0 + $0x80] sm:$0xff]
  %v34 = vld [vmem:[%s0 + $0x88] sm:$0xff]
  %v35 = vld [vmem:[%s0 + $0x90] sm:$0xff]
  %v36 = vld [vmem:[%s0 + $0x98] sm:$0xff]
  %v37 = vld [vmem:[%s0 + $0xa0] sm:$0xff]
  %v38 = vld [vmem:[%s0 + $0xa8] sm:$0xff]
  %v39 = vld [vmem:[%s0 + $0xb0] sm:$0xff]
  %v40 = vld [vmem:[%s0 + $0xb8] sm:$0xff]
  %v41 = vld [vmem:[%s0 + $0xc0] sm:$0xff]
  %v42 = vld [vmem:[%s0 + $0xc8] sm:$0xff]
  %v43 = vld [vmem:[%s0 + $0xd0] sm:$0xff]
  %v44 = vld [vmem:[%s0 + $0xd8] sm:$0xff]
  %v45 = vld [vmem:[%s0 + $0xe0] sm:$0xff]
  %v46 = vld [vmem:[%s0 + $0xe8] sm:$0xff]
  %v47 = vld [vmem:[%s0 + $0xf0] sm:$0xff]
  %v48 = vld [vmem:[%s0 + $0xf8] sm:$0xff]
  %v49 = vld [vmem:[%s1] sm:$0xff]
  %v50 = vld [vmem:[%s1 + $0x8] sm:$0xff]
  %v51 = vld [vmem:[%s1 + $0x10] sm:$0xff]
  %v52 = vld [vmem:[%s1 + $0x18] sm:$0xff]
  %v53 = vld [vmem:[%s1 + $0x20] sm:$0xff]
  %v54 = vld [vmem:[%s1 + $0x28] sm:$0xff]
  %v55 = vld [vmem:[%s1 + $0x30] sm:$0xff]
  %v56 = vld [vmem:[%s1 + $0x38] sm:$0xff]
  %v57 = vld [vmem:[%s1 + $0x40] sm:$0xff]
  %v58 = vld [vmem:[%s1 + $0x48] sm:$0xff]
  %v59 = vld [vmem:[%s1 + $0x50] sm:$0xff]
  %v60 = vld [vmem:[%s1 + $0x58] sm:$0xff]
  %v61 = vld [vmem:[%s1 + $0x60] sm:$0xff]
  %v62 = vld [vmem:[%s1 + $0x68] sm:$0xff]
  %v63 = vld [vmem:[%s1 + $0x70] sm:$0xff]
  %v64 = vld [vmem:[%s1 + $0x78] sm:$0xff]
  %v65 = vld [vmem:[%s1 + $0x80] sm:$0x7f]
  %vm66 = vcmask 56320
  %v68 = vsel %vm66, %v18, 0
  %v71 = vsel %vm66, %v20, 0
  %v74 = vsel %vm66, %v22, 0
  %v77 = vsel %vm66, %v24, 0
  %v80 = vsel %vm66, %v26, 0
  %v83 = vsel %vm66, %v28, 0
  %v86 = vsel %vm66, %v30, 0
  %v89 = vsel %vm66, %v32, 0
  %v92 = vsel %vm66, %v34, 0
  %v95 = vsel %vm66, %v36, 0
  %v98 = vsel %vm66, %v38, 0
  %v101 = vsel %vm66, %v40, 0
  %v104 = vsel %vm66, %v42, 0
  %v107 = vsel %vm66, %v44, 0
  %v110 = vsel %vm66, %v46, 0
  %v113 = vsel %vm66, %v48, 0
  %vm115 = vcmask 1046528
  %v117 = vsel %vm115, %v65, 0
  %119 = vmatprep.subr.mxu0 0.0
  %120 = vmatpush1.msra.mxu0 %v64
  %121 = vmatprep.subr.mxu0 0.0
  %122 = vmatpush1.msra.mxu0 %v63
  %123 = vmatprep.subr.mxu0 0.0
  %124 = vmatpush1.msra.mxu0 %v62
  %125 = vmatprep.subr.mxu0 0.0
  %126 = vmatpush1.msra.mxu0 %v61
  %127 = vmatprep.subr.mxu0 0.0
  %128 = vmatpush1.msra.mxu0 %v60
  %129 = vmatprep.subr.mxu0 0.0
  %130 = vmatpush1.msra.mxu0 %v59
  %131 = vmatprep.subr.mxu0 0.0
  %132 = vmatpush1.msra.mxu0 %v58
  %133 = vmatprep.subr.mxu0 0.0
  %134 = vmatpush1.msra.mxu0 %v57
  %135 = vmatprep.subr.mxu0 0.0
  %136 = vmatpush1.msra.mxu0 %v56
  %137 = vmatprep.subr.mxu0 0.0
  %138 = vmatpush1.msra.mxu0 %v55
  %139 = vmatprep.subr.mxu0 0.0
  %140 = vmatpush1.msra.mxu0 %v54
  %141 = vmatprep.subr.mxu0 0.0
  %142 = vmatpush1.msra.mxu0 %v53
  %143 = vmatprep.subr.mxu0 0.0
  %144 = vmatpush1.msra.mxu0 %v52
  %145 = vmatprep.subr.mxu0 0.0
  %146 = vmatpush1.msra.mxu0 %v51
  %147 = vmatprep.subr.mxu0 0.0
  %148 = vmatpush1.msra.mxu0 %v50
  %149 = vmatprep.subr.mxu0 0.0
  %150 = vmatpush1.msra.mxu0 %v49
  %151 = vmatprep.subr.mxu0 0.0
  %152 = vmatpush2.msra.mxu0 0.0
  %153 = vmatprep.subr.mxu0 0.0
  %154 = vmatpush2.msra.mxu0 0.0
  %155 = vmatprep.subr.mxu0 0.0
  %156 = vmatpush2.msra.mxu0 0.0
  %157 = vmatprep.subr.mxu0 0.0
  %158 = vmatpush2.msra.mxu0 0.0
  %159 = vmatprep.subr.mxu0 0.0
  %160 = vmatpush2.msra.mxu0 0.0
  %161 = vmatprep.subr.mxu0 0.0
  %162 = vmatpush2.msra.mxu0 0.0
  %163 = vmatprep.subr.mxu0 0.0
  %164 = vmatpush2.msra.mxu0 0.0
  %165 = vmatprep.subr.mxu0 0.0
  %166 = vmatpush2.msra.mxu0 0.0
  %167 = vmatprep.subr.mxu0 0.0
  %168 = vmatpush2.msra.mxu0 0.0
  %169 = vmatprep.subr.mxu0 0.0
  %170 = vmatpush2.msra.mxu0 0.0
  %171 = vmatprep.subr.mxu0 0.0
  %172 = vmatpush2.msra.mxu0 0.0
  %173 = vmatprep.subr.mxu0 0.0
  %174 = vmatpush2.msra.mxu0 0.0
  %175 = vmatprep.subr.mxu0 0.0
  %176 = vmatpush2.msra.mxu0 0.0
  %177 = vmatprep.subr.mxu0 0.0
  %178 = vmatpush2.msra.mxu0 0.0
  %179 = vmatprep.subr.mxu0 0.0
  %180 = vmatpush2.msra.mxu0 0.0
  %181 = vmatprep.subr.mxu0 0.0
  %182 = vmatpush2.msra.mxu0 %v117
  %183 = vmatprep.mubr.f32.mxu0 %v68
  %184 = vmatmul.mubr.f32.gmra.mxu0 %v17
  %v185 = vpop.f32.mrf.mxu0
  %v186 = vadd.f32 0.0, %v185
  %v187 = vpop.f32.mrf.mxu0
  %188 = vmatprep.mubr.f32.mxu0 %v71
  %189 = vmatmul.mubr.f32.gmra.mxu0 %v19
  %v190 = vpop.f32.mrf.mxu0
  %v191 = vadd.f32 0.0, %v190
  %v192 = vpop.f32.mrf.mxu0
  %193 = vmatprep.mubr.f32.mxu0 %v74
  %194 = vmatmul.mubr.f32.gmra.mxu0 %v21
  %v195 = vpop.f32.mrf.mxu0
  %v196 = vadd.f32 0.0, %v195
  %v197 = vpop.f32.mrf.mxu0
  %198 = vmatprep.mubr.f32.mxu0 %v77
  %199 = vmatmul.mubr.f32.gmra.mxu0 %v23
  %v200 = vpop.f32.mrf.mxu0
  %v201 = vadd.f32 0.0, %v200
  %v202 = vpop.f32.mrf.mxu0
  %203 = vmatprep.mubr.f32.mxu0 %v80
  %204 = vmatmul.mubr.f32.gmra.mxu0 %v25
  %v205 = vpop.f32.mrf.mxu0
  %v206 = vadd.f32 0.0, %v205
  %v207 = vpop.f32.mrf.mxu0
  %208 = vmatprep.mubr.f32.mxu0 %v83
  %209 = vmatmul.mubr.f32.gmra.mxu0 %v27
  %v210 = vpop.f32.mrf.mxu0
  %v211 = vadd.f32 0.0, %v210
  %v212 = vpop.f32.mrf.mxu0
  %213 = vmatprep.mubr.f32.mxu0 %v86
  %214 = vmatmul.mubr.f32.gmra.mxu0 %v29
  %v215 = vpop.f32.mrf.mxu0
  %v216 = vadd.f32 0.0, %v215
  %v217 = vpop.f32.mrf.mxu0
  %218 = vmatprep.mubr.f32.mxu0 %v89
  %219 = vmatmul.mubr.f32.gmra.mxu0 %v31
  %v220 = vpop.f32.mrf.mxu0
  %v221 = vadd.f32 0.0, %v220
  %v222 = vpop.f32.mrf.mxu0
  %223 = vmatprep.mubr.f32.mxu0 %v92
  %224 = vmatmul.mubr.f32.gmra.mxu0 %v33
  %v225 = vpop.f32.mrf.mxu0
  %v226 = vadd.f32 0.0, %v225
  %v227 = vpop.f32.mrf.mxu0
  %228 = vmatprep.mubr.f32.mxu0 %v95
  %229 = vmatmul.mubr.f32.gmra.mxu0 %v35
  %v230 = vpop.f32.mrf.mxu0
  %v231 = vadd.f32 0.0, %v230
  %v232 = vpop.f32.mrf.mxu0
  %233 = vmatprep.mubr.f32.mxu0 %v98
  %234 = vmatmul.mubr.f32.gmra.mxu0 %v37
  %v235 = vpop.f32.mrf.mxu0
  %v236 = vadd.f32 0.0, %v235
  %v237 = vpop.f32.mrf.mxu0
  %238 = vmatprep.mubr.f32.mxu0 %v101
  %239 = vmatmul.mubr.f32.gmra.mxu0 %v39
  %v240 = vpop.f32.mrf.mxu0
  %v241 = vadd.f32 0.0, %v240
  %v242 = vpop.f32.mrf.mxu0
  %243 = vmatprep.mubr.f32.mxu0 %v104
  %244 = vmatmul.mubr.f32.gmra.mxu0 %v41
  %v245 = vpop.f32.mrf.mxu0
  %v246 = vadd.f32 0.0, %v245
  %v247 = vpop.f32.mrf.mxu0
  %248 = vmatprep.mubr.f32.mxu0 %v107
  %249 = vmatmul.mubr.f32.gmra.mxu0 %v43
  %v250 = vpop.f32.mrf.mxu0
  %v251 = vadd.f32 0.0, %v250
  %v252 = vpop.f32.mrf.mxu0
  %253 = vmatprep.mubr.f32.mxu0 %v110
  %254 = vmatmul.mubr.f32.gmra.mxu0 %v45
  %v255 = vpop.f32.mrf.mxu0
  %v256 = vadd.f32 0.0, %v255
  %v257 = vpop.f32.mrf.mxu0
  %258 = vmatprep.mubr.f32.mxu0 %v113
  %259 = vmatmul.mubr.f32.gmra.mxu0 %v47
  %v260 = vpop.f32.mrf.mxu0
  %v261 = vadd.f32 0.0, %v260
  %v262 = vpop.f32.mrf.mxu0
  %263 = vdwg.mxu0
  %v264 = vmax.f32 %v186, 0.0
  %v265 = vmax.f32 %v191, 0.0
  %v266 = vmax.f32 %v196, 0.0
  %v267 = vmax.f32 %v201, 0.0
  %v268 = vmax.f32 %v206, 0.0
  %v269 = vmax.f32 %v211, 0.0
  %v270 = vmax.f32 %v216, 0.0
  %v271 = vmax.f32 %v221, 0.0
  %v272 = vmax.f32 %v226, 0.0
  %v273 = vmax.f32 %v231, 0.0
  %v274 = vmax.f32 %v236, 0.0
  %v275 = vmax.f32 %v241, 0.0
  %v276 = vmax.f32 %v246, 0.0
  %v277 = vmax.f32 %v251, 0.0
  %v278 = vmax.f32 %v256, 0.0
  %v279 = vmax.f32 %v261, 0.0
  %vm280 = vcmask 244736
  %v281 = vsel %vm280, %v264, 0.0
  %v282 = vsel %vm280, %v265, 0.0
  %v283 = vadd.f32 %v281, %v282
  %v284 = vsel %vm280, %v266, 0.0
  %v285 = vadd.f32 %v283, %v284
  %v286 = vsel %vm280, %v267, 0.0
  %v287 = vadd.f32 %v285, %v286
  %v288 = vsel %vm280, %v268, 0.0
  %v289 = vadd.f32 %v287, %v288
  %v290 = vsel %vm280, %v269, 0.0
  %v291 = vadd.f32 %v289, %v290
  %v292 = vsel %vm280, %v270, 0.0
  %v293 = vadd.f32 %v291, %v292
  %v294 = vsel %vm280, %v271, 0.0
  %v295 = vadd.f32 %v293, %v294
  %v296 = vsel %vm280, %v272, 0.0
  %v297 = vadd.f32 %v295, %v296
  %v298 = vsel %vm280, %v273, 0.0
  %v299 = vadd.f32 %v297, %v298
  %v300 = vsel %vm280, %v274, 0.0
  %v301 = vadd.f32 %v299, %v300
  %v302 = vsel %vm280, %v275, 0.0
  %v303 = vadd.f32 %v301, %v302
  %v304 = vsel %vm280, %v276, 0.0
  %v305 = vadd.f32 %v303, %v304
  %v306 = vsel %vm280, %v277, 0.0
  %v307 = vadd.f32 %v305, %v306
  %v308 = vsel %vm280, %v278, 0.0
  %v309 = vadd.f32 %v307, %v308
  %v310 = vsel %vm280, %v279, 0.0
  %v311 = vadd.f32 %v309, %v310
  %v312 = vrot.slane %v311, 4
  %v313 = vadd.f32 %v311, %v312
  %v314 = vrot.slane %v313, 2
  %v315 = vadd.f32 %v313, %v314
  %v316 = vrot.slane %v315, 1
  %v317 = vadd.f32 %v315, %v316
  %v318 = vmul.f32 %v317, 0.0078125
  %v319 = vsub.f32 %v264, %v318
  %v320 = vsub.f32 %v265, %v318
  %v321 = vsub.f32 %v266, %v318
  %v322 = vsub.f32 %v267, %v318
  %v323 = vsub.f32 %v268, %v318
  %v324 = vsub.f32 %v269, %v318
  %v325 = vsub.f32 %v270, %v318
  %v326 = vsub.f32 %v271, %v318
  %v327 = vsub.f32 %v272, %v318
  %v328 = vsub.f32 %v273, %v318
  %v329 = vsub.f32 %v274, %v318
  %v330 = vsub.f32 %v275, %v318
  %v331 = vsub.f32 %v276, %v318
  %v332 = vsub.f32 %v277, %v318
  %v333 = vsub.f32 %v278, %v318
  %v334 = vsub.f32 %v279, %v318
  %v335 = vmul.f32 %v319, %v319
  %v336 = vmul.f32 %v320, %v320
  %v337 = vmul.f32 %v321, %v321
  %v338 = vmul.f32 %v322, %v322
  %v339 = vmul.f32 %v323, %v323
  %v340 = vmul.f32 %v324, %v324
  %v341 = vmul.f32 %v325, %v325
  %v342 = vmul.f32 %v326, %v326
  %v343 = vmul.f32 %v327, %v327
  %v344 = vmul.f32 %v328, %v328
  %v345 = vmul.f32 %v329, %v329
  %v346 = vmul.f32 %v330, %v330
  %v347 = vmul.f32 %v331, %v331
  %v348 = vmul.f32 %v332, %v332
  %v349 = vmul.f32 %v333, %v333
  %v350 = vmul.f32 %v334, %v334
  %v351 = vsel %vm280, %v335, 0.0
  %v352 = vsel %vm280, %v336, 0.0
  %v353 = vadd.f32 %v351, %v352
  %v354 = vsel %vm280, %v337, 0.0
  %v355 = vadd.f32 %v353, %v354
  %v356 = vsel %vm280, %v338, 0.0
  %v357 = vadd.f32 %v355, %v356
  %v358 = vsel %vm280, %v339, 0.0
  %v359 = vadd.f32 %v357, %v358
  %v360 = vsel %vm280, %v340, 0.0
  %v361 = vadd.f32 %v359, %v360
  %v362 = vsel %vm280, %v341, 0.0
  %v363 = vadd.f32 %v361, %v362
  %v364 = vsel %vm280, %v342, 0.0
  %v365 = vadd.f32 %v363, %v364
  %v366 = vsel %vm280, %v343, 0.0
  %v367 = vadd.f32 %v365, %v366
  %v368 = vsel %vm280, %v344, 0.0
  %v369 = vadd.f32 %v367, %v368
  %v370 = vsel %vm280, %v345, 0.0
  %v371 = vadd.f32 %v369, %v370
  %v372 = vsel %vm280, %v346, 0.0
  %v373 = vadd.f32 %v371, %v372
  %v374 = vsel %vm280, %v347, 0.0
  %v375 = vadd.f32 %v373, %v374
  %v376 = vsel %vm280, %v348, 0.0
  %v377 = vadd.f32 %v375, %v376
  %v378 = vsel %vm280, %v349, 0.0
  %v379 = vadd.f32 %v377, %v378
  %v380 = vsel %vm280, %v350, 0.0
  %v381 = vadd.f32 %v379, %v380
  %v382 = vrot.slane %v381, 4
  %v383 = vadd.f32 %v381, %v382
  %v384 = vrot.slane %v383, 2
  %v385 = vadd.f32 %v383, %v384
  %v386 = vrot.slane %v385, 1
  %v387 = vadd.f32 %v385, %v386
  %v388 = vmul.f32 %v387, 0.0078125
  %v389 = vadd.f32 %v388, 1e-05
  %v390 = vrsqrt.pop %v389
  %v391 = vmul.f32 %v319, %v390
  %v392 = vmul.f32 %v320, %v390
  %v393 = vmul.f32 %v321, %v390
  %v394 = vmul.f32 %v322, %v390
  %v395 = vmul.f32 %v323, %v390
  %v396 = vmul.f32 %v324, %v390
  %v397 = vmul.f32 %v325, %v390
  %v398 = vmul.f32 %v326, %v390
  %v399 = vmul.f32 %v327, %v390
  %v400 = vmul.f32 %v328, %v390
  %v401 = vmul.f32 %v329, %v390
  %v402 = vmul.f32 %v330, %v390
  %v403 = vmul.f32 %v331, %v390
  %v404 = vmul.f32 %v332, %v390
  %v405 = vmul.f32 %v333, %v390
  %v406 = vmul.f32 %v334, %v390
  %v407 = vld [vmem:[%s2] sm:$0x1]
  %v409 = vlaneseq
  %v410 = vshrl.u32 %v409, 7
  %v411 = vsub.s32 0, %v410
  %v412 = vrot.slane %v407, %v411
  %v414 = vmul.f32 %v391, %v412
  %v415 = vmul.f32 %v392, %v412
  %v416 = vmul.f32 %v393, %v412
  %v417 = vmul.f32 %v394, %v412
  %v418 = vmul.f32 %v395, %v412
  %v419 = vmul.f32 %v396, %v412
  %v420 = vmul.f32 %v397, %v412
  %v421 = vmul.f32 %v398, %v412
  %v422 = vmul.f32 %v399, %v412
  %v423 = vmul.f32 %v400, %v412
  %v424 = vmul.f32 %v401, %v412
  %v425 = vmul.f32 %v402, %v412
  %v426 = vmul.f32 %v403, %v412
  %v427 = vmul.f32 %v404, %v412
  %v428 = vmul.f32 %v405, %v412
  %v429 = vmul.f32 %v406, %v412
  %v430 = vld [vmem:[%s3] sm:$0x1]
  %v432 = vlaneseq
  %v433 = vshrl.u32 %v432, 7
  %v434 = vsub.s32 0, %v433
  %v435 = vrot.slane %v430, %v434
  %v437 = vadd.f32 %v414, %v435
  %v438 = vadd.f32 %v415, %v435
  %v439 = vadd.f32 %v416, %v435
  %v440 = vadd.f32 %v417, %v435
  %v441 = vadd.f32 %v418, %v435
  %v442 = vadd.f32 %v419, %v435
  %v443 = vadd.f32 %v420, %v435
  %v444 = vadd.f32 %v421, %v435
  %v445 = vadd.f32 %v422, %v435
  %v446 = vadd.f32 %v423, %v435
  %v447 = vadd.f32 %v424, %v435
  %v448 = vadd.f32 %v425, %v435
  %v449 = vadd.f32 %v426, %v435
  %v450 = vadd.f32 %v427, %v435
  %v451 = vadd.f32 %v428, %v435
  %v452 = vadd.f32 %v429, %v435
  %453 = vst.msk [vmem:[%s4] sm:$0xff] %vm280, %v437
  %454 = vst.msk [vmem:[%s4 + $0x8] sm:$0xff] %vm280, %v438
  %455 = vst.msk [vmem:[%s4 + $0x10] sm:$0xff] %vm280, %v439
  %456 = vst.msk [vmem:[%s4 + $0x18] sm:$0xff] %vm280, %v440
  %457 = vst.msk [vmem:[%s4 + $0x20] sm:$0xff] %vm280, %v441
  %458 = vst.msk [vmem:[%s4 + $0x28] sm:$0xff] %vm280, %v442
  %459 = vst.msk [vmem:[%s4 + $0x30] sm:$0xff] %vm280, %v443
  %460 = vst.msk [vmem:[%s4 + $0x38] sm:$0xff] %vm280, %v444
  %461 = vst.msk [vmem:[%s4 + $0x40] sm:$0xff] %vm280, %v445
  %462 = vst.msk [vmem:[%s4 + $0x48] sm:$0xff] %vm280, %v446
  %463 = vst.msk [vmem:[%s4 + $0x50] sm:$0xff] %vm280, %v447
  %464 = vst.msk [vmem:[%s4 + $0x58] sm:$0xff] %vm280, %v448
  %465 = vst.msk [vmem:[%s4 + $0x60] sm:$0xff] %vm280, %v449
  %466 = vst.msk [vmem:[%s4 + $0x68] sm:$0xff] %vm280, %v450
  %467 = vst.msk [vmem:[%s4 + $0x70] sm:$0xff] %vm280, %v451
  %468 = vst.msk [vmem:[%s4 + $0x78] sm:$0xff] %vm280, %v452
  // Predicated region
  $region18: #{mask_generator_forward.8} parent=0 // pred_check
    _
  $region19: #{mask_generator_forward.8} parent=0 // pred_check_branch
    %470 = sbr.rel (0) target = $region21
  $region20: #{mask_generator_forward.8} parent=0 // pred_region
    _
  $region21: #{mask_generator_forward.8} parent=0 // pred_fallthru
    _
  // Predicated region
  $region22: #{mask_generator_forward.8} parent=0 // pred_check
    _
  $region23: #{mask_generator_forward.8} parent=0 // pred_check_branch
    %472 = sbr.rel (0) target = $region25
  $region24: #{mask_generator_forward.8} parent=0 // pred_region
    _
  $region25: #{mask_generator_forward.8} parent=0 // pred_fallthru
    _

// kernel: mask_generator_forward.9
$region0: #{mask_generator_forward.9}
  #allocation0 [shape = 'u32[]', space=smem, size = 0x4, offset = 0x4, fixed_abs, tag = 'smem constant byte address 0x4 - core index']
  #allocation1 [shape = 'u32[144,128]{1,0:T(1,128)}', space=vmem, size = 0x12000, scoped, tag = 'internal scratch']
  %s0 = inlined_call_operand.vmem [shape: f32[32,270], index: 0, kind: input, shape index: {}]
  %s1 = inlined_call_operand.vmem [shape: f32[270,60], index: 1, kind: input, shape index: {}]
  %s2 = inlined_call_operand.vmem [shape: f32[1,60], index: 2, kind: input, shape index: {}]
  %s3 = inlined_call_operand.vmem [shape: f32[1,60], index: 3, kind: input, shape index: {}]
  %s4 = inlined_call_operand.vmem [shape: f32[32,60], index: 4, kind: output, shape index: {}]
  %s5 = sld [smem:[#allocation0]]
  $region26: #{mask_generator_forward.9} parent=0
    _
  %s7 = ssub.s32 1, %s5
  %s8 = scalar_select 0, %s7, %s5
  // Predicated region
  $region2: #{mask_generator_forward.9} parent=0 // pred_check
    _
  $region3: #{mask_generator_forward.9} parent=0 // pred_check_branch
    %10 = sbr.rel (0) target = $region5
  $region4: #{mask_generator_forward.9} parent=0 // pred_region
    _
  $region5: #{mask_generator_forward.9} parent=0 // pred_fallthru
    _
  // Predicated region
  $region6: #{mask_generator_forward.9} parent=0 // pred_check
    _
  $region7: #{mask_generator_forward.9} parent=0 // pred_check_branch
    %12 = sbr.rel (0) target = $region9
  $region8: #{mask_generator_forward.9} parent=0 // pred_region
    _
  $region9: #{mask_generator_forward.9} parent=0 // pred_fallthru
    _
  // Predicated region
  $region10: #{mask_generator_forward.9} parent=0 // pred_check
    _
  $region11: #{mask_generator_forward.9} parent=0 // pred_check_branch
    %14 = sbr.rel (0) target = $region13
  $region12: #{mask_generator_forward.9} parent=0 // pred_region
    _
  $region13: #{mask_generator_forward.9} parent=0 // pred_fallthru
    _
  // Predicated region
  $region14: #{mask_generator_forward.9} parent=0 // pred_check
    _
  $region15: #{mask_generator_forward.9} parent=0 // pred_check_branch
    %16 = sbr.rel (0) target = $region17
  $region16: #{mask_generator_forward.9} parent=0 // pred_region
    _
  $region17: #{mask_generator_forward.9} parent=0 // pred_fallthru
    _
  %v17 = vld [vmem:[%s0] sm:$0xff]
  %v18 = vld [vmem:[%s0 + $0x8] sm:$0xff]
  %v19 = vld [vmem:[%s0 + $0x10] sm:$0xff]
  %v20 = vld [vmem:[%s0 + $0x18] sm:$0xff]
  %v21 = vld [vmem:[%s0 + $0x20] sm:$0xff]
  %v22 = vld [vmem:[%s0 + $0x28] sm:$0xff]
  %v23 = vld [vmem:[%s0 + $0x30] sm:$0xff]
  %v24 = vld [vmem:[%s0 + $0x38] sm:$0xff]
  %v25 = vld [vmem:[%s0 + $0x40] sm:$0xff]
  %v26 = vld [vmem:[%s0 + $0x48] sm:$0xff]
  %v27 = vld [vmem:[%s0 + $0x50] sm:$0xff]
  %v28 = vld [vmem:[%s0 + $0x58] sm:$0xff]
  %v29 = vld [vmem:[%s1] sm:$0xff]
  %v30 = vld [vmem:[%s1 + $0x8] sm:$0xff]
  %v31 = vld [vmem:[%s1 + $0x10] sm:$0xff]
  %v32 = vld [vmem:[%s1 + $0x18] sm:$0xff]
  %v33 = vld [vmem:[%s1 + $0x20] sm:$0xff]
  %v34 = vld [vmem:[%s1 + $0x28] sm:$0xff]
  %v35 = vld [vmem:[%s1 + $0x30] sm:$0xff]
  %v36 = vld [vmem:[%s1 + $0x38] sm:$0xff]
  %v37 = vld [vmem:[%s1 + $0x40] sm:$0xff]
  %v38 = vld [vmem:[%s1 + $0x48] sm:$0xff]
  %v39 = vld [vmem:[%s1 + $0x50] sm:$0xff]
  %v40 = vld [vmem:[%s1 + $0x58] sm:$0xff]
  %v41 = vld [vmem:[%s1 + $0x60] sm:$0xff]
  %v42 = vld [vmem:[%s1 + $0x68] sm:$0xff]
  %v43 = vld [vmem:[%s1 + $0x70] sm:$0xff]
  %v44 = vld [vmem:[%s1 + $0x78] sm:$0xff]
  %v45 = vld [vmem:[%s1 + $0x80] sm:$0xff]
  %v46 = vld [vmem:[%s1 + $0x88] sm:$0xff]
  %v47 = vld [vmem:[%s1 + $0x90] sm:$0xff]
  %v48 = vld [vmem:[%s1 + $0x98] sm:$0xff]
  %v49 = vld [vmem:[%s1 + $0xa0] sm:$0xff]
  %v50 = vld [vmem:[%s1 + $0xa8] sm:$0xff]
  %v51 = vld [vmem:[%s1 + $0xb0] sm:$0xff]
  %v52 = vld [vmem:[%s1 + $0xb8] sm:$0xff]
  %v53 = vld [vmem:[%s1 + $0xc0] sm:$0xff]
  %v54 = vld [vmem:[%s1 + $0xc8] sm:$0xff]
  %v55 = vld [vmem:[%s1 + $0xd0] sm:$0xff]
  %v56 = vld [vmem:[%s1 + $0xd8] sm:$0xff]
  %v57 = vld [vmem:[%s1 + $0xe0] sm:$0xff]
  %v58 = vld [vmem:[%s1 + $0xe8] sm:$0xff]
  %v59 = vld [vmem:[%s1 + $0xf0] sm:$0xff]
  %v60 = vld [vmem:[%s1 + $0xf8] sm:$0xff]
  %v61 = vld [vmem:[%s1 + $0x100] sm:$0xff]
  %v62 = vld [vmem:[%s1 + $0x108] sm:$0x3f]
  %vm63 = vcmask 113664
  %v65 = vsel %vm63, %v19, 0
  %v68 = vsel %vm63, %v22, 0
  %v71 = vsel %vm63, %v25, 0
  %v74 = vsel %vm63, %v28, 0
  %vm76 = vcmask 1045504
  %v78 = vsel %vm76, %v62, 0
  %80 = vmatprep.subr.mxu0 0.0
  %81 = vmatpush1.msra.mxu0 %v44
  %82 = vmatprep.subr.mxu0 0.0
  %83 = vmatpush1.msra.mxu0 %v43
  %84 = vmatprep.subr.mxu0 0.0
  %85 = vmatpush1.msra.mxu0 %v42
  %86 = vmatprep.subr.mxu0 0.0
  %87 = vmatpush1.msra.mxu0 %v41
  %88 = vmatprep.subr.mxu0 0.0
  %89 = vmatpush1.msra.mxu0 %v40
  %90 = vmatprep.subr.mxu0 0.0
  %91 = vmatpush1.msra.mxu0 %v39
  %92 = vmatprep.subr.mxu0 0.0
  %93 = vmatpush1.msra.mxu0 %v38
  %94 = vmatprep.subr.mxu0 0.0
  %95 = vmatpush1.msra.mxu0 %v37
  %96 = vmatprep.subr.mxu0 0.0
  %97 = vmatpush1.msra.mxu0 %v36
  %98 = vmatprep.subr.mxu0 0.0
  %99 = vmatpush1.msra.mxu0 %v35
  %100 = vmatprep.subr.mxu0 0.0
  %101 = vmatpush1.msra.mxu0 %v34
  %102 = vmatprep.subr.mxu0 0.0
  %103 = vmatpush1.msra.mxu0 %v33
  %104 = vmatprep.subr.mxu0 0.0
  %105 = vmatpush1.msra.mxu0 %v32
  %106 = vmatprep.subr.mxu0 0.0
  %107 = vmatpush1.msra.mxu0 %v31
  %108 = vmatprep.subr.mxu0 0.0
  %109 = vmatpush1.msra.mxu0 %v30
  %110 = vmatprep.subr.mxu0 0.0
  %111 = vmatpush1.msra.mxu0 %v29
  %112 = vmatprep.subr.mxu0 0.0
  %113 = vmatpush2.msra.mxu0 %v60
  %114 = vmatprep.subr.mxu0 0.0
  %115 = vmatpush2.msra.mxu0 %v59
  %116 = vmatprep.subr.mxu0 0.0
  %117 = vmatpush2.msra.mxu0 %v58
  %118 = vmatprep.subr.mxu0 0.0
  %119 = vmatpush2.msra.mxu0 %v57
  %120 = vmatprep.subr.mxu0 0.0
  %121 = vmatpush2.msra.mxu0 %v56
  %122 = vmatprep.subr.mxu0 0.0
  %123 = vmatpush2.msra.mxu0 %v55
  %124 = vmatprep.subr.mxu0 0.0
  %125 = vmatpush2.msra.mxu0 %v54
  %126 = vmatprep.subr.mxu0 0.0
  %127 = vmatpush2.msra.mxu0 %v53
  %128 = vmatprep.subr.mxu0 0.0
  %129 = vmatpush2.msra.mxu0 %v52
  %130 = vmatprep.subr.mxu0 0.0
  %131 = vmatpush2.msra.mxu0 %v51
  %132 = vmatprep.subr.mxu0 0.0
  %133 = vmatpush2.msra.mxu0 %v50
  %134 = vmatprep.subr.mxu0 0.0
  %135 = vmatpush2.msra.mxu0 %v49
  %136 = vmatprep.subr.mxu0 0.0
  %137 = vmatpush2.msra.mxu0 %v48
  %138 = vmatprep.subr.mxu0 0.0
  %139 = vmatpush2.msra.mxu0 %v47
  %140 = vmatprep.subr.mxu0 0.0
  %141 = vmatpush2.msra.mxu0 %v46
  %142 = vmatprep.subr.mxu0 0.0
  %143 = vmatpush2.msra.mxu0 %v45
  %144 = vmatprep.mubr.f32.mxu0 %v18
  %145 = vmatmul.mubr.f32.gmra.mxu0 %v17
  %v146 = vpop.f32.mrf.mxu0
  %v147 = vadd.f32 0.0, %v146
  %v148 = vpop.f32.mrf.mxu0
  %149 = vmatprep.mubr.f32.mxu0 %v21
  %150 = vmatmul.mubr.f32.gmra.mxu0 %v20
  %v151 = vpop.f32.mrf.mxu0
  %v152 = vadd.f32 0.0, %v151
  %v153 = vpop.f32.mrf.mxu0
  %154 = vmatprep.mubr.f32.mxu0 %v24
  %155 = vmatmul.mubr.f32.gmra.mxu0 %v23
  %v156 = vpop.f32.mrf.mxu0
  %v157 = vadd.f32 0.0, %v156
  %v158 = vpop.f32.mrf.mxu0
  %159 = vmatprep.mubr.f32.mxu0 %v27
  %160 = vmatmul.mubr.f32.gmra.mxu0 %v26
  %v161 = vpop.f32.mrf.mxu0
  %v162 = vadd.f32 0.0, %v161
  %v163 = vpop.f32.mrf.mxu0
  %164 = vdwg.mxu0
  %165 = vmatprep.subr.mxu0 0.0
  %166 = vmatpush1.msra.mxu0 0.0
  %167 = vmatprep.subr.mxu0 0.0
  %168 = vmatpush1.msra.mxu0 0.0
  %169 = vmatprep.subr.mxu0 0.0
  %170 = vmatpush1.msra.mxu0 0.0
  %171 = vmatprep.subr.mxu0 0.0
  %172 = vmatpush1.msra.mxu0 0.0
  %173 = vmatprep.subr.mxu0 0.0
  %174 = vmatpush1.msra.mxu0 0.0
  %175 = vmatprep.subr.mxu0 0.0
  %176 = vmatpush1.msra.mxu0 0.0
  %177 = vmatprep.subr.mxu0 0.0
  %178 = vmatpush1.msra.mxu0 0.0
  %179 = vmatprep.subr.mxu0 0.0
  %180 = vmatpush1.msra.mxu0 0.0
  %181 = vmatprep.subr.mxu0 0.0
  %182 = vmatpush1.msra.mxu0 0.0
  %183 = vmatprep.subr.mxu0 0.0
  %184 = vmatpush1.msra.mxu0 0.0
  %185 = vmatprep.subr.mxu0 0.0
  %186 = vmatpush1.msra.mxu0 0.0
  %187 = vmatprep.subr.mxu0 0.0
  %188 = vmatpush1.msra.mxu0 0.0
  %189 = vmatprep.subr.mxu0 0.0
  %190 = vmatpush1.msra.mxu0 0.0
  %191 = vmatprep.subr.mxu0 0.0
  %192 = vmatpush1.msra.mxu0 0.0
  %193 = vmatprep.subr.mxu0 0.0
  %194 = vmatpush1.msra.mxu0 %v78
  %195 = vmatprep.subr.mxu0 0.0
  %196 = vmatpush1.msra.mxu0 %v61
  %197 = vmatprep.subr.mxu0 0.0
  %198 = vmatpush2.msra.mxu0 0.0
  %199 = vmatprep.subr.mxu0 0.0
  %200 = vmatpush2.msra.mxu0 0.0
  %201 = vmatprep.subr.mxu0 0.0
  %202 = vmatpush2.msra.mxu0 0.0
  %203 = vmatprep.subr.mxu0 0.0
  %204 = vmatpush2.msra.mxu0 0.0
  %205 = vmatprep.subr.mxu0 0.0
  %206 = vmatpush2.msra.mxu0 0.0
  %207 = vmatprep.subr.mxu0 0.0
  %208 = vmatpush2.msra.mxu0 0.0
  %209 = vmatprep.subr.mxu0 0.0
  %210 = vmatpush2.msra.mxu0 0.0
  %211 = vmatprep.subr.mxu0 0.0
  %212 = vmatpush2.msra.mxu0 0.0
  %213 = vmatprep.subr.mxu0 0.0
  %214 = vmatpush2.msra.mxu0 0.0
  %215 = vmatprep.subr.mxu0 0.0
  %216 = vmatpush2.msra.mxu0 0.0
  %217 = vmatprep.subr.mxu0 0.0
  %218 = vmatpush2.msra.mxu0 0.0
  %219 = vmatprep.subr.mxu0 0.0
  %220 = vmatpush2.msra.mxu0 0.0
  %221 = vmatprep.subr.mxu0 0.0
  %222 = vmatpush2.msra.mxu0 0.0
  %223 = vmatprep.subr.mxu0 0.0
  %224 = vmatpush2.msra.mxu0 0.0
  %225 = vmatprep.subr.mxu0 0.0
  %226 = vmatpush2.msra.mxu0 0.0
  %227 = vmatprep.subr.mxu0 0.0
  %228 = vmatpush2.msra.mxu0 0.0
  %229 = vmatprep.mubr.f32.mxu0 0.0
  %230 = vmatmul.mubr.f32.gmra.mxu0 %v65
  %v231 = vpop.f32.mrf.mxu0
  %v232 = vadd.f32 %v147, %v231
  %v233 = vpop.f32.mrf.mxu0
  %234 = vmatprep.mubr.f32.mxu0 0.0
  %235 = vmatmul.mubr.f32.gmra.mxu0 %v68
  %v236 = vpop.f32.mrf.mxu0
  %v237 = vadd.f32 %v152, %v236
  %v238 = vpop.f32.mrf.mxu0
  %239 = vmatprep.mubr.f32.mxu0 0.0
  %240 = vmatmul.mubr.f32.gmra.mxu0 %v71
  %v241 = vpop.f32.mrf.mxu0
  %v242 = vadd.f32 %v157, %v241
  %v243 = vpop.f32.mrf.mxu0
  %244 = vmatprep.mubr.f32.mxu0 0.0
  %245 = vmatmul.mubr.f32.gmra.mxu0 %v74
  %v246 = vpop.f32.mrf.mxu0
  %v247 = vadd.f32 %v162, %v246
  %v248 = vpop.f32.mrf.mxu0
  %249 = vdwg.mxu0
  %v250 = vmax.f32 %v232, 0.0
  %v251 = vmax.f32 %v237, 0.0
  %v252 = vmax.f32 %v242, 0.0
  %v253 = vmax.f32 %v247, 0.0
  %vm254 = vcmask 490496
  %v255 = vsel %vm254, %v250, 0.0
  %v256 = vsel %vm254, %v251, 0.0
  %v257 = vadd.f32 %v255, %v256
  %v258 = vsel %vm254, %v252, 0.0
  %v259 = vadd.f32 %v257, %v258
  %v260 = vsel %vm254, %v253, 0.0
  %v261 = vadd.f32 %v259, %v260
  %v262 = vrot.slane %v261, 4
  %v263 = vadd.f32 %v261, %v262
  %v264 = vrot.slane %v263, 2
  %v265 = vadd.f32 %v263, %v264
  %v266 = vrot.slane %v265, 1
  %v267 = vadd.f32 %v265, %v266
  %v268 = vmul.f32 %v267, 0.03125
  %v269 = vsub.f32 %v250, %v268
  %v270 = vsub.f32 %v251, %v268
  %v271 = vsub.f32 %v252, %v268
  %v272 = vsub.f32 %v253, %v268
  %v273 = vmul.f32 %v269, %v269
  %v274 = vmul.f32 %v270, %v270
  %v275 = vmul.f32 %v271, %v271
  %v276 = vmul.f32 %v272, %v272
  %v277 = vsel %vm254, %v273, 0.0
  %v278 = vsel %vm254, %v274, 0.0
  %v279 = vadd.f32 %v277, %v278
  %v280 = vsel %vm254, %v275, 0.0
  %v281 = vadd.f32 %v279, %v280
  %v282 = vsel %vm254, %v276, 0.0
  %v283 = vadd.f32 %v281, %v282
  %v284 = vrot.slane %v283, 4
  %v285 = vadd.f32 %v283, %v284
  %v286 = vrot.slane %v285, 2
  %v287 = vadd.f32 %v285, %v286
  %v288 = vrot.slane %v287, 1
  %v289 = vadd.f32 %v287, %v288
  %v290 = vmul.f32 %v289, 0.03125
  %v291 = vadd.f32 %v290, 1e-05
  %v292 = vrsqrt.pop %v291
  %v293 = vmul.f32 %v269, %v292
  %v294 = vmul.f32 %v270, %v292
  %v295 = vmul.f32 %v271, %v292
  %v296 = vmul.f32 %v272, %v292
  %v297 = vld [vmem:[%s2] sm:$0x1]
  %v299 = vlaneseq
  %v300 = vshrl.u32 %v299, 7
  %v301 = vsub.s32 0, %v300
  %v302 = vrot.slane %v297, %v301
  %v304 = vmul.f32 %v293, %v302
  %v305 = vmul.f32 %v294, %v302
  %v306 = vmul.f32 %v295, %v302
  %v307 = vmul.f32 %v296, %v302
  %v308 = vld [vmem:[%s3] sm:$0x1]
  %v310 = vlaneseq
  %v311 = vshrl.u32 %v310, 7
  %v312 = vsub.s32 0, %v311
  %v313 = vrot.slane %v308, %v312
  %v315 = vadd.f32 %v304, %v313
  %v316 = vadd.f32 %v305, %v313
  %v317 = vadd.f32 %v306, %v313
  %v318 = vadd.f32 %v307, %v313
  %319 = vst.msk [vmem:[%s4] sm:$0xff] %vm254, %v315
  %320 = vst.msk [vmem:[%s4 + $0x8] sm:$0xff] %vm254, %v316
  %321 = vst.msk [vmem:[%s4 + $0x10] sm:$0xff] %vm254, %v317
  %322 = vst.msk [vmem:[%s4 + $0x18] sm:$0xff] %vm254, %v318
  // Predicated region
  $region18: #{mask_generator_forward.9} parent=0 // pred_check
    _
  $region19: #{mask_generator_forward.9} parent=0 // pred_check_branch
    %324 = sbr.rel (0) target = $region21
  $region20: #{mask_generator_forward.9} parent=0 // pred_region
    _
  $region21: #{mask_generator_forward.9} parent=0 // pred_fallthru
    _
  // Predicated region
  $region22: #{mask_generator_forward.9} parent=0 // pred_check
    _
  $region23: #{mask_generator_forward.9} parent=0 // pred_check_branch
    %326 = sbr.rel (0) target = $region25
  $region24: #{mask_generator_forward.9} parent=0 // pred_region
    _
  $region25: #{mask_generator_forward.9} parent=0 // pred_fallthru
    _

// kernel: mask_generator_forward.10
$region0: #{mask_generator_forward.10}
  #allocation0 [shape = 'u32[]', space=smem, size = 0x4, offset = 0x4, fixed_abs, tag = 'smem constant byte address 0x4 - core index']
  #allocation1 [shape = 'u32[144,128]{1,0:T(1,128)}', space=vmem, size = 0x12000, scoped, tag = 'internal scratch']
  %s0 = inlined_call_operand.vmem [shape: f32[8,540], index: 0, kind: input, shape index: {}]
  %s1 = inlined_call_operand.vmem [shape: f32[540,120], index: 1, kind: input, shape index: {}]
  %s2 = inlined_call_operand.vmem [shape: f32[1,120], index: 2, kind: input, shape index: {}]
  %s3 = inlined_call_operand.vmem [shape: f32[1,120], index: 3, kind: input, shape index: {}]
  %s4 = inlined_call_operand.vmem [shape: f32[8,120], index: 4, kind: output, shape index: {}]
  %s5 = sld [smem:[#allocation0]]
  $region26: #{mask_generator_forward.10} parent=0
    _
  %s7 = ssub.s32 1, %s5
  %s8 = scalar_select 0, %s7, %s5
  // Predicated region
  $region2: #{mask_generator_forward.10} parent=0 // pred_check
    _
  $region3: #{mask_generator_forward.10} parent=0 // pred_check_branch
    %10 = sbr.rel (0) target = $region5
  $region4: #{mask_generator_forward.10} parent=0 // pred_region
    _
  $region5: #{mask_generator_forward.10} parent=0 // pred_fallthru
    _
  // Predicated region
  $region6: #{mask_generator_forward.10} parent=0 // pred_check
    _
  $region7: #{mask_generator_forward.10} parent=0 // pred_check_branch
    %12 = sbr.rel (0) target = $region9
  $region8: #{mask_generator_forward.10} parent=0 // pred_region
    _
  $region9: #{mask_generator_forward.10} parent=0 // pred_fallthru
    _
  // Predicated region
  $region10: #{mask_generator_forward.10} parent=0 // pred_check
    _
  $region11: #{mask_generator_forward.10} parent=0 // pred_check_branch
    %14 = sbr.rel (0) target = $region13
  $region12: #{mask_generator_forward.10} parent=0 // pred_region
    _
  $region13: #{mask_generator_forward.10} parent=0 // pred_fallthru
    _
  // Predicated region
  $region14: #{mask_generator_forward.10} parent=0 // pred_check
    _
  $region15: #{mask_generator_forward.10} parent=0 // pred_check_branch
    %16 = sbr.rel (0) target = $region17
  $region16: #{mask_generator_forward.10} parent=0 // pred_region
    _
  $region17: #{mask_generator_forward.10} parent=0 // pred_fallthru
    _
  %v17 = vld [vmem:[%s0] sm:$0xff]
  %v18 = vld [vmem:[%s0 + $0x8] sm:$0xff]
  %v19 = vld [vmem:[%s0 + $0x10] sm:$0xff]
  %v20 = vld [vmem:[%s0 + $0x18] sm:$0xff]
  %v21 = vld [vmem:[%s0 + $0x20] sm:$0xff]
  %v22 = vld [vmem:[%s1] sm:$0xff]
  %v23 = vld [vmem:[%s1 + $0x8] sm:$0xff]
  %v24 = vld [vmem:[%s1 + $0x10] sm:$0xff]
  %v25 = vld [vmem:[%s1 + $0x18] sm:$0xff]
  %v26 = vld [vmem:[%s1 + $0x20] sm:$0xff]
  %v27 = vld [vmem:[%s1 + $0x28] sm:$0xff]
  %v28 = vld [vmem:[%s1 + $0x30] sm:$0xff]
  %v29 = vld [vmem:[%s1 + $0x38] sm:$0xff]
  %v30 = vld [vmem:[%s1 + $0x40] sm:$0xff]
  %v31 = vld [vmem:[%s1 + $0x48] sm:$0xff]
  %v32 = vld [vmem:[%s1 + $0x50] sm:$0xff]
  %v33 = vld [vmem:[%s1 + $0x58] sm:$0xff]
  %v34 = vld [vmem:[%s1 + $0x60] sm:$0xff]
  %v35 = vld [vmem:[%s1 + $0x68] sm:$0xff]
  %v36 = vld [vmem:[%s1 + $0x70] sm:$0xff]
  %v37 = vld [vmem:[%s1 + $0x78] sm:$0xff]
  %v38 = vld [vmem:[%s1 + $0x80] sm:$0xff]
  %v39 = vld [vmem:[%s1 + $0x88] sm:$0xff]
  %v40 = vld [vmem:[%s1 + $0x90] sm:$0xff]
  %v41 = vld [vmem:[%s1 + $0x98] sm:$0xff]
  %v42 = vld [vmem:[%s1 + $0xa0] sm:$0xff]
  %v43 = vld [vmem:[%s1 + $0xa8] sm:$0xff]
  %v44 = vld [vmem:[%s1 + $0xb0] sm:$0xff]
  %v45 = vld [vmem:[%s1 + $0xb8] sm:$0xff]
  %v46 = vld [vmem:[%s1 + $0xc0] sm:$0xff]
  %v47 = vld [vmem:[%s1 + $0xc8] sm:$0xff]
  %v48 = vld [vmem:[%s1 + $0xd0] sm:$0xff]
  %v49 = vld [vmem:[%s1 + $0xd8] sm:$0xff]
  %v50 = vld [vmem:[%s1 + $0xe0] sm:$0xff]
  %v51 = vld [vmem:[%s1 + $0xe8] sm:$0xff]
  %v52 = vld [vmem:[%s1 + $0xf0] sm:$0xff]
  %v53 = vld [vmem:[%s1 + $0xf8] sm:$0xff]
  %v54 = vld [vmem:[%s1 + $0x100] sm:$0xff]
  %v55 = vld [vmem:[%s1 + $0x108] sm:$0xff]
  %v56 = vld [vmem:[%s1 + $0x110] sm:$0xff]
  %v57 = vld [vmem:[%s1 + $0x118] sm:$0xff]
  %v58 = vld [vmem:[%s1 + $0x120] sm:$0xff]
  %v59 = vld [vmem:[%s1 + $0x128] sm:$0xff]
  %v60 = vld [vmem:[%s1 + $0x130] sm:$0xff]
  %v61 = vld [vmem:[%s1 + $0x138] sm:$0xff]
  %v62 = vld [vmem:[%s1 + $0x140] sm:$0xff]
  %v63 = vld [vmem:[%s1 + $0x148] sm:$0xff]
  %v64 = vld [vmem:[%s1 + $0x150] sm:$0xff]
  %v65 = vld [vmem:[%s1 + $0x158] sm:$0xff]
  %v66 = vld [vmem:[%s1 + $0x160] sm:$0xff]
  %v67 = vld [vmem:[%s1 + $0x168] sm:$0xff]
  %v68 = vld [vmem:[%s1 + $0x170] sm:$0xff]
  %v69 = vld [vmem:[%s1 + $0x178] sm:$0xff]
  %v70 = vld [vmem:[%s1 + $0x180] sm:$0xff]
  %v71 = vld [vmem:[%s1 + $0x188] sm:$0xff]
  %v72 = vld [vmem:[%s1 + $0x190] sm:$0xff]
  %v73 = vld [vmem:[%s1 + $0x198] sm:$0xff]
  %v74 = vld [vmem:[%s1 + $0x1a0] sm:$0xff]
  %v75 = vld [vmem:[%s1 + $0x1a8] sm:$0xff]
  %v76 = vld [vmem:[%s1 + $0x1b0] sm:$0xff]
  %v77 = vld [vmem:[%s1 + $0x1b8] sm:$0xff]
  %v78 = vld [vmem:[%s1 + $0x1c0] sm:$0xff]
  %v79 = vld [vmem:[%s1 + $0x1c8] sm:$0xff]
  %v80 = vld [vmem:[%s1 + $0x1d0] sm:$0xff]
  %v81 = vld [vmem:[%s1 + $0x1d8] sm:$0xff]
  %v82 = vld [vmem:[%s1 + $0x1e0] sm:$0xff]
  %v83 = vld [vmem:[%s1 + $0x1e8] sm:$0xff]
  %v84 = vld [vmem:[%s1 + $0x1f0] sm:$0xff]
  %v85 = vld [vmem:[%s1 + $0x1f8] sm:$0xff]
  %v86 = vld [vmem:[%s1 + $0x200] sm:$0xff]
  %v87 = vld [vmem:[%s1 + $0x208] sm:$0xff]
  %v88 = vld [vmem:[%s1 + $0x210] sm:$0xff]
  %v89 = vld [vmem:[%s1 + $0x218] sm:$0xf]
  %vm90 = vcmask 228352
  %v92 = vsel %vm90, %v21, 0
  %vm94 = vcmask 1043456
  %v96 = vsel %vm94, %v89, 0
  %98 = vmatprep.subr.mxu0 0.0
  %99 = vmatpush1.msra.mxu0 %v37
  %100 = vmatprep.subr.mxu0 0.0
  %101 = vmatpush1.msra.mxu0 %v36
  %102 = vmatprep.subr.mxu0 0.0
  %103 = vmatpush1.msra.mxu0 %v35
  %104 = vmatprep.subr.mxu0 0.0
  %105 = vmatpush1.msra.mxu0 %v34
  %106 = vmatprep.subr.mxu0 0.0
  %107 = vmatpush1.msra.mxu0 %v33
  %108 = vmatprep.subr.mxu0 0.0
  %109 = vmatpush1.msra.mxu0 %v32
  %110 = vmatprep.subr.mxu0 0.0
  %111 = vmatpush1.msra.mxu0 %v31
  %112 = vmatprep.subr.mxu0 0.0
  %113 = vmatpush1.msra.mxu0 %v30
  %114 = vmatprep.subr.mxu0 0.0
  %115 = vmatpush1.msra.mxu0 %v29
  %116 = vmatprep.subr.mxu0 0.0
  %117 = vmatpush1.msra.mxu0 %v28
  %118 = vmatprep.subr.mxu0 0.0
  %119 = vmatpush1.msra.mxu0 %v27
  %120 = vmatprep.subr.mxu0 0.0
  %121 = vmatpush1.msra.mxu0 %v26
  %122 = vmatprep.subr.mxu0 0.0
  %123 = vmatpush1.msra.mxu0 %v25
  %124 = vmatprep.subr.mxu0 0.0
  %125 = vmatpush1.msra.mxu0 %v24
  %126 = vmatprep.subr.mxu0 0.0
  %127 = vmatpush1.msra.mxu0 %v23
  %128 = vmatprep.subr.mxu0 0.0
  %129 = vmatpush1.msra.mxu0 %v22
  %130 = vmatprep.subr.mxu0 0.0
  %131 = vmatpush2.msra.mxu0 %v53
  %132 = vmatprep.subr.mxu0 0.0
  %133 = vmatpush2.msra.mxu0 %v52
  %134 = vmatprep.subr.mxu0 0.0
  %135 = vmatpush2.msra.mxu0 %v51
  %136 = vmatprep.subr.mxu0 0.0
  %137 = vmatpush2.msra.mxu0 %v50
  %138 = vmatprep.subr.mxu0 0.0
  %139 = vmatpush2.msra.mxu0 %v49
  %140 = vmatprep.subr.mxu0 0.0
  %141 = vmatpush2.msra.mxu0 %v48
  %142 = vmatprep.subr.mxu0 0.0
  %143 = vmatpush2.msra.mxu0 %v47
  %144 = vmatprep.subr.mxu0 0.0
  %145 = vmatpush2.msra.mxu0 %v46
  %146 = vmatprep.subr.mxu0 0.0
  %147 = vmatpush2.msra.mxu0 %v45
  %148 = vmatprep.subr.mxu0 0.0
  %149 = vmatpush2.msra.mxu0 %v44
  %150 = vmatprep.subr.mxu0 0.0
  %151 = vmatpush2.msra.mxu0 %v43
  %152 = vmatprep.subr.mxu0 0.0
  %153 = vmatpush2.msra.mxu0 %v42
  %154 = vmatprep.subr.mxu0 0.0
  %155 = vmatpush2.msra.mxu0 %v41
  %156 = vmatprep.subr.mxu0 0.0
  %157 = vmatpush2.msra.mxu0 %v40
  %158 = vmatprep.subr.mxu0 0.0
  %159 = vmatpush2.msra.mxu0 %v39
  %160 = vmatprep.subr.mxu0 0.0
  %161 = vmatpush2.msra.mxu0 %v38
  %162 = vmatprep.mubr.f32.mxu0 %v18
  %163 = vmatmul.mubr.f32.gmra.mxu0 %v17
  %v164 = vpop.f32.mrf.mxu0
  %v165 = vadd.f32 0.0, %v164
  %v166 = vpop.f32.mrf.mxu0
  %167 = vdwg.mxu0
  %168 = vmatprep.subr.mxu0 0.0
  %169 = vmatpush1.msra.mxu0 %v69
  %170 = vmatprep.subr.mxu0 0.0
  %171 = vmatpush1.msra.mxu0 %v68
  %172 = vmatprep.subr.mxu0 0.0
  %173 = vmatpush1.msra.mxu0 %v67
  %174 = vmatprep.subr.mxu0 0.0
  %175 = vmatpush1.msra.mxu0 %v66
  %176 = vmatprep.subr.mxu0 0.0
  %177 = vmatpush1.msra.mxu0 %v65
  %178 = vmatprep.subr.mxu0 0.0
  %179 = vmatpush1.msra.mxu0 %v64
  %180 = vmatprep.subr.mxu0 0.0
  %181 = vmatpush1.msra.mxu0 %v63
  %182 = vmatprep.subr.mxu0 0.0
  %183 = vmatpush1.msra.mxu0 %v62
  %184 = vmatprep.subr.mxu0 0.0
  %185 = vmatpush1.msra.mxu0 %v61
  %186 = vmatprep.subr.mxu0 0.0
  %187 = vmatpush1.msra.mxu0 %v60
  %188 = vmatprep.subr.mxu0 0.0
  %189 = vmatpush1.msra.mxu0 %v59
  %190 = vmatprep.subr.mxu0 0.0
  %191 = vmatpush1.msra.mxu0 %v58
  %192 = vmatprep.subr.mxu0 0.0
  %193 = vmatpush1.msra.mxu0 %v57
  %194 = vmatprep.subr.mxu0 0.0
  %195 = vmatpush1.msra.mxu0 %v56
  %196 = vmatprep.subr.mxu0 0.0
  %197 = vmatpush1.msra.mxu0 %v55
  %198 = vmatprep.subr.mxu0 0.0
  %199 = vmatpush1.msra.mxu0 %v54
  %200 = vmatprep.subr.mxu0 0.0
  %201 = vmatpush2.msra.mxu0 %v85
  %202 = vmatprep.subr.mxu0 0.0
  %203 = vmatpush2.msra.mxu0 %v84
  %204 = vmatprep.subr.mxu0 0.0
  %205 = vmatpush2.msra.mxu0 %v83
  %206 = vmatprep.subr.mxu0 0.0
  %207 = vmatpush2.msra.mxu0 %v82
  %208 = vmatprep.subr.mxu0 0.0
  %209 = vmatpush2.msra.mxu0 %v81
  %210 = vmatprep.subr.mxu0 0.0
  %211 = vmatpush2.msra.mxu0 %v80
  %212 = vmatprep.subr.mxu0 0.0
  %213 = vmatpush2.msra.mxu0 %v79
  %214 = vmatprep.subr.mxu0 0.0
  %215 = vmatpush2.msra.mxu0 %v78
  %216 = vmatprep.subr.mxu0 0.0
  %217 = vmatpush2.msra.mxu0 %v77
  %218 = vmatprep.subr.mxu0 0.0
  %219 = vmatpush2.msra.mxu0 %v76
  %220 = vmatprep.subr.mxu0 0.0
  %221 = vmatpush2.msra.mxu0 %v75
  %222 = vmatprep.subr.mxu0 0.0
  %223 = vmatpush2.msra.mxu0 %v74
  %224 = vmatprep.subr.mxu0 0.0
  %225 = vmatpush2.msra.mxu0 %v73
  %226 = vmatprep.subr.mxu0 0.0
  %227 = vmatpush2.msra.mxu0 %v72
  %228 = vmatprep.subr.mxu0 0.0
  %229 = vmatpush2.msra.mxu0 %v71
  %230 = vmatprep.subr.mxu0 0.0
  %231 = vmatpush2.msra.mxu0 %v70
  %232 = vmatprep.mubr.f32.mxu0 %v20
  %233 = vmatmul.mubr.f32.gmra.mxu0 %v19
  %v234 = vpop.f32.mrf.mxu0
  %v235 = vadd.f32 %v165, %v234
  %v236 = vpop.f32.mrf.mxu0
  %237 = vdwg.mxu0
  %238 = vmatprep.subr.mxu0 0.0
  %239 = vmatpush1.msra.mxu0 0.0
  %240 = vmatprep.subr.mxu0 0.0
  %241 = vmatpush1.msra.mxu0 0.0
  %242 = vmatprep.subr.mxu0 0.0
  %243 = vmatpush1.msra.mxu0 0.0
  %244 = vmatprep.subr.mxu0 0.0
  %245 = vmatpush1.msra.mxu0 0.0
  %246 = vmatprep.subr.mxu0 0.0
  %247 = vmatpush1.msra.mxu0 0.0
  %248 = vmatprep.subr.mxu0 0.0
  %249 = vmatpush1.msra.mxu0 0.0
  %250 = vmatprep.subr.mxu0 0.0
  %251 = vmatpush1.msra.mxu0 0.0
  %252 = vmatprep.subr.mxu0 0.0
  %253 = vmatpush1.msra.mxu0 0.0
  %254 = vmatprep.subr.mxu0 0.0
  %255 = vmatpush1.msra.mxu0 0.0
  %256 = vmatprep.subr.mxu0 0.0
  %257 = vmatpush1.msra.mxu0 0.0
  %258 = vmatprep.subr.mxu0 0.0
  %259 = vmatpush1.msra.mxu0 0.0
  %260 = vmatprep.subr.mxu0 0.0
  %261 = vmatpush1.msra.mxu0 0.0
  %262 = vmatprep.subr.mxu0 0.0
  %263 = vmatpush1.msra.mxu0 %v96
  %264 = vmatprep.subr.mxu0 0.0
  %265 = vmatpush1.msra.mxu0 %v88
  %266 = vmatprep.subr.mxu0 0.0
  %267 = vmatpush1.msra.mxu0 %v87
  %268 = vmatprep.subr.mxu0 0.0
  %269 = vmatpush1.msra.mxu0 %v86
  %270 = vmatprep.subr.mxu0 0.0
  %271 = vmatpush2.msra.mxu0 0.0
  %272 = vmatprep.subr.mxu0 0.0
  %273 = vmatpush2.msra.mxu0 0.0
  %274 = vmatprep.subr.mxu0 0.0
  %275 = vmatpush2.msra.mxu0 0.0
  %276 = vmatprep.subr.mxu0 0.0
  %277 = vmatpush2.msra.mxu0 0.0
  %278 = vmatprep.subr.mxu0 0.0
  %279 = vmatpush2.msra.mxu0 0.0
  %280 = vmatprep.subr.mxu0 0.0
  %281 = vmatpush2.msra.mxu0 0.0
  %282 = vmatprep.subr.mxu0 0.0
  %283 = vmatpush2.msra.mxu0 0.0
  %284 = vmatprep.subr.mxu0 0.0
  %285 = vmatpush2.msra.mxu0 0.0
  %286 = vmatprep.subr.mxu0 0.0
  %287 = vmatpush2.msra.mxu0 0.0
  %288 = vmatprep.subr.mxu0 0.0
  %289 = vmatpush2.msra.mxu0 0.0
  %290 = vmatprep.subr.mxu0 0.0
  %291 = vmatpush2.msra.mxu0 0.0
  %292 = vmatprep.subr.mxu0 0.0
  %293 = vmatpush2.msra.mxu0 0.0
  %294 = vmatprep.subr.mxu0 0.0
  %295 = vmatpush2.msra.mxu0 0.0
  %296 = vmatprep.subr.mxu0 0.0
  %297 = vmatpush2.msra.mxu0 0.0
  %298 = vmatprep.subr.mxu0 0.0
  %299 = vmatpush2.msra.mxu0 0.0
  %300 = vmatprep.subr.mxu0 0.0
  %301 = vmatpush2.msra.mxu0 0.0
  %302 = vmatprep.mubr.f32.mxu0 0.0
  %303 = vmatmul.mubr.f32.gmra.mxu0 %v92
  %v304 = vpop.f32.mrf.mxu0
  %v305 = vadd.f32 %v235, %v304
  %v306 = vpop.f32.mrf.mxu0
  %307 = vdwg.mxu0
  %v308 = vmax.f32 %v305, 0.0
  %vm309 = vcmask 982016
  %v310 = vsel %vm309, %v308, 0.0
  %v311 = vrot.slane %v310, 4
  %v312 = vadd.f32 %v310, %v311
  %v313 = vrot.slane %v312, 2
  %v314 = vadd.f32 %v312, %v313
  %v315 = vrot.slane %v314, 1
  %v316 = vadd.f32 %v314, %v315
  %v317 = vmul.f32 %v316, 0.125
  %v318 = vsub.f32 %v308, %v317
  %v319 = vmul.f32 %v318, %v318
  %v320 = vsel %vm309, %v319, 0.0
  %v321 = vrot.slane %v320, 4
  %v322 = vadd.f32 %v320, %v321
  %v323 = vrot.slane %v322, 2
  %v324 = vadd.f32 %v322, %v323
  %v325 = vrot.slane %v324, 1
  %v326 = vadd.f32 %v324, %v325
  %v327 = vmul.f32 %v326, 0.125
  %v328 = vadd.f32 %v327, 1e-05
  %v329 = vrsqrt.pop %v328
  %v330 = vmul.f32 %v318, %v329
  %v331 = vld [vmem:[%s2] sm:$0x1]
  %v333 = vlaneseq
  %v334 = vshrl.u32 %v333, 7
  %v335 = vsub.s32 0, %v334
  %v336 = vrot.slane %v331, %v335
  %v338 = vmul.f32 %v330, %v336
  %v339 = vld [vmem:[%s3] sm:$0x1]
  %v341 = vlaneseq
  %v342 = vshrl.u32 %v341, 7
  %v343 = vsub.s32 0, %v342
  %v344 = vrot.slane %v339, %v343
  %v346 = vadd.f32 %v338, %v344
  %347 = vst.msk [vmem:[%s4] sm:$0xff] %vm309, %v346
  // Predicated region
  $region18: #{mask_generator_forward.10} parent=0 // pred_check
    _
  $region19: #{mask_generator_forward.10} parent=0 // pred_check_branch
    %349 = sbr.rel (0) target = $region21
  $region20: #{mask_generator_forward.10} parent=0 // pred_region
    _
  $region21: #{mask_generator_forward.10} parent=0 // pred_fallthru
    _
  // Predicated region
  $region22: #{mask_generator_forward.10} parent=0 // pred_check
    _
  $region23: #{mask_generator_forward.10} parent=0 // pred_check_branch
    %351 = sbr.rel (0) target = $region25
  $region24: #{mask_generator_forward.10} parent=0 // pred_region
    _
  $region25: #{mask_generator_forward.10} parent=0 // pred_fallthru
    _

// kernel: mask_generator_forward.11
$region0: #{mask_generator_forward.11}
  #allocation0 [shape = 'u32[]', space=smem, size = 0x4, offset = 0x4, fixed_abs, tag = 'smem constant byte address 0x4 - core index']
  #allocation1 [shape = 'u32[144,128]{1,0:T(1,128)}', space=vmem, size = 0x12000, scoped, tag = 'internal scratch']
  %s0 = inlined_call_operand.vmem [shape: f32[32,1080], index: 0, kind: input, shape index: {}]
  %s1 = inlined_call_operand.vmem [shape: f32[1080,60], index: 1, kind: input, shape index: {}]
  %s2 = inlined_call_operand.vmem [shape: f32[1,60], index: 2, kind: input, shape index: {}]
  %s3 = inlined_call_operand.vmem [shape: f32[1,60], index: 3, kind: input, shape index: {}]
  %s4 = inlined_call_operand.vmem [shape: f32[32,60], index: 4, kind: output, shape index: {}]
  %s5 = sld [smem:[#allocation0]]
  $region26: #{mask_generator_forward.11} parent=0
    _
  %s7 = ssub.s32 1, %s5
  %s8 = scalar_select 0, %s7, %s5
  // Predicated region
  $region2: #{mask_generator_forward.11} parent=0 // pred_check
    _
  $region3: #{mask_generator_forward.11} parent=0 // pred_check_branch
    %10 = sbr.rel (0) target = $region5
  $region4: #{mask_generator_forward.11} parent=0 // pred_region
    _
  $region5: #{mask_generator_forward.11} parent=0 // pred_fallthru
    _
  // Predicated region
  $region6: #{mask_generator_forward.11} parent=0 // pred_check
    _
  $region7: #{mask_generator_forward.11} parent=0 // pred_check_branch
    %12 = sbr.rel (0) target = $region9
  $region8: #{mask_generator_forward.11} parent=0 // pred_region
    _
  $region9: #{mask_generator_forward.11} parent=0 // pred_fallthru
    _
  // Predicated region
  $region10: #{mask_generator_forward.11} parent=0 // pred_check
    _
  $region11: #{mask_generator_forward.11} parent=0 // pred_check_branch
    %14 = sbr.rel (0) target = $region13
  $region12: #{mask_generator_forward.11} parent=0 // pred_region
    _
  $region13: #{mask_generator_forward.11} parent=0 // pred_fallthru
    _
  // Predicated region
  $region14: #{mask_generator_forward.11} parent=0 // pred_check
    _
  $region15: #{mask_generator_forward.11} parent=0 // pred_check_branch
    %16 = sbr.rel (0) target = $region17
  $region16: #{mask_generator_forward.11} parent=0 // pred_region
    _
  $region17: #{mask_generator_forward.11} parent=0 // pred_fallthru
    _
  %v17 = vld [vmem:[%s0] sm:$0xff]
  %v18 = vld [vmem:[%s0 + $0x8] sm:$0xff]
  %v19 = vld [vmem:[%s0 + $0x10] sm:$0xff]
  %v20 = vld [vmem:[%s0 + $0x18] sm:$0xff]
  %v21 = vld [vmem:[%s0 + $0x20] sm:$0xff]
  %v22 = vld [vmem:[%s0 + $0x28] sm:$0xff]
  %v23 = vld [vmem:[%s0 + $0x30] sm:$0xff]
  %v24 = vld [vmem:[%s0 + $0x38] sm:$0xff]
  %v25 = vld [vmem:[%s0 + $0x40] sm:$0xff]
  %v26 = vld [vmem:[%s0 + $0x48] sm:$0xff]
  %v27 = vld [vmem:[%s0 + $0x50] sm:$0xff]
  %v28 = vld [vmem:[%s0 + $0x58] sm:$0xff]
  %v29 = vld [vmem:[%s0 + $0x60] sm:$0xff]
  %v30 = vld [vmem:[%s0 + $0x68] sm:$0xff]
  %v31 = vld [vmem:[%s0 + $0x70] sm:$0xff]
  %v32 = vld [vmem:[%s0 + $0x78] sm:$0xff]
  %v33 = vld [vmem:[%s0 + $0x80] sm:$0xff]
  %v34 = vld [vmem:[%s0 + $0x88] sm:$0xff]
  %v35 = vld [vmem:[%s0 + $0x90] sm:$0xff]
  %v36 = vld [vmem:[%s0 + $0x98] sm:$0xff]
  %v37 = vld [vmem:[%s0 + $0xa0] sm:$0xff]
  %v38 = vld [vmem:[%s0 + $0xa8] sm:$0xff]
  %v39 = vld [vmem:[%s0 + $0xb0] sm:$0xff]
  %v40 = vld [vmem:[%s0 + $0xb8] sm:$0xff]
  %v41 = vld [vmem:[%s0 + $0xc0] sm:$0xff]
  %v42 = vld [vmem:[%s0 + $0xc8] sm:$0xff]
  %v43 = vld [vmem:[%s0 + $0xd0] sm:$0xff]
  %v44 = vld [vmem:[%s0 + $0xd8] sm:$0xff]
  %v45 = vld [vmem:[%s0 + $0xe0] sm:$0xff]
  %v46 = vld [vmem:[%s0 + $0xe8] sm:$0xff]
  %v47 = vld [vmem:[%s0 + $0xf0] sm:$0xff]
  %v48 = vld [vmem:[%s0 + $0xf8] sm:$0xff]
  %v49 = vld [vmem:[%s0 + $0x100] sm:$0xff]
  %v50 = vld [vmem:[%s0 + $0x108] sm:$0xff]
  %v51 = vld [vmem:[%s0 + $0x110] sm:$0xff]
  %v52 = vld [vmem:[%s0 + $0x118] sm:$0xff]
  %v53 = vld [vmem:[%s1] sm:$0xff]
  %v54 = vld [vmem:[%s1 + $0x8] sm:$0xff]
  %v55 = vld [vmem:[%s1 + $0x10] sm:$0xff]
  %v56 = vld [vmem:[%s1 + $0x18] sm:$0xff]
  %v57 = vld [vmem:[%s1 + $0x20] sm:$0xff]
  %v58 = vld [vmem:[%s1 + $0x28] sm:$0xff]
  %v59 = vld [vmem:[%s1 + $0x30] sm:$0xff]
  %v60 = vld [vmem:[%s1 + $0x38] sm:$0xff]
  %v61 = vld [vmem:[%s1 + $0x40] sm:$0xff]
  %v62 = vld [vmem:[%s1 + $0x48] sm:$0xff]
  %v63 = vld [vmem:[%s1 + $0x50] sm:$0xff]
  %v64 = vld [vmem:[%s1 + $0x58] sm:$0xff]
  %v65 = vld [vmem:[%s1 + $0x60] sm:$0xff]
  %v66 = vld [vmem:[%s1 + $0x68] sm:$0xff]
  %v67 = vld [vmem:[%s1 + $0x70] sm:$0xff]
  %v68 = vld [vmem:[%s1 + $0x78] sm:$0xff]
  %v69 = vld [vmem:[%s1 + $0x80] sm:$0xff]
  %v70 = vld [vmem:[%s1 + $0x88] sm:$0xff]
  %v71 = vld [vmem:[%s1 + $0x90] sm:$0xff]
  %v72 = vld [vmem:[%s1 + $0x98] sm:$0xff]
  %v73 = vld [vmem:[%s1 + $0xa0] sm:$0xff]
  %v74 = vld [vmem:[%s1 + $0xa8] sm:$0xff]
  %v75 = vld [vmem:[%s1 + $0xb0] sm:$0xff]
  %v76 = vld [vmem:[%s1 + $0xb8] sm:$0xff]
  %v77 = vld [vmem:[%s1 + $0xc0] sm:$0xff]
  %v78 = vld [vmem:[%s1 + $0xc8] sm:$0xff]
  %v79 = vld [vmem:[%s1 + $0xd0] sm:$0xff]
  %v80 = vld [vmem:[%s1 + $0xd8] sm:$0xff]
  %v81 = vld [vmem:[%s1 + $0xe0] sm:$0xff]
  %v82 = vld [vmem:[%s1 + $0xe8] sm:$0xff]
  %v83 = vld [vmem:[%s1 + $0xf0] sm:$0xff]
  %v84 = vld [vmem:[%s1 + $0xf8] sm:$0xff]
  %v85 = vld [vmem:[%s1 + $0x100] sm:$0xff]
  %v86 = vld [vmem:[%s1 + $0x108] sm:$0xff]
  %v87 = vld [vmem:[%s1 + $0x110] sm:$0xff]
  %v88 = vld [vmem:[%s1 + $0x118] sm:$0xff]
  %v89 = vld [vmem:[%s1 + $0x120] sm:$0xff]
  %v90 = vld [vmem:[%s1 + $0x128] sm:$0xff]
  %v91 = vld [vmem:[%s1 + $0x130] sm:$0xff]
  %v92 = vld [vmem:[%s1 + $0x138] sm:$0xff]
  %v93 = vld [vmem:[%s1 + $0x140] sm:$0xff]
  %v94 = vld [vmem:[%s1 + $0x148] sm:$0xff]
  %v95 = vld [vmem:[%s1 + $0x150] sm:$0xff]
  %v96 = vld [vmem:[%s1 + $0x158] sm:$0xff]
  %v97 = vld [vmem:[%s1 + $0x160] sm:$0xff]
  %v98 = vld [vmem:[%s1 + $0x168] sm:$0xff]
  %v99 = vld [vmem:[%s1 + $0x170] sm:$0xff]
  %v100 = vld [vmem:[%s1 + $0x178] sm:$0xff]
  %v101 = vld [vmem:[%s1 + $0x180] sm:$0xff]
  %v102 = vld [vmem:[%s1 + $0x188] sm:$0xff]
  %v103 = vld [vmem:[%s1 + $0x190] sm:$0xff]
  %v104 = vld [vmem:[%s1 + $0x198] sm:$0xff]
  %v105 = vld [vmem:[%s1 + $0x1a0] sm:$0xff]
  %v106 = vld [vmem:[%s1 + $0x1a8] sm:$0xff]
  %v107 = vld [vmem:[%s1 + $0x1b0] sm:$0xff]
  %v108 = vld [vmem:[%s1 + $0x1b8] sm:$0xff]
  %v109 = vld [vmem:[%s1 + $0x1c0] sm:$0xff]
  %v110 = vld [vmem:[%s1 + $0x1c8] sm:$0xff]
  %v111 = vld [vmem:[%s1 + $0x1d0] sm:$0xff]
  %v112 = vld [vmem:[%s1 + $0x1d8] sm:$0xff]
  %v113 = vld [vmem:[%s1 + $0x1e0] sm:$0xff]
  %v114 = vld [vmem:[%s1 + $0x1e8] sm:$0xff]
  %v115 = vld [vmem:[%s1 + $0x1f0] sm:$0xff]
  %v116 = vld [vmem:[%s1 + $0x1f8] sm:$0xff]
  %v117 = vld [vmem:[%s1 + $0x200] sm:$0xff]
  %v118 = vld [vmem:[%s1 + $0x208] sm:$0xff]
  %v119 = vld [vmem:[%s1 + $0x210] sm:$0xff]
  %v120 = vld [vmem:[%s1 + $0x218] sm:$0xff]
  %v121 = vld [vmem:[%s1 + $0x220] sm:$0xff]
  %v122 = vld [vmem:[%s1 + $0x228] sm:$0xff]
  %v123 = vld [vmem:[%s1 + $0x230] sm:$0xff]
  %v124 = vld [vmem:[%s1 + $0x238] sm:$0xff]
  %v125 = vld [vmem:[%s1 + $0x240] sm:$0xff]
  %v126 = vld [vmem:[%s1 + $0x248] sm:$0xff]
  %v127 = vld [vmem:[%s1 + $0x250] sm:$0xff]
  %v128 = vld [vmem:[%s1 + $0x258] sm:$0xff]
  %v129 = vld [vmem:[%s1 + $0x260] sm:$0xff]
  %v130 = vld [vmem:[%s1 + $0x268] sm:$0xff]
  %v131 = vld [vmem:[%s1 + $0x270] sm:$0xff]
  %v132 = vld [vmem:[%s1 + $0x278] sm:$0xff]
  %v133 = vld [vmem:[%s1 + $0x280] sm:$0xff]
  %v134 = vld [vmem:[%s1 + $0x288] sm:$0xff]
  %v135 = vld [vmem:[%s1 + $0x290] sm:$0xff]
  %v136 = vld [vmem:[%s1 + $0x298] sm:$0xff]
  %v137 = vld [vmem:[%s1 + $0x2a0] sm:$0xff]
  %v138 = vld [vmem:[%s1 + $0x2a8] sm:$0xff]
  %v139 = vld [vmem:[%s1 + $0x2b0] sm:$0xff]
  %v140 = vld [vmem:[%s1 + $0x2b8] sm:$0xff]
  %v141 = vld [vmem:[%s1 + $0x2c0] sm:$0xff]
  %v142 = vld [vmem:[%s1 + $0x2c8] sm:$0xff]
  %v143 = vld [vmem:[%s1 + $0x2d0] sm:$0xff]
  %v144 = vld [vmem:[%s1 + $0x2d8] sm:$0xff]
  %v145 = vld [vmem:[%s1 + $0x2e0] sm:$0xff]
  %v146 = vld [vmem:[%s1 + $0x2e8] sm:$0xff]
  %v147 = vld [vmem:[%s1 + $0x2f0] sm:$0xff]
  %v148 = vld [vmem:[%s1 + $0x2f8] sm:$0xff]
  %v149 = vld [vmem:[%s1 + $0x300] sm:$0xff]
  %v150 = vld [vmem:[%s1 + $0x308] sm:$0xff]
  %v151 = vld [vmem:[%s1 + $0x310] sm:$0xff]
  %v152 = vld [vmem:[%s1 + $0x318] sm:$0xff]
  %v153 = vld [vmem:[%s1 + $0x320] sm:$0xff]
  %v154 = vld [vmem:[%s1 + $0x328] sm:$0xff]
  %v155 = vld [vmem:[%s1 + $0x330] sm:$0xff]
  %v156 = vld [vmem:[%s1 + $0x338] sm:$0xff]
  %v157 = vld [vmem:[%s1 + $0x340] sm:$0xff]
  %v158 = vld [vmem:[%s1 + $0x348] sm:$0xff]
  %v159 = vld [vmem:[%s1 + $0x350] sm:$0xff]
  %v160 = vld [vmem:[%s1 + $0x358] sm:$0xff]
  %v161 = vld [vmem:[%s1 + $0x360] sm:$0xff]
  %v162 = vld [vmem:[%s1 + $0x368] sm:$0xff]
  %v163 = vld [vmem:[%s1 + $0x370] sm:$0xff]
  %v164 = vld [vmem:[%s1 + $0x378] sm:$0xff]
  %v165 = vld [vmem:[%s1 + $0x380] sm:$0xff]
  %v166 = vld [vmem:[%s1 + $0x388] sm:$0xff]
  %v167 = vld [vmem:[%s1 + $0x390] sm:$0xff]
  %v168 = vld [vmem:[%s1 + $0x398] sm:$0xff]
  %v169 = vld [vmem:[%s1 + $0x3a0] sm:$0xff]
  %v170 = vld [vmem:[%s1 + $0x3a8] sm:$0xff]
  %v171 = vld [vmem:[%s1 + $0x3b0] sm:$0xff]
  %v172 = vld [vmem:[%s1 + $0x3b8] sm:$0xff]
  %v173 = vld [vmem:[%s1 + $0x3c0] sm:$0xff]
  %v174 = vld [vmem:[%s1 + $0x3c8] sm:$0xff]
  %v175 = vld [vmem:[%s1 + $0x3d0] sm:$0xff]
  %v176 = vld [vmem:[%s1 + $0x3d8] sm:$0xff]
  %v177 = vld [vmem:[%s1 + $0x3e0] sm:$0xff]
  %v178 = vld [vmem:[%s1 + $0x3e8] sm:$0xff]
  %v179 = vld [vmem:[%s1 + $0x3f0] sm:$0xff]
  %v180 = vld [vmem:[%s1 + $0x3f8] sm:$0xff]
  %v181 = vld [vmem:[%s1 + $0x400] sm:$0xff]
  %v182 = vld [vmem:[%s1 + $0x408] sm:$0xff]
  %v183 = vld [vmem:[%s1 + $0x410] sm:$0xff]
  %v184 = vld [vmem:[%s1 + $0x418] sm:$0xff]
  %v185 = vld [vmem:[%s1 + $0x420] sm:$0xff]
  %v186 = vld [vmem:[%s1 + $0x428] sm:$0xff]
  %v187 = vld [vmem:[%s1 + $0x430] sm:$0xff]
  %vm188 = vcmask 457728
  %v190 = vsel %vm188, %v25, 0
  %v193 = vsel %vm188, %v34, 0
  %v196 = vsel %vm188, %v43, 0
  %v199 = vsel %vm188, %v52, 0
  %201 = vmatprep.subr.mxu0 0.0
  %202 = vmatpush1.msra.mxu0 %v68
  %203 = vmatprep.subr.mxu0 0.0
  %204 = vmatpush1.msra.mxu0 %v67
  %205 = vmatprep.subr.mxu0 0.0
  %206 = vmatpush1.msra.mxu0 %v66
  %207 = vmatprep.subr.mxu0 0.0
  %208 = vmatpush1.msra.mxu0 %v65
  %209 = vmatprep.subr.mxu0 0.0
  %210 = vmatpush1.msra.mxu0 %v64
  %211 = vmatprep.subr.mxu0 0.0
  %212 = vmatpush1.msra.mxu0 %v63
  %213 = vmatprep.subr.mxu0 0.0
  %214 = vmatpush1.msra.mxu0 %v62
  %215 = vmatprep.subr.mxu0 0.0
  %216 = vmatpush1.msra.mxu0 %v61
  %217 = vmatprep.subr.mxu0 0.0
  %218 = vmatpush1.msra.mxu0 %v60
  %219 = vmatprep.subr.mxu0 0.0
  %220 = vmatpush1.msra.mxu0 %v59
  %221 = vmatprep.subr.mxu0 0.0
  %222 = vmatpush1.msra.mxu0 %v58
  %223 = vmatprep.subr.mxu0 0.0
  %224 = vmatpush1.msra.mxu0 %v57
  %225 = vmatprep.subr.mxu0 0.0
  %226 = vmatpush1.msra.mxu0 %v56
  %227 = vmatprep.subr.mxu0 0.0
  %228 = vmatpush1.msra.mxu0 %v55
  %229 = vmatprep.subr.mxu0 0.0
  %230 = vmatpush1.msra.mxu0 %v54
  %231 = vmatprep.subr.mxu0 0.0
  %232 = vmatpush1.msra.mxu0 %v53
  %233 = vmatprep.subr.mxu0 0.0
  %234 = vmatpush2.msra.mxu0 %v84
  %235 = vmatprep.subr.mxu0 0.0
  %236 = vmatpush2.msra.mxu0 %v83
  %237 = vmatprep.subr.mxu0 0.0
  %238 = vmatpush2.msra.mxu0 %v82
  %239 = vmatprep.subr.mxu0 0.0
  %240 = vmatpush2.msra.mxu0 %v81
  %241 = vmatprep.subr.mxu0 0.0
  %242 = vmatpush2.msra.mxu0 %v80
  %243 = vmatprep.subr.mxu0 0.0
  %244 = vmatpush2.msra.mxu0 %v79
  %245 = vmatprep.subr.mxu0 0.0
  %246 = vmatpush2.msra.mxu0 %v78
  %247 = vmatprep.subr.mxu0 0.0
  %248 = vmatpush2.msra.mxu0 %v77
  %249 = vmatprep.subr.mxu0 0.0
  %250 = vmatpush2.msra.mxu0 %v76
  %251 = vmatprep.subr.mxu0 0.0
  %252 = vmatpush2.msra.mxu0 %v75
  %253 = vmatprep.subr.mxu0 0.0
  %254 = vmatpush2.msra.mxu0 %v74
  %255 = vmatprep.subr.mxu0 0.0
  %256 = vmatpush2.msra.mxu0 %v73
  %257 = vmatprep.subr.mxu0 0.0
  %258 = vmatpush2.msra.mxu0 %v72
  %259 = vmatprep.subr.mxu0 0.0
  %260 = vmatpush2.msra.mxu0 %v71
  %261 = vmatprep.subr.mxu0 0.0
  %262 = vmatpush2.msra.mxu0 %v70
  %263 = vmatprep.subr.mxu0 0.0
  %264 = vmatpush2.msra.mxu0 %v69
  %265 = vmatprep.mubr.f32.mxu0 %v18
  %266 = vmatmul.mubr.f32.gmra.mxu0 %v17
  %v267 = vpop.f32.mrf.mxu0
  %v268 = vadd.f32 0.0, %v267
  %v269 = vpop.f32.mrf.mxu0
  %270 = vmatprep.mubr.f32.mxu0 %v27
  %271 = vmatmul.mubr.f32.gmra.mxu0 %v26
  %v272 = vpop.f32.mrf.mxu0
  %v273 = vadd.f32 0.0, %v272
  %v274 = vpop.f32.mrf.mxu0
  %275 = vmatprep.mubr.f32.mxu0 %v36
  %276 = vmatmul.mubr.f32.gmra.mxu0 %v35
  %v277 = vpop.f32.mrf.mxu0
  %v278 = vadd.f32 0.0, %v277
  %v279 = vpop.f32.mrf.mxu0
  %280 = vmatprep.mubr.f32.mxu0 %v45
  %281 = vmatmul.mubr.f32.gmra.mxu0 %v44
  %v282 = vpop.f32.mrf.mxu0
  %v283 = vadd.f32 0.0, %v282
  %v284 = vpop.f32.mrf.mxu0
  %285 = vdwg.mxu0
  %286 = vmatprep.subr.mxu0 0.0
  %287 = vmatpush1.msra.mxu0 %v100
  %288 = vmatprep.subr.mxu0 0.0
  %289 = vmatpush1.msra.mxu0 %v99
  %290 = vmatprep.subr.mxu0 0.0
  %291 = vmatpush1.msra.mxu0 %v98
  %292 = vmatprep.subr.mxu0 0.0
  %293 = vmatpush1.msra.mxu0 %v97
  %294 = vmatprep.subr.mxu0 0.0
  %295 = vmatpush1.msra.mxu0 %v96
  %296 = vmatprep.subr.mxu0 0.0
  %297 = vmatpush1.msra.mxu0 %v95
  %298 = vmatprep.subr.mxu0 0.0
  %299 = vmatpush1.msra.mxu0 %v94
  %300 = vmatprep.subr.mxu0 0.0
  %301 = vmatpush1.msra.mxu0 %v93
  %302 = vmatprep.subr.mxu0 0.0
  %303 = vmatpush1.msra.mxu0 %v92
  %304 = vmatprep.subr.mxu0 0.0
  %305 = vmatpush1.msra.mxu0 %v91
  %306 = vmatprep.subr.mxu0 0.0
  %307 = vmatpush1.msra.mxu0 %v90
  %308 = vmatprep.subr.mxu0 0.0
  %309 = vmatpush1.msra.mxu0 %v89
  %310 = vmatprep.subr.mxu0 0.0
  %311 = vmatpush1.msra.mxu0 %v88
  %312 = vmatprep.subr.mxu0 0.0
  %313 = vmatpush1.msra.mxu0 %v87
  %314 = vmatprep.subr.mxu0 0.0
  %315 = vmatpush1.msra.mxu0 %v86
  %316 = vmatprep.subr.mxu0 0.0
  %317 = vmatpush1.msra.mxu0 %v85
  %318 = vmatprep.subr.mxu0 0.0
  %319 = vmatpush2.msra.mxu0 %v116
  %320 = vmatprep.subr.mxu0 0.0
  %321 = vmatpush2.msra.mxu0 %v115
  %322 = vmatprep.subr.mxu0 0.0
  %323 = vmatpush2.msra.mxu0 %v114
  %324 = vmatprep.subr.mxu0 0.0
  %325 = vmatpush2.msra.mxu0 %v113
  %326 = vmatprep.subr.mxu0 0.0
  %327 = vmatpush2.msra.mxu0 %v112
  %328 = vmatprep.subr.mxu0 0.0
  %329 = vmatpush2.msra.mxu0 %v111
  %330 = vmatprep.subr.mxu0 0.0
  %331 = vmatpush2.msra.mxu0 %v110
  %332 = vmatprep.subr.mxu0 0.0
  %333 = vmatpush2.msra.mxu0 %v109
  %334 = vmatprep.subr.mxu0 0.0
  %335 = vmatpush2.msra.mxu0 %v108
  %336 = vmatprep.subr.mxu0 0.0
  %337 = vmatpush2.msra.mxu0 %v107
  %338 = vmatprep.subr.mxu0 0.0
  %339 = vmatpush2.msra.mxu0 %v106
  %340 = vmatprep.subr.mxu0 0.0
  %341 = vmatpush2.msra.mxu0 %v105
  %342 = vmatprep.subr.mxu0 0.0
  %343 = vmatpush2.msra.mxu0 %v104
  %344 = vmatprep.subr.mxu0 0.0
  %345 = vmatpush2.msra.mxu0 %v103
  %346 = vmatprep.subr.mxu0 0.0
  %347 = vmatpush2.msra.mxu0 %v102
  %348 = vmatprep.subr.mxu0 0.0
  %349 = vmatpush2.msra.mxu0 %v101
  %350 = vmatprep.mubr.f32.mxu0 %v20
  %351 = vmatmul.mubr.f32.gmra.mxu0 %v19
  %v352 = vpop.f32.mrf.mxu0
  %v353 = vadd.f32 %v268, %v352
  %v354 = vpop.f32.mrf.mxu0
  %355 = vmatprep.mubr.f32.mxu0 %v29
  %356 = vmatmul.mubr.f32.gmra.mxu0 %v28
  %v357 = vpop.f32.mrf.mxu0
  %v358 = vadd.f32 %v273, %v357
  %v359 = vpop.f32.mrf.mxu0
  %360 = vmatprep.mubr.f32.mxu0 %v38
  %361 = vmatmul.mubr.f32.gmra.mxu0 %v37
  %v362 = vpop.f32.mrf.mxu0
  %v363 = vadd.f32 %v278, %v362
  %v364 = vpop.f32.mrf.mxu0
  %365 = vmatprep.mubr.f32.mxu0 %v47
  %366 = vmatmul.mubr.f32.gmra.mxu0 %v46
  %v367 = vpop.f32.mrf.mxu0
  %v368 = vadd.f32 %v283, %v367
  %v369 = vpop.f32.mrf.mxu0
  %370 = vdwg.mxu0
  %371 = vmatprep.subr.mxu0 0.0
  %372 = vmatpush1.msra.mxu0 %v132
  %373 = vmatprep.subr.mxu0 0.0
  %374 = vmatpush1.msra.mxu0 %v131
  %375 = vmatprep.subr.mxu0 0.0
  %376 = vmatpush1.msra.mxu0 %v130
  %377 = vmatprep.subr.mxu0 0.0
  %378 = vmatpush1.msra.mxu0 %v129
  %379 = vmatprep.subr.mxu0 0.0
  %380 = vmatpush1.msra.mxu0 %v128
  %381 = vmatprep.subr.mxu0 0.0
  %382 = vmatpush1.msra.mxu0 %v127
  %383 = vmatprep.subr.mxu0 0.0
  %384 = vmatpush1.msra.mxu0 %v126
  %385 = vmatprep.subr.mxu0 0.0
  %386 = vmatpush1.msra.mxu0 %v125
  %387 = vmatprep.subr.mxu0 0.0
  %388 = vmatpush1.msra.mxu0 %v124
  %389 = vmatprep.subr.mxu0 0.0
  %390 = vmatpush1.msra.mxu0 %v123
  %391 = vmatprep.subr.mxu0 0.0
  %392 = vmatpush1.msra.mxu0 %v122
  %393 = vmatprep.subr.mxu0 0.0
  %394 = vmatpush1.msra.mxu0 %v121
  %395 = vmatprep.subr.mxu0 0.0
  %396 = vmatpush1.msra.mxu0 %v120
  %397 = vmatprep.subr.mxu0 0.0
  %398 = vmatpush1.msra.mxu0 %v119
  %399 = vmatprep.subr.mxu0 0.0
  %400 = vmatpush1.msra.mxu0 %v118
  %401 = vmatprep.subr.mxu0 0.0
  %402 = vmatpush1.msra.mxu0 %v117
  %403 = vmatprep.subr.mxu0 0.0
  %404 = vmatpush2.msra.mxu0 %v148
  %405 = vmatprep.subr.mxu0 0.0
  %406 = vmatpush2.msra.mxu0 %v147
  %407 = vmatprep.subr.mxu0 0.0
  %408 = vmatpush2.msra.mxu0 %v146
  %409 = vmatprep.subr.mxu0 0.0
  %410 = vmatpush2.msra.mxu0 %v145
  %411 = vmatprep.subr.mxu0 0.0
  %412 = vmatpush2.msra.mxu0 %v144
  %413 = vmatprep.subr.mxu0 0.0
  %414 = vmatpush2.msra.mxu0 %v143
  %415 = vmatprep.subr.mxu0 0.0
  %416 = vmatpush2.msra.mxu0 %v142
  %417 = vmatprep.subr.mxu0 0.0
  %418 = vmatpush2.msra.mxu0 %v141
  %419 = vmatprep.subr.mxu0 0.0
  %420 = vmatpush2.msra.mxu0 %v140
  %421 = vmatprep.subr.mxu0 0.0
  %422 = vmatpush2.msra.mxu0 %v139
  %423 = vmatprep.subr.mxu0 0.0
  %424 = vmatpush2.msra.mxu0 %v138
  %425 = vmatprep.subr.mxu0 0.0
  %426 = vmatpush2.msra.mxu0 %v137
  %427 = vmatprep.subr.mxu0 0.0
  %428 = vmatpush2.msra.mxu0 %v136
  %429 = vmatprep.subr.mxu0 0.0
  %430 = vmatpush2.msra.mxu0 %v135
  %431 = vmatprep.subr.mxu0 0.0
  %432 = vmatpush2.msra.mxu0 %v134
  %433 = vmatprep.subr.mxu0 0.0
  %434 = vmatpush2.msra.mxu0 %v133
  %435 = vmatprep.mubr.f32.mxu0 %v22
  %436 = vmatmul.mubr.f32.gmra.mxu0 %v21
  %v437 = vpop.f32.mrf.mxu0
  %v438 = vadd.f32 %v353, %v437
  %v439 = vpop.f32.mrf.mxu0
  %440 = vmatprep.mubr.f32.mxu0 %v31
  %441 = vmatmul.mubr.f32.gmra.mxu0 %v30
  %v442 = vpop.f32.mrf.mxu0
  %v443 = vadd.f32 %v358, %v442
  %v444 = vpop.f32.mrf.mxu0
  %445 = vmatprep.mubr.f32.mxu0 %v40
  %446 = vmatmul.mubr.f32.gmra.mxu0 %v39
  %v447 = vpop.f32.mrf.mxu0
  %v448 = vadd.f32 %v363, %v447
  %v449 = vpop.f32.mrf.mxu0
  %450 = vmatprep.mubr.f32.mxu0 %v49
  %451 = vmatmul.mubr.f32.gmra.mxu0 %v48
  %v452 = vpop.f32.mrf.mxu0
  %v453 = vadd.f32 %v368, %v452
  %v454 = vpop.f32.mrf.mxu0
  %455 = vdwg.mxu0
  %456 = vmatprep.subr.mxu0 0.0
  %457 = vmatpush1.msra.mxu0 %v164
  %458 = vmatprep.subr.mxu0 0.0
  %459 = vmatpush1.msra.mxu0 %v163
  %460 = vmatprep.subr.mxu0 0.0
  %461 = vmatpush1.msra.mxu0 %v162
  %462 = vmatprep.subr.mxu0 0.0
  %463 = vmatpush1.msra.mxu0 %v161
  %464 = vmatprep.subr.mxu0 0.0
  %465 = vmatpush1.msra.mxu0 %v160
  %466 = vmatprep.subr.mxu0 0.0
  %467 = vmatpush1.msra.mxu0 %v159
  %468 = vmatprep.subr.mxu0 0.0
  %469 = vmatpush1.msra.mxu0 %v158
  %470 = vmatprep.subr.mxu0 0.0
  %471 = vmatpush1.msra.mxu0 %v157
  %472 = vmatprep.subr.mxu0 0.0
  %473 = vmatpush1.msra.mxu0 %v156
  %474 = vmatprep.subr.mxu0 0.0
  %475 = vmatpush1.msra.mxu0 %v155
  %476 = vmatprep.subr.mxu0 0.0
  %477 = vmatpush1.msra.mxu0 %v154
  %478 = vmatprep.subr.mxu0 0.0
  %479 = vmatpush1.msra.mxu0 %v153
  %480 = vmatprep.subr.mxu0 0.0
  %481 = vmatpush1.msra.mxu0 %v152
  %482 = vmatprep.subr.mxu0 0.0
  %483 = vmatpush1.msra.mxu0 %v151
  %484 = vmatprep.subr.mxu0 0.0
  %485 = vmatpush1.msra.mxu0 %v150
  %486 = vmatprep.subr.mxu0 0.0
  %487 = vmatpush1.msra.mxu0 %v149
  %488 = vmatprep.subr.mxu0 0.0
  %489 = vmatpush2.msra.mxu0 %v180
  %490 = vmatprep.subr.mxu0 0.0
  %491 = vmatpush2.msra.mxu0 %v179
  %492 = vmatprep.subr.mxu0 0.0
  %493 = vmatpush2.msra.mxu0 %v178
  %494 = vmatprep.subr.mxu0 0.0
  %495 = vmatpush2.msra.mxu0 %v177
  %496 = vmatprep.subr.mxu0 0.0
  %497 = vmatpush2.msra.mxu0 %v176
  %498 = vmatprep.subr.mxu0 0.0
  %499 = vmatpush2.msra.mxu0 %v175
  %500 = vmatprep.subr.mxu0 0.0
  %501 = vmatpush2.msra.mxu0 %v174
  %502 = vmatprep.subr.mxu0 0.0
  %503 = vmatpush2.msra.mxu0 %v173
  %504 = vmatprep.subr.mxu0 0.0
  %505 = vmatpush2.msra.mxu0 %v172
  %506 = vmatprep.subr.mxu0 0.0
  %507 = vmatpush2.msra.mxu0 %v171
  %508 = vmatprep.subr.mxu0 0.0
  %509 = vmatpush2.msra.mxu0 %v170
  %510 = vmatprep.subr.mxu0 0.0
  %511 = vmatpush2.msra.mxu0 %v169
  %512 = vmatprep.subr.mxu0 0.0
  %513 = vmatpush2.msra.mxu0 %v168
  %514 = vmatprep.subr.mxu0 0.0
  %515 = vmatpush2.msra.mxu0 %v167
  %516 = vmatprep.subr.mxu0 0.0
  %517 = vmatpush2.msra.mxu0 %v166
  %518 = vmatprep.subr.mxu0 0.0
  %519 = vmatpush2.msra.mxu0 %v165
  %520 = vmatprep.mubr.f32.mxu0 %v24
  %521 = vmatmul.mubr.f32.gmra.mxu0 %v23
  %v522 = vpop.f32.mrf.mxu0
  %v523 = vadd.f32 %v438, %v522
  %v524 = vpop.f32.mrf.mxu0
  %525 = vmatprep.mubr.f32.mxu0 %v33
  %526 = vmatmul.mubr.f32.gmra.mxu0 %v32
  %v527 = vpop.f32.mrf.mxu0
  %v528 = vadd.f32 %v443, %v527
  %v529 = vpop.f32.mrf.mxu0
  %530 = vmatprep.mubr.f32.mxu0 %v42
  %531 = vmatmul.mubr.f32.gmra.mxu0 %v41
  %v532 = vpop.f32.mrf.mxu0
  %v533 = vadd.f32 %v448, %v532
  %v534 = vpop.f32.mrf.mxu0
  %535 = vmatprep.mubr.f32.mxu0 %v51
  %536 = vmatmul.mubr.f32.gmra.mxu0 %v50
  %v537 = vpop.f32.mrf.mxu0
  %v538 = vadd.f32 %v453, %v537
  %v539 = vpop.f32.mrf.mxu0
  %540 = vdwg.mxu0
  %541 = vmatprep.subr.mxu0 0.0
  %542 = vmatpush1.msra.mxu0 0.0
  %543 = vmatprep.subr.mxu0 0.0
  %544 = vmatpush1.msra.mxu0 0.0
  %545 = vmatprep.subr.mxu0 0.0
  %546 = vmatpush1.msra.mxu0 0.0
  %547 = vmatprep.subr.mxu0 0.0
  %548 = vmatpush1.msra.mxu0 0.0
  %549 = vmatprep.subr.mxu0 0.0
  %550 = vmatpush1.msra.mxu0 0.0
  %551 = vmatprep.subr.mxu0 0.0
  %552 = vmatpush1.msra.mxu0 0.0
  %553 = vmatprep.subr.mxu0 0.0
  %554 = vmatpush1.msra.mxu0 0.0
  %555 = vmatprep.subr.mxu0 0.0
  %556 = vmatpush1.msra.mxu0 0.0
  %557 = vmatprep.subr.mxu0 0.0
  %558 = vmatpush1.msra.mxu0 0.0
  %559 = vmatprep.subr.mxu0 0.0
  %560 = vmatpush1.msra.mxu0 %v187
  %561 = vmatprep.subr.mxu0 0.0
  %562 = vmatpush1.msra.mxu0 %v186
  %563 = vmatprep.subr.mxu0 0.0
  %564 = vmatpush1.msra.mxu0 %v185
  %565 = vmatprep.subr.mxu0 0.0
  %566 = vmatpush1.msra.mxu0 %v184
  %567 = vmatprep.subr.mxu0 0.0
  %568 = vmatpush1.msra.mxu0 %v183
  %569 = vmatprep.subr.mxu0 0.0
  %570 = vmatpush1.msra.mxu0 %v182
  %571 = vmatprep.subr.mxu0 0.0
  %572 = vmatpush1.msra.mxu0 %v181
  %573 = vmatprep.subr.mxu0 0.0
  %574 = vmatpush2.msra.mxu0 0.0
  %575 = vmatprep.subr.mxu0 0.0
  %576 = vmatpush2.msra.mxu0 0.0
  %577 = vmatprep.subr.mxu0 0.0
  %578 = vmatpush2.msra.mxu0 0.0
  %579 = vmatprep.subr.mxu0 0.0
  %580 = vmatpush2.msra.mxu0 0.0
  %581 = vmatprep.subr.mxu0 0.0
  %582 = vmatpush2.msra.mxu0 0.0
  %583 = vmatprep.subr.mxu0 0.0
  %584 = vmatpush2.msra.mxu0 0.0
  %585 = vmatprep.subr.mxu0 0.0
  %586 = vmatpush2.msra.mxu0 0.0
  %587 = vmatprep.subr.mxu0 0.0
  %588 = vmatpush2.msra.mxu0 0.0
  %589 = vmatprep.subr.mxu0 0.0
  %590 = vmatpush2.msra.mxu0 0.0
  %591 = vmatprep.subr.mxu0 0.0
  %592 = vmatpush2.msra.mxu0 0.0
  %593 = vmatprep.subr.mxu0 0.0
  %594 = vmatpush2.msra.mxu0 0.0
  %595 = vmatprep.subr.mxu0 0.0
  %596 = vmatpush2.msra.mxu0 0.0
  %597 = vmatprep.subr.mxu0 0.0
  %598 = vmatpush2.msra.mxu0 0.0
  %599 = vmatprep.subr.mxu0 0.0
  %600 = vmatpush2.msra.mxu0 0.0
  %601 = vmatprep.subr.mxu0 0.0
  %602 = vmatpush2.msra.mxu0 0.0
  %603 = vmatprep.subr.mxu0 0.0
  %604 = vmatpush2.msra.mxu0 0.0
  %605 = vmatprep.mubr.f32.mxu0 0.0
  %606 = vmatmul.mubr.f32.gmra.mxu0 %v190
  %v607 = vpop.f32.mrf.mxu0
  %v608 = vadd.f32 %v523, %v607
  %v609 = vpop.f32.mrf.mxu0
  %610 = vmatprep.mubr.f32.mxu0 0.0
  %611 = vmatmul.mubr.f32.gmra.mxu0 %v193
  %v612 = vpop.f32.mrf.mxu0
  %v613 = vadd.f32 %v528, %v612
  %v614 = vpop.f32.mrf.mxu0
  %615 = vmatprep.mubr.f32.mxu0 0.0
  %616 = vmatmul.mubr.f32.gmra.mxu0 %v196
  %v617 = vpop.f32.mrf.mxu0
  %v618 = vadd.f32 %v533, %v617
  %v619 = vpop.f32.mrf.mxu0
  %620 = vmatprep.mubr.f32.mxu0 0.0
  %621 = vmatmul.mubr.f32.gmra.mxu0 %v199
  %v622 = vpop.f32.mrf.mxu0
  %v623 = vadd.f32 %v538, %v622
  %v624 = vpop.f32.mrf.mxu0
  %625 = vdwg.mxu0
  %v626 = vmax.f32 %v608, 0.0
  %v627 = vmax.f32 %v613, 0.0
  %v628 = vmax.f32 %v618, 0.0
  %v629 = vmax.f32 %v623, 0.0
  %vm630 = vcmask 490496
  %v631 = vsel %vm630, %v626, 0.0
  %v632 = vsel %vm630, %v627, 0.0
  %v633 = vadd.f32 %v631, %v632
  %v634 = vsel %vm630, %v628, 0.0
  %v635 = vadd.f32 %v633, %v634
  %v636 = vsel %vm630, %v629, 0.0
  %v637 = vadd.f32 %v635, %v636
  %v638 = vrot.slane %v637, 4
  %v639 = vadd.f32 %v637, %v638
  %v640 = vrot.slane %v639, 2
  %v641 = vadd.f32 %v639, %v640
  %v642 = vrot.slane %v641, 1
  %v643 = vadd.f32 %v641, %v642
  %v644 = vmul.f32 %v643, 0.03125
  %v645 = vsub.f32 %v626, %v644
  %v646 = vsub.f32 %v627, %v644
  %v647 = vsub.f32 %v628, %v644
  %v648 = vsub.f32 %v629, %v644
  %v649 = vmul.f32 %v645, %v645
  %v650 = vmul.f32 %v646, %v646
  %v651 = vmul.f32 %v647, %v647
  %v652 = vmul.f32 %v648, %v648
  %v653 = vsel %vm630, %v649, 0.0
  %v654 = vsel %vm630, %v650, 0.0
  %v655 = vadd.f32 %v653, %v654
  %v656 = vsel %vm630, %v651, 0.0
  %v657 = vadd.f32 %v655, %v656
  %v658 = vsel %vm630, %v652, 0.0
  %v659 = vadd.f32 %v657, %v658
  %v660 = vrot.slane %v659, 4
  %v661 = vadd.f32 %v659, %v660
  %v662 = vrot.slane %v661, 2
  %v663 = vadd.f32 %v661, %v662
  %v664 = vrot.slane %v663, 1
  %v665 = vadd.f32 %v663, %v664
  %v666 = vmul.f32 %v665, 0.03125
  %v667 = vadd.f32 %v666, 1e-05
  %v668 = vrsqrt.pop %v667
  %v669 = vmul.f32 %v645, %v668
  %v670 = vmul.f32 %v646, %v668
  %v671 = vmul.f32 %v647, %v668
  %v672 = vmul.f32 %v648, %v668
  %v673 = vld [vmem:[%s2] sm:$0x1]
  %v675 = vlaneseq
  %v676 = vshrl.u32 %v675, 7
  %v677 = vsub.s32 0, %v676
  %v678 = vrot.slane %v673, %v677
  %v680 = vmul.f32 %v669, %v678
  %v681 = vmul.f32 %v670, %v678
  %v682 = vmul.f32 %v671, %v678
  %v683 = vmul.f32 %v672, %v678
  %v684 = vld [vmem:[%s3] sm:$0x1]
  %v686 = vlaneseq
  %v687 = vshrl.u32 %v686, 7
  %v688 = vsub.s32 0, %v687
  %v689 = vrot.slane %v684, %v688
  %v691 = vadd.f32 %v680, %v689
  %v692 = vadd.f32 %v681, %v689
  %v693 = vadd.f32 %v682, %v689
  %v694 = vadd.f32 %v683, %v689
  %695 = vst.msk [vmem:[%s4] sm:$0xff] %vm630, %v691
  %696 = vst.msk [vmem:[%s4 + $0x8] sm:$0xff] %vm630, %v692
  %697 = vst.msk [vmem:[%s4 + $0x10] sm:$0xff] %vm630, %v693
  %698 = vst.msk [vmem:[%s4 + $0x18] sm:$0xff] %vm630, %v694
  // Predicated region
  $region18: #{mask_generator_forward.11} parent=0 // pred_check
    _
  $region19: #{mask_generator_forward.11} parent=0 // pred_check_branch
    %700 = sbr.rel (0) target = $region21
  $region20: #{mask_generator_forward.11} parent=0 // pred_region
    _
  $region21: #{mask_generator_forward.11} parent=0 // pred_fallthru
    _
  // Predicated region
  $region22: #{mask_generator_forward.11} parent=0 // pred_check
    _
  $region23: #{mask_generator_forward.11} parent=0 // pred_check_branch
    %702 = sbr.rel (0) target = $region25
  $region24: #{mask_generator_forward.11} parent=0 // pred_region
    _
  $region25: #{mask_generator_forward.11} parent=0 // pred_fallthru
    _

// kernel: mask_generator_forward.12
$region0: #{mask_generator_forward.12}
  #allocation0 [shape = 'u32[]', space=smem, size = 0x4, offset = 0x4, fixed_abs, tag = 'smem constant byte address 0x4 - core index']
  #allocation1 [shape = 'u32[144,128]{1,0:T(1,128)}', space=vmem, size = 0x12000, scoped, tag = 'internal scratch']
  %s0 = inlined_call_operand.vmem [shape: f32[128,1080], index: 0, kind: input, shape index: {}]
  %s1 = inlined_call_operand.vmem [shape: f32[1080,30], index: 1, kind: input, shape index: {}]
  %s2 = inlined_call_operand.vmem [shape: f32[1,30], index: 2, kind: input, shape index: {}]
  %s3 = inlined_call_operand.vmem [shape: f32[1,30], index: 3, kind: input, shape index: {}]
  %s4 = inlined_call_operand.vmem [shape: f32[128,30], index: 4, kind: output, shape index: {}]
  %s5 = sld [smem:[#allocation0]]
  $region26: #{mask_generator_forward.12} parent=0
    _
  %s7 = ssub.s32 1, %s5
  %s8 = scalar_select 0, %s7, %s5
  // Predicated region
  $region2: #{mask_generator_forward.12} parent=0 // pred_check
    _
  $region3: #{mask_generator_forward.12} parent=0 // pred_check_branch
    %10 = sbr.rel (0) target = $region5
  $region4: #{mask_generator_forward.12} parent=0 // pred_region
    _
  $region5: #{mask_generator_forward.12} parent=0 // pred_fallthru
    _
  // Predicated region
  $region6: #{mask_generator_forward.12} parent=0 // pred_check
    _
  $region7: #{mask_generator_forward.12} parent=0 // pred_check_branch
    %12 = sbr.rel (0) target = $region9
  $region8: #{mask_generator_forward.12} parent=0 // pred_region
    _
  $region9: #{mask_generator_forward.12} parent=0 // pred_fallthru
    _
  // Predicated region
  $region10: #{mask_generator_forward.12} parent=0 // pred_check
    _
  $region11: #{mask_generator_forward.12} parent=0 // pred_check_branch
    %14 = sbr.rel (0) target = $region13
  $region12: #{mask_generator_forward.12} parent=0 // pred_region
    _
  $region13: #{mask_generator_forward.12} parent=0 // pred_fallthru
    _
  // Predicated region
  $region14: #{mask_generator_forward.12} parent=0 // pred_check
    _
  $region15: #{mask_generator_forward.12} parent=0 // pred_check_branch
    %16 = sbr.rel (0) target = $region17
  $region16: #{mask_generator_forward.12} parent=0 // pred_region
    _
  $region17: #{mask_generator_forward.12} parent=0 // pred_fallthru
    _
  %v17 = vld [vmem:[%s0] sm:$0xff]
  %v18 = vld [vmem:[%s0 + $0x8] sm:$0xff]
  %v19 = vld [vmem:[%s0 + $0x10] sm:$0xff]
  %v20 = vld [vmem:[%s0 + $0x18] sm:$0xff]
  %v21 = vld [vmem:[%s0 + $0x20] sm:$0xff]
  %v22 = vld [vmem:[%s0 + $0x28] sm:$0xff]
  %v23 = vld [vmem:[%s0 + $0x30] sm:$0xff]
  %v24 = vld [vmem:[%s0 + $0x38] sm:$0xff]
  %v25 = vld [vmem:[%s0 + $0x40] sm:$0xff]
  %v26 = vld [vmem:[%s0 + $0x48] sm:$0xff]
  %v27 = vld [vmem:[%s0 + $0x50] sm:$0xff]
  %v28 = vld [vmem:[%s0 + $0x58] sm:$0xff]
  %v29 = vld [vmem:[%s0 + $0x60] sm:$0xff]
  %v30 = vld [vmem:[%s0 + $0x68] sm:$0xff]
  %v31 = vld [vmem:[%s0 + $0x70] sm:$0xff]
  %v32 = vld [vmem:[%s0 + $0x78] sm:$0xff]
  %v33 = vld [vmem:[%s0 + $0x80] sm:$0xff]
  %v34 = vld [vmem:[%s0 + $0x88] sm:$0xff]
  %v35 = vld [vmem:[%s0 + $0x90] sm:$0xff]
  %v36 = vld [vmem:[%s0 + $0x98] sm:$0xff]
  %v37 = vld [vmem:[%s0 + $0xa0] sm:$0xff]
  %v38 = vld [vmem:[%s0 + $0xa8] sm:$0xff]
  %v39 = vld [vmem:[%s0 + $0xb0] sm:$0xff]
  %v40 = vld [vmem:[%s0 + $0xb8] sm:$0xff]
  %v41 = vld [vmem:[%s0 + $0xc0] sm:$0xff]
  %v42 = vld [vmem:[%s0 + $0xc8] sm:$0xff]
  %v43 = vld [vmem:[%s0 + $0xd0] sm:$0xff]
  %v44 = vld [vmem:[%s0 + $0xd8] sm:$0xff]
  %v45 = vld [vmem:[%s0 + $0xe0] sm:$0xff]
  %v46 = vld [vmem:[%s0 + $0xe8] sm:$0xff]
  %v47 = vld [vmem:[%s0 + $0xf0] sm:$0xff]
  %v48 = vld [vmem:[%s0 + $0xf8] sm:$0xff]
  %v49 = vld [vmem:[%s0 + $0x100] sm:$0xff]
  %v50 = vld [vmem:[%s0 + $0x108] sm:$0xff]
  %v51 = vld [vmem:[%s0 + $0x110] sm:$0xff]
  %v52 = vld [vmem:[%s0 + $0x118] sm:$0xff]
  %v53 = vld [vmem:[%s0 + $0x120] sm:$0xff]
  %v54 = vld [vmem:[%s0 + $0x128] sm:$0xff]
  %v55 = vld [vmem:[%s0 + $0x130] sm:$0xff]
  %v56 = vld [vmem:[%s0 + $0x138] sm:$0xff]
  %v57 = vld [vmem:[%s0 + $0x140] sm:$0xff]
  %v58 = vld [vmem:[%s0 + $0x148] sm:$0xff]
  %v59 = vld [vmem:[%s0 + $0x150] sm:$0xff]
  %v60 = vld [vmem:[%s0 + $0x158] sm:$0xff]
  %v61 = vld [vmem:[%s0 + $0x160] sm:$0xff]
  %v62 = vld [vmem:[%s0 + $0x168] sm:$0xff]
  %v63 = vld [vmem:[%s0 + $0x170] sm:$0xff]
  %v64 = vld [vmem:[%s0 + $0x178] sm:$0xff]
  %v65 = vld [vmem:[%s0 + $0x180] sm:$0xff]
  %v66 = vld [vmem:[%s0 + $0x188] sm:$0xff]
  %v67 = vld [vmem:[%s0 + $0x190] sm:$0xff]
  %v68 = vld [vmem:[%s0 + $0x198] sm:$0xff]
  %v69 = vld [vmem:[%s0 + $0x1a0] sm:$0xff]
  %v70 = vld [vmem:[%s0 + $0x1a8] sm:$0xff]
  %v71 = vld [vmem:[%s0 + $0x1b0] sm:$0xff]
  %v72 = vld [vmem:[%s0 + $0x1b8] sm:$0xff]
  %v73 = vld [vmem:[%s0 + $0x1c0] sm:$0xff]
  %v74 = vld [vmem:[%s0 + $0x1c8] sm:$0xff]
  %v75 = vld [vmem:[%s0 + $0x1d0] sm:$0xff]
  %v76 = vld [vmem:[%s0 + $0x1d8] sm:$0xff]
  %v77 = vld [vmem:[%s0 + $0x1e0] sm:$0xff]
  %v78 = vld [vmem:[%s0 + $0x1e8] sm:$0xff]
  %v79 = vld [vmem:[%s0 + $0x1f0] sm:$0xff]
  %v80 = vld [vmem:[%s0 + $0x1f8] sm:$0xff]
  %v81 = vld [vmem:[%s0 + $0x200] sm:$0xff]
  %v82 = vld [vmem:[%s0 + $0x208] sm:$0xff]
  %v83 = vld [vmem:[%s0 + $0x210] sm:$0xff]
  %v84 = vld [vmem:[%s0 + $0x218] sm:$0xff]
  %v85 = vld [vmem:[%s0 + $0x220] sm:$0xff]
  %v86 = vld [vmem:[%s0 + $0x228] sm:$0xff]
  %v87 = vld [vmem:[%s0 + $0x230] sm:$0xff]
  %v88 = vld [vmem:[%s0 + $0x238] sm:$0xff]
  %v89 = vld [vmem:[%s0 + $0x240] sm:$0xff]
  %v90 = vld [vmem:[%s0 + $0x248] sm:$0xff]
  %v91 = vld [vmem:[%s0 + $0x250] sm:$0xff]
  %v92 = vld [vmem:[%s0 + $0x258] sm:$0xff]
  %v93 = vld [vmem:[%s0 + $0x260] sm:$0xff]
  %v94 = vld [vmem:[%s0 + $0x268] sm:$0xff]
  %v95 = vld [vmem:[%s0 + $0x270] sm:$0xff]
  %v96 = vld [vmem:[%s0 + $0x278] sm:$0xff]
  %v97 = vld [vmem:[%s0 + $0x280] sm:$0xff]
  %v98 = vld [vmem:[%s0 + $0x288] sm:$0xff]
  %v99 = vld [vmem:[%s0 + $0x290] sm:$0xff]
  %v100 = vld [vmem:[%s0 + $0x298] sm:$0xff]
  %v101 = vld [vmem:[%s0 + $0x2a0] sm:$0xff]
  %v102 = vld [vmem:[%s0 + $0x2a8] sm:$0xff]
  %v103 = vld [vmem:[%s0 + $0x2b0] sm:$0xff]
  %v104 = vld [vmem:[%s0 + $0x2b8] sm:$0xff]
  %v105 = vld [vmem:[%s0 + $0x2c0] sm:$0xff]
  %v106 = vld [vmem:[%s0 + $0x2c8] sm:$0xff]
  %v107 = vld [vmem:[%s0 + $0x2d0] sm:$0xff]
  %v108 = vld [vmem:[%s0 + $0x2d8] sm:$0xff]
  %v109 = vld [vmem:[%s0 + $0x2e0] sm:$0xff]
  %v110 = vld [vmem:[%s0 + $0x2e8] sm:$0xff]
  %v111 = vld [vmem:[%s0 + $0x2f0] sm:$0xff]
  %v112 = vld [vmem:[%s0 + $0x2f8] sm:$0xff]
  %v113 = vld [vmem:[%s0 + $0x300] sm:$0xff]
  %v114 = vld [vmem:[%s0 + $0x308] sm:$0xff]
  %v115 = vld [vmem:[%s0 + $0x310] sm:$0xff]
  %v116 = vld [vmem:[%s0 + $0x318] sm:$0xff]
  %v117 = vld [vmem:[%s0 + $0x320] sm:$0xff]
  %v118 = vld [vmem:[%s0 + $0x328] sm:$0xff]
  %v119 = vld [vmem:[%s0 + $0x330] sm:$0xff]
  %v120 = vld [vmem:[%s0 + $0x338] sm:$0xff]
  %v121 = vld [vmem:[%s0 + $0x340] sm:$0xff]
  %v122 = vld [vmem:[%s0 + $0x348] sm:$0xff]
  %v123 = vld [vmem:[%s0 + $0x350] sm:$0xff]
  %v124 = vld [vmem:[%s0 + $0x358] sm:$0xff]
  %v125 = vld [vmem:[%s0 + $0x360] sm:$0xff]
  %v126 = vld [vmem:[%s0 + $0x368] sm:$0xff]
  %v127 = vld [vmem:[%s0 + $0x370] sm:$0xff]
  %v128 = vld [vmem:[%s0 + $0x378] sm:$0xff]
  %v129 = vld [vmem:[%s0 + $0x380] sm:$0xff]
  %v130 = vld [vmem:[%s0 + $0x388] sm:$0xff]
  %v131 = vld [vmem:[%s0 + $0x390] sm:$0xff]
  %v132 = vld [vmem:[%s0 + $0x398] sm:$0xff]
  %v133 = vld [vmem:[%s0 + $0x3a0] sm:$0xff]
  %v134 = vld [vmem:[%s0 + $0x3a8] sm:$0xff]
  %v135 = vld [vmem:[%s0 + $0x3b0] sm:$0xff]
  %v136 = vld [vmem:[%s0 + $0x3b8] sm:$0xff]
  %v137 = vld [vmem:[%s0 + $0x3c0] sm:$0xff]
  %v138 = vld [vmem:[%s0 + $0x3c8] sm:$0xff]
  %v139 = vld [vmem:[%s0 + $0x3d0] sm:$0xff]
  %v140 = vld [vmem:[%s0 + $0x3d8] sm:$0xff]
  %v141 = vld [vmem:[%s0 + $0x3e0] sm:$0xff]
  %v142 = vld [vmem:[%s0 + $0x3e8] sm:$0xff]
  %v143 = vld [vmem:[%s0 + $0x3f0] sm:$0xff]
  %v144 = vld [vmem:[%s0 + $0x3f8] sm:$0xff]
  %v145 = vld [vmem:[%s0 + $0x400] sm:$0xff]
  %v146 = vld [vmem:[%s0 + $0x408] sm:$0xff]
  %v147 = vld [vmem:[%s0 + $0x410] sm:$0xff]
  %v148 = vld [vmem:[%s0 + $0x418] sm:$0xff]
  %v149 = vld [vmem:[%s0 + $0x420] sm:$0xff]
  %v150 = vld [vmem:[%s0 + $0x428] sm:$0xff]
  %v151 = vld [vmem:[%s0 + $0x430] sm:$0xff]
  %v152 = vld [vmem:[%s0 + $0x438] sm:$0xff]
  %v153 = vld [vmem:[%s0 + $0x440] sm:$0xff]
  %v154 = vld [vmem:[%s0 + $0x448] sm:$0xff]
  %v155 = vld [vmem:[%s0 + $0x450] sm:$0xff]
  %v156 = vld [vmem:[%s0 + $0x458] sm:$0xff]
  %v157 = vld [vmem:[%s0 + $0x460] sm:$0xff]
  %v158 = vld [vmem:[%s0 + $0x468] sm:$0xff]
  %v159 = vld [vmem:[%s0 + $0x470] sm:$0xff]
  %v160 = vld [vmem:[%s0 + $0x478] sm:$0xff]
  %v161 = vld [vmem:[%s1] sm:$0xff]
  %v162 = vld [vmem:[%s1 + $0x8] sm:$0xff]
  %v163 = vld [vmem:[%s1 + $0x10] sm:$0xff]
  %v164 = vld [vmem:[%s1 + $0x18] sm:$0xff]
  %v165 = vld [vmem:[%s1 + $0x20] sm:$0xff]
  %v166 = vld [vmem:[%s1 + $0x28] sm:$0xff]
  %v167 = vld [vmem:[%s1 + $0x30] sm:$0xff]
  %v168 = vld [vmem:[%s1 + $0x38] sm:$0xff]
  %v169 = vld [vmem:[%s1 + $0x40] sm:$0xff]
  %v170 = vld [vmem:[%s1 + $0x48] sm:$0xff]
  %v171 = vld [vmem:[%s1 + $0x50] sm:$0xff]
  %v172 = vld [vmem:[%s1 + $0x58] sm:$0xff]
  %v173 = vld [vmem:[%s1 + $0x60] sm:$0xff]
  %v174 = vld [vmem:[%s1 + $0x68] sm:$0xff]
  %v175 = vld [vmem:[%s1 + $0x70] sm:$0xff]
  %v176 = vld [vmem:[%s1 + $0x78] sm:$0xff]
  %v177 = vld [vmem:[%s1 + $0x80] sm:$0xff]
  %v178 = vld [vmem:[%s1 + $0x88] sm:$0xff]
  %v179 = vld [vmem:[%s1 + $0x90] sm:$0xff]
  %v180 = vld [vmem:[%s1 + $0x98] sm:$0xff]
  %v181 = vld [vmem:[%s1 + $0xa0] sm:$0xff]
  %v182 = vld [vmem:[%s1 + $0xa8] sm:$0xff]
  %v183 = vld [vmem:[%s1 + $0xb0] sm:$0xff]
  %v184 = vld [vmem:[%s1 + $0xb8] sm:$0xff]
  %v185 = vld [vmem:[%s1 + $0xc0] sm:$0xff]
  %v186 = vld [vmem:[%s1 + $0xc8] sm:$0xff]
  %v187 = vld [vmem:[%s1 + $0xd0] sm:$0xff]
  %v188 = vld [vmem:[%s1 + $0xd8] sm:$0xff]
  %v189 = vld [vmem:[%s1 + $0xe0] sm:$0xff]
  %v190 = vld [vmem:[%s1 + $0xe8] sm:$0xff]
  %v191 = vld [vmem:[%s1 + $0xf0] sm:$0xff]
  %v192 = vld [vmem:[%s1 + $0xf8] sm:$0xff]
  %v193 = vld [vmem:[%s1 + $0x100] sm:$0xff]
  %v194 = vld [vmem:[%s1 + $0x108] sm:$0xff]
  %v195 = vld [vmem:[%s1 + $0x110] sm:$0xff]
  %v196 = vld [vmem:[%s1 + $0x118] sm:$0xff]
  %v197 = vld [vmem:[%s1 + $0x120] sm:$0xff]
  %v198 = vld [vmem:[%s1 + $0x128] sm:$0xff]
  %v199 = vld [vmem:[%s1 + $0x130] sm:$0xff]
  %v200 = vld [vmem:[%s1 + $0x138] sm:$0xff]
  %v201 = vld [vmem:[%s1 + $0x140] sm:$0xff]
  %v202 = vld [vmem:[%s1 + $0x148] sm:$0xff]
  %v203 = vld [vmem:[%s1 + $0x150] sm:$0xff]
  %v204 = vld [vmem:[%s1 + $0x158] sm:$0xff]
  %v205 = vld [vmem:[%s1 + $0x160] sm:$0xff]
  %v206 = vld [vmem:[%s1 + $0x168] sm:$0xff]
  %v207 = vld [vmem:[%s1 + $0x170] sm:$0xff]
  %v208 = vld [vmem:[%s1 + $0x178] sm:$0xff]
  %v209 = vld [vmem:[%s1 + $0x180] sm:$0xff]
  %v210 = vld [vmem:[%s1 + $0x188] sm:$0xff]
  %v211 = vld [vmem:[%s1 + $0x190] sm:$0xff]
  %v212 = vld [vmem:[%s1 + $0x198] sm:$0xff]
  %v213 = vld [vmem:[%s1 + $0x1a0] sm:$0xff]
  %v214 = vld [vmem:[%s1 + $0x1a8] sm:$0xff]
  %v215 = vld [vmem:[%s1 + $0x1b0] sm:$0xff]
  %v216 = vld [vmem:[%s1 + $0x1b8] sm:$0xff]
  %v217 = vld [vmem:[%s1 + $0x1c0] sm:$0xff]
  %v218 = vld [vmem:[%s1 + $0x1c8] sm:$0xff]
  %v219 = vld [vmem:[%s1 + $0x1d0] sm:$0xff]
  %v220 = vld [vmem:[%s1 + $0x1d8] sm:$0xff]
  %v221 = vld [vmem:[%s1 + $0x1e0] sm:$0xff]
  %v222 = vld [vmem:[%s1 + $0x1e8] sm:$0xff]
  %v223 = vld [vmem:[%s1 + $0x1f0] sm:$0xff]
  %v224 = vld [vmem:[%s1 + $0x1f8] sm:$0xff]
  %v225 = vld [vmem:[%s1 + $0x200] sm:$0xff]
  %v226 = vld [vmem:[%s1 + $0x208] sm:$0xff]
  %v227 = vld [vmem:[%s1 + $0x210] sm:$0xff]
  %v228 = vld [vmem:[%s1 + $0x218] sm:$0xff]
  %v229 = vld [vmem:[%s1 + $0x220] sm:$0xff]
  %v230 = vld [vmem:[%s1 + $0x228] sm:$0xff]
  %v231 = vld [vmem:[%s1 + $0x230] sm:$0xff]
  %v232 = vld [vmem:[%s1 + $0x238] sm:$0xff]
  %v233 = vld [vmem:[%s1 + $0x240] sm:$0xff]
  %v234 = vld [vmem:[%s1 + $0x248] sm:$0xff]
  %v235 = vld [vmem:[%s1 + $0x250] sm:$0xff]
  %v236 = vld [vmem:[%s1 + $0x258] sm:$0xff]
  %v237 = vld [vmem:[%s1 + $0x260] sm:$0xff]
  %v238 = vld [vmem:[%s1 + $0x268] sm:$0xff]
  %v239 = vld [vmem:[%s1 + $0x270] sm:$0xff]
  %v240 = vld [vmem:[%s1 + $0x278] sm:$0xff]
  %v241 = vld [vmem:[%s1 + $0x280] sm:$0xff]
  %v242 = vld [vmem:[%s1 + $0x288] sm:$0xff]
  %v243 = vld [vmem:[%s1 + $0x290] sm:$0xff]
  %v244 = vld [vmem:[%s1 + $0x298] sm:$0xff]
  %v245 = vld [vmem:[%s1 + $0x2a0] sm:$0xff]
  %v246 = vld [vmem:[%s1 + $0x2a8] sm:$0xff]
  %v247 = vld [vmem:[%s1 + $0x2b0] sm:$0xff]
  %v248 = vld [vmem:[%s1 + $0x2b8] sm:$0xff]
  %v249 = vld [vmem:[%s1 + $0x2c0] sm:$0xff]
  %v250 = vld [vmem:[%s1 + $0x2c8] sm:$0xff]
  %v251 = vld [vmem:[%s1 + $0x2d0] sm:$0xff]
  %v252 = vld [vmem:[%s1 + $0x2d8] sm:$0xff]
  %v253 = vld [vmem:[%s1 + $0x2e0] sm:$0xff]
  %v254 = vld [vmem:[%s1 + $0x2e8] sm:$0xff]
  %v255 = vld [vmem:[%s1 + $0x2f0] sm:$0xff]
  %v256 = vld [vmem:[%s1 + $0x2f8] sm:$0xff]
  %v257 = vld [vmem:[%s1 + $0x300] sm:$0xff]
  %v258 = vld [vmem:[%s1 + $0x308] sm:$0xff]
  %v259 = vld [vmem:[%s1 + $0x310] sm:$0xff]
  %v260 = vld [vmem:[%s1 + $0x318] sm:$0xff]
  %v261 = vld [vmem:[%s1 + $0x320] sm:$0xff]
  %v262 = vld [vmem:[%s1 + $0x328] sm:$0xff]
  %v263 = vld [vmem:[%s1 + $0x330] sm:$0xff]
  %v264 = vld [vmem:[%s1 + $0x338] sm:$0xff]
  %v265 = vld [vmem:[%s1 + $0x340] sm:$0xff]
  %v266 = vld [vmem:[%s1 + $0x348] sm:$0xff]
  %v267 = vld [vmem:[%s1 + $0x350] sm:$0xff]
  %v268 = vld [vmem:[%s1 + $0x358] sm:$0xff]
  %v269 = vld [vmem:[%s1 + $0x360] sm:$0xff]
  %v270 = vld [vmem:[%s1 + $0x368] sm:$0xff]
  %v271 = vld [vmem:[%s1 + $0x370] sm:$0xff]
  %v272 = vld [vmem:[%s1 + $0x378] sm:$0xff]
  %v273 = vld [vmem:[%s1 + $0x380] sm:$0xff]
  %v274 = vld [vmem:[%s1 + $0x388] sm:$0xff]
  %v275 = vld [vmem:[%s1 + $0x390] sm:$0xff]
  %v276 = vld [vmem:[%s1 + $0x398] sm:$0xff]
  %v277 = vld [vmem:[%s1 + $0x3a0] sm:$0xff]
  %v278 = vld [vmem:[%s1 + $0x3a8] sm:$0xff]
  %v279 = vld [vmem:[%s1 + $0x3b0] sm:$0xff]
  %v280 = vld [vmem:[%s1 + $0x3b8] sm:$0xff]
  %v281 = vld [vmem:[%s1 + $0x3c0] sm:$0xff]
  %v282 = vld [vmem:[%s1 + $0x3c8] sm:$0xff]
  %v283 = vld [vmem:[%s1 + $0x3d0] sm:$0xff]
  %v284 = vld [vmem:[%s1 + $0x3d8] sm:$0xff]
  %v285 = vld [vmem:[%s1 + $0x3e0] sm:$0xff]
  %v286 = vld [vmem:[%s1 + $0x3e8] sm:$0xff]
  %v287 = vld [vmem:[%s1 + $0x3f0] sm:$0xff]
  %v288 = vld [vmem:[%s1 + $0x3f8] sm:$0xff]
  %v289 = vld [vmem:[%s1 + $0x400] sm:$0xff]
  %v290 = vld [vmem:[%s1 + $0x408] sm:$0xff]
  %v291 = vld [vmem:[%s1 + $0x410] sm:$0xff]
  %v292 = vld [vmem:[%s1 + $0x418] sm:$0xff]
  %v293 = vld [vmem:[%s1 + $0x420] sm:$0xff]
  %v294 = vld [vmem:[%s1 + $0x428] sm:$0xff]
  %v295 = vld [vmem:[%s1 + $0x430] sm:$0xff]
  %vm296 = vcmask 457728
  %v298 = vsel %vm296, %v25, 0
  %v301 = vsel %vm296, %v34, 0
  %v304 = vsel %vm296, %v43, 0
  %v307 = vsel %vm296, %v52, 0
  %v310 = vsel %vm296, %v61, 0
  %v313 = vsel %vm296, %v70, 0
  %v316 = vsel %vm296, %v79, 0
  %v319 = vsel %vm296, %v88, 0
  %v322 = vsel %vm296, %v97, 0
  %v325 = vsel %vm296, %v106, 0
  %v328 = vsel %vm296, %v115, 0
  %v331 = vsel %vm296, %v124, 0
  %v334 = vsel %vm296, %v133, 0
  %v337 = vsel %vm296, %v142, 0
  %v340 = vsel %vm296, %v151, 0
  %v343 = vsel %vm296, %v160, 0
  %345 = vmatprep.subr.mxu0 0.0
  %346 = vmatpush1.msra.mxu0 %v176
  %347 = vmatprep.subr.mxu0 0.0
  %348 = vmatpush1.msra.mxu0 %v175
  %349 = vmatprep.subr.mxu0 0.0
  %350 = vmatpush1.msra.mxu0 %v174
  %351 = vmatprep.subr.mxu0 0.0
  %352 = vmatpush1.msra.mxu0 %v173
  %353 = vmatprep.subr.mxu0 0.0
  %354 = vmatpush1.msra.mxu0 %v172
  %355 = vmatprep.subr.mxu0 0.0
  %356 = vmatpush1.msra.mxu0 %v171
  %357 = vmatprep.subr.mxu0 0.0
  %358 = vmatpush1.msra.mxu0 %v170
  %359 = vmatprep.subr.mxu0 0.0
  %360 = vmatpush1.msra.mxu0 %v169
  %361 = vmatprep.subr.mxu0 0.0
  %362 = vmatpush1.msra.mxu0 %v168
  %363 = vmatprep.subr.mxu0 0.0
  %364 = vmatpush1.msra.mxu0 %v167
  %365 = vmatprep.subr.mxu0 0.0
  %366 = vmatpush1.msra.mxu0 %v166
  %367 = vmatprep.subr.mxu0 0.0
  %368 = vmatpush1.msra.mxu0 %v165
  %369 = vmatprep.subr.mxu0 0.0
  %370 = vmatpush1.msra.mxu0 %v164
  %371 = vmatprep.subr.mxu0 0.0
  %372 = vmatpush1.msra.mxu0 %v163
  %373 = vmatprep.subr.mxu0 0.0
  %374 = vmatpush1.msra.mxu0 %v162
  %375 = vmatprep.subr.mxu0 0.0
  %376 = vmatpush1.msra.mxu0 %v161
  %377 = vmatprep.subr.mxu0 0.0
  %378 = vmatpush2.msra.mxu0 %v192
  %379 = vmatprep.subr.mxu0 0.0
  %380 = vmatpush2.msra.mxu0 %v191
  %381 = vmatprep.subr.mxu0 0.0
  %382 = vmatpush2.msra.mxu0 %v190
  %383 = vmatprep.subr.mxu0 0.0
  %384 = vmatpush2.msra.mxu0 %v189
  %385 = vmatprep.subr.mxu0 0.0
  %386 = vmatpush2.msra.mxu0 %v188
  %387 = vmatprep.subr.mxu0 0.0
  %388 = vmatpush2.msra.mxu0 %v187
  %389 = vmatprep.subr.mxu0 0.0
  %390 = vmatpush2.msra.mxu0 %v186
  %391 = vmatprep.subr.mxu0 0.0
  %392 = vmatpush2.msra.mxu0 %v185
  %393 = vmatprep.subr.mxu0 0.0
  %394 = vmatpush2.msra.mxu0 %v184
  %395 = vmatprep.subr.mxu0 0.0
  %396 = vmatpush2.msra.mxu0 %v183
  %397 = vmatprep.subr.mxu0 0.0
  %398 = vmatpush2.msra.mxu0 %v182
  %399 = vmatprep.subr.mxu0 0.0
  %400 = vmatpush2.msra.mxu0 %v181
  %401 = vmatprep.subr.mxu0 0.0
  %402 = vmatpush2.msra.mxu0 %v180
  %403 = vmatprep.subr.mxu0 0.0
  %404 = vmatpush2.msra.mxu0 %v179
  %405 = vmatprep.subr.mxu0 0.0
  %406 = vmatpush2.msra.mxu0 %v178
  %407 = vmatprep.subr.mxu0 0.0
  %408 = vmatpush2.msra.mxu0 %v177
  %409 = vmatprep.mubr.f32.mxu0 %v18
  %410 = vmatmul.mubr.f32.gmra.mxu0 %v17
  %v411 = vpop.f32.mrf.mxu0
  %v412 = vadd.f32 0.0, %v411
  %v413 = vpop.f32.mrf.mxu0
  %414 = vmatprep.mubr.f32.mxu0 %v27
  %415 = vmatmul.mubr.f32.gmra.mxu0 %v26
  %v416 = vpop.f32.mrf.mxu0
  %v417 = vadd.f32 0.0, %v416
  %v418 = vpop.f32.mrf.mxu0
  %419 = vmatprep.mubr.f32.mxu0 %v36
  %420 = vmatmul.mubr.f32.gmra.mxu0 %v35
  %v421 = vpop.f32.mrf.mxu0
  %v422 = vadd.f32 0.0, %v421
  %v423 = vpop.f32.mrf.mxu0
  %424 = vmatprep.mubr.f32.mxu0 %v45
  %425 = vmatmul.mubr.f32.gmra.mxu0 %v44
  %v426 = vpop.f32.mrf.mxu0
  %v427 = vadd.f32 0.0, %v426
  %v428 = vpop.f32.mrf.mxu0
  %429 = vmatprep.mubr.f32.mxu0 %v54
  %430 = vmatmul.mubr.f32.gmra.mxu0 %v53
  %v431 = vpop.f32.mrf.mxu0
  %v432 = vadd.f32 0.0, %v431
  %v433 = vpop.f32.mrf.mxu0
  %434 = vmatprep.mubr.f32.mxu0 %v63
  %435 = vmatmul.mubr.f32.gmra.mxu0 %v62
  %v436 = vpop.f32.mrf.mxu0
  %v437 = vadd.f32 0.0, %v436
  %v438 = vpop.f32.mrf.mxu0
  %439 = vmatprep.mubr.f32.mxu0 %v72
  %440 = vmatmul.mubr.f32.gmra.mxu0 %v71
  %v441 = vpop.f32.mrf.mxu0
  %v442 = vadd.f32 0.0, %v441
  %v443 = vpop.f32.mrf.mxu0
  %444 = vmatprep.mubr.f32.mxu0 %v81
  %445 = vmatmul.mubr.f32.gmra.mxu0 %v80
  %v446 = vpop.f32.mrf.mxu0
  %v447 = vadd.f32 0.0, %v446
  %v448 = vpop.f32.mrf.mxu0
  %449 = vmatprep.mubr.f32.mxu0 %v90
  %450 = vmatmul.mubr.f32.gmra.mxu0 %v89
  %v451 = vpop.f32.mrf.mxu0
  %v452 = vadd.f32 0.0, %v451
  %v453 = vpop.f32.mrf.mxu0
  %454 = vmatprep.mubr.f32.mxu0 %v99
  %455 = vmatmul.mubr.f32.gmra.mxu0 %v98
  %v456 = vpop.f32.mrf.mxu0
  %v457 = vadd.f32 0.0, %v456
  %v458 = vpop.f32.mrf.mxu0
  %459 = vmatprep.mubr.f32.mxu0 %v108
  %460 = vmatmul.mubr.f32.gmra.mxu0 %v107
  %v461 = vpop.f32.mrf.mxu0
  %v462 = vadd.f32 0.0, %v461
  %v463 = vpop.f32.mrf.mxu0
  %464 = vmatprep.mubr.f32.mxu0 %v117
  %465 = vmatmul.mubr.f32.gmra.mxu0 %v116
  %v466 = vpop.f32.mrf.mxu0
  %v467 = vadd.f32 0.0, %v466
  %v468 = vpop.f32.mrf.mxu0
  %469 = vmatprep.mubr.f32.mxu0 %v126
  %470 = vmatmul.mubr.f32.gmra.mxu0 %v125
  %v471 = vpop.f32.mrf.mxu0
  %v472 = vadd.f32 0.0, %v471
  %v473 = vpop.f32.mrf.mxu0
  %474 = vmatprep.mubr.f32.mxu0 %v135
  %475 = vmatmul.mubr.f32.gmra.mxu0 %v134
  %v476 = vpop.f32.mrf.mxu0
  %v477 = vadd.f32 0.0, %v476
  %v478 = vpop.f32.mrf.mxu0
  %479 = vmatprep.mubr.f32.mxu0 %v144
  %480 = vmatmul.mubr.f32.gmra.mxu0 %v143
  %v481 = vpop.f32.mrf.mxu0
  %v482 = vadd.f32 0.0, %v481
  %v483 = vpop.f32.mrf.mxu0
  %484 = vmatprep.mubr.f32.mxu0 %v153
  %485 = vmatmul.mubr.f32.gmra.mxu0 %v152
  %v486 = vpop.f32.mrf.mxu0
  %v487 = vadd.f32 0.0, %v486
  %v488 = vpop.f32.mrf.mxu0
  %489 = vdwg.mxu0
  %490 = vmatprep.subr.mxu0 0.0
  %491 = vmatpush1.msra.mxu0 %v208
  %492 = vmatprep.subr.mxu0 0.0
  %493 = vmatpush1.msra.mxu0 %v207
  %494 = vmatprep.subr.mxu0 0.0
  %495 = vmatpush1.msra.mxu0 %v206
  %496 = vmatprep.subr.mxu0 0.0
  %497 = vmatpush1.msra.mxu0 %v205
  %498 = vmatprep.subr.mxu0 0.0
  %499 = vmatpush1.msra.mxu0 %v204
  %500 = vmatprep.subr.mxu0 0.0
  %501 = vmatpush1.msra.mxu0 %v203
  %502 = vmatprep.subr.mxu0 0.0
  %503 = vmatpush1.msra.mxu0 %v202
  %504 = vmatprep.subr.mxu0 0.0
  %505 = vmatpush1.msra.mxu0 %v201
  %506 = vmatprep.subr.mxu0 0.0
  %507 = vmatpush1.msra.mxu0 %v200
  %508 = vmatprep.subr.mxu0 0.0
  %509 = vmatpush1.msra.mxu0 %v199
  %510 = vmatprep.subr.mxu0 0.0
  %511 = vmatpush1.msra.mxu0 %v198
  %512 = vmatprep.subr.mxu0 0.0
  %513 = vmatpush1.msra.mxu0 %v197
  %514 = vmatprep.subr.mxu0 0.0
  %515 = vmatpush1.msra.mxu0 %v196
  %516 = vmatprep.subr.mxu0 0.0
  %517 = vmatpush1.msra.mxu0 %v195
  %518 = vmatprep.subr.mxu0 0.0
  %519 = vmatpush1.msra.mxu0 %v194
  %520 = vmatprep.subr.mxu0 0.0
  %521 = vmatpush1.msra.mxu0 %v193
  %522 = vmatprep.subr.mxu0 0.0
  %523 = vmatpush2.msra.mxu0 %v224
  %524 = vmatprep.subr.mxu0 0.0
  %525 = vmatpush2.msra.mxu0 %v223
  %526 = vmatprep.subr.mxu0 0.0
  %527 = vmatpush2.msra.mxu0 %v222
  %528 = vmatprep.subr.mxu0 0.0
  %529 = vmatpush2.msra.mxu0 %v221
  %530 = vmatprep.subr.mxu0 0.0
  %531 = vmatpush2.msra.mxu0 %v220
  %532 = vmatprep.subr.mxu0 0.0
  %533 = vmatpush2.msra.mxu0 %v219
  %534 = vmatprep.subr.mxu0 0.0
  %535 = vmatpush2.msra.mxu0 %v218
  %536 = vmatprep.subr.mxu0 0.0
  %537 = vmatpush2.msra.mxu0 %v217
  %538 = vmatprep.subr.mxu0 0.0
  %539 = vmatpush2.msra.mxu0 %v216
  %540 = vmatprep.subr.mxu0 0.0
  %541 = vmatpush2.msra.mxu0 %v215
  %542 = vmatprep.subr.mxu0 0.0
  %543 = vmatpush2.msra.mxu0 %v214
  %544 = vmatprep.subr.mxu0 0.0
  %545 = vmatpush2.msra.mxu0 %v213
  %546 = vmatprep.subr.mxu0 0.0
  %547 = vmatpush2.msra.mxu0 %v212
  %548 = vmatprep.subr.mxu0 0.0
  %549 = vmatpush2.msra.mxu0 %v211
  %550 = vmatprep.subr.mxu0 0.0
  %551 = vmatpush2.msra.mxu0 %v210
  %552 = vmatprep.subr.mxu0 0.0
  %553 = vmatpush2.msra.mxu0 %v209
  %554 = vmatprep.mubr.f32.mxu0 %v20
  %555 = vmatmul.mubr.f32.gmra.mxu0 %v19
  %v556 = vpop.f32.mrf.mxu0
  %v557 = vadd.f32 %v412, %v556
  %v558 = vpop.f32.mrf.mxu0
  %559 = vmatprep.mubr.f32.mxu0 %v29
  %560 = vmatmul.mubr.f32.gmra.mxu0 %v28
  %v561 = vpop.f32.mrf.mxu0
  %v562 = vadd.f32 %v417, %v561
  %v563 = vpop.f32.mrf.mxu0
  %564 = vmatprep.mubr.f32.mxu0 %v38
  %565 = vmatmul.mubr.f32.gmra.mxu0 %v37
  %v566 = vpop.f32.mrf.mxu0
  %v567 = vadd.f32 %v422, %v566
  %v568 = vpop.f32.mrf.mxu0
  %569 = vmatprep.mubr.f32.mxu0 %v47
  %570 = vmatmul.mubr.f32.gmra.mxu0 %v46
  %v571 = vpop.f32.mrf.mxu0
  %v572 = vadd.f32 %v427, %v571
  %v573 = vpop.f32.mrf.mxu0
  %574 = vmatprep.mubr.f32.mxu0 %v56
  %575 = vmatmul.mubr.f32.gmra.mxu0 %v55
  %v576 = vpop.f32.mrf.mxu0
  %v577 = vadd.f32 %v432, %v576
  %v578 = vpop.f32.mrf.mxu0
  %579 = vmatprep.mubr.f32.mxu0 %v65
  %580 = vmatmul.mubr.f32.gmra.mxu0 %v64
  %v581 = vpop.f32.mrf.mxu0
  %v582 = vadd.f32 %v437, %v581
  %v583 = vpop.f32.mrf.mxu0
  %584 = vmatprep.mubr.f32.mxu0 %v74
  %585 = vmatmul.mubr.f32.gmra.mxu0 %v73
  %v586 = vpop.f32.mrf.mxu0
  %v587 = vadd.f32 %v442, %v586
  %v588 = vpop.f32.mrf.mxu0
  %589 = vmatprep.mubr.f32.mxu0 %v83
  %590 = vmatmul.mubr.f32.gmra.mxu0 %v82
  %v591 = vpop.f32.mrf.mxu0
  %v592 = vadd.f32 %v447, %v591
  %v593 = vpop.f32.mrf.mxu0
  %594 = vmatprep.mubr.f32.mxu0 %v92
  %595 = vmatmul.mubr.f32.gmra.mxu0 %v91
  %v596 = vpop.f32.mrf.mxu0
  %v597 = vadd.f32 %v452, %v596
  %v598 = vpop.f32.mrf.mxu0
  %599 = vmatprep.mubr.f32.mxu0 %v101
  %600 = vmatmul.mubr.f32.gmra.mxu0 %v100
  %v601 = vpop.f32.mrf.mxu0
  %v602 = vadd.f32 %v457, %v601
  %v603 = vpop.f32.mrf.mxu0
  %604 = vmatprep.mubr.f32.mxu0 %v110
  %605 = vmatmul.mubr.f32.gmra.mxu0 %v109
  %v606 = vpop.f32.mrf.mxu0
  %v607 = vadd.f32 %v462, %v606
  %v608 = vpop.f32.mrf.mxu0
  %609 = vmatprep.mubr.f32.mxu0 %v119
  %610 = vmatmul.mubr.f32.gmra.mxu0 %v118
  %v611 = vpop.f32.mrf.mxu0
  %v612 = vadd.f32 %v467, %v611
  %v613 = vpop.f32.mrf.mxu0
  %614 = vmatprep.mubr.f32.mxu0 %v128
  %615 = vmatmul.mubr.f32.gmra.mxu0 %v127
  %v616 = vpop.f32.mrf.mxu0
  %v617 = vadd.f32 %v472, %v616
  %v618 = vpop.f32.mrf.mxu0
  %619 = vmatprep.mubr.f32.mxu0 %v137
  %620 = vmatmul.mubr.f32.gmra.mxu0 %v136
  %v621 = vpop.f32.mrf.mxu0
  %v622 = vadd.f32 %v477, %v621
  %v623 = vpop.f32.mrf.mxu0
  %624 = vmatprep.mubr.f32.mxu0 %v146
  %625 = vmatmul.mubr.f32.gmra.mxu0 %v145
  %v626 = vpop.f32.mrf.mxu0
  %v627 = vadd.f32 %v482, %v626
  %v628 = vpop.f32.mrf.mxu0
  %629 = vmatprep.mubr.f32.mxu0 %v155
  %630 = vmatmul.mubr.f32.gmra.mxu0 %v154
  %v631 = vpop.f32.mrf.mxu0
  %v632 = vadd.f32 %v487, %v631
  %v633 = vpop.f32.mrf.mxu0
  %634 = vdwg.mxu0
  %635 = vmatprep.subr.mxu0 0.0
  %636 = vmatpush1.msra.mxu0 %v240
  %637 = vmatprep.subr.mxu0 0.0
  %638 = vmatpush1.msra.mxu0 %v239
  %639 = vmatprep.subr.mxu0 0.0
  %640 = vmatpush1.msra.mxu0 %v238
  %641 = vmatprep.subr.mxu0 0.0
  %642 = vmatpush1.msra.mxu0 %v237
  %643 = vmatprep.subr.mxu0 0.0
  %644 = vmatpush1.msra.mxu0 %v236
  %645 = vmatprep.subr.mxu0 0.0
  %646 = vmatpush1.msra.mxu0 %v235
  %647 = vmatprep.subr.mxu0 0.0
  %648 = vmatpush1.msra.mxu0 %v234
  %649 = vmatprep.subr.mxu0 0.0
  %650 = vmatpush1.msra.mxu0 %v233
  %651 = vmatprep.subr.mxu0 0.0
  %652 = vmatpush1.msra.mxu0 %v232
  %653 = vmatprep.subr.mxu0 0.0
  %654 = vmatpush1.msra.mxu0 %v231
  %655 = vmatprep.subr.mxu0 0.0
  %656 = vmatpush1.msra.mxu0 %v230
  %657 = vmatprep.subr.mxu0 0.0
  %658 = vmatpush1.msra.mxu0 %v229
  %659 = vmatprep.subr.mxu0 0.0
  %660 = vmatpush1.msra.mxu0 %v228
  %661 = vmatprep.subr.mxu0 0.0
  %662 = vmatpush1.msra.mxu0 %v227
  %663 = vmatprep.subr.mxu0 0.0
  %664 = vmatpush1.msra.mxu0 %v226
  %665 = vmatprep.subr.mxu0 0.0
  %666 = vmatpush1.msra.mxu0 %v225
  %667 = vmatprep.subr.mxu0 0.0
  %668 = vmatpush2.msra.mxu0 %v256
  %669 = vmatprep.subr.mxu0 0.0
  %670 = vmatpush2.msra.mxu0 %v255
  %671 = vmatprep.subr.mxu0 0.0
  %672 = vmatpush2.msra.mxu0 %v254
  %673 = vmatprep.subr.mxu0 0.0
  %674 = vmatpush2.msra.mxu0 %v253
  %675 = vmatprep.subr.mxu0 0.0
  %676 = vmatpush2.msra.mxu0 %v252
  %677 = vmatprep.subr.mxu0 0.0
  %678 = vmatpush2.msra.mxu0 %v251
  %679 = vmatprep.subr.mxu0 0.0
  %680 = vmatpush2.msra.mxu0 %v250
  %681 = vmatprep.subr.mxu0 0.0
  %682 = vmatpush2.msra.mxu0 %v249
  %683 = vmatprep.subr.mxu0 0.0
  %684 = vmatpush2.msra.mxu0 %v248
  %685 = vmatprep.subr.mxu0 0.0
  %686 = vmatpush2.msra.mxu0 %v247
  %687 = vmatprep.subr.mxu0 0.0
  %688 = vmatpush2.msra.mxu0 %v246
  %689 = vmatprep.subr.mxu0 0.0
  %690 = vmatpush2.msra.mxu0 %v245
  %691 = vmatprep.subr.mxu0 0.0
  %692 = vmatpush2.msra.mxu0 %v244
  %693 = vmatprep.subr.mxu0 0.0
  %694 = vmatpush2.msra.mxu0 %v243
  %695 = vmatprep.subr.mxu0 0.0
  %696 = vmatpush2.msra.mxu0 %v242
  %697 = vmatprep.subr.mxu0 0.0
  %698 = vmatpush2.msra.mxu0 %v241
  %699 = vmatprep.mubr.f32.mxu0 %v22
  %700 = vmatmul.mubr.f32.gmra.mxu0 %v21
  %v701 = vpop.f32.mrf.mxu0
  %v702 = vadd.f32 %v557, %v701
  %v703 = vpop.f32.mrf.mxu0
  %704 = vmatprep.mubr.f32.mxu0 %v31
  %705 = vmatmul.mubr.f32.gmra.mxu0 %v30
  %v706 = vpop.f32.mrf.mxu0
  %v707 = vadd.f32 %v562, %v706
  %v708 = vpop.f32.mrf.mxu0
  %709 = vmatprep.mubr.f32.mxu0 %v40
  %710 = vmatmul.mubr.f32.gmra.mxu0 %v39
  %v711 = vpop.f32.mrf.mxu0
  %v712 = vadd.f32 %v567, %v711
  %v713 = vpop.f32.mrf.mxu0
  %714 = vmatprep.mubr.f32.mxu0 %v49
  %715 = vmatmul.mubr.f32.gmra.mxu0 %v48
  %v716 = vpop.f32.mrf.mxu0
  %v717 = vadd.f32 %v572, %v716
  %v718 = vpop.f32.mrf.mxu0
  %719 = vmatprep.mubr.f32.mxu0 %v58
  %720 = vmatmul.mubr.f32.gmra.mxu0 %v57
  %v721 = vpop.f32.mrf.mxu0
  %v722 = vadd.f32 %v577, %v721
  %v723 = vpop.f32.mrf.mxu0
  %724 = vmatprep.mubr.f32.mxu0 %v67
  %725 = vmatmul.mubr.f32.gmra.mxu0 %v66
  %v726 = vpop.f32.mrf.mxu0
  %v727 = vadd.f32 %v582, %v726
  %v728 = vpop.f32.mrf.mxu0
  %729 = vmatprep.mubr.f32.mxu0 %v76
  %730 = vmatmul.mubr.f32.gmra.mxu0 %v75
  %v731 = vpop.f32.mrf.mxu0
  %v732 = vadd.f32 %v587, %v731
  %v733 = vpop.f32.mrf.mxu0
  %734 = vmatprep.mubr.f32.mxu0 %v85
  %735 = vmatmul.mubr.f32.gmra.mxu0 %v84
  %v736 = vpop.f32.mrf.mxu0
  %v737 = vadd.f32 %v592, %v736
  %v738 = vpop.f32.mrf.mxu0
  %739 = vmatprep.mubr.f32.mxu0 %v94
  %740 = vmatmul.mubr.f32.gmra.mxu0 %v93
  %v741 = vpop.f32.mrf.mxu0
  %v742 = vadd.f32 %v597, %v741
  %v743 = vpop.f32.mrf.mxu0
  %744 = vmatprep.mubr.f32.mxu0 %v103
  %745 = vmatmul.mubr.f32.gmra.mxu0 %v102
  %v746 = vpop.f32.mrf.mxu0
  %v747 = vadd.f32 %v602, %v746
  %v748 = vpop.f32.mrf.mxu0
  %749 = vmatprep.mubr.f32.mxu0 %v112
  %750 = vmatmul.mubr.f32.gmra.mxu0 %v111
  %v751 = vpop.f32.mrf.mxu0
  %v752 = vadd.f32 %v607, %v751
  %v753 = vpop.f32.mrf.mxu0
  %754 = vmatprep.mubr.f32.mxu0 %v121
  %755 = vmatmul.mubr.f32.gmra.mxu0 %v120
  %v756 = vpop.f32.mrf.mxu0
  %v757 = vadd.f32 %v612, %v756
  %v758 = vpop.f32.mrf.mxu0
  %759 = vmatprep.mubr.f32.mxu0 %v130
  %760 = vmatmul.mubr.f32.gmra.mxu0 %v129
  %v761 = vpop.f32.mrf.mxu0
  %v762 = vadd.f32 %v617, %v761
  %v763 = vpop.f32.mrf.mxu0
  %764 = vmatprep.mubr.f32.mxu0 %v139
  %765 = vmatmul.mubr.f32.gmra.mxu0 %v138
  %v766 = vpop.f32.mrf.mxu0
  %v767 = vadd.f32 %v622, %v766
  %v768 = vpop.f32.mrf.mxu0
  %769 = vmatprep.mubr.f32.mxu0 %v148
  %770 = vmatmul.mubr.f32.gmra.mxu0 %v147
  %v771 = vpop.f32.mrf.mxu0
  %v772 = vadd.f32 %v627, %v771
  %v773 = vpop.f32.mrf.mxu0
  %774 = vmatprep.mubr.f32.mxu0 %v157
  %775 = vmatmul.mubr.f32.gmra.mxu0 %v156
  %v776 = vpop.f32.mrf.mxu0
  %v777 = vadd.f32 %v632, %v776
  %v778 = vpop.f32.mrf.mxu0
  %779 = vdwg.mxu0
  %780 = vmatprep.subr.mxu0 0.0
  %781 = vmatpush1.msra.mxu0 %v272
  %782 = vmatprep.subr.mxu0 0.0
  %783 = vmatpush1.msra.mxu0 %v271
  %784 = vmatprep.subr.mxu0 0.0
  %785 = vmatpush1.msra.mxu0 %v270
  %786 = vmatprep.subr.mxu0 0.0
  %787 = vmatpush1.msra.mxu0 %v269
  %788 = vmatprep.subr.mxu0 0.0
  %789 = vmatpush1.msra.mxu0 %v268
  %790 = vmatprep.subr.mxu0 0.0
  %791 = vmatpush1.msra.mxu0 %v267
  %792 = vmatprep.subr.mxu0 0.0
  %793 = vmatpush1.msra.mxu0 %v266
  %794 = vmatprep.subr.mxu0 0.0
  %795 = vmatpush1.msra.mxu0 %v265
  %796 = vmatprep.subr.mxu0 0.0
  %797 = vmatpush1.msra.mxu0 %v264
  %798 = vmatprep.subr.mxu0 0.0
  %799 = vmatpush1.msra.mxu0 %v263
  %800 = vmatprep.subr.mxu0 0.0
  %801 = vmatpush1.msra.mxu0 %v262
  %802 = vmatprep.subr.mxu0 0.0
  %803 = vmatpush1.msra.mxu0 %v261
  %804 = vmatprep.subr.mxu0 0.0
  %805 = vmatpush1.msra.mxu0 %v260
  %806 = vmatprep.subr.mxu0 0.0
  %807 = vmatpush1.msra.mxu0 %v259
  %808 = vmatprep.subr.mxu0 0.0
  %809 = vmatpush1.msra.mxu0 %v258
  %810 = vmatprep.subr.mxu0 0.0
  %811 = vmatpush1.msra.mxu0 %v257
  %812 = vmatprep.subr.mxu0 0.0
  %813 = vmatpush2.msra.mxu0 %v288
  %814 = vmatprep.subr.mxu0 0.0
  %815 = vmatpush2.msra.mxu0 %v287
  %816 = vmatprep.subr.mxu0 0.0
  %817 = vmatpush2.msra.mxu0 %v286
  %818 = vmatprep.subr.mxu0 0.0
  %819 = vmatpush2.msra.mxu0 %v285
  %820 = vmatprep.subr.mxu0 0.0
  %821 = vmatpush2.msra.mxu0 %v284
  %822 = vmatprep.subr.mxu0 0.0
  %823 = vmatpush2.msra.mxu0 %v283
  %824 = vmatprep.subr.mxu0 0.0
  %825 = vmatpush2.msra.mxu0 %v282
  %826 = vmatprep.subr.mxu0 0.0
  %827 = vmatpush2.msra.mxu0 %v281
  %828 = vmatprep.subr.mxu0 0.0
  %829 = vmatpush2.msra.mxu0 %v280
  %830 = vmatprep.subr.mxu0 0.0
  %831 = vmatpush2.msra.mxu0 %v279
  %832 = vmatprep.subr.mxu0 0.0
  %833 = vmatpush2.msra.mxu0 %v278
  %834 = vmatprep.subr.mxu0 0.0
  %835 = vmatpush2.msra.mxu0 %v277
  %836 = vmatprep.subr.mxu0 0.0
  %837 = vmatpush2.msra.mxu0 %v276
  %838 = vmatprep.subr.mxu0 0.0
  %839 = vmatpush2.msra.mxu0 %v275
  %840 = vmatprep.subr.mxu0 0.0
  %841 = vmatpush2.msra.mxu0 %v274
  %842 = vmatprep.subr.mxu0 0.0
  %843 = vmatpush2.msra.mxu0 %v273
  %844 = vmatprep.mubr.f32.mxu0 %v24
  %845 = vmatmul.mubr.f32.gmra.mxu0 %v23
  %v846 = vpop.f32.mrf.mxu0
  %v847 = vadd.f32 %v702, %v846
  %v848 = vpop.f32.mrf.mxu0
  %849 = vmatprep.mubr.f32.mxu0 %v33
  %850 = vmatmul.mubr.f32.gmra.mxu0 %v32
  %v851 = vpop.f32.mrf.mxu0
  %v852 = vadd.f32 %v707, %v851
  %v853 = vpop.f32.mrf.mxu0
  %854 = vmatprep.mubr.f32.mxu0 %v42
  %855 = vmatmul.mubr.f32.gmra.mxu0 %v41
  %v856 = vpop.f32.mrf.mxu0
  %v857 = vadd.f32 %v712, %v856
  %v858 = vpop.f32.mrf.mxu0
  %859 = vmatprep.mubr.f32.mxu0 %v51
  %860 = vmatmul.mubr.f32.gmra.mxu0 %v50
  %v861 = vpop.f32.mrf.mxu0
  %v862 = vadd.f32 %v717, %v861
  %v863 = vpop.f32.mrf.mxu0
  %864 = vmatprep.mubr.f32.mxu0 %v60
  %865 = vmatmul.mubr.f32.gmra.mxu0 %v59
  %v866 = vpop.f32.mrf.mxu0
  %v867 = vadd.f32 %v722, %v866
  %v868 = vpop.f32.mrf.mxu0
  %869 = vmatprep.mubr.f32.mxu0 %v69
  %870 = vmatmul.mubr.f32.gmra.mxu0 %v68
  %v871 = vpop.f32.mrf.mxu0
  %v872 = vadd.f32 %v727, %v871
  %v873 = vpop.f32.mrf.mxu0
  %874 = vmatprep.mubr.f32.mxu0 %v78
  %875 = vmatmul.mubr.f32.gmra.mxu0 %v77
  %v876 = vpop.f32.mrf.mxu0
  %v877 = vadd.f32 %v732, %v876
  %v878 = vpop.f32.mrf.mxu0
  %879 = vmatprep.mubr.f32.mxu0 %v87
  %880 = vmatmul.mubr.f32.gmra.mxu0 %v86
  %v881 = vpop.f32.mrf.mxu0
  %v882 = vadd.f32 %v737, %v881
  %v883 = vpop.f32.mrf.mxu0
  %884 = vmatprep.mubr.f32.mxu0 %v96
  %885 = vmatmul.mubr.f32.gmra.mxu0 %v95
  %v886 = vpop.f32.mrf.mxu0
  %v887 = vadd.f32 %v742, %v886
  %v888 = vpop.f32.mrf.mxu0
  %889 = vmatprep.mubr.f32.mxu0 %v105
  %890 = vmatmul.mubr.f32.gmra.mxu0 %v104
  %v891 = vpop.f32.mrf.mxu0
  %v892 = vadd.f32 %v747, %v891
  %v893 = vpop.f32.mrf.mxu0
  %894 = vmatprep.mubr.f32.mxu0 %v114
  %895 = vmatmul.mubr.f32.gmra.mxu0 %v113
  %v896 = vpop.f32.mrf.mxu0
  %v897 = vadd.f32 %v752, %v896
  %v898 = vpop.f32.mrf.mxu0
  %899 = vmatprep.mubr.f32.mxu0 %v123
  %900 = vmatmul.mubr.f32.gmra.mxu0 %v122
  %v901 = vpop.f32.mrf.mxu0
  %v902 = vadd.f32 %v757, %v901
  %v903 = vpop.f32.mrf.mxu0
  %904 = vmatprep.mubr.f32.mxu0 %v132
  %905 = vmatmul.mubr.f32.gmra.mxu0 %v131
  %v906 = vpop.f32.mrf.mxu0
  %v907 = vadd.f32 %v762, %v906
  %v908 = vpop.f32.mrf.mxu0
  %909 = vmatprep.mubr.f32.mxu0 %v141
  %910 = vmatmul.mubr.f32.gmra.mxu0 %v140
  %v911 = vpop.f32.mrf.mxu0
  %v912 = vadd.f32 %v767, %v911
  %v913 = vpop.f32.mrf.mxu0
  %914 = vmatprep.mubr.f32.mxu0 %v150
  %915 = vmatmul.mubr.f32.gmra.mxu0 %v149
  %v916 = vpop.f32.mrf.mxu0
  %v917 = vadd.f32 %v772, %v916
  %v918 = vpop.f32.mrf.mxu0
  %919 = vmatprep.mubr.f32.mxu0 %v159
  %920 = vmatmul.mubr.f32.gmra.mxu0 %v158
  %v921 = vpop.f32.mrf.mxu0
  %v922 = vadd.f32 %v777, %v921
  %v923 = vpop.f32.mrf.mxu0
  %924 = vdwg.mxu0
  %925 = vmatprep.subr.mxu0 0.0
  %926 = vmatpush1.msra.mxu0 0.0
  %927 = vmatprep.subr.mxu0 0.0
  %928 = vmatpush1.msra.mxu0 0.0
  %929 = vmatprep.subr.mxu0 0.0
  %930 = vmatpush1.msra.mxu0 0.0
  %931 = vmatprep.subr.mxu0 0.0
  %932 = vmatpush1.msra.mxu0 0.0
  %933 = vmatprep.subr.mxu0 0.0
  %934 = vmatpush1.msra.mxu0 0.0
  %935 = vmatprep.subr.mxu0 0.0
  %936 = vmatpush1.msra.mxu0 0.0
  %937 = vmatprep.subr.mxu0 0.0
  %938 = vmatpush1.msra.mxu0 0.0
  %939 = vmatprep.subr.mxu0 0.0
  %940 = vmatpush1.msra.mxu0 0.0
  %941 = vmatprep.subr.mxu0 0.0
  %942 = vmatpush1.msra.mxu0 0.0
  %943 = vmatprep.subr.mxu0 0.0
  %944 = vmatpush1.msra.mxu0 %v295
  %945 = vmatprep.subr.mxu0 0.0
  %946 = vmatpush1.msra.mxu0 %v294
  %947 = vmatprep.subr.mxu0 0.0
  %948 = vmatpush1.msra.mxu0 %v293
  %949 = vmatprep.subr.mxu0 0.0
  %950 = vmatpush1.msra.mxu0 %v292
  %951 = vmatprep.subr.mxu0 0.0
  %952 = vmatpush1.msra.mxu0 %v291
  %953 = vmatprep.subr.mxu0 0.0
  %954 = vmatpush1.msra.mxu0 %v290
  %955 = vmatprep.subr.mxu0 0.0
  %956 = vmatpush1.msra.mxu0 %v289
  %957 = vmatprep.subr.mxu0 0.0
  %958 = vmatpush2.msra.mxu0 0.0
  %959 = vmatprep.subr.mxu0 0.0
  %960 = vmatpush2.msra.mxu0 0.0
  %961 = vmatprep.subr.mxu0 0.0
  %962 = vmatpush2.msra.mxu0 0.0
  %963 = vmatprep.subr.mxu0 0.0
  %964 = vmatpush2.msra.mxu0 0.0
  %965 = vmatprep.subr.mxu0 0.0
  %966 = vmatpush2.msra.mxu0 0.0
  %967 = vmatprep.subr.mxu0 0.0
  %968 = vmatpush2.msra.mxu0 0.0
  %969 = vmatprep.subr.mxu0 0.0
  %970 = vmatpush2.msra.mxu0 0.0
  %971 = vmatprep.subr.mxu0 0.0
  %972 = vmatpush2.msra.mxu0 0.0
  %973 = vmatprep.subr.mxu0 0.0
  %974 = vmatpush2.msra.mxu0 0.0
  %975 = vmatprep.subr.mxu0 0.0
  %976 = vmatpush2.msra.mxu0 0.0
  %977 = vmatprep.subr.mxu0 0.0
  %978 = vmatpush2.msra.mxu0 0.0
  %979 = vmatprep.subr.mxu0 0.0
  %980 = vmatpush2.msra.mxu0 0.0
  %981 = vmatprep.subr.mxu0 0.0
  %982 = vmatpush2.msra.mxu0 0.0
  %983 = vmatprep.subr.mxu0 0.0
  %984 = vmatpush2.msra.mxu0 0.0
  %985 = vmatprep.subr.mxu0 0.0
  %986 = vmatpush2.msra.mxu0 0.0
  %987 = vmatprep.subr.mxu0 0.0
  %988 = vmatpush2.msra.mxu0 0.0
  %989 = vmatprep.mubr.f32.mxu0 0.0
  %990 = vmatmul.mubr.f32.gmra.mxu0 %v298
  %v991 = vpop.f32.mrf.mxu0
  %v992 = vadd.f32 %v847, %v991
  %v993 = vpop.f32.mrf.mxu0
  %994 = vmatprep.mubr.f32.mxu0 0.0
  %995 = vmatmul.mubr.f32.gmra.mxu0 %v301
  %v996 = vpop.f32.mrf.mxu0
  %v997 = vadd.f32 %v852, %v996
  %v998 = vpop.f32.mrf.mxu0
  %999 = vmatprep.mubr.f32.mxu0 0.0
  %1000 = vmatmul.mubr.f32.gmra.mxu0 %v304
  %v1001 = vpop.f32.mrf.mxu0
  %v1002 = vadd.f32 %v857, %v1001
  %v1003 = vpop.f32.mrf.mxu0
  %1004 = vmatprep.mubr.f32.mxu0 0.0
  %1005 = vmatmul.mubr.f32.gmra.mxu0 %v307
  %v1006 = vpop.f32.mrf.mxu0
  %v1007 = vadd.f32 %v862, %v1006
  %v1008 = vpop.f32.mrf.mxu0
  %1009 = vmatprep.mubr.f32.mxu0 0.0
  %1010 = vmatmul.mubr.f32.gmra.mxu0 %v310
  %v1011 = vpop.f32.mrf.mxu0
  %v1012 = vadd.f32 %v867, %v1011
  %v1013 = vpop.f32.mrf.mxu0
  %1014 = vmatprep.mubr.f32.mxu0 0.0
  %1015 = vmatmul.mubr.f32.gmra.mxu0 %v313
  %v1016 = vpop.f32.mrf.mxu0
  %v1017 = vadd.f32 %v872, %v1016
  %v1018 = vpop.f32.mrf.mxu0
  %1019 = vmatprep.mubr.f32.mxu0 0.0
  %1020 = vmatmul.mubr.f32.gmra.mxu0 %v316
  %v1021 = vpop.f32.mrf.mxu0
  %v1022 = vadd.f32 %v877, %v1021
  %v1023 = vpop.f32.mrf.mxu0
  %1024 = vmatprep.mubr.f32.mxu0 0.0
  %1025 = vmatmul.mubr.f32.gmra.mxu0 %v319
  %v1026 = vpop.f32.mrf.mxu0
  %v1027 = vadd.f32 %v882, %v1026
  %v1028 = vpop.f32.mrf.mxu0
  %1029 = vmatprep.mubr.f32.mxu0 0.0
  %1030 = vmatmul.mubr.f32.gmra.mxu0 %v322
  %v1031 = vpop.f32.mrf.mxu0
  %v1032 = vadd.f32 %v887, %v1031
  %v1033 = vpop.f32.mrf.mxu0
  %1034 = vmatprep.mubr.f32.mxu0 0.0
  %1035 = vmatmul.mubr.f32.gmra.mxu0 %v325
  %v1036 = vpop.f32.mrf.mxu0
  %v1037 = vadd.f32 %v892, %v1036
  %v1038 = vpop.f32.mrf.mxu0
  %1039 = vmatprep.mubr.f32.mxu0 0.0
  %1040 = vmatmul.mubr.f32.gmra.mxu0 %v328
  %v1041 = vpop.f32.mrf.mxu0
  %v1042 = vadd.f32 %v897, %v1041
  %v1043 = vpop.f32.mrf.mxu0
  %1044 = vmatprep.mubr.f32.mxu0 0.0
  %1045 = vmatmul.mubr.f32.gmra.mxu0 %v331
  %v1046 = vpop.f32.mrf.mxu0
  %v1047 = vadd.f32 %v902, %v1046
  %v1048 = vpop.f32.mrf.mxu0
  %1049 = vmatprep.mubr.f32.mxu0 0.0
  %1050 = vmatmul.mubr.f32.gmra.mxu0 %v334
  %v1051 = vpop.f32.mrf.mxu0
  %v1052 = vadd.f32 %v907, %v1051
  %v1053 = vpop.f32.mrf.mxu0
  %1054 = vmatprep.mubr.f32.mxu0 0.0
  %1055 = vmatmul.mubr.f32.gmra.mxu0 %v337
  %v1056 = vpop.f32.mrf.mxu0
  %v1057 = vadd.f32 %v912, %v1056
  %v1058 = vpop.f32.mrf.mxu0
  %1059 = vmatprep.mubr.f32.mxu0 0.0
  %1060 = vmatmul.mubr.f32.gmra.mxu0 %v340
  %v1061 = vpop.f32.mrf.mxu0
  %v1062 = vadd.f32 %v917, %v1061
  %v1063 = vpop.f32.mrf.mxu0
  %1064 = vmatprep.mubr.f32.mxu0 0.0
  %1065 = vmatmul.mubr.f32.gmra.mxu0 %v343
  %v1066 = vpop.f32.mrf.mxu0
  %v1067 = vadd.f32 %v922, %v1066
  %v1068 = vpop.f32.mrf.mxu0
  %1069 = vdwg.mxu0
  %v1070 = vmax.f32 %v992, 0.0
  %v1071 = vmax.f32 %v997, 0.0
  %v1072 = vmax.f32 %v1002, 0.0
  %v1073 = vmax.f32 %v1007, 0.0
  %v1074 = vmax.f32 %v1012, 0.0
  %v1075 = vmax.f32 %v1017, 0.0
  %v1076 = vmax.f32 %v1022, 0.0
  %v1077 = vmax.f32 %v1027, 0.0
  %v1078 = vmax.f32 %v1032, 0.0
  %v1079 = vmax.f32 %v1037, 0.0
  %v1080 = vmax.f32 %v1042, 0.0
  %v1081 = vmax.f32 %v1047, 0.0
  %v1082 = vmax.f32 %v1052, 0.0
  %v1083 = vmax.f32 %v1057, 0.0
  %v1084 = vmax.f32 %v1062, 0.0
  %v1085 = vmax.f32 %v1067, 0.0
  %vm1086 = vcmask 244736
  %v1087 = vsel %vm1086, %v1070, 0.0
  %v1088 = vsel %vm1086, %v1071, 0.0
  %v1089 = vadd.f32 %v1087, %v1088
  %v1090 = vsel %vm1086, %v1072, 0.0
  %v1091 = vadd.f32 %v1089, %v1090
  %v1092 = vsel %vm1086, %v1073, 0.0
  %v1093 = vadd.f32 %v1091, %v1092
  %v1094 = vsel %vm1086, %v1074, 0.0
  %v1095 = vadd.f32 %v1093, %v1094
  %v1096 = vsel %vm1086, %v1075, 0.0
  %v1097 = vadd.f32 %v1095, %v1096
  %v1098 = vsel %vm1086, %v1076, 0.0
  %v1099 = vadd.f32 %v1097, %v1098
  %v1100 = vsel %vm1086, %v1077, 0.0
  %v1101 = vadd.f32 %v1099, %v1100
  %v1102 = vsel %vm1086, %v1078, 0.0
  %v1103 = vadd.f32 %v1101, %v1102
  %v1104 = vsel %vm1086, %v1079, 0.0
  %v1105 = vadd.f32 %v1103, %v1104
  %v1106 = vsel %vm1086, %v1080, 0.0
  %v1107 = vadd.f32 %v1105, %v1106
  %v1108 = vsel %vm1086, %v1081, 0.0
  %v1109 = vadd.f32 %v1107, %v1108
  %v1110 = vsel %vm1086, %v1082, 0.0
  %v1111 = vadd.f32 %v1109, %v1110
  %v1112 = vsel %vm1086, %v1083, 0.0
  %v1113 = vadd.f32 %v1111, %v1112
  %v1114 = vsel %vm1086, %v1084, 0.0
  %v1115 = vadd.f32 %v1113, %v1114
  %v1116 = vsel %vm1086, %v1085, 0.0
  %v1117 = vadd.f32 %v1115, %v1116
  %v1118 = vrot.slane %v1117, 4
  %v1119 = vadd.f32 %v1117, %v1118
  %v1120 = vrot.slane %v1119, 2
  %v1121 = vadd.f32 %v1119, %v1120
  %v1122 = vrot.slane %v1121, 1
  %v1123 = vadd.f32 %v1121, %v1122
  %v1124 = vmul.f32 %v1123, 0.0078125
  %v1125 = vsub.f32 %v1070, %v1124
  %v1126 = vsub.f32 %v1071, %v1124
  %v1127 = vsub.f32 %v1072, %v1124
  %v1128 = vsub.f32 %v1073, %v1124
  %v1129 = vsub.f32 %v1074, %v1124
  %v1130 = vsub.f32 %v1075, %v1124
  %v1131 = vsub.f32 %v1076, %v1124
  %v1132 = vsub.f32 %v1077, %v1124
  %v1133 = vsub.f32 %v1078, %v1124
  %v1134 = vsub.f32 %v1079, %v1124
  %v1135 = vsub.f32 %v1080, %v1124
  %v1136 = vsub.f32 %v1081, %v1124
  %v1137 = vsub.f32 %v1082, %v1124
  %v1138 = vsub.f32 %v1083, %v1124
  %v1139 = vsub.f32 %v1084, %v1124
  %v1140 = vsub.f32 %v1085, %v1124
  %v1141 = vmul.f32 %v1125, %v1125
  %v1142 = vmul.f32 %v1126, %v1126
  %v1143 = vmul.f32 %v1127, %v1127
  %v1144 = vmul.f32 %v1128, %v1128
  %v1145 = vmul.f32 %v1129, %v1129
  %v1146 = vmul.f32 %v1130, %v1130
  %v1147 = vmul.f32 %v1131, %v1131
  %v1148 = vmul.f32 %v1132, %v1132
  %v1149 = vmul.f32 %v1133, %v1133
  %v1150 = vmul.f32 %v1134, %v1134
  %v1151 = vmul.f32 %v1135, %v1135
  %v1152 = vmul.f32 %v1136, %v1136
  %v1153 = vmul.f32 %v1137, %v1137
  %v1154 = vmul.f32 %v1138, %v1138
  %v1155 = vmul.f32 %v1139, %v1139
  %v1156 = vmul.f32 %v1140, %v1140
  %v1157 = vsel %vm1086, %v1141, 0.0
  %v1158 = vsel %vm1086, %v1142, 0.0
  %v1159 = vadd.f32 %v1157, %v1158
  %v1160 = vsel %vm1086, %v1143, 0.0
  %v1161 = vadd.f32 %v1159, %v1160
  %v1162 = vsel %vm1086, %v1144, 0.0
  %v1163 = vadd.f32 %v1161, %v1162
  %v1164 = vsel %vm1086, %v1145, 0.0
  %v1165 = vadd.f32 %v1163, %v1164
  %v1166 = vsel %vm1086, %v1146, 0.0
  %v1167 = vadd.f32 %v1165, %v1166
  %v1168 = vsel %vm1086, %v1147, 0.0
  %v1169 = vadd.f32 %v1167, %v1168
  %v1170 = vsel %vm1086, %v1148, 0.0
  %v1171 = vadd.f32 %v1169, %v1170
  %v1172 = vsel %vm1086, %v1149, 0.0
  %v1173 = vadd.f32 %v1171, %v1172
  %v1174 = vsel %vm1086, %v1150, 0.0
  %v1175 = vadd.f32 %v1173, %v1174
  %v1176 = vsel %vm1086, %v1151, 0.0
  %v1177 = vadd.f32 %v1175, %v1176
  %v1178 = vsel %vm1086, %v1152, 0.0
  %v1179 = vadd.f32 %v1177, %v1178
  %v1180 = vsel %vm1086, %v1153, 0.0
  %v1181 = vadd.f32 %v1179, %v1180
  %v1182 = vsel %vm1086, %v1154, 0.0
  %v1183 = vadd.f32 %v1181, %v1182
  %v1184 = vsel %vm1086, %v1155, 0.0
  %v1185 = vadd.f32 %v1183, %v1184
  %v1186 = vsel %vm1086, %v1156, 0.0
  %v1187 = vadd.f32 %v1185, %v1186
  %v1188 = vrot.slane %v1187, 4
  %v1189 = vadd.f32 %v1187, %v1188
  %v1190 = vrot.slane %v1189, 2
  %v1191 = vadd.f32 %v1189, %v1190
  %v1192 = vrot.slane %v1191, 1
  %v1193 = vadd.f32 %v1191, %v1192
  %v1194 = vmul.f32 %v1193, 0.0078125
  %v1195 = vadd.f32 %v1194, 1e-05
  %v1196 = vrsqrt.pop %v1195
  %v1197 = vmul.f32 %v1125, %v1196
  %v1198 = vmul.f32 %v1126, %v1196
  %v1199 = vmul.f32 %v1127, %v1196
  %v1200 = vmul.f32 %v1128, %v1196
  %v1201 = vmul.f32 %v1129, %v1196
  %v1202 = vmul.f32 %v1130, %v1196
  %v1203 = vmul.f32 %v1131, %v1196
  %v1204 = vmul.f32 %v1132, %v1196
  %v1205 = vmul.f32 %v1133, %v1196
  %v1206 = vmul.f32 %v1134, %v1196
  %v1207 = vmul.f32 %v1135, %v1196
  %v1208 = vmul.f32 %v1136, %v1196
  %v1209 = vmul.f32 %v1137, %v1196
  %v1210 = vmul.f32 %v1138, %v1196
  %v1211 = vmul.f32 %v1139, %v1196
  %v1212 = vmul.f32 %v1140, %v1196
  %v1213 = vld [vmem:[%s2] sm:$0x1]
  %v1215 = vlaneseq
  %v1216 = vshrl.u32 %v1215, 7
  %v1217 = vsub.s32 0, %v1216
  %v1218 = vrot.slane %v1213, %v1217
  %v1220 = vmul.f32 %v1197, %v1218
  %v1221 = vmul.f32 %v1198, %v1218
  %v1222 = vmul.f32 %v1199, %v1218
  %v1223 = vmul.f32 %v1200, %v1218
  %v1224 = vmul.f32 %v1201, %v1218
  %v1225 = vmul.f32 %v1202, %v1218
  %v1226 = vmul.f32 %v1203, %v1218
  %v1227 = vmul.f32 %v1204, %v1218
  %v1228 = vmul.f32 %v1205, %v1218
  %v1229 = vmul.f32 %v1206, %v1218
  %v1230 = vmul.f32 %v1207, %v1218
  %v1231 = vmul.f32 %v1208, %v1218
  %v1232 = vmul.f32 %v1209, %v1218
  %v1233 = vmul.f32 %v1210, %v1218
  %v1234 = vmul.f32 %v1211, %v1218
  %v1235 = vmul.f32 %v1212, %v1218
  %v1236 = vld [vmem:[%s3] sm:$0x1]
  %v1238 = vlaneseq
  %v1239 = vshrl.u32 %v1238, 7
  %v1240 = vsub.s32 0, %v1239
  %v1241 = vrot.slane %v1236, %v1240
  %v1243 = vadd.f32 %v1220, %v1241
  %v1244 = vadd.f32 %v1221, %v1241
  %v1245 = vadd.f32 %v1222, %v1241
  %v1246 = vadd.f32 %v1223, %v1241
  %v1247 = vadd.f32 %v1224, %v1241
  %v1248 = vadd.f32 %v1225, %v1241
  %v1249 = vadd.f32 %v1226, %v1241
  %v1250 = vadd.f32 %v1227, %v1241
  %v1251 = vadd.f32 %v1228, %v1241
  %v1252 = vadd.f32 %v1229, %v1241
  %v1253 = vadd.f32 %v1230, %v1241
  %v1254 = vadd.f32 %v1231, %v1241
  %v1255 = vadd.f32 %v1232, %v1241
  %v1256 = vadd.f32 %v1233, %v1241
  %v1257 = vadd.f32 %v1234, %v1241
  %v1258 = vadd.f32 %v1235, %v1241
  %1259 = vst.msk [vmem:[%s4] sm:$0xff] %vm1086, %v1243
  %1260 = vst.msk [vmem:[%s4 + $0x8] sm:$0xff] %vm1086, %v1244
  %1261 = vst.msk [vmem:[%s4 + $0x10] sm:$0xff] %vm1086, %v1245
  %1262 = vst.msk [vmem:[%s4 + $0x18] sm:$0xff] %vm1086, %v1246
  %1263 = vst.msk [vmem:[%s4 + $0x20] sm:$0xff] %vm1086, %v1247
  %1264 = vst.msk [vmem:[%s4 + $0x28] sm:$0xff] %vm1086, %v1248
  %1265 = vst.msk [vmem:[%s4 + $0x30] sm:$0xff] %vm1086, %v1249
  %1266 = vst.msk [vmem:[%s4 + $0x38] sm:$0xff] %vm1086, %v1250
  %1267 = vst.msk [vmem:[%s4 + $0x40] sm:$0xff] %vm1086, %v1251
  %1268 = vst.msk [vmem:[%s4 + $0x48] sm:$0xff] %vm1086, %v1252
  %1269 = vst.msk [vmem:[%s4 + $0x50] sm:$0xff] %vm1086, %v1253
  %1270 = vst.msk [vmem:[%s4 + $0x58] sm:$0xff] %vm1086, %v1254
  %1271 = vst.msk [vmem:[%s4 + $0x60] sm:$0xff] %vm1086, %v1255
  %1272 = vst.msk [vmem:[%s4 + $0x68] sm:$0xff] %vm1086, %v1256
  %1273 = vst.msk [vmem:[%s4 + $0x70] sm:$0xff] %vm1086, %v1257
  %1274 = vst.msk [vmem:[%s4 + $0x78] sm:$0xff] %vm1086, %v1258
  // Predicated region
  $region18: #{mask_generator_forward.12} parent=0 // pred_check
    _
  $region19: #{mask_generator_forward.12} parent=0 // pred_check_branch
    %1276 = sbr.rel (0) target = $region21
  $region20: #{mask_generator_forward.12} parent=0 // pred_region
    _
  $region21: #{mask_generator_forward.12} parent=0 // pred_fallthru
    _
  // Predicated region
  $region22: #{mask_generator_forward.12} parent=0 // pred_check
    _
  $region23: #{mask_generator_forward.12} parent=0 // pred_check_branch
    %1278 = sbr.rel (0) target = $region25
  $region24: #{mask_generator_forward.12} parent=0 // pred_region
    _
  $region25: #{mask_generator_forward.12} parent=0 // pred_fallthru
    _

// kernel: mask_generator_forward.13
$region0: #{mask_generator_forward.13}
  #allocation0 [shape = 'u32[]', space=smem, size = 0x4, offset = 0x4, fixed_abs, tag = 'smem constant byte address 0x4 - core index']
  #allocation1 [shape = 'u32[144,128]{1,0:T(1,128)}', space=vmem, size = 0x12000, scoped, tag = 'internal scratch']
  %s0 = inlined_call_operand.vmem [shape: f32[512,540], index: 0, kind: input, shape index: {}]
  %s1 = inlined_call_operand.vmem [shape: f32[540,30], index: 1, kind: input, shape index: {}]
  %s2 = inlined_call_operand.vmem [shape: f32[1,30], index: 2, kind: input, shape index: {}]
  %s3 = inlined_call_operand.vmem [shape: f32[1,30], index: 3, kind: input, shape index: {}]
  %s4 = inlined_call_operand.vmem [shape: f32[512,30], index: 4, kind: output, shape index: {}]
  %s5 = sld [smem:[#allocation0]]
  $region26: #{mask_generator_forward.13} parent=0
    _
  %s7 = ssub.s32 1, %s5
  %s8 = scalar_select 0, %s7, %s5
  // Predicated region
  $region2: #{mask_generator_forward.13} parent=0 // pred_check
    _
  $region3: #{mask_generator_forward.13} parent=0 // pred_check_branch
    %10 = sbr.rel (0) target = $region5
  $region4: #{mask_generator_forward.13} parent=0 // pred_region
    _
  $region5: #{mask_generator_forward.13} parent=0 // pred_fallthru
    _
  // Predicated region
  $region6: #{mask_generator_forward.13} parent=0 // pred_check
    _
  $region7: #{mask_generator_forward.13} parent=0 // pred_check_branch
    %12 = sbr.rel (0) target = $region9
  $region8: #{mask_generator_forward.13} parent=0 // pred_region
    _
  $region9: #{mask_generator_forward.13} parent=0 // pred_fallthru
    _
  // Predicated region
  $region10: #{mask_generator_forward.13} parent=0 // pred_check
    _
  $region11: #{mask_generator_forward.13} parent=0 // pred_check_branch
    %14 = sbr.rel (0) target = $region13
  $region12: #{mask_generator_forward.13} parent=0 // pred_region
    _
  $region13: #{mask_generator_forward.13} parent=0 // pred_fallthru
    _
  // Predicated region
  $region14: #{mask_generator_forward.13} parent=0 // pred_check
    _
  $region15: #{mask_generator_forward.13} parent=0 // pred_check_branch
    %16 = sbr.rel (0) target = $region17
  $region16: #{mask_generator_forward.13} parent=0 // pred_region
    _
  $region17: #{mask_generator_forward.13} parent=0 // pred_fallthru
    _
  %v17 = vld [vmem:[%s0] sm:$0xff]
  %v18 = vld [vmem:[%s0 + $0x8] sm:$0xff]
  %v19 = vld [vmem:[%s0 + $0x10] sm:$0xff]
  %v20 = vld [vmem:[%s0 + $0x18] sm:$0xff]
  %v21 = vld [vmem:[%s0 + $0x20] sm:$0xff]
  %v22 = vld [vmem:[%s0 + $0x28] sm:$0xff]
  %v23 = vld [vmem:[%s0 + $0x30] sm:$0xff]
  %v24 = vld [vmem:[%s0 + $0x38] sm:$0xff]
  %v25 = vld [vmem:[%s0 + $0x40] sm:$0xff]
  %v26 = vld [vmem:[%s0 + $0x48] sm:$0xff]
  %v27 = vld [vmem:[%s0 + $0x50] sm:$0xff]
  %v28 = vld [vmem:[%s0 + $0x58] sm:$0xff]
  %v29 = vld [vmem:[%s0 + $0x60] sm:$0xff]
  %v30 = vld [vmem:[%s0 + $0x68] sm:$0xff]
  %v31 = vld [vmem:[%s0 + $0x70] sm:$0xff]
  %v32 = vld [vmem:[%s0 + $0x78] sm:$0xff]
  %v33 = vld [vmem:[%s0 + $0x80] sm:$0xff]
  %v34 = vld [vmem:[%s0 + $0x88] sm:$0xff]
  %v35 = vld [vmem:[%s0 + $0x90] sm:$0xff]
  %v36 = vld [vmem:[%s0 + $0x98] sm:$0xff]
  %v37 = vld [vmem:[%s0 + $0xa0] sm:$0xff]
  %v38 = vld [vmem:[%s0 + $0xa8] sm:$0xff]
  %v39 = vld [vmem:[%s0 + $0xb0] sm:$0xff]
  %v40 = vld [vmem:[%s0 + $0xb8] sm:$0xff]
  %v41 = vld [vmem:[%s0 + $0xc0] sm:$0xff]
  %v42 = vld [vmem:[%s0 + $0xc8] sm:$0xff]
  %v43 = vld [vmem:[%s0 + $0xd0] sm:$0xff]
  %v44 = vld [vmem:[%s0 + $0xd8] sm:$0xff]
  %v45 = vld [vmem:[%s0 + $0xe0] sm:$0xff]
  %v46 = vld [vmem:[%s0 + $0xe8] sm:$0xff]
  %v47 = vld [vmem:[%s0 + $0xf0] sm:$0xff]
  %v48 = vld [vmem:[%s0 + $0xf8] sm:$0xff]
  %v49 = vld [vmem:[%s0 + $0x100] sm:$0xff]
  %v50 = vld [vmem:[%s0 + $0x108] sm:$0xff]
  %v51 = vld [vmem:[%s0 + $0x110] sm:$0xff]
  %v52 = vld [vmem:[%s0 + $0x118] sm:$0xff]
  %v53 = vld [vmem:[%s0 + $0x120] sm:$0xff]
  %v54 = vld [vmem:[%s0 + $0x128] sm:$0xff]
  %v55 = vld [vmem:[%s0 + $0x130] sm:$0xff]
  %v56 = vld [vmem:[%s0 + $0x138] sm:$0xff]
  %v57 = vld [vmem:[%s0 + $0x140] sm:$0xff]
  %v58 = vld [vmem:[%s0 + $0x148] sm:$0xff]
  %v59 = vld [vmem:[%s0 + $0x150] sm:$0xff]
  %v60 = vld [vmem:[%s0 + $0x158] sm:$0xff]
  %v61 = vld [vmem:[%s0 + $0x160] sm:$0xff]
  %v62 = vld [vmem:[%s0 + $0x168] sm:$0xff]
  %v63 = vld [vmem:[%s0 + $0x170] sm:$0xff]
  %v64 = vld [vmem:[%s0 + $0x178] sm:$0xff]
  %v65 = vld [vmem:[%s0 + $0x180] sm:$0xff]
  %v66 = vld [vmem:[%s0 + $0x188] sm:$0xff]
  %v67 = vld [vmem:[%s0 + $0x190] sm:$0xff]
  %v68 = vld [vmem:[%s0 + $0x198] sm:$0xff]
  %v69 = vld [vmem:[%s0 + $0x1a0] sm:$0xff]
  %v70 = vld [vmem:[%s0 + $0x1a8] sm:$0xff]
  %v71 = vld [vmem:[%s0 + $0x1b0] sm:$0xff]
  %v72 = vld [vmem:[%s0 + $0x1b8] sm:$0xff]
  %v73 = vld [vmem:[%s0 + $0x1c0] sm:$0xff]
  %v74 = vld [vmem:[%s0 + $0x1c8] sm:$0xff]
  %v75 = vld [vmem:[%s0 + $0x1d0] sm:$0xff]
  %v76 = vld [vmem:[%s0 + $0x1d8] sm:$0xff]
  %v77 = vld [vmem:[%s0 + $0x1e0] sm:$0xff]
  %v78 = vld [vmem:[%s0 + $0x1e8] sm:$0xff]
  %v79 = vld [vmem:[%s0 + $0x1f0] sm:$0xff]
  %v80 = vld [vmem:[%s0 + $0x1f8] sm:$0xff]
  %v81 = vld [vmem:[%s0 + $0x200] sm:$0xff]
  %v82 = vld [vmem:[%s0 + $0x208] sm:$0xff]
  %v83 = vld [vmem:[%s0 + $0x210] sm:$0xff]
  %v84 = vld [vmem:[%s0 + $0x218] sm:$0xff]
  %v85 = vld [vmem:[%s0 + $0x220] sm:$0xff]
  %v86 = vld [vmem:[%s0 + $0x228] sm:$0xff]
  %v87 = vld [vmem:[%s0 + $0x230] sm:$0xff]
  %v88 = vld [vmem:[%s0 + $0x238] sm:$0xff]
  %v89 = vld [vmem:[%s0 + $0x240] sm:$0xff]
  %v90 = vld [vmem:[%s0 + $0x248] sm:$0xff]
  %v91 = vld [vmem:[%s0 + $0x250] sm:$0xff]
  %v92 = vld [vmem:[%s0 + $0x258] sm:$0xff]
  %v93 = vld [vmem:[%s0 + $0x260] sm:$0xff]
  %v94 = vld [vmem:[%s0 + $0x268] sm:$0xff]
  %v95 = vld [vmem:[%s0 + $0x270] sm:$0xff]
  %v96 = vld [vmem:[%s0 + $0x278] sm:$0xff]
  %v97 = vld [vmem:[%s0 + $0x280] sm:$0xff]
  %v98 = vld [vmem:[%s0 + $0x288] sm:$0xff]
  %v99 = vld [vmem:[%s0 + $0x290] sm:$0xff]
  %v100 = vld [vmem:[%s0 + $0x298] sm:$0xff]
  %v101 = vld [vmem:[%s0 + $0x2a0] sm:$0xff]
  %v102 = vld [vmem:[%s0 + $0x2a8] sm:$0xff]
  %v103 = vld [vmem:[%s0 + $0x2b0] sm:$0xff]
  %v104 = vld [vmem:[%s0 + $0x2b8] sm:$0xff]
  %v105 = vld [vmem:[%s0 + $0x2c0] sm:$0xff]
  %v106 = vld [vmem:[%s0 + $0x2c8] sm:$0xff]
  %v107 = vld [vmem:[%s0 + $0x2d0] sm:$0xff]
  %v108 = vld [vmem:[%s0 + $0x2d8] sm:$0xff]
  %v109 = vld [vmem:[%s0 + $0x2e0] sm:$0xff]
  %v110 = vld [vmem:[%s0 + $0x2e8] sm:$0xff]
  %v111 = vld [vmem:[%s0 + $0x2f0] sm:$0xff]
  %v112 = vld [vmem:[%s0 + $0x2f8] sm:$0xff]
  %v113 = vld [vmem:[%s0 + $0x300] sm:$0xff]
  %v114 = vld [vmem:[%s0 + $0x308] sm:$0xff]
  %v115 = vld [vmem:[%s0 + $0x310] sm:$0xff]
  %v116 = vld [vmem:[%s0 + $0x318] sm:$0xff]
  %v117 = vld [vmem:[%s0 + $0x320] sm:$0xff]
  %v118 = vld [vmem:[%s0 + $0x328] sm:$0xff]
  %v119 = vld [vmem:[%s0 + $0x330] sm:$0xff]
  %v120 = vld [vmem:[%s0 + $0x338] sm:$0xff]
  %v121 = vld [vmem:[%s0 + $0x340] sm:$0xff]
  %v122 = vld [vmem:[%s0 + $0x348] sm:$0xff]
  %v123 = vld [vmem:[%s0 + $0x350] sm:$0xff]
  %v124 = vld [vmem:[%s0 + $0x358] sm:$0xff]
  %v125 = vld [vmem:[%s0 + $0x360] sm:$0xff]
  %v126 = vld [vmem:[%s0 + $0x368] sm:$0xff]
  %v127 = vld [vmem:[%s0 + $0x370] sm:$0xff]
  %v128 = vld [vmem:[%s0 + $0x378] sm:$0xff]
  %v129 = vld [vmem:[%s0 + $0x380] sm:$0xff]
  %v130 = vld [vmem:[%s0 + $0x388] sm:$0xff]
  %v131 = vld [vmem:[%s0 + $0x390] sm:$0xff]
  %v132 = vld [vmem:[%s0 + $0x398] sm:$0xff]
  %v133 = vld [vmem:[%s0 + $0x3a0] sm:$0xff]
  %v134 = vld [vmem:[%s0 + $0x3a8] sm:$0xff]
  %v135 = vld [vmem:[%s0 + $0x3b0] sm:$0xff]
  %v136 = vld [vmem:[%s0 + $0x3b8] sm:$0xff]
  %v137 = vld [vmem:[%s0 + $0x3c0] sm:$0xff]
  %v138 = vld [vmem:[%s0 + $0x3c8] sm:$0xff]
  %v139 = vld [vmem:[%s0 + $0x3d0] sm:$0xff]
  %v140 = vld [vmem:[%s0 + $0x3d8] sm:$0xff]
  %v141 = vld [vmem:[%s0 + $0x3e0] sm:$0xff]
  %v142 = vld [vmem:[%s0 + $0x3e8] sm:$0xff]
  %v143 = vld [vmem:[%s0 + $0x3f0] sm:$0xff]
  %v144 = vld [vmem:[%s0 + $0x3f8] sm:$0xff]
  %v145 = vld [vmem:[%s0 + $0x400] sm:$0xff]
  %v146 = vld [vmem:[%s0 + $0x408] sm:$0xff]
  %v147 = vld [vmem:[%s0 + $0x410] sm:$0xff]
  %v148 = vld [vmem:[%s0 + $0x418] sm:$0xff]
  %v149 = vld [vmem:[%s0 + $0x420] sm:$0xff]
  %v150 = vld [vmem:[%s0 + $0x428] sm:$0xff]
  %v151 = vld [vmem:[%s0 + $0x430] sm:$0xff]
  %v152 = vld [vmem:[%s0 + $0x438] sm:$0xff]
  %v153 = vld [vmem:[%s0 + $0x440] sm:$0xff]
  %v154 = vld [vmem:[%s0 + $0x448] sm:$0xff]
  %v155 = vld [vmem:[%s0 + $0x450] sm:$0xff]
  %v156 = vld [vmem:[%s0 + $0x458] sm:$0xff]
  %v157 = vld [vmem:[%s0 + $0x460] sm:$0xff]
  %v158 = vld [vmem:[%s0 + $0x468] sm:$0xff]
  %v159 = vld [vmem:[%s0 + $0x470] sm:$0xff]
  %v160 = vld [vmem:[%s0 + $0x478] sm:$0xff]
  %v161 = vld [vmem:[%s0 + $0x480] sm:$0xff]
  %v162 = vld [vmem:[%s0 + $0x488] sm:$0xff]
  %v163 = vld [vmem:[%s0 + $0x490] sm:$0xff]
  %v164 = vld [vmem:[%s0 + $0x498] sm:$0xff]
  %v165 = vld [vmem:[%s0 + $0x4a0] sm:$0xff]
  %v166 = vld [vmem:[%s0 + $0x4a8] sm:$0xff]
  %v167 = vld [vmem:[%s0 + $0x4b0] sm:$0xff]
  %v168 = vld [vmem:[%s0 + $0x4b8] sm:$0xff]
  %v169 = vld [vmem:[%s0 + $0x4c0] sm:$0xff]
  %v170 = vld [vmem:[%s0 + $0x4c8] sm:$0xff]
  %v171 = vld [vmem:[%s0 + $0x4d0] sm:$0xff]
  %v172 = vld [vmem:[%s0 + $0x4d8] sm:$0xff]
  %v173 = vld [vmem:[%s0 + $0x4e0] sm:$0xff]
  %v174 = vld [vmem:[%s0 + $0x4e8] sm:$0xff]
  %v175 = vld [vmem:[%s0 + $0x4f0] sm:$0xff]
  %v176 = vld [vmem:[%s0 + $0x4f8] sm:$0xff]
  %v177 = vld [vmem:[%s0 + $0x500] sm:$0xff]
  %v178 = vld [vmem:[%s0 + $0x508] sm:$0xff]
  %v179 = vld [vmem:[%s0 + $0x510] sm:$0xff]
  %v180 = vld [vmem:[%s0 + $0x518] sm:$0xff]
  %v181 = vld [vmem:[%s0 + $0x520] sm:$0xff]
  %v182 = vld [vmem:[%s0 + $0x528] sm:$0xff]
  %v183 = vld [vmem:[%s0 + $0x530] sm:$0xff]
  %v184 = vld [vmem:[%s0 + $0x538] sm:$0xff]
  %v185 = vld [vmem:[%s0 + $0x540] sm:$0xff]
  %v186 = vld [vmem:[%s0 + $0x548] sm:$0xff]
  %v187 = vld [vmem:[%s0 + $0x550] sm:$0xff]
  %v188 = vld [vmem:[%s0 + $0x558] sm:$0xff]
  %v189 = vld [vmem:[%s0 + $0x560] sm:$0xff]
  %v190 = vld [vmem:[%s0 + $0x568] sm:$0xff]
  %v191 = vld [vmem:[%s0 + $0x570] sm:$0xff]
  %v192 = vld [vmem:[%s0 + $0x578] sm:$0xff]
  %v193 = vld [vmem:[%s0 + $0x580] sm:$0xff]
  %v194 = vld [vmem:[%s0 + $0x588] sm:$0xff]
  %v195 = vld [vmem:[%s0 + $0x590] sm:$0xff]
  %v196 = vld [vmem:[%s0 + $0x598] sm:$0xff]
  %v197 = vld [vmem:[%s0 + $0x5a0] sm:$0xff]
  %v198 = vld [vmem:[%s0 + $0x5a8] sm:$0xff]
  %v199 = vld [vmem:[%s0 + $0x5b0] sm:$0xff]
  %v200 = vld [vmem:[%s0 + $0x5b8] sm:$0xff]
  %v201 = vld [vmem:[%s0 + $0x5c0] sm:$0xff]
  %v202 = vld [vmem:[%s0 + $0x5c8] sm:$0xff]
  %v203 = vld [vmem:[%s0 + $0x5d0] sm:$0xff]
  %v204 = vld [vmem:[%s0 + $0x5d8] sm:$0xff]
  %v205 = vld [vmem:[%s0 + $0x5e0] sm:$0xff]
  %v206 = vld [vmem:[%s0 + $0x5e8] sm:$0xff]
  %v207 = vld [vmem:[%s0 + $0x5f0] sm:$0xff]
  %v208 = vld [vmem:[%s0 + $0x5f8] sm:$0xff]
  %v209 = vld [vmem:[%s0 + $0x600] sm:$0xff]
  %v210 = vld [vmem:[%s0 + $0x608] sm:$0xff]
  %v211 = vld [vmem:[%s0 + $0x610] sm:$0xff]
  %v212 = vld [vmem:[%s0 + $0x618] sm:$0xff]
  %v213 = vld [vmem:[%s0 + $0x620] sm:$0xff]
  %v214 = vld [vmem:[%s0 + $0x628] sm:$0xff]
  %v215 = vld [vmem:[%s0 + $0x630] sm:$0xff]
  %v216 = vld [vmem:[%s0 + $0x638] sm:$0xff]
  %v217 = vld [vmem:[%s0 + $0x640] sm:$0xff]
  %v218 = vld [vmem:[%s0 + $0x648] sm:$0xff]
  %v219 = vld [vmem:[%s0 + $0x650] sm:$0xff]
  %v220 = vld [vmem:[%s0 + $0x658] sm:$0xff]
  %v221 = vld [vmem:[%s0 + $0x660] sm:$0xff]
  %v222 = vld [vmem:[%s0 + $0x668] sm:$0xff]
  %v223 = vld [vmem:[%s0 + $0x670] sm:$0xff]
  %v224 = vld [vmem:[%s0 + $0x678] sm:$0xff]
  %v225 = vld [vmem:[%s0 + $0x680] sm:$0xff]
  %v226 = vld [vmem:[%s0 + $0x688] sm:$0xff]
  %v227 = vld [vmem:[%s0 + $0x690] sm:$0xff]
  %v228 = vld [vmem:[%s0 + $0x698] sm:$0xff]
  %v229 = vld [vmem:[%s0 + $0x6a0] sm:$0xff]
  %v230 = vld [vmem:[%s0 + $0x6a8] sm:$0xff]
  %v231 = vld [vmem:[%s0 + $0x6b0] sm:$0xff]
  %v232 = vld [vmem:[%s0 + $0x6b8] sm:$0xff]
  %v233 = vld [vmem:[%s0 + $0x6c0] sm:$0xff]
  %v234 = vld [vmem:[%s0 + $0x6c8] sm:$0xff]
  %v235 = vld [vmem:[%s0 + $0x6d0] sm:$0xff]
  %v236 = vld [vmem:[%s0 + $0x6d8] sm:$0xff]
  %v237 = vld [vmem:[%s0 + $0x6e0] sm:$0xff]
  %v238 = vld [vmem:[%s0 + $0x6e8] sm:$0xff]
  %v239 = vld [vmem:[%s0 + $0x6f0] sm:$0xff]
  %v240 = vld [vmem:[%s0 + $0x6f8] sm:$0xff]
  %v241 = vld [vmem:[%s0 + $0x700] sm:$0xff]
  %v242 = vld [vmem:[%s0 + $0x708] sm:$0xff]
  %v243 = vld [vmem:[%s0 + $0x710] sm:$0xff]
  %v244 = vld [vmem:[%s0 + $0x718] sm:$0xff]
  %v245 = vld [vmem:[%s0 + $0x720] sm:$0xff]
  %v246 = vld [vmem:[%s0 + $0x728] sm:$0xff]
  %v247 = vld [vmem:[%s0 + $0x730] sm:$0xff]
  %v248 = vld [vmem:[%s0 + $0x738] sm:$0xff]
  %v249 = vld [vmem:[%s0 + $0x740] sm:$0xff]
  %v250 = vld [vmem:[%s0 + $0x748] sm:$0xff]
  %v251 = vld [vmem:[%s0 + $0x750] sm:$0xff]
  %v252 = vld [vmem:[%s0 + $0x758] sm:$0xff]
  %v253 = vld [vmem:[%s0 + $0x760] sm:$0xff]
  %v254 = vld [vmem:[%s0 + $0x768] sm:$0xff]
  %v255 = vld [vmem:[%s0 + $0x770] sm:$0xff]
  %v256 = vld [vmem:[%s0 + $0x778] sm:$0xff]
  %v257 = vld [vmem:[%s0 + $0x780] sm:$0xff]
  %v258 = vld [vmem:[%s0 + $0x788] sm:$0xff]
  %v259 = vld [vmem:[%s0 + $0x790] sm:$0xff]
  %v260 = vld [vmem:[%s0 + $0x798] sm:$0xff]
  %v261 = vld [vmem:[%s0 + $0x7a0] sm:$0xff]
  %v262 = vld [vmem:[%s0 + $0x7a8] sm:$0xff]
  %v263 = vld [vmem:[%s0 + $0x7b0] sm:$0xff]
  %v264 = vld [vmem:[%s0 + $0x7b8] sm:$0xff]
  %v265 = vld [vmem:[%s0 + $0x7c0] sm:$0xff]
  %v266 = vld [vmem:[%s0 + $0x7c8] sm:$0xff]
  %v267 = vld [vmem:[%s0 + $0x7d0] sm:$0xff]
  %v268 = vld [vmem:[%s0 + $0x7d8] sm:$0xff]
  %v269 = vld [vmem:[%s0 + $0x7e0] sm:$0xff]
  %v270 = vld [vmem:[%s0 + $0x7e8] sm:$0xff]
  %v271 = vld [vmem:[%s0 + $0x7f0] sm:$0xff]
  %v272 = vld [vmem:[%s0 + $0x7f8] sm:$0xff]
  %v273 = vld [vmem:[%s0 + $0x800] sm:$0xff]
  %v274 = vld [vmem:[%s0 + $0x808] sm:$0xff]
  %v275 = vld [vmem:[%s0 + $0x810] sm:$0xff]
  %v276 = vld [vmem:[%s0 + $0x818] sm:$0xff]
  %v277 = vld [vmem:[%s0 + $0x820] sm:$0xff]
  %v278 = vld [vmem:[%s0 + $0x828] sm:$0xff]
  %v279 = vld [vmem:[%s0 + $0x830] sm:$0xff]
  %v280 = vld [vmem:[%s0 + $0x838] sm:$0xff]
  %v281 = vld [vmem:[%s0 + $0x840] sm:$0xff]
  %v282 = vld [vmem:[%s0 + $0x848] sm:$0xff]
  %v283 = vld [vmem:[%s0 + $0x850] sm:$0xff]
  %v284 = vld [vmem:[%s0 + $0x858] sm:$0xff]
  %v285 = vld [vmem:[%s0 + $0x860] sm:$0xff]
  %v286 = vld [vmem:[%s0 + $0x868] sm:$0xff]
  %v287 = vld [vmem:[%s0 + $0x870] sm:$0xff]
  %v288 = vld [vmem:[%s0 + $0x878] sm:$0xff]
  %v289 = vld [vmem:[%s0 + $0x880] sm:$0xff]
  %v290 = vld [vmem:[%s0 + $0x888] sm:$0xff]
  %v291 = vld [vmem:[%s0 + $0x890] sm:$0xff]
  %v292 = vld [vmem:[%s0 + $0x898] sm:$0xff]
  %v293 = vld [vmem:[%s0 + $0x8a0] sm:$0xff]
  %v294 = vld [vmem:[%s0 + $0x8a8] sm:$0xff]
  %v295 = vld [vmem:[%s0 + $0x8b0] sm:$0xff]
  %v296 = vld [vmem:[%s0 + $0x8b8] sm:$0xff]
  %v297 = vld [vmem:[%s0 + $0x8c0] sm:$0xff]
  %v298 = vld [vmem:[%s0 + $0x8c8] sm:$0xff]
  %v299 = vld [vmem:[%s0 + $0x8d0] sm:$0xff]
  %v300 = vld [vmem:[%s0 + $0x8d8] sm:$0xff]
  %v301 = vld [vmem:[%s0 + $0x8e0] sm:$0xff]
  %v302 = vld [vmem:[%s0 + $0x8e8] sm:$0xff]
  %v303 = vld [vmem:[%s0 + $0x8f0] sm:$0xff]
  %v304 = vld [vmem:[%s0 + $0x8f8] sm:$0xff]
  %v305 = vld [vmem:[%s0 + $0x900] sm:$0xff]
  %v306 = vld [vmem:[%s0 + $0x908] sm:$0xff]
  %v307 = vld [vmem:[%s0 + $0x910] sm:$0xff]
  %v308 = vld [vmem:[%s0 + $0x918] sm:$0xff]
  %v309 = vld [vmem:[%s0 + $0x920] sm:$0xff]
  %v310 = vld [vmem:[%s0 + $0x928] sm:$0xff]
  %v311 = vld [vmem:[%s0 + $0x930] sm:$0xff]
  %v312 = vld [vmem:[%s0 + $0x938] sm:$0xff]
  %v313 = vld [vmem:[%s0 + $0x940] sm:$0xff]
  %v314 = vld [vmem:[%s0 + $0x948] sm:$0xff]
  %v315 = vld [vmem:[%s0 + $0x950] sm:$0xff]
  %v316 = vld [vmem:[%s0 + $0x958] sm:$0xff]
  %v317 = vld [vmem:[%s0 + $0x960] sm:$0xff]
  %v318 = vld [vmem:[%s0 + $0x968] sm:$0xff]
  %v319 = vld [vmem:[%s0 + $0x970] sm:$0xff]
  %v320 = vld [vmem:[%s0 + $0x978] sm:$0xff]
  %v321 = vld [vmem:[%s0 + $0x980] sm:$0xff]
  %v322 = vld [vmem:[%s0 + $0x988] sm:$0xff]
  %v323 = vld [vmem:[%s0 + $0x990] sm:$0xff]
  %v324 = vld [vmem:[%s0 + $0x998] sm:$0xff]
  %v325 = vld [vmem:[%s0 + $0x9a0] sm:$0xff]
  %v326 = vld [vmem:[%s0 + $0x9a8] sm:$0xff]
  %v327 = vld [vmem:[%s0 + $0x9b0] sm:$0xff]
  %v328 = vld [vmem:[%s0 + $0x9b8] sm:$0xff]
  %v329 = vld [vmem:[%s0 + $0x9c0] sm:$0xff]
  %v330 = vld [vmem:[%s0 + $0x9c8] sm:$0xff]
  %v331 = vld [vmem:[%s0 + $0x9d0] sm:$0xff]
  %v332 = vld [vmem:[%s0 + $0x9d8] sm:$0xff]
  %v333 = vld [vmem:[%s0 + $0x9e0] sm:$0xff]
  %v334 = vld [vmem:[%s0 + $0x9e8] sm:$0xff]
  %v335 = vld [vmem:[%s0 + $0x9f0] sm:$0xff]
  %v336 = vld [vmem:[%s0 + $0x9f8] sm:$0xff]
  %v337 = vld [vmem:[%s1] sm:$0xff]
  %v338 = vld [vmem:[%s1 + $0x8] sm:$0xff]
  %v339 = vld [vmem:[%s1 + $0x10] sm:$0xff]
  %v340 = vld [vmem:[%s1 + $0x18] sm:$0xff]
  %v341 = vld [vmem:[%s1 + $0x20] sm:$0xff]
  %v342 = vld [vmem:[%s1 + $0x28] sm:$0xff]
  %v343 = vld [vmem:[%s1 + $0x30] sm:$0xff]
  %v344 = vld [vmem:[%s1 + $0x38] sm:$0xff]
  %v345 = vld [vmem:[%s1 + $0x40] sm:$0xff]
  %v346 = vld [vmem:[%s1 + $0x48] sm:$0xff]
  %v347 = vld [vmem:[%s1 + $0x50] sm:$0xff]
  %v348 = vld [vmem:[%s1 + $0x58] sm:$0xff]
  %v349 = vld [vmem:[%s1 + $0x60] sm:$0xff]
  %v350 = vld [vmem:[%s1 + $0x68] sm:$0xff]
  %v351 = vld [vmem:[%s1 + $0x70] sm:$0xff]
  %v352 = vld [vmem:[%s1 + $0x78] sm:$0xff]
  %v353 = vld [vmem:[%s1 + $0x80] sm:$0xff]
  %v354 = vld [vmem:[%s1 + $0x88] sm:$0xff]
  %v355 = vld [vmem:[%s1 + $0x90] sm:$0xff]
  %v356 = vld [vmem:[%s1 + $0x98] sm:$0xff]
  %v357 = vld [vmem:[%s1 + $0xa0] sm:$0xff]
  %v358 = vld [vmem:[%s1 + $0xa8] sm:$0xff]
  %v359 = vld [vmem:[%s1 + $0xb0] sm:$0xff]
  %v360 = vld [vmem:[%s1 + $0xb8] sm:$0xff]
  %v361 = vld [vmem:[%s1 + $0xc0] sm:$0xff]
  %v362 = vld [vmem:[%s1 + $0xc8] sm:$0xff]
  %v363 = vld [vmem:[%s1 + $0xd0] sm:$0xff]
  %v364 = vld [vmem:[%s1 + $0xd8] sm:$0xff]
  %v365 = vld [vmem:[%s1 + $0xe0] sm:$0xff]
  %v366 = vld [vmem:[%s1 + $0xe8] sm:$0xff]
  %v367 = vld [vmem:[%s1 + $0xf0] sm:$0xff]
  %v368 = vld [vmem:[%s1 + $0xf8] sm:$0xff]
  %v369 = vld [vmem:[%s1 + $0x100] sm:$0xff]
  %v370 = vld [vmem:[%s1 + $0x108] sm:$0xff]
  %v371 = vld [vmem:[%s1 + $0x110] sm:$0xff]
  %v372 = vld [vmem:[%s1 + $0x118] sm:$0xff]
  %v373 = vld [vmem:[%s1 + $0x120] sm:$0xff]
  %v374 = vld [vmem:[%s1 + $0x128] sm:$0xff]
  %v375 = vld [vmem:[%s1 + $0x130] sm:$0xff]
  %v376 = vld [vmem:[%s1 + $0x138] sm:$0xff]
  %v377 = vld [vmem:[%s1 + $0x140] sm:$0xff]
  %v378 = vld [vmem:[%s1 + $0x148] sm:$0xff]
  %v379 = vld [vmem:[%s1 + $0x150] sm:$0xff]
  %v380 = vld [vmem:[%s1 + $0x158] sm:$0xff]
  %v381 = vld [vmem:[%s1 + $0x160] sm:$0xff]
  %v382 = vld [vmem:[%s1 + $0x168] sm:$0xff]
  %v383 = vld [vmem:[%s1 + $0x170] sm:$0xff]
  %v384 = vld [vmem:[%s1 + $0x178] sm:$0xff]
  %v385 = vld [vmem:[%s1 + $0x180] sm:$0xff]
  %v386 = vld [vmem:[%s1 + $0x188] sm:$0xff]
  %v387 = vld [vmem:[%s1 + $0x190] sm:$0xff]
  %v388 = vld [vmem:[%s1 + $0x198] sm:$0xff]
  %v389 = vld [vmem:[%s1 + $0x1a0] sm:$0xff]
  %v390 = vld [vmem:[%s1 + $0x1a8] sm:$0xff]
  %v391 = vld [vmem:[%s1 + $0x1b0] sm:$0xff]
  %v392 = vld [vmem:[%s1 + $0x1b8] sm:$0xff]
  %v393 = vld [vmem:[%s1 + $0x1c0] sm:$0xff]
  %v394 = vld [vmem:[%s1 + $0x1c8] sm:$0xff]
  %v395 = vld [vmem:[%s1 + $0x1d0] sm:$0xff]
  %v396 = vld [vmem:[%s1 + $0x1d8] sm:$0xff]
  %v397 = vld [vmem:[%s1 + $0x1e0] sm:$0xff]
  %v398 = vld [vmem:[%s1 + $0x1e8] sm:$0xff]
  %v399 = vld [vmem:[%s1 + $0x1f0] sm:$0xff]
  %v400 = vld [vmem:[%s1 + $0x1f8] sm:$0xff]
  %v401 = vld [vmem:[%s1 + $0x200] sm:$0xff]
  %v402 = vld [vmem:[%s1 + $0x208] sm:$0xff]
  %v403 = vld [vmem:[%s1 + $0x210] sm:$0xff]
  %v404 = vld [vmem:[%s1 + $0x218] sm:$0xf]
  %vm405 = vcmask 228352
  %v407 = vsel %vm405, %v21, 0
  %v410 = vsel %vm405, %v26, 0
  %v413 = vsel %vm405, %v31, 0
  %v416 = vsel %vm405, %v36, 0
  %v419 = vsel %vm405, %v41, 0
  %v422 = vsel %vm405, %v46, 0
  %v425 = vsel %vm405, %v51, 0
  %v428 = vsel %vm405, %v56, 0
  %v431 = vsel %vm405, %v61, 0
  %v434 = vsel %vm405, %v66, 0
  %v437 = vsel %vm405, %v71, 0
  %v440 = vsel %vm405, %v76, 0
  %v443 = vsel %vm405, %v81, 0
  %v446 = vsel %vm405, %v86, 0
  %v449 = vsel %vm405, %v91, 0
  %v452 = vsel %vm405, %v96, 0
  %v455 = vsel %vm405, %v101, 0
  %v458 = vsel %vm405, %v106, 0
  %v461 = vsel %vm405, %v111, 0
  %v464 = vsel %vm405, %v116, 0
  %v467 = vsel %vm405, %v121, 0
  %v470 = vsel %vm405, %v126, 0
  %v473 = vsel %vm405, %v131, 0
  %v476 = vsel %vm405, %v136, 0
  %v479 = vsel %vm405, %v141, 0
  %v482 = vsel %vm405, %v146, 0
  %v485 = vsel %vm405, %v151, 0
  %v488 = vsel %vm405, %v156, 0
  %v491 = vsel %vm405, %v161, 0
  %v494 = vsel %vm405, %v166, 0
  %v497 = vsel %vm405, %v171, 0
  %v500 = vsel %vm405, %v176, 0
  %v503 = vsel %vm405, %v181, 0
  %v506 = vsel %vm405, %v186, 0
  %v509 = vsel %vm405, %v191, 0
  %v512 = vsel %vm405, %v196, 0
  %v515 = vsel %vm405, %v201, 0
  %v518 = vsel %vm405, %v206, 0
  %v521 = vsel %vm405, %v211, 0
  %v524 = vsel %vm405, %v216, 0
  %v527 = vsel %vm405, %v221, 0
  %v530 = vsel %vm405, %v226, 0
  %v533 = vsel %vm405, %v231, 0
  %v536 = vsel %vm405, %v236, 0
  %v539 = vsel %vm405, %v241, 0
  %v542 = vsel %vm405, %v246, 0
  %v545 = vsel %vm405, %v251, 0
  %v548 = vsel %vm405, %v256, 0
  %v551 = vsel %vm405, %v261, 0
  %v554 = vsel %vm405, %v266, 0
  %v557 = vsel %vm405, %v271, 0
  %v560 = vsel %vm405, %v276, 0
  %v563 = vsel %vm405, %v281, 0
  %v566 = vsel %vm405, %v286, 0
  %v569 = vsel %vm405, %v291, 0
  %v572 = vsel %vm405, %v296, 0
  %v575 = vsel %vm405, %v301, 0
  %v578 = vsel %vm405, %v306, 0
  %v581 = vsel %vm405, %v311, 0
  %v584 = vsel %vm405, %v316, 0
  %v587 = vsel %vm405, %v321, 0
  %v590 = vsel %vm405, %v326, 0
  %v593 = vsel %vm405, %v331, 0
  %v596 = vsel %vm405, %v336, 0
  %vm598 = vcmask 1043456
  %v600 = vsel %vm598, %v404, 0
  %602 = vmatprep.subr.mxu0 0.0
  %603 = vmatpush1.msra.mxu0 %v352
  %604 = vmatprep.subr.mxu0 0.0
  %605 = vmatpush1.msra.mxu0 %v351
  %606 = vmatprep.subr.mxu0 0.0
  %607 = vmatpush1.msra.mxu0 %v350
  %608 = vmatprep.subr.mxu0 0.0
  %609 = vmatpush1.msra.mxu0 %v349
  %610 = vmatprep.subr.mxu0 0.0
  %611 = vmatpush1.msra.mxu0 %v348
  %612 = vmatprep.subr.mxu0 0.0
  %613 = vmatpush1.msra.mxu0 %v347
  %614 = vmatprep.subr.mxu0 0.0
  %615 = vmatpush1.msra.mxu0 %v346
  %616 = vmatprep.subr.mxu0 0.0
  %617 = vmatpush1.msra.mxu0 %v345
  %618 = vmatprep.subr.mxu0 0.0
  %619 = vmatpush1.msra.mxu0 %v344
  %620 = vmatprep.subr.mxu0 0.0
  %621 = vmatpush1.msra.mxu0 %v343
  %622 = vmatprep.subr.mxu0 0.0
  %623 = vmatpush1.msra.mxu0 %v342
  %624 = vmatprep.subr.mxu0 0.0
  %625 = vmatpush1.msra.mxu0 %v341
  %626 = vmatprep.subr.mxu0 0.0
  %627 = vmatpush1.msra.mxu0 %v340
  %628 = vmatprep.subr.mxu0 0.0
  %629 = vmatpush1.msra.mxu0 %v339
  %630 = vmatprep.subr.mxu0 0.0
  %631 = vmatpush1.msra.mxu0 %v338
  %632 = vmatprep.subr.mxu0 0.0
  %633 = vmatpush1.msra.mxu0 %v337
  %634 = vmatprep.subr.mxu0 0.0
  %635 = vmatpush2.msra.mxu0 %v368
  %636 = vmatprep.subr.mxu0 0.0
  %637 = vmatpush2.msra.mxu0 %v367
  %638 = vmatprep.subr.mxu0 0.0
  %639 = vmatpush2.msra.mxu0 %v366
  %640 = vmatprep.subr.mxu0 0.0
  %641 = vmatpush2.msra.mxu0 %v365
  %642 = vmatprep.subr.mxu0 0.0
  %643 = vmatpush2.msra.mxu0 %v364
  %644 = vmatprep.subr.mxu0 0.0
  %645 = vmatpush2.msra.mxu0 %v363
  %646 = vmatprep.subr.mxu0 0.0
  %647 = vmatpush2.msra.mxu0 %v362
  %648 = vmatprep.subr.mxu0 0.0
  %649 = vmatpush2.msra.mxu0 %v361
  %650 = vmatprep.subr.mxu0 0.0
  %651 = vmatpush2.msra.mxu0 %v360
  %652 = vmatprep.subr.mxu0 0.0
  %653 = vmatpush2.msra.mxu0 %v359
  %654 = vmatprep.subr.mxu0 0.0
  %655 = vmatpush2.msra.mxu0 %v358
  %656 = vmatprep.subr.mxu0 0.0
  %657 = vmatpush2.msra.mxu0 %v357
  %658 = vmatprep.subr.mxu0 0.0
  %659 = vmatpush2.msra.mxu0 %v356
  %660 = vmatprep.subr.mxu0 0.0
  %661 = vmatpush2.msra.mxu0 %v355
  %662 = vmatprep.subr.mxu0 0.0
  %663 = vmatpush2.msra.mxu0 %v354
  %664 = vmatprep.subr.mxu0 0.0
  %665 = vmatpush2.msra.mxu0 %v353
  %666 = vmatprep.mubr.f32.mxu0 %v18
  %667 = vmatmul.mubr.f32.gmra.mxu0 %v17
  %v668 = vpop.f32.mrf.mxu0
  %v669 = vadd.f32 0.0, %v668
  %v670 = vpop.f32.mrf.mxu0
  %671 = vmatprep.mubr.f32.mxu0 %v23
  %672 = vmatmul.mubr.f32.gmra.mxu0 %v22
  %v673 = vpop.f32.mrf.mxu0
  %v674 = vadd.f32 0.0, %v673
  %v675 = vpop.f32.mrf.mxu0
  %676 = vmatprep.mubr.f32.mxu0 %v28
  %677 = vmatmul.mubr.f32.gmra.mxu0 %v27
  %v678 = vpop.f32.mrf.mxu0
  %v679 = vadd.f32 0.0, %v678
  %v680 = vpop.f32.mrf.mxu0
  %681 = vmatprep.mubr.f32.mxu0 %v33
  %682 = vmatmul.mubr.f32.gmra.mxu0 %v32
  %v683 = vpop.f32.mrf.mxu0
  %v684 = vadd.f32 0.0, %v683
  %v685 = vpop.f32.mrf.mxu0
  %686 = vmatprep.mubr.f32.mxu0 %v38
  %687 = vmatmul.mubr.f32.gmra.mxu0 %v37
  %v688 = vpop.f32.mrf.mxu0
  %v689 = vadd.f32 0.0, %v688
  %v690 = vpop.f32.mrf.mxu0
  %691 = vmatprep.mubr.f32.mxu0 %v43
  %692 = vmatmul.mubr.f32.gmra.mxu0 %v42
  %v693 = vpop.f32.mrf.mxu0
  %v694 = vadd.f32 0.0, %v693
  %v695 = vpop.f32.mrf.mxu0
  %696 = vmatprep.mubr.f32.mxu0 %v48
  %697 = vmatmul.mubr.f32.gmra.mxu0 %v47
  %v698 = vpop.f32.mrf.mxu0
  %v699 = vadd.f32 0.0, %v698
  %v700 = vpop.f32.mrf.mxu0
  %701 = vmatprep.mubr.f32.mxu0 %v53
  %702 = vmatmul.mubr.f32.gmra.mxu0 %v52
  %v703 = vpop.f32.mrf.mxu0
  %v704 = vadd.f32 0.0, %v703
  %v705 = vpop.f32.mrf.mxu0
  %706 = vmatprep.mubr.f32.mxu0 %v58
  %707 = vmatmul.mubr.f32.gmra.mxu0 %v57
  %v708 = vpop.f32.mrf.mxu0
  %v709 = vadd.f32 0.0, %v708
  %v710 = vpop.f32.mrf.mxu0
  %711 = vmatprep.mubr.f32.mxu0 %v63
  %712 = vmatmul.mubr.f32.gmra.mxu0 %v62
  %v713 = vpop.f32.mrf.mxu0
  %v714 = vadd.f32 0.0, %v713
  %v715 = vpop.f32.mrf.mxu0
  %716 = vmatprep.mubr.f32.mxu0 %v68
  %717 = vmatmul.mubr.f32.gmra.mxu0 %v67
  %v718 = vpop.f32.mrf.mxu0
  %v719 = vadd.f32 0.0, %v718
  %v720 = vpop.f32.mrf.mxu0
  %721 = vmatprep.mubr.f32.mxu0 %v73
  %722 = vmatmul.mubr.f32.gmra.mxu0 %v72
  %v723 = vpop.f32.mrf.mxu0
  %v724 = vadd.f32 0.0, %v723
  %v725 = vpop.f32.mrf.mxu0
  %726 = vmatprep.mubr.f32.mxu0 %v78
  %727 = vmatmul.mubr.f32.gmra.mxu0 %v77
  %v728 = vpop.f32.mrf.mxu0
  %v729 = vadd.f32 0.0, %v728
  %v730 = vpop.f32.mrf.mxu0
  %731 = vmatprep.mubr.f32.mxu0 %v83
  %732 = vmatmul.mubr.f32.gmra.mxu0 %v82
  %v733 = vpop.f32.mrf.mxu0
  %v734 = vadd.f32 0.0, %v733
  %v735 = vpop.f32.mrf.mxu0
  %736 = vmatprep.mubr.f32.mxu0 %v88
  %737 = vmatmul.mubr.f32.gmra.mxu0 %v87
  %v738 = vpop.f32.mrf.mxu0
  %v739 = vadd.f32 0.0, %v738
  %v740 = vpop.f32.mrf.mxu0
  %741 = vmatprep.mubr.f32.mxu0 %v93
  %742 = vmatmul.mubr.f32.gmra.mxu0 %v92
  %v743 = vpop.f32.mrf.mxu0
  %v744 = vadd.f32 0.0, %v743
  %v745 = vpop.f32.mrf.mxu0
  %746 = vmatprep.mubr.f32.mxu0 %v98
  %747 = vmatmul.mubr.f32.gmra.mxu0 %v97
  %v748 = vpop.f32.mrf.mxu0
  %v749 = vadd.f32 0.0, %v748
  %v750 = vpop.f32.mrf.mxu0
  %751 = vmatprep.mubr.f32.mxu0 %v103
  %752 = vmatmul.mubr.f32.gmra.mxu0 %v102
  %v753 = vpop.f32.mrf.mxu0
  %v754 = vadd.f32 0.0, %v753
  %v755 = vpop.f32.mrf.mxu0
  %756 = vmatprep.mubr.f32.mxu0 %v108
  %757 = vmatmul.mubr.f32.gmra.mxu0 %v107
  %v758 = vpop.f32.mrf.mxu0
  %v759 = vadd.f32 0.0, %v758
  %v760 = vpop.f32.mrf.mxu0
  %761 = vmatprep.mubr.f32.mxu0 %v113
  %762 = vmatmul.mubr.f32.gmra.mxu0 %v112
  %v763 = vpop.f32.mrf.mxu0
  %v764 = vadd.f32 0.0, %v763
  %v765 = vpop.f32.mrf.mxu0
  %766 = vmatprep.mubr.f32.mxu0 %v118
  %767 = vmatmul.mubr.f32.gmra.mxu0 %v117
  %v768 = vpop.f32.mrf.mxu0
  %v769 = vadd.f32 0.0, %v768
  %v770 = vpop.f32.mrf.mxu0
  %771 = vmatprep.mubr.f32.mxu0 %v123
  %772 = vmatmul.mubr.f32.gmra.mxu0 %v122
  %v773 = vpop.f32.mrf.mxu0
  %v774 = vadd.f32 0.0, %v773
  %v775 = vpop.f32.mrf.mxu0
  %776 = vmatprep.mubr.f32.mxu0 %v128
  %777 = vmatmul.mubr.f32.gmra.mxu0 %v127
  %v778 = vpop.f32.mrf.mxu0
  %v779 = vadd.f32 0.0, %v778
  %v780 = vpop.f32.mrf.mxu0
  %781 = vmatprep.mubr.f32.mxu0 %v133
  %782 = vmatmul.mubr.f32.gmra.mxu0 %v132
  %v783 = vpop.f32.mrf.mxu0
  %v784 = vadd.f32 0.0, %v783
  %v785 = vpop.f32.mrf.mxu0
  %786 = vmatprep.mubr.f32.mxu0 %v138
  %787 = vmatmul.mubr.f32.gmra.mxu0 %v137
  %v788 = vpop.f32.mrf.mxu0
  %v789 = vadd.f32 0.0, %v788
  %v790 = vpop.f32.mrf.mxu0
  %791 = vmatprep.mubr.f32.mxu0 %v143
  %792 = vmatmul.mubr.f32.gmra.mxu0 %v142
  %v793 = vpop.f32.mrf.mxu0
  %v794 = vadd.f32 0.0, %v793
  %v795 = vpop.f32.mrf.mxu0
  %796 = vmatprep.mubr.f32.mxu0 %v148
  %797 = vmatmul.mubr.f32.gmra.mxu0 %v147
  %v798 = vpop.f32.mrf.mxu0
  %v799 = vadd.f32 0.0, %v798
  %v800 = vpop.f32.mrf.mxu0
  %801 = vmatprep.mubr.f32.mxu0 %v153
  %802 = vmatmul.mubr.f32.gmra.mxu0 %v152
  %v803 = vpop.f32.mrf.mxu0
  %v804 = vadd.f32 0.0, %v803
  %v805 = vpop.f32.mrf.mxu0
  %806 = vmatprep.mubr.f32.mxu0 %v158
  %807 = vmatmul.mubr.f32.gmra.mxu0 %v157
  %v808 = vpop.f32.mrf.mxu0
  %v809 = vadd.f32 0.0, %v808
  %v810 = vpop.f32.mrf.mxu0
  %811 = vmatprep.mubr.f32.mxu0 %v163
  %812 = vmatmul.mubr.f32.gmra.mxu0 %v162
  %v813 = vpop.f32.mrf.mxu0
  %v814 = vadd.f32 0.0, %v813
  %v815 = vpop.f32.mrf.mxu0
  %816 = vmatprep.mubr.f32.mxu0 %v168
  %817 = vmatmul.mubr.f32.gmra.mxu0 %v167
  %v818 = vpop.f32.mrf.mxu0
  %v819 = vadd.f32 0.0, %v818
  %v820 = vpop.f32.mrf.mxu0
  %821 = vmatprep.mubr.f32.mxu0 %v173
  %822 = vmatmul.mubr.f32.gmra.mxu0 %v172
  %v823 = vpop.f32.mrf.mxu0
  %v824 = vadd.f32 0.0, %v823
  %v825 = vpop.f32.mrf.mxu0
  %826 = vmatprep.mubr.f32.mxu0 %v178
  %827 = vmatmul.mubr.f32.gmra.mxu0 %v177
  %v828 = vpop.f32.mrf.mxu0
  %v829 = vadd.f32 0.0, %v828
  %v830 = vpop.f32.mrf.mxu0
  %831 = vmatprep.mubr.f32.mxu0 %v183
  %832 = vmatmul.mubr.f32.gmra.mxu0 %v182
  %v833 = vpop.f32.mrf.mxu0
  %v834 = vadd.f32 0.0, %v833
  %v835 = vpop.f32.mrf.mxu0
  %836 = vmatprep.mubr.f32.mxu0 %v188
  %837 = vmatmul.mubr.f32.gmra.mxu0 %v187
  %v838 = vpop.f32.mrf.mxu0
  %v839 = vadd.f32 0.0, %v838
  %v840 = vpop.f32.mrf.mxu0
  %841 = vmatprep.mubr.f32.mxu0 %v193
  %842 = vmatmul.mubr.f32.gmra.mxu0 %v192
  %v843 = vpop.f32.mrf.mxu0
  %v844 = vadd.f32 0.0, %v843
  %v845 = vpop.f32.mrf.mxu0
  %846 = vmatprep.mubr.f32.mxu0 %v198
  %847 = vmatmul.mubr.f32.gmra.mxu0 %v197
  %v848 = vpop.f32.mrf.mxu0
  %v849 = vadd.f32 0.0, %v848
  %v850 = vpop.f32.mrf.mxu0
  %851 = vmatprep.mubr.f32.mxu0 %v203
  %852 = vmatmul.mubr.f32.gmra.mxu0 %v202
  %v853 = vpop.f32.mrf.mxu0
  %v854 = vadd.f32 0.0, %v853
  %v855 = vpop.f32.mrf.mxu0
  %856 = vmatprep.mubr.f32.mxu0 %v208
  %857 = vmatmul.mubr.f32.gmra.mxu0 %v207
  %v858 = vpop.f32.mrf.mxu0
  %v859 = vadd.f32 0.0, %v858
  %v860 = vpop.f32.mrf.mxu0
  %861 = vmatprep.mubr.f32.mxu0 %v213
  %862 = vmatmul.mubr.f32.gmra.mxu0 %v212
  %v863 = vpop.f32.mrf.mxu0
  %v864 = vadd.f32 0.0, %v863
  %v865 = vpop.f32.mrf.mxu0
  %866 = vmatprep.mubr.f32.mxu0 %v218
  %867 = vmatmul.mubr.f32.gmra.mxu0 %v217
  %v868 = vpop.f32.mrf.mxu0
  %v869 = vadd.f32 0.0, %v868
  %v870 = vpop.f32.mrf.mxu0
  %871 = vmatprep.mubr.f32.mxu0 %v223
  %872 = vmatmul.mubr.f32.gmra.mxu0 %v222
  %v873 = vpop.f32.mrf.mxu0
  %v874 = vadd.f32 0.0, %v873
  %v875 = vpop.f32.mrf.mxu0
  %876 = vmatprep.mubr.f32.mxu0 %v228
  %877 = vmatmul.mubr.f32.gmra.mxu0 %v227
  %v878 = vpop.f32.mrf.mxu0
  %v879 = vadd.f32 0.0, %v878
  %v880 = vpop.f32.mrf.mxu0
  %881 = vmatprep.mubr.f32.mxu0 %v233
  %882 = vmatmul.mubr.f32.gmra.mxu0 %v232
  %v883 = vpop.f32.mrf.mxu0
  %v884 = vadd.f32 0.0, %v883
  %v885 = vpop.f32.mrf.mxu0
  %886 = vmatprep.mubr.f32.mxu0 %v238
  %887 = vmatmul.mubr.f32.gmra.mxu0 %v237
  %v888 = vpop.f32.mrf.mxu0
  %v889 = vadd.f32 0.0, %v888
  %v890 = vpop.f32.mrf.mxu0
  %891 = vmatprep.mubr.f32.mxu0 %v243
  %892 = vmatmul.mubr.f32.gmra.mxu0 %v242
  %v893 = vpop.f32.mrf.mxu0
  %v894 = vadd.f32 0.0, %v893
  %v895 = vpop.f32.mrf.mxu0
  %896 = vmatprep.mubr.f32.mxu0 %v248
  %897 = vmatmul.mubr.f32.gmra.mxu0 %v247
  %v898 = vpop.f32.mrf.mxu0
  %v899 = vadd.f32 0.0, %v898
  %v900 = vpop.f32.mrf.mxu0
  %901 = vmatprep.mubr.f32.mxu0 %v253
  %902 = vmatmul.mubr.f32.gmra.mxu0 %v252
  %v903 = vpop.f32.mrf.mxu0
  %v904 = vadd.f32 0.0, %v903
  %v905 = vpop.f32.mrf.mxu0
  %906 = vmatprep.mubr.f32.mxu0 %v258
  %907 = vmatmul.mubr.f32.gmra.mxu0 %v257
  %v908 = vpop.f32.mrf.mxu0
  %v909 = vadd.f32 0.0, %v908
  %v910 = vpop.f32.mrf.mxu0
  %911 = vmatprep.mubr.f32.mxu0 %v263
  %912 = vmatmul.mubr.f32.gmra.mxu0 %v262
  %v913 = vpop.f32.mrf.mxu0
  %v914 = vadd.f32 0.0, %v913
  %v915 = vpop.f32.mrf.mxu0
  %916 = vmatprep.mubr.f32.mxu0 %v268
  %917 = vmatmul.mubr.f32.gmra.mxu0 %v267
  %v918 = vpop.f32.mrf.mxu0
  %v919 = vadd.f32 0.0, %v918
  %v920 = vpop.f32.mrf.mxu0
  %921 = vmatprep.mubr.f32.mxu0 %v273
  %922 = vmatmul.mubr.f32.gmra.mxu0 %v272
  %v923 = vpop.f32.mrf.mxu0
  %v924 = vadd.f32 0.0, %v923
  %v925 = vpop.f32.mrf.mxu0
  %926 = vmatprep.mubr.f32.mxu0 %v278
  %927 = vmatmul.mubr.f32.gmra.mxu0 %v277
  %v928 = vpop.f32.mrf.mxu0
  %v929 = vadd.f32 0.0, %v928
  %v930 = vpop.f32.mrf.mxu0
  %931 = vmatprep.mubr.f32.mxu0 %v283
  %932 = vmatmul.mubr.f32.gmra.mxu0 %v282
  %v933 = vpop.f32.mrf.mxu0
  %v934 = vadd.f32 0.0, %v933
  %v935 = vpop.f32.mrf.mxu0
  %936 = vmatprep.mubr.f32.mxu0 %v288
  %937 = vmatmul.mubr.f32.gmra.mxu0 %v287
  %v938 = vpop.f32.mrf.mxu0
  %v939 = vadd.f32 0.0, %v938
  %v940 = vpop.f32.mrf.mxu0
  %941 = vmatprep.mubr.f32.mxu0 %v293
  %942 = vmatmul.mubr.f32.gmra.mxu0 %v292
  %v943 = vpop.f32.mrf.mxu0
  %v944 = vadd.f32 0.0, %v943
  %v945 = vpop.f32.mrf.mxu0
  %946 = vmatprep.mubr.f32.mxu0 %v298
  %947 = vmatmul.mubr.f32.gmra.mxu0 %v297
  %v948 = vpop.f32.mrf.mxu0
  %v949 = vadd.f32 0.0, %v948
  %v950 = vpop.f32.mrf.mxu0
  %951 = vmatprep.mubr.f32.mxu0 %v303
  %952 = vmatmul.mubr.f32.gmra.mxu0 %v302
  %v953 = vpop.f32.mrf.mxu0
  %v954 = vadd.f32 0.0, %v953
  %v955 = vpop.f32.mrf.mxu0
  %956 = vmatprep.mubr.f32.mxu0 %v308
  %957 = vmatmul.mubr.f32.gmra.mxu0 %v307
  %v958 = vpop.f32.mrf.mxu0
  %v959 = vadd.f32 0.0, %v958
  %v960 = vpop.f32.mrf.mxu0
  %961 = vmatprep.mubr.f32.mxu0 %v313
  %962 = vmatmul.mubr.f32.gmra.mxu0 %v312
  %v963 = vpop.f32.mrf.mxu0
  %v964 = vadd.f32 0.0, %v963
  %v965 = vpop.f32.mrf.mxu0
  %966 = vmatprep.mubr.f32.mxu0 %v318
  %967 = vmatmul.mubr.f32.gmra.mxu0 %v317
  %v968 = vpop.f32.mrf.mxu0
  %v969 = vadd.f32 0.0, %v968
  %v970 = vpop.f32.mrf.mxu0
  %971 = vmatprep.mubr.f32.mxu0 %v323
  %972 = vmatmul.mubr.f32.gmra.mxu0 %v322
  %v973 = vpop.f32.mrf.mxu0
  %v974 = vadd.f32 0.0, %v973
  %v975 = vpop.f32.mrf.mxu0
  %976 = vmatprep.mubr.f32.mxu0 %v328
  %977 = vmatmul.mubr.f32.gmra.mxu0 %v327
  %v978 = vpop.f32.mrf.mxu0
  %v979 = vadd.f32 0.0, %v978
  %v980 = vpop.f32.mrf.mxu0
  %981 = vmatprep.mubr.f32.mxu0 %v333
  %982 = vmatmul.mubr.f32.gmra.mxu0 %v332
  %v983 = vpop.f32.mrf.mxu0
  %v984 = vadd.f32 0.0, %v983
  %v985 = vpop.f32.mrf.mxu0
  %986 = vdwg.mxu0
  %987 = vmatprep.subr.mxu0 0.0
  %988 = vmatpush1.msra.mxu0 %v384
  %989 = vmatprep.subr.mxu0 0.0
  %990 = vmatpush1.msra.mxu0 %v383
  %991 = vmatprep.subr.mxu0 0.0
  %992 = vmatpush1.msra.mxu0 %v382
  %993 = vmatprep.subr.mxu0 0.0
  %994 = vmatpush1.msra.mxu0 %v381
  %995 = vmatprep.subr.mxu0 0.0
  %996 = vmatpush1.msra.mxu0 %v380
  %997 = vmatprep.subr.mxu0 0.0
  %998 = vmatpush1.msra.mxu0 %v379
  %999 = vmatprep.subr.mxu0 0.0
  %1000 = vmatpush1.msra.mxu0 %v378
  %1001 = vmatprep.subr.mxu0 0.0
  %1002 = vmatpush1.msra.mxu0 %v377
  %1003 = vmatprep.subr.mxu0 0.0
  %1004 = vmatpush1.msra.mxu0 %v376
  %1005 = vmatprep.subr.mxu0 0.0
  %1006 = vmatpush1.msra.mxu0 %v375
  %1007 = vmatprep.subr.mxu0 0.0
  %1008 = vmatpush1.msra.mxu0 %v374
  %1009 = vmatprep.subr.mxu0 0.0
  %1010 = vmatpush1.msra.mxu0 %v373
  %1011 = vmatprep.subr.mxu0 0.0
  %1012 = vmatpush1.msra.mxu0 %v372
  %1013 = vmatprep.subr.mxu0 0.0
  %1014 = vmatpush1.msra.mxu0 %v371
  %1015 = vmatprep.subr.mxu0 0.0
  %1016 = vmatpush1.msra.mxu0 %v370
  %1017 = vmatprep.subr.mxu0 0.0
  %1018 = vmatpush1.msra.mxu0 %v369
  %1019 = vmatprep.subr.mxu0 0.0
  %1020 = vmatpush2.msra.mxu0 %v400
  %1021 = vmatprep.subr.mxu0 0.0
  %1022 = vmatpush2.msra.mxu0 %v399
  %1023 = vmatprep.subr.mxu0 0.0
  %1024 = vmatpush2.msra.mxu0 %v398
  %1025 = vmatprep.subr.mxu0 0.0
  %1026 = vmatpush2.msra.mxu0 %v397
  %1027 = vmatprep.subr.mxu0 0.0
  %1028 = vmatpush2.msra.mxu0 %v396
  %1029 = vmatprep.subr.mxu0 0.0
  %1030 = vmatpush2.msra.mxu0 %v395
  %1031 = vmatprep.subr.mxu0 0.0
  %1032 = vmatpush2.msra.mxu0 %v394
  %1033 = vmatprep.subr.mxu0 0.0
  %1034 = vmatpush2.msra.mxu0 %v393
  %1035 = vmatprep.subr.mxu0 0.0
  %1036 = vmatpush2.msra.mxu0 %v392
  %1037 = vmatprep.subr.mxu0 0.0
  %1038 = vmatpush2.msra.mxu0 %v391
  %1039 = vmatprep.subr.mxu0 0.0
  %1040 = vmatpush2.msra.mxu0 %v390
  %1041 = vmatprep.subr.mxu0 0.0
  %1042 = vmatpush2.msra.mxu0 %v389
  %1043 = vmatprep.subr.mxu0 0.0
  %1044 = vmatpush2.msra.mxu0 %v388
  %1045 = vmatprep.subr.mxu0 0.0
  %1046 = vmatpush2.msra.mxu0 %v387
  %1047 = vmatprep.subr.mxu0 0.0
  %1048 = vmatpush2.msra.mxu0 %v386
  %1049 = vmatprep.subr.mxu0 0.0
  %1050 = vmatpush2.msra.mxu0 %v385
  %1051 = vmatprep.mubr.f32.mxu0 %v20
  %1052 = vmatmul.mubr.f32.gmra.mxu0 %v19
  %v1053 = vpop.f32.mrf.mxu0
  %v1054 = vadd.f32 %v669, %v1053
  %v1055 = vpop.f32.mrf.mxu0
  %1056 = vmatprep.mubr.f32.mxu0 %v25
  %1057 = vmatmul.mubr.f32.gmra.mxu0 %v24
  %v1058 = vpop.f32.mrf.mxu0
  %v1059 = vadd.f32 %v674, %v1058
  %v1060 = vpop.f32.mrf.mxu0
  %1061 = vmatprep.mubr.f32.mxu0 %v30
  %1062 = vmatmul.mubr.f32.gmra.mxu0 %v29
  %v1063 = vpop.f32.mrf.mxu0
  %v1064 = vadd.f32 %v679, %v1063
  %v1065 = vpop.f32.mrf.mxu0
  %1066 = vmatprep.mubr.f32.mxu0 %v35
  %1067 = vmatmul.mubr.f32.gmra.mxu0 %v34
  %v1068 = vpop.f32.mrf.mxu0
  %v1069 = vadd.f32 %v684, %v1068
  %v1070 = vpop.f32.mrf.mxu0
  %1071 = vmatprep.mubr.f32.mxu0 %v40
  %1072 = vmatmul.mubr.f32.gmra.mxu0 %v39
  %v1073 = vpop.f32.mrf.mxu0
  %v1074 = vadd.f32 %v689, %v1073
  %v1075 = vpop.f32.mrf.mxu0
  %1076 = vmatprep.mubr.f32.mxu0 %v45
  %1077 = vmatmul.mubr.f32.gmra.mxu0 %v44
  %v1078 = vpop.f32.mrf.mxu0
  %v1079 = vadd.f32 %v694, %v1078
  %v1080 = vpop.f32.mrf.mxu0
  %1081 = vmatprep.mubr.f32.mxu0 %v50
  %1082 = vmatmul.mubr.f32.gmra.mxu0 %v49
  %v1083 = vpop.f32.mrf.mxu0
  %v1084 = vadd.f32 %v699, %v1083
  %v1085 = vpop.f32.mrf.mxu0
  %1086 = vmatprep.mubr.f32.mxu0 %v55
  %1087 = vmatmul.mubr.f32.gmra.mxu0 %v54
  %v1088 = vpop.f32.mrf.mxu0
  %v1089 = vadd.f32 %v704, %v1088
  %v1090 = vpop.f32.mrf.mxu0
  %1091 = vmatprep.mubr.f32.mxu0 %v60
  %1092 = vmatmul.mubr.f32.gmra.mxu0 %v59
  %v1093 = vpop.f32.mrf.mxu0
  %v1094 = vadd.f32 %v709, %v1093
  %v1095 = vpop.f32.mrf.mxu0
  %1096 = vmatprep.mubr.f32.mxu0 %v65
  %1097 = vmatmul.mubr.f32.gmra.mxu0 %v64
  %v1098 = vpop.f32.mrf.mxu0
  %v1099 = vadd.f32 %v714, %v1098
  %v1100 = vpop.f32.mrf.mxu0
  %1101 = vmatprep.mubr.f32.mxu0 %v70
  %1102 = vmatmul.mubr.f32.gmra.mxu0 %v69
  %v1103 = vpop.f32.mrf.mxu0
  %v1104 = vadd.f32 %v719, %v1103
  %v1105 = vpop.f32.mrf.mxu0
  %1106 = vmatprep.mubr.f32.mxu0 %v75
  %1107 = vmatmul.mubr.f32.gmra.mxu0 %v74
  %v1108 = vpop.f32.mrf.mxu0
  %v1109 = vadd.f32 %v724, %v1108
  %v1110 = vpop.f32.mrf.mxu0
  %1111 = vmatprep.mubr.f32.mxu0 %v80
  %1112 = vmatmul.mubr.f32.gmra.mxu0 %v79
  %v1113 = vpop.f32.mrf.mxu0
  %v1114 = vadd.f32 %v729, %v1113
  %v1115 = vpop.f32.mrf.mxu0
  %1116 = vmatprep.mubr.f32.mxu0 %v85
  %1117 = vmatmul.mubr.f32.gmra.mxu0 %v84
  %v1118 = vpop.f32.mrf.mxu0
  %v1119 = vadd.f32 %v734, %v1118
  %v1120 = vpop.f32.mrf.mxu0
  %1121 = vmatprep.mubr.f32.mxu0 %v90
  %1122 = vmatmul.mubr.f32.gmra.mxu0 %v89
  %v1123 = vpop.f32.mrf.mxu0
  %v1124 = vadd.f32 %v739, %v1123
  %v1125 = vpop.f32.mrf.mxu0
  %1126 = vmatprep.mubr.f32.mxu0 %v95
  %1127 = vmatmul.mubr.f32.gmra.mxu0 %v94
  %v1128 = vpop.f32.mrf.mxu0
  %v1129 = vadd.f32 %v744, %v1128
  %v1130 = vpop.f32.mrf.mxu0
  %1131 = vmatprep.mubr.f32.mxu0 %v100
  %1132 = vmatmul.mubr.f32.gmra.mxu0 %v99
  %v1133 = vpop.f32.mrf.mxu0
  %v1134 = vadd.f32 %v749, %v1133
  %v1135 = vpop.f32.mrf.mxu0
  %1136 = vmatprep.mubr.f32.mxu0 %v105
  %1137 = vmatmul.mubr.f32.gmra.mxu0 %v104
  %v1138 = vpop.f32.mrf.mxu0
  %v1139 = vadd.f32 %v754, %v1138
  %v1140 = vpop.f32.mrf.mxu0
  %1141 = vmatprep.mubr.f32.mxu0 %v110
  %1142 = vmatmul.mubr.f32.gmra.mxu0 %v109
  %v1143 = vpop.f32.mrf.mxu0
  %v1144 = vadd.f32 %v759, %v1143
  %v1145 = vpop.f32.mrf.mxu0
  %1146 = vmatprep.mubr.f32.mxu0 %v115
  %1147 = vmatmul.mubr.f32.gmra.mxu0 %v114
  %v1148 = vpop.f32.mrf.mxu0
  %v1149 = vadd.f32 %v764, %v1148
  %v1150 = vpop.f32.mrf.mxu0
  %1151 = vmatprep.mubr.f32.mxu0 %v120
  %1152 = vmatmul.mubr.f32.gmra.mxu0 %v119
  %v1153 = vpop.f32.mrf.mxu0
  %v1154 = vadd.f32 %v769, %v1153
  %v1155 = vpop.f32.mrf.mxu0
  %1156 = vmatprep.mubr.f32.mxu0 %v125
  %1157 = vmatmul.mubr.f32.gmra.mxu0 %v124
  %v1158 = vpop.f32.mrf.mxu0
  %v1159 = vadd.f32 %v774, %v1158
  %v1160 = vpop.f32.mrf.mxu0
  %1161 = vmatprep.mubr.f32.mxu0 %v130
  %1162 = vmatmul.mubr.f32.gmra.mxu0 %v129
  %v1163 = vpop.f32.mrf.mxu0
  %v1164 = vadd.f32 %v779, %v1163
  %v1165 = vpop.f32.mrf.mxu0
  %1166 = vmatprep.mubr.f32.mxu0 %v135
  %1167 = vmatmul.mubr.f32.gmra.mxu0 %v134
  %v1168 = vpop.f32.mrf.mxu0
  %v1169 = vadd.f32 %v784, %v1168
  %v1170 = vpop.f32.mrf.mxu0
  %1171 = vmatprep.mubr.f32.mxu0 %v140
  %1172 = vmatmul.mubr.f32.gmra.mxu0 %v139
  %v1173 = vpop.f32.mrf.mxu0
  %v1174 = vadd.f32 %v789, %v1173
  %v1175 = vpop.f32.mrf.mxu0
  %1176 = vmatprep.mubr.f32.mxu0 %v145
  %1177 = vmatmul.mubr.f32.gmra.mxu0 %v144
  %v1178 = vpop.f32.mrf.mxu0
  %v1179 = vadd.f32 %v794, %v1178
  %v1180 = vpop.f32.mrf.mxu0
  %1181 = vmatprep.mubr.f32.mxu0 %v150
  %1182 = vmatmul.mubr.f32.gmra.mxu0 %v149
  %v1183 = vpop.f32.mrf.mxu0
  %v1184 = vadd.f32 %v799, %v1183
  %v1185 = vpop.f32.mrf.mxu0
  %1186 = vmatprep.mubr.f32.mxu0 %v155
  %1187 = vmatmul.mubr.f32.gmra.mxu0 %v154
  %v1188 = vpop.f32.mrf.mxu0
  %v1189 = vadd.f32 %v804, %v1188
  %v1190 = vpop.f32.mrf.mxu0
  %1191 = vmatprep.mubr.f32.mxu0 %v160
  %1192 = vmatmul.mubr.f32.gmra.mxu0 %v159
  %v1193 = vpop.f32.mrf.mxu0
  %v1194 = vadd.f32 %v809, %v1193
  %v1195 = vpop.f32.mrf.mxu0
  %1196 = vmatprep.mubr.f32.mxu0 %v165
  %1197 = vmatmul.mubr.f32.gmra.mxu0 %v164
  %v1198 = vpop.f32.mrf.mxu0
  %v1199 = vadd.f32 %v814, %v1198
  %v1200 = vpop.f32.mrf.mxu0
  %1201 = vmatprep.mubr.f32.mxu0 %v170
  %1202 = vmatmul.mubr.f32.gmra.mxu0 %v169
  %v1203 = vpop.f32.mrf.mxu0
  %v1204 = vadd.f32 %v819, %v1203
  %v1205 = vpop.f32.mrf.mxu0
  %1206 = vmatprep.mubr.f32.mxu0 %v175
  %1207 = vmatmul.mubr.f32.gmra.mxu0 %v174
  %v1208 = vpop.f32.mrf.mxu0
  %v1209 = vadd.f32 %v824, %v1208
  %v1210 = vpop.f32.mrf.mxu0
  %1211 = vmatprep.mubr.f32.mxu0 %v180
  %1212 = vmatmul.mubr.f32.gmra.mxu0 %v179
  %v1213 = vpop.f32.mrf.mxu0
  %v1214 = vadd.f32 %v829, %v1213
  %v1215 = vpop.f32.mrf.mxu0
  %1216 = vmatprep.mubr.f32.mxu0 %v185
  %1217 = vmatmul.mubr.f32.gmra.mxu0 %v184
  %v1218 = vpop.f32.mrf.mxu0
  %v1219 = vadd.f32 %v834, %v1218
  %v1220 = vpop.f32.mrf.mxu0
  %1221 = vmatprep.mubr.f32.mxu0 %v190
  %1222 = vmatmul.mubr.f32.gmra.mxu0 %v189
  %v1223 = vpop.f32.mrf.mxu0
  %v1224 = vadd.f32 %v839, %v1223
  %v1225 = vpop.f32.mrf.mxu0
  %1226 = vmatprep.mubr.f32.mxu0 %v195
  %1227 = vmatmul.mubr.f32.gmra.mxu0 %v194
  %v1228 = vpop.f32.mrf.mxu0
  %v1229 = vadd.f32 %v844, %v1228
  %v1230 = vpop.f32.mrf.mxu0
  %1231 = vmatprep.mubr.f32.mxu0 %v200
  %1232 = vmatmul.mubr.f32.gmra.mxu0 %v199
  %v1233 = vpop.f32.mrf.mxu0
  %v1234 = vadd.f32 %v849, %v1233
  %v1235 = vpop.f32.mrf.mxu0
  %1236 = vmatprep.mubr.f32.mxu0 %v205
  %1237 = vmatmul.mubr.f32.gmra.mxu0 %v204
  %v1238 = vpop.f32.mrf.mxu0
  %v1239 = vadd.f32 %v854, %v1238
  %v1240 = vpop.f32.mrf.mxu0
  %1241 = vmatprep.mubr.f32.mxu0 %v210
  %1242 = vmatmul.mubr.f32.gmra.mxu0 %v209
  %v1243 = vpop.f32.mrf.mxu0
  %v1244 = vadd.f32 %v859, %v1243
  %v1245 = vpop.f32.mrf.mxu0
  %1246 = vmatprep.mubr.f32.mxu0 %v215
  %1247 = vmatmul.mubr.f32.gmra.mxu0 %v214
  %v1248 = vpop.f32.mrf.mxu0
  %v1249 = vadd.f32 %v864, %v1248
  %v1250 = vpop.f32.mrf.mxu0
  %1251 = vmatprep.mubr.f32.mxu0 %v220
  %1252 = vmatmul.mubr.f32.gmra.mxu0 %v219
  %v1253 = vpop.f32.mrf.mxu0
  %v1254 = vadd.f32 %v869, %v1253
  %v1255 = vpop.f32.mrf.mxu0
  %1256 = vmatprep.mubr.f32.mxu0 %v225
  %1257 = vmatmul.mubr.f32.gmra.mxu0 %v224
  %v1258 = vpop.f32.mrf.mxu0
  %v1259 = vadd.f32 %v874, %v1258
  %v1260 = vpop.f32.mrf.mxu0
  %1261 = vmatprep.mubr.f32.mxu0 %v230
  %1262 = vmatmul.mubr.f32.gmra.mxu0 %v229
  %v1263 = vpop.f32.mrf.mxu0
  %v1264 = vadd.f32 %v879, %v1263
  %v1265 = vpop.f32.mrf.mxu0
  %1266 = vmatprep.mubr.f32.mxu0 %v235
  %1267 = vmatmul.mubr.f32.gmra.mxu0 %v234
  %v1268 = vpop.f32.mrf.mxu0
  %v1269 = vadd.f32 %v884, %v1268
  %v1270 = vpop.f32.mrf.mxu0
  %1271 = vmatprep.mubr.f32.mxu0 %v240
  %1272 = vmatmul.mubr.f32.gmra.mxu0 %v239
  %v1273 = vpop.f32.mrf.mxu0
  %v1274 = vadd.f32 %v889, %v1273
  %v1275 = vpop.f32.mrf.mxu0
  %1276 = vmatprep.mubr.f32.mxu0 %v245
  %1277 = vmatmul.mubr.f32.gmra.mxu0 %v244
  %v1278 = vpop.f32.mrf.mxu0
  %v1279 = vadd.f32 %v894, %v1278
  %v1280 = vpop.f32.mrf.mxu0
  %1281 = vmatprep.mubr.f32.mxu0 %v250
  %1282 = vmatmul.mubr.f32.gmra.mxu0 %v249
  %v1283 = vpop.f32.mrf.mxu0
  %v1284 = vadd.f32 %v899, %v1283
  %v1285 = vpop.f32.mrf.mxu0
  %1286 = vmatprep.mubr.f32.mxu0 %v255
  %1287 = vmatmul.mubr.f32.gmra.mxu0 %v254
  %v1288 = vpop.f32.mrf.mxu0
  %v1289 = vadd.f32 %v904, %v1288
  %v1290 = vpop.f32.mrf.mxu0
  %1291 = vmatprep.mubr.f32.mxu0 %v260
  %1292 = vmatmul.mubr.f32.gmra.mxu0 %v259
  %v1293 = vpop.f32.mrf.mxu0
  %v1294 = vadd.f32 %v909, %v1293
  %v1295 = vpop.f32.mrf.mxu0
  %1296 = vmatprep.mubr.f32.mxu0 %v265
  %1297 = vmatmul.mubr.f32.gmra.mxu0 %v264
  %v1298 = vpop.f32.mrf.mxu0
  %v1299 = vadd.f32 %v914, %v1298
  %v1300 = vpop.f32.mrf.mxu0
  %1301 = vmatprep.mubr.f32.mxu0 %v270
  %1302 = vmatmul.mubr.f32.gmra.mxu0 %v269
  %v1303 = vpop.f32.mrf.mxu0
  %v1304 = vadd.f32 %v919, %v1303
  %v1305 = vpop.f32.mrf.mxu0
  %1306 = vmatprep.mubr.f32.mxu0 %v275
  %1307 = vmatmul.mubr.f32.gmra.mxu0 %v274
  %v1308 = vpop.f32.mrf.mxu0
  %v1309 = vadd.f32 %v924, %v1308
  %v1310 = vpop.f32.mrf.mxu0
  %1311 = vmatprep.mubr.f32.mxu0 %v280
  %1312 = vmatmul.mubr.f32.gmra.mxu0 %v279
  %v1313 = vpop.f32.mrf.mxu0
  %v1314 = vadd.f32 %v929, %v1313
  %v1315 = vpop.f32.mrf.mxu0
  %1316 = vmatprep.mubr.f32.mxu0 %v285
  %1317 = vmatmul.mubr.f32.gmra.mxu0 %v284
  %v1318 = vpop.f32.mrf.mxu0
  %v1319 = vadd.f32 %v934, %v1318
  %v1320 = vpop.f32.mrf.mxu0
  %1321 = vmatprep.mubr.f32.mxu0 %v290
  %1322 = vmatmul.mubr.f32.gmra.mxu0 %v289
  %v1323 = vpop.f32.mrf.mxu0
  %v1324 = vadd.f32 %v939, %v1323
  %v1325 = vpop.f32.mrf.mxu0
  %1326 = vmatprep.mubr.f32.mxu0 %v295
  %1327 = vmatmul.mubr.f32.gmra.mxu0 %v294
  %v1328 = vpop.f32.mrf.mxu0
  %v1329 = vadd.f32 %v944, %v1328
  %v1330 = vpop.f32.mrf.mxu0
  %1331 = vmatprep.mubr.f32.mxu0 %v300
  %1332 = vmatmul.mubr.f32.gmra.mxu0 %v299
  %v1333 = vpop.f32.mrf.mxu0
  %v1334 = vadd.f32 %v949, %v1333
  %v1335 = vpop.f32.mrf.mxu0
  %1336 = vmatprep.mubr.f32.mxu0 %v305
  %1337 = vmatmul.mubr.f32.gmra.mxu0 %v304
  %v1338 = vpop.f32.mrf.mxu0
  %v1339 = vadd.f32 %v954, %v1338
  %v1340 = vpop.f32.mrf.mxu0
  %1341 = vmatprep.mubr.f32.mxu0 %v310
  %1342 = vmatmul.mubr.f32.gmra.mxu0 %v309
  %v1343 = vpop.f32.mrf.mxu0
  %v1344 = vadd.f32 %v959, %v1343
  %v1345 = vpop.f32.mrf.mxu0
  %1346 = vmatprep.mubr.f32.mxu0 %v315
  %1347 = vmatmul.mubr.f32.gmra.mxu0 %v314
  %v1348 = vpop.f32.mrf.mxu0
  %v1349 = vadd.f32 %v964, %v1348
  %v1350 = vpop.f32.mrf.mxu0
  %1351 = vmatprep.mubr.f32.mxu0 %v320
  %1352 = vmatmul.mubr.f32.gmra.mxu0 %v319
  %v1353 = vpop.f32.mrf.mxu0
  %v1354 = vadd.f32 %v969, %v1353
  %v1355 = vpop.f32.mrf.mxu0
  %1356 = vmatprep.mubr.f32.mxu0 %v325
  %1357 = vmatmul.mubr.f32.gmra.mxu0 %v324
  %v1358 = vpop.f32.mrf.mxu0
  %v1359 = vadd.f32 %v974, %v1358
  %v1360 = vpop.f32.mrf.mxu0
  %1361 = vmatprep.mubr.f32.mxu0 %v330
  %1362 = vmatmul.mubr.f32.gmra.mxu0 %v329
  %v1363 = vpop.f32.mrf.mxu0
  %v1364 = vadd.f32 %v979, %v1363
  %v1365 = vpop.f32.mrf.mxu0
  %1366 = vmatprep.mubr.f32.mxu0 %v335
  %1367 = vmatmul.mubr.f32.gmra.mxu0 %v334
  %v1368 = vpop.f32.mrf.mxu0
  %v1369 = vadd.f32 %v984, %v1368
  %v1370 = vpop.f32.mrf.mxu0
  %1371 = vdwg.mxu0
  %1372 = vmatprep.subr.mxu0 0.0
  %1373 = vmatpush1.msra.mxu0 0.0
  %1374 = vmatprep.subr.mxu0 0.0
  %1375 = vmatpush1.msra.mxu0 0.0
  %1376 = vmatprep.subr.mxu0 0.0
  %1377 = vmatpush1.msra.mxu0 0.0
  %1378 = vmatprep.subr.mxu0 0.0
  %1379 = vmatpush1.msra.mxu0 0.0
  %1380 = vmatprep.subr.mxu0 0.0
  %1381 = vmatpush1.msra.mxu0 0.0
  %1382 = vmatprep.subr.mxu0 0.0
  %1383 = vmatpush1.msra.mxu0 0.0
  %1384 = vmatprep.subr.mxu0 0.0
  %1385 = vmatpush1.msra.mxu0 0.0
  %1386 = vmatprep.subr.mxu0 0.0
  %1387 = vmatpush1.msra.mxu0 0.0
  %1388 = vmatprep.subr.mxu0 0.0
  %1389 = vmatpush1.msra.mxu0 0.0
  %1390 = vmatprep.subr.mxu0 0.0
  %1391 = vmatpush1.msra.mxu0 0.0
  %1392 = vmatprep.subr.mxu0 0.0
  %1393 = vmatpush1.msra.mxu0 0.0
  %1394 = vmatprep.subr.mxu0 0.0
  %1395 = vmatpush1.msra.mxu0 0.0
  %1396 = vmatprep.subr.mxu0 0.0
  %1397 = vmatpush1.msra.mxu0 %v600
  %1398 = vmatprep.subr.mxu0 0.0
  %1399 = vmatpush1.msra.mxu0 %v403
  %1400 = vmatprep.subr.mxu0 0.0
  %1401 = vmatpush1.msra.mxu0 %v402
  %1402 = vmatprep.subr.mxu0 0.0
  %1403 = vmatpush1.msra.mxu0 %v401
  %1404 = vmatprep.subr.mxu0 0.0
  %1405 = vmatpush2.msra.mxu0 0.0
  %1406 = vmatprep.subr.mxu0 0.0
  %1407 = vmatpush2.msra.mxu0 0.0
  %1408 = vmatprep.subr.mxu0 0.0
  %1409 = vmatpush2.msra.mxu0 0.0
  %1410 = vmatprep.subr.mxu0 0.0
  %1411 = vmatpush2.msra.mxu0 0.0
  %1412 = vmatprep.subr.mxu0 0.0
  %1413 = vmatpush2.msra.mxu0 0.0
  %1414 = vmatprep.subr.mxu0 0.0
  %1415 = vmatpush2.msra.mxu0 0.0
  %1416 = vmatprep.subr.mxu0 0.0
  %1417 = vmatpush2.msra.mxu0 0.0
  %1418 = vmatprep.subr.mxu0 0.0
  %1419 = vmatpush2.msra.mxu0 0.0
  %1420 = vmatprep.subr.mxu0 0.0
  %1421 = vmatpush2.msra.mxu0 0.0
  %1422 = vmatprep.subr.mxu0 0.0
  %1423 = vmatpush2.msra.mxu0 0.0
  %1424 = vmatprep.subr.mxu0 0.0
  %1425 = vmatpush2.msra.mxu0 0.0
  %1426 = vmatprep.subr.mxu0 0.0
  %1427 = vmatpush2.msra.mxu0 0.0
  %1428 = vmatprep.subr.mxu0 0.0
  %1429 = vmatpush2.msra.mxu0 0.0
  %1430 = vmatprep.subr.mxu0 0.0
  %1431 = vmatpush2.msra.mxu0 0.0
  %1432 = vmatprep.subr.mxu0 0.0
  %1433 = vmatpush2.msra.mxu0 0.0
  %1434 = vmatprep.subr.mxu0 0.0
  %1435 = vmatpush2.msra.mxu0 0.0
  %1436 = vmatprep.mubr.f32.mxu0 0.0
  %1437 = vmatmul.mubr.f32.gmra.mxu0 %v407
  %v1438 = vpop.f32.mrf.mxu0
  %v1439 = vadd.f32 %v1054, %v1438
  %v1440 = vpop.f32.mrf.mxu0
  %1441 = vmatprep.mubr.f32.mxu0 0.0
  %1442 = vmatmul.mubr.f32.gmra.mxu0 %v410
  %v1443 = vpop.f32.mrf.mxu0
  %v1444 = vadd.f32 %v1059, %v1443
  %v1445 = vpop.f32.mrf.mxu0
  %1446 = vmatprep.mubr.f32.mxu0 0.0
  %1447 = vmatmul.mubr.f32.gmra.mxu0 %v413
  %v1448 = vpop.f32.mrf.mxu0
  %v1449 = vadd.f32 %v1064, %v1448
  %v1450 = vpop.f32.mrf.mxu0
  %1451 = vmatprep.mubr.f32.mxu0 0.0
  %1452 = vmatmul.mubr.f32.gmra.mxu0 %v416
  %v1453 = vpop.f32.mrf.mxu0
  %v1454 = vadd.f32 %v1069, %v1453
  %v1455 = vpop.f32.mrf.mxu0
  %1456 = vmatprep.mubr.f32.mxu0 0.0
  %1457 = vmatmul.mubr.f32.gmra.mxu0 %v419
  %v1458 = vpop.f32.mrf.mxu0
  %v1459 = vadd.f32 %v1074, %v1458
  %v1460 = vpop.f32.mrf.mxu0
  %1461 = vmatprep.mubr.f32.mxu0 0.0
  %1462 = vmatmul.mubr.f32.gmra.mxu0 %v422
  %v1463 = vpop.f32.mrf.mxu0
  %v1464 = vadd.f32 %v1079, %v1463
  %v1465 = vpop.f32.mrf.mxu0
  %1466 = vmatprep.mubr.f32.mxu0 0.0
  %1467 = vmatmul.mubr.f32.gmra.mxu0 %v425
  %v1468 = vpop.f32.mrf.mxu0
  %v1469 = vadd.f32 %v1084, %v1468
  %v1470 = vpop.f32.mrf.mxu0
  %1471 = vmatprep.mubr.f32.mxu0 0.0
  %1472 = vmatmul.mubr.f32.gmra.mxu0 %v428
  %v1473 = vpop.f32.mrf.mxu0
  %v1474 = vadd.f32 %v1089, %v1473
  %v1475 = vpop.f32.mrf.mxu0
  %1476 = vmatprep.mubr.f32.mxu0 0.0
  %1477 = vmatmul.mubr.f32.gmra.mxu0 %v431
  %v1478 = vpop.f32.mrf.mxu0
  %v1479 = vadd.f32 %v1094, %v1478
  %v1480 = vpop.f32.mrf.mxu0
  %1481 = vmatprep.mubr.f32.mxu0 0.0
  %1482 = vmatmul.mubr.f32.gmra.mxu0 %v434
  %v1483 = vpop.f32.mrf.mxu0
  %v1484 = vadd.f32 %v1099, %v1483
  %v1485 = vpop.f32.mrf.mxu0
  %1486 = vmatprep.mubr.f32.mxu0 0.0
  %1487 = vmatmul.mubr.f32.gmra.mxu0 %v437
  %v1488 = vpop.f32.mrf.mxu0
  %v1489 = vadd.f32 %v1104, %v1488
  %v1490 = vpop.f32.mrf.mxu0
  %1491 = vmatprep.mubr.f32.mxu0 0.0
  %1492 = vmatmul.mubr.f32.gmra.mxu0 %v440
  %v1493 = vpop.f32.mrf.mxu0
  %v1494 = vadd.f32 %v1109, %v1493
  %v1495 = vpop.f32.mrf.mxu0
  %1496 = vmatprep.mubr.f32.mxu0 0.0
  %1497 = vmatmul.mubr.f32.gmra.mxu0 %v443
  %v1498 = vpop.f32.mrf.mxu0
  %v1499 = vadd.f32 %v1114, %v1498
  %v1500 = vpop.f32.mrf.mxu0
  %1501 = vmatprep.mubr.f32.mxu0 0.0
  %1502 = vmatmul.mubr.f32.gmra.mxu0 %v446
  %v1503 = vpop.f32.mrf.mxu0
  %v1504 = vadd.f32 %v1119, %v1503
  %v1505 = vpop.f32.mrf.mxu0
  %1506 = vmatprep.mubr.f32.mxu0 0.0
  %1507 = vmatmul.mubr.f32.gmra.mxu0 %v449
  %v1508 = vpop.f32.mrf.mxu0
  %v1509 = vadd.f32 %v1124, %v1508
  %v1510 = vpop.f32.mrf.mxu0
  %1511 = vmatprep.mubr.f32.mxu0 0.0
  %1512 = vmatmul.mubr.f32.gmra.mxu0 %v452
  %v1513 = vpop.f32.mrf.mxu0
  %v1514 = vadd.f32 %v1129, %v1513
  %v1515 = vpop.f32.mrf.mxu0
  %1516 = vmatprep.mubr.f32.mxu0 0.0
  %1517 = vmatmul.mubr.f32.gmra.mxu0 %v455
  %v1518 = vpop.f32.mrf.mxu0
  %v1519 = vadd.f32 %v1134, %v1518
  %v1520 = vpop.f32.mrf.mxu0
  %1521 = vmatprep.mubr.f32.mxu0 0.0
  %1522 = vmatmul.mubr.f32.gmra.mxu0 %v458
  %v1523 = vpop.f32.mrf.mxu0
  %v1524 = vadd.f32 %v1139, %v1523
  %v1525 = vpop.f32.mrf.mxu0
  %1526 = vmatprep.mubr.f32.mxu0 0.0
  %1527 = vmatmul.mubr.f32.gmra.mxu0 %v461
  %v1528 = vpop.f32.mrf.mxu0
  %v1529 = vadd.f32 %v1144, %v1528
  %v1530 = vpop.f32.mrf.mxu0
  %1531 = vmatprep.mubr.f32.mxu0 0.0
  %1532 = vmatmul.mubr.f32.gmra.mxu0 %v464
  %v1533 = vpop.f32.mrf.mxu0
  %v1534 = vadd.f32 %v1149, %v1533
  %v1535 = vpop.f32.mrf.mxu0
  %1536 = vmatprep.mubr.f32.mxu0 0.0
  %1537 = vmatmul.mubr.f32.gmra.mxu0 %v467
  %v1538 = vpop.f32.mrf.mxu0
  %v1539 = vadd.f32 %v1154, %v1538
  %v1540 = vpop.f32.mrf.mxu0
  %1541 = vmatprep.mubr.f32.mxu0 0.0
  %1542 = vmatmul.mubr.f32.gmra.mxu0 %v470
  %v1543 = vpop.f32.mrf.mxu0
  %v1544 = vadd.f32 %v1159, %v1543
  %v1545 = vpop.f32.mrf.mxu0
  %1546 = vmatprep.mubr.f32.mxu0 0.0
  %1547 = vmatmul.mubr.f32.gmra.mxu0 %v473
  %v1548 = vpop.f32.mrf.mxu0
  %v1549 = vadd.f32 %v1164, %v1548
  %v1550 = vpop.f32.mrf.mxu0
  %1551 = vmatprep.mubr.f32.mxu0 0.0
  %1552 = vmatmul.mubr.f32.gmra.mxu0 %v476
  %v1553 = vpop.f32.mrf.mxu0
  %v1554 = vadd.f32 %v1169, %v1553
  %v1555 = vpop.f32.mrf.mxu0
  %1556 = vmatprep.mubr.f32.mxu0 0.0
  %1557 = vmatmul.mubr.f32.gmra.mxu0 %v479
  %v1558 = vpop.f32.mrf.mxu0
  %v1559 = vadd.f32 %v1174, %v1558
  %v1560 = vpop.f32.mrf.mxu0
  %1561 = vmatprep.mubr.f32.mxu0 0.0
  %1562 = vmatmul.mubr.f32.gmra.mxu0 %v482
  %v1563 = vpop.f32.mrf.mxu0
  %v1564 = vadd.f32 %v1179, %v1563
  %v1565 = vpop.f32.mrf.mxu0
  %1566 = vmatprep.mubr.f32.mxu0 0.0
  %1567 = vmatmul.mubr.f32.gmra.mxu0 %v485
  %v1568 = vpop.f32.mrf.mxu0
  %v1569 = vadd.f32 %v1184, %v1568
  %v1570 = vpop.f32.mrf.mxu0
  %1571 = vmatprep.mubr.f32.mxu0 0.0
  %1572 = vmatmul.mubr.f32.gmra.mxu0 %v488
  %v1573 = vpop.f32.mrf.mxu0
  %v1574 = vadd.f32 %v1189, %v1573
  %v1575 = vpop.f32.mrf.mxu0
  %1576 = vmatprep.mubr.f32.mxu0 0.0
  %1577 = vmatmul.mubr.f32.gmra.mxu0 %v491
  %v1578 = vpop.f32.mrf.mxu0
  %v1579 = vadd.f32 %v1194, %v1578
  %v1580 = vpop.f32.mrf.mxu0
  %1581 = vmatprep.mubr.f32.mxu0 0.0
  %1582 = vmatmul.mubr.f32.gmra.mxu0 %v494
  %v1583 = vpop.f32.mrf.mxu0
  %v1584 = vadd.f32 %v1199, %v1583
  %v1585 = vpop.f32.mrf.mxu0
  %1586 = vmatprep.mubr.f32.mxu0 0.0
  %1587 = vmatmul.mubr.f32.gmra.mxu0 %v497
  %v1588 = vpop.f32.mrf.mxu0
  %v1589 = vadd.f32 %v1204, %v1588
  %v1590 = vpop.f32.mrf.mxu0
  %1591 = vmatprep.mubr.f32.mxu0 0.0
  %1592 = vmatmul.mubr.f32.gmra.mxu0 %v500
  %v1593 = vpop.f32.mrf.mxu0
  %v1594 = vadd.f32 %v1209, %v1593
  %v1595 = vpop.f32.mrf.mxu0
  %1596 = vmatprep.mubr.f32.mxu0 0.0
  %1597 = vmatmul.mubr.f32.gmra.mxu0 %v503
  %v1598 = vpop.f32.mrf.mxu0
  %v1599 = vadd.f32 %v1214, %v1598
  %v1600 = vpop.f32.mrf.mxu0
  %1601 = vmatprep.mubr.f32.mxu0 0.0
  %1602 = vmatmul.mubr.f32.gmra.mxu0 %v506
  %v1603 = vpop.f32.mrf.mxu0
  %v1604 = vadd.f32 %v1219, %v1603
  %v1605 = vpop.f32.mrf.mxu0
  %1606 = vmatprep.mubr.f32.mxu0 0.0
  %1607 = vmatmul.mubr.f32.gmra.mxu0 %v509
  %v1608 = vpop.f32.mrf.mxu0
  %v1609 = vadd.f32 %v1224, %v1608
  %v1610 = vpop.f32.mrf.mxu0
  %1611 = vmatprep.mubr.f32.mxu0 0.0
  %1612 = vmatmul.mubr.f32.gmra.mxu0 %v512
  %v1613 = vpop.f32.mrf.mxu0
  %v1614 = vadd.f32 %v1229, %v1613
  %v1615 = vpop.f32.mrf.mxu0
  %1616 = vmatprep.mubr.f32.mxu0 0.0
  %1617 = vmatmul.mubr.f32.gmra.mxu0 %v515
  %v1618 = vpop.f32.mrf.mxu0
  %v1619 = vadd.f32 %v1234, %v1618
  %v1620 = vpop.f32.mrf.mxu0
  %1621 = vmatprep.mubr.f32.mxu0 0.0
  %1622 = vmatmul.mubr.f32.gmra.mxu0 %v518
  %v1623 = vpop.f32.mrf.mxu0
  %v1624 = vadd.f32 %v1239, %v1623
  %v1625 = vpop.f32.mrf.mxu0
  %1626 = vmatprep.mubr.f32.mxu0 0.0
  %1627 = vmatmul.mubr.f32.gmra.mxu0 %v521
  %v1628 = vpop.f32.mrf.mxu0
  %v1629 = vadd.f32 %v1244, %v1628
  %v1630 = vpop.f32.mrf.mxu0
  %1631 = vmatprep.mubr.f32.mxu0 0.0
  %1632 = vmatmul.mubr.f32.gmra.mxu0 %v524
  %v1633 = vpop.f32.mrf.mxu0
  %v1634 = vadd.f32 %v1249, %v1633
  %v1635 = vpop.f32.mrf.mxu0
  %1636 = vmatprep.mubr.f32.mxu0 0.0
  %1637 = vmatmul.mubr.f32.gmra.mxu0 %v527
  %v1638 = vpop.f32.mrf.mxu0
  %v1639 = vadd.f32 %v1254, %v1638
  %v1640 = vpop.f32.mrf.mxu0
  %1641 = vmatprep.mubr.f32.mxu0 0.0
  %1642 = vmatmul.mubr.f32.gmra.mxu0 %v530
  %v1643 = vpop.f32.mrf.mxu0
  %v1644 = vadd.f32 %v1259, %v1643
  %v1645 = vpop.f32.mrf.mxu0
  %1646 = vmatprep.mubr.f32.mxu0 0.0
  %1647 = vmatmul.mubr.f32.gmra.mxu0 %v533
  %v1648 = vpop.f32.mrf.mxu0
  %v1649 = vadd.f32 %v1264, %v1648
  %v1650 = vpop.f32.mrf.mxu0
  %1651 = vmatprep.mubr.f32.mxu0 0.0
  %1652 = vmatmul.mubr.f32.gmra.mxu0 %v536
  %v1653 = vpop.f32.mrf.mxu0
  %v1654 = vadd.f32 %v1269, %v1653
  %v1655 = vpop.f32.mrf.mxu0
  %1656 = vmatprep.mubr.f32.mxu0 0.0
  %1657 = vmatmul.mubr.f32.gmra.mxu0 %v539
  %v1658 = vpop.f32.mrf.mxu0
  %v1659 = vadd.f32 %v1274, %v1658
  %v1660 = vpop.f32.mrf.mxu0
  %1661 = vmatprep.mubr.f32.mxu0 0.0
  %1662 = vmatmul.mubr.f32.gmra.mxu0 %v542
  %v1663 = vpop.f32.mrf.mxu0
  %v1664 = vadd.f32 %v1279, %v1663
  %v1665 = vpop.f32.mrf.mxu0
  %1666 = vmatprep.mubr.f32.mxu0 0.0
  %1667 = vmatmul.mubr.f32.gmra.mxu0 %v545
  %v1668 = vpop.f32.mrf.mxu0
  %v1669 = vadd.f32 %v1284, %v1668
  %v1670 = vpop.f32.mrf.mxu0
  %1671 = vmatprep.mubr.f32.mxu0 0.0
  %1672 = vmatmul.mubr.f32.gmra.mxu0 %v548
  %v1673 = vpop.f32.mrf.mxu0
  %v1674 = vadd.f32 %v1289, %v1673
  %v1675 = vpop.f32.mrf.mxu0
  %1676 = vmatprep.mubr.f32.mxu0 0.0
  %1677 = vmatmul.mubr.f32.gmra.mxu0 %v551
  %v1678 = vpop.f32.mrf.mxu0
  %v1679 = vadd.f32 %v1294, %v1678
  %v1680 = vpop.f32.mrf.mxu0
  %1681 = vmatprep.mubr.f32.mxu0 0.0
  %1682 = vmatmul.mubr.f32.gmra.mxu0 %v554
  %v1683 = vpop.f32.mrf.mxu0
  %v1684 = vadd.f32 %v1299, %v1683
  %v1685 = vpop.f32.mrf.mxu0
  %1686 = vmatprep.mubr.f32.mxu0 0.0
  %1687 = vmatmul.mubr.f32.gmra.mxu0 %v557
  %v1688 = vpop.f32.mrf.mxu0
  %v1689 = vadd.f32 %v1304, %v1688
  %v1690 = vpop.f32.mrf.mxu0
  %1691 = vmatprep.mubr.f32.mxu0 0.0
  %1692 = vmatmul.mubr.f32.gmra.mxu0 %v560
  %v1693 = vpop.f32.mrf.mxu0
  %v1694 = vadd.f32 %v1309, %v1693
  %v1695 = vpop.f32.mrf.mxu0
  %1696 = vmatprep.mubr.f32.mxu0 0.0
  %1697 = vmatmul.mubr.f32.gmra.mxu0 %v563
  %v1698 = vpop.f32.mrf.mxu0
  %v1699 = vadd.f32 %v1314, %v1698
  %v1700 = vpop.f32.mrf.mxu0
  %1701 = vmatprep.mubr.f32.mxu0 0.0
  %1702 = vmatmul.mubr.f32.gmra.mxu0 %v566
  %v1703 = vpop.f32.mrf.mxu0
  %v1704 = vadd.f32 %v1319, %v1703
  %v1705 = vpop.f32.mrf.mxu0
  %1706 = vmatprep.mubr.f32.mxu0 0.0
  %1707 = vmatmul.mubr.f32.gmra.mxu0 %v569
  %v1708 = vpop.f32.mrf.mxu0
  %v1709 = vadd.f32 %v1324, %v1708
  %v1710 = vpop.f32.mrf.mxu0
  %1711 = vmatprep.mubr.f32.mxu0 0.0
  %1712 = vmatmul.mubr.f32.gmra.mxu0 %v572
  %v1713 = vpop.f32.mrf.mxu0
  %v1714 = vadd.f32 %v1329, %v1713
  %v1715 = vpop.f32.mrf.mxu0
  %1716 = vmatprep.mubr.f32.mxu0 0.0
  %1717 = vmatmul.mubr.f32.gmra.mxu0 %v575
  %v1718 = vpop.f32.mrf.mxu0
  %v1719 = vadd.f32 %v1334, %v1718
  %v1720 = vpop.f32.mrf.mxu0
  %1721 = vmatprep.mubr.f32.mxu0 0.0
  %1722 = vmatmul.mubr.f32.gmra.mxu0 %v578
  %v1723 = vpop.f32.mrf.mxu0
  %v1724 = vadd.f32 %v1339, %v1723
  %v1725 = vpop.f32.mrf.mxu0
  %1726 = vmatprep.mubr.f32.mxu0 0.0
  %1727 = vmatmul.mubr.f32.gmra.mxu0 %v581
  %v1728 = vpop.f32.mrf.mxu0
  %v1729 = vadd.f32 %v1344, %v1728
  %v1730 = vpop.f32.mrf.mxu0
  %1731 = vmatprep.mubr.f32.mxu0 0.0
  %1732 = vmatmul.mubr.f32.gmra.mxu0 %v584
  %v1733 = vpop.f32.mrf.mxu0
  %v1734 = vadd.f32 %v1349, %v1733
  %v1735 = vpop.f32.mrf.mxu0
  %1736 = vmatprep.mubr.f32.mxu0 0.0
  %1737 = vmatmul.mubr.f32.gmra.mxu0 %v587
  %v1738 = vpop.f32.mrf.mxu0
  %v1739 = vadd.f32 %v1354, %v1738
  %v1740 = vpop.f32.mrf.mxu0
  %1741 = vmatprep.mubr.f32.mxu0 0.0
  %1742 = vmatmul.mubr.f32.gmra.mxu0 %v590
  %v1743 = vpop.f32.mrf.mxu0
  %v1744 = vadd.f32 %v1359, %v1743
  %v1745 = vpop.f32.mrf.mxu0
  %1746 = vmatprep.mubr.f32.mxu0 0.0
  %1747 = vmatmul.mubr.f32.gmra.mxu0 %v593
  %v1748 = vpop.f32.mrf.mxu0
  %v1749 = vadd.f32 %v1364, %v1748
  %v1750 = vpop.f32.mrf.mxu0
  %1751 = vmatprep.mubr.f32.mxu0 0.0
  %1752 = vmatmul.mubr.f32.gmra.mxu0 %v596
  %v1753 = vpop.f32.mrf.mxu0
  %v1754 = vadd.f32 %v1369, %v1753
  %v1755 = vpop.f32.mrf.mxu0
  %1756 = vdwg.mxu0
  %v1757 = vmax.f32 %v1439, 0.0
  %v1758 = vmax.f32 %v1444, 0.0
  %v1759 = vmax.f32 %v1449, 0.0
  %v1760 = vmax.f32 %v1454, 0.0
  %v1761 = vmax.f32 %v1459, 0.0
  %v1762 = vmax.f32 %v1464, 0.0
  %v1763 = vmax.f32 %v1469, 0.0
  %v1764 = vmax.f32 %v1474, 0.0
  %v1765 = vmax.f32 %v1479, 0.0
  %v1766 = vmax.f32 %v1484, 0.0
  %v1767 = vmax.f32 %v1489, 0.0
  %v1768 = vmax.f32 %v1494, 0.0
  %v1769 = vmax.f32 %v1499, 0.0
  %v1770 = vmax.f32 %v1504, 0.0
  %v1771 = vmax.f32 %v1509, 0.0
  %v1772 = vmax.f32 %v1514, 0.0
  %v1773 = vmax.f32 %v1519, 0.0
  %v1774 = vmax.f32 %v1524, 0.0
  %v1775 = vmax.f32 %v1529, 0.0
  %v1776 = vmax.f32 %v1534, 0.0
  %v1777 = vmax.f32 %v1539, 0.0
  %v1778 = vmax.f32 %v1544, 0.0
  %v1779 = vmax.f32 %v1549, 0.0
  %v1780 = vmax.f32 %v1554, 0.0
  %v1781 = vmax.f32 %v1559, 0.0
  %v1782 = vmax.f32 %v1564, 0.0
  %v1783 = vmax.f32 %v1569, 0.0
  %v1784 = vmax.f32 %v1574, 0.0
  %v1785 = vmax.f32 %v1579, 0.0
  %v1786 = vmax.f32 %v1584, 0.0
  %v1787 = vmax.f32 %v1589, 0.0
  %v1788 = vmax.f32 %v1594, 0.0
  %v1789 = vmax.f32 %v1599, 0.0
  %v1790 = vmax.f32 %v1604, 0.0
  %v1791 = vmax.f32 %v1609, 0.0
  %v1792 = vmax.f32 %v1614, 0.0
  %v1793 = vmax.f32 %v1619, 0.0
  %v1794 = vmax.f32 %v1624, 0.0
  %v1795 = vmax.f32 %v1629, 0.0
  %v1796 = vmax.f32 %v1634, 0.0
  %v1797 = vmax.f32 %v1639, 0.0
  %v1798 = vmax.f32 %v1644, 0.0
  %v1799 = vmax.f32 %v1649, 0.0
  %v1800 = vmax.f32 %v1654, 0.0
  %v1801 = vmax.f32 %v1659, 0.0
  %v1802 = vmax.f32 %v1664, 0.0
  %v1803 = vmax.f32 %v1669, 0.0
  %v1804 = vmax.f32 %v1674, 0.0
  %v1805 = vmax.f32 %v1679, 0.0
  %v1806 = vmax.f32 %v1684, 0.0
  %v1807 = vmax.f32 %v1689, 0.0
  %v1808 = vmax.f32 %v1694, 0.0
  %v1809 = vmax.f32 %v1699, 0.0
  %v1810 = vmax.f32 %v1704, 0.0
  %v1811 = vmax.f32 %v1709, 0.0
  %v1812 = vmax.f32 %v1714, 0.0
  %v1813 = vmax.f32 %v1719, 0.0
  %v1814 = vmax.f32 %v1724, 0.0
  %v1815 = vmax.f32 %v1729, 0.0
  %v1816 = vmax.f32 %v1734, 0.0
  %v1817 = vmax.f32 %v1739, 0.0
  %v1818 = vmax.f32 %v1744, 0.0
  %v1819 = vmax.f32 %v1749, 0.0
  %v1820 = vmax.f32 %v1754, 0.0
  %vm1821 = vcmask 244736
  %v1822 = vsel %vm1821, %v1757, 0.0
  %v1823 = vsel %vm1821, %v1758, 0.0
  %v1824 = vadd.f32 %v1822, %v1823
  %v1825 = vsel %vm1821, %v1759, 0.0
  %v1826 = vadd.f32 %v1824, %v1825
  %v1827 = vsel %vm1821, %v1760, 0.0
  %v1828 = vadd.f32 %v1826, %v1827
  %v1829 = vsel %vm1821, %v1761, 0.0
  %v1830 = vadd.f32 %v1828, %v1829
  %v1831 = vsel %vm1821, %v1762, 0.0
  %v1832 = vadd.f32 %v1830, %v1831
  %v1833 = vsel %vm1821, %v1763, 0.0
  %v1834 = vadd.f32 %v1832, %v1833
  %v1835 = vsel %vm1821, %v1764, 0.0
  %v1836 = vadd.f32 %v1834, %v1835
  %v1837 = vsel %vm1821, %v1765, 0.0
  %v1838 = vadd.f32 %v1836, %v1837
  %v1839 = vsel %vm1821, %v1766, 0.0
  %v1840 = vadd.f32 %v1838, %v1839
  %v1841 = vsel %vm1821, %v1767, 0.0
  %v1842 = vadd.f32 %v1840, %v1841
  %v1843 = vsel %vm1821, %v1768, 0.0
  %v1844 = vadd.f32 %v1842, %v1843
  %v1845 = vsel %vm1821, %v1769, 0.0
  %v1846 = vadd.f32 %v1844, %v1845
  %v1847 = vsel %vm1821, %v1770, 0.0
  %v1848 = vadd.f32 %v1846, %v1847
  %v1849 = vsel %vm1821, %v1771, 0.0
  %v1850 = vadd.f32 %v1848, %v1849
  %v1851 = vsel %vm1821, %v1772, 0.0
  %v1852 = vadd.f32 %v1850, %v1851
  %v1853 = vsel %vm1821, %v1773, 0.0
  %v1854 = vadd.f32 %v1852, %v1853
  %v1855 = vsel %vm1821, %v1774, 0.0
  %v1856 = vadd.f32 %v1854, %v1855
  %v1857 = vsel %vm1821, %v1775, 0.0
  %v1858 = vadd.f32 %v1856, %v1857
  %v1859 = vsel %vm1821, %v1776, 0.0
  %v1860 = vadd.f32 %v1858, %v1859
  %v1861 = vsel %vm1821, %v1777, 0.0
  %v1862 = vadd.f32 %v1860, %v1861
  %v1863 = vsel %vm1821, %v1778, 0.0
  %v1864 = vadd.f32 %v1862, %v1863
  %v1865 = vsel %vm1821, %v1779, 0.0
  %v1866 = vadd.f32 %v1864, %v1865
  %v1867 = vsel %vm1821, %v1780, 0.0
  %v1868 = vadd.f32 %v1866, %v1867
  %v1869 = vsel %vm1821, %v1781, 0.0
  %v1870 = vadd.f32 %v1868, %v1869
  %v1871 = vsel %vm1821, %v1782, 0.0
  %v1872 = vadd.f32 %v1870, %v1871
  %v1873 = vsel %vm1821, %v1783, 0.0
  %v1874 = vadd.f32 %v1872, %v1873
  %v1875 = vsel %vm1821, %v1784, 0.0
  %v1876 = vadd.f32 %v1874, %v1875
  %v1877 = vsel %vm1821, %v1785, 0.0
  %v1878 = vadd.f32 %v1876, %v1877
  %v1879 = vsel %vm1821, %v1786, 0.0
  %v1880 = vadd.f32 %v1878, %v1879
  %v1881 = vsel %vm1821, %v1787, 0.0
  %v1882 = vadd.f32 %v1880, %v1881
  %v1883 = vsel %vm1821, %v1788, 0.0
  %v1884 = vadd.f32 %v1882, %v1883
  %v1885 = vsel %vm1821, %v1789, 0.0
  %v1886 = vadd.f32 %v1884, %v1885
  %v1887 = vsel %vm1821, %v1790, 0.0
  %v1888 = vadd.f32 %v1886, %v1887
  %v1889 = vsel %vm1821, %v1791, 0.0
  %v1890 = vadd.f32 %v1888, %v1889
  %v1891 = vsel %vm1821, %v1792, 0.0
  %v1892 = vadd.f32 %v1890, %v1891
  %v1893 = vsel %vm1821, %v1793, 0.0
  %v1894 = vadd.f32 %v1892, %v1893
  %v1895 = vsel %vm1821, %v1794, 0.0
  %v1896 = vadd.f32 %v1894, %v1895
  %v1897 = vsel %vm1821, %v1795, 0.0
  %v1898 = vadd.f32 %v1896, %v1897
  %v1899 = vsel %vm1821, %v1796, 0.0
  %v1900 = vadd.f32 %v1898, %v1899
  %v1901 = vsel %vm1821, %v1797, 0.0
  %v1902 = vadd.f32 %v1900, %v1901
  %v1903 = vsel %vm1821, %v1798, 0.0
  %v1904 = vadd.f32 %v1902, %v1903
  %v1905 = vsel %vm1821, %v1799, 0.0
  %v1906 = vadd.f32 %v1904, %v1905
  %v1907 = vsel %vm1821, %v1800, 0.0
  %v1908 = vadd.f32 %v1906, %v1907
  %v1909 = vsel %vm1821, %v1801, 0.0
  %v1910 = vadd.f32 %v1908, %v1909
  %v1911 = vsel %vm1821, %v1802, 0.0
  %v1912 = vadd.f32 %v1910, %v1911
  %v1913 = vsel %vm1821, %v1803, 0.0
  %v1914 = vadd.f32 %v1912, %v1913
  %v1915 = vsel %vm1821, %v1804, 0.0
  %v1916 = vadd.f32 %v1914, %v1915
  %v1917 = vsel %vm1821, %v1805, 0.0
  %v1918 = vadd.f32 %v1916, %v1917
  %v1919 = vsel %vm1821, %v1806, 0.0
  %v1920 = vadd.f32 %v1918, %v1919
  %v1921 = vsel %vm1821, %v1807, 0.0
  %v1922 = vadd.f32 %v1920, %v1921
  %v1923 = vsel %vm1821, %v1808, 0.0
  %v1924 = vadd.f32 %v1922, %v1923
  %v1925 = vsel %vm1821, %v1809, 0.0
  %v1926 = vadd.f32 %v1924, %v1925
  %v1927 = vsel %vm1821, %v1810, 0.0
  %v1928 = vadd.f32 %v1926, %v1927
  %v1929 = vsel %vm1821, %v1811, 0.0
  %v1930 = vadd.f32 %v1928, %v1929
  %v1931 = vsel %vm1821, %v1812, 0.0
  %v1932 = vadd.f32 %v1930, %v1931
  %v1933 = vsel %vm1821, %v1813, 0.0
  %v1934 = vadd.f32 %v1932, %v1933
  %v1935 = vsel %vm1821, %v1814, 0.0
  %v1936 = vadd.f32 %v1934, %v1935
  %v1937 = vsel %vm1821, %v1815, 0.0
  %v1938 = vadd.f32 %v1936, %v1937
  %v1939 = vsel %vm1821, %v1816, 0.0
  %v1940 = vadd.f32 %v1938, %v1939
  %v1941 = vsel %vm1821, %v1817, 0.0
  %v1942 = vadd.f32 %v1940, %v1941
  %v1943 = vsel %vm1821, %v1818, 0.0
  %v1944 = vadd.f32 %v1942, %v1943
  %v1945 = vsel %vm1821, %v1819, 0.0
  %v1946 = vadd.f32 %v1944, %v1945
  %v1947 = vsel %vm1821, %v1820, 0.0
  %v1948 = vadd.f32 %v1946, %v1947
  %v1949 = vrot.slane %v1948, 4
  %v1950 = vadd.f32 %v1948, %v1949
  %v1951 = vrot.slane %v1950, 2
  %v1952 = vadd.f32 %v1950, %v1951
  %v1953 = vrot.slane %v1952, 1
  %v1954 = vadd.f32 %v1952, %v1953
  %v1955 = vmul.f32 %v1954, 0.001953125
  %v1956 = vsub.f32 %v1757, %v1955
  %v1957 = vsub.f32 %v1758, %v1955
  %v1958 = vsub.f32 %v1759, %v1955
  %v1959 = vsub.f32 %v1760, %v1955
  %v1960 = vsub.f32 %v1761, %v1955
  %v1961 = vsub.f32 %v1762, %v1955
  %v1962 = vsub.f32 %v1763, %v1955
  %v1963 = vsub.f32 %v1764, %v1955
  %v1964 = vsub.f32 %v1765, %v1955
  %v1965 = vsub.f32 %v1766, %v1955
  %v1966 = vsub.f32 %v1767, %v1955
  %v1967 = vsub.f32 %v1768, %v1955
  %v1968 = vsub.f32 %v1769, %v1955
  %v1969 = vsub.f32 %v1770, %v1955
  %v1970 = vsub.f32 %v1771, %v1955
  %v1971 = vsub.f32 %v1772, %v1955
  %v1972 = vsub.f32 %v1773, %v1955
  %v1973 = vsub.f32 %v1774, %v1955
  %v1974 = vsub.f32 %v1775, %v1955
  %v1975 = vsub.f32 %v1776, %v1955
  %v1976 = vsub.f32 %v1777, %v1955
  %v1977 = vsub.f32 %v1778, %v1955
  %v1978 = vsub.f32 %v1779, %v1955
  %v1979 = vsub.f32 %v1780, %v1955
  %v1980 = vsub.f32 %v1781, %v1955
  %v1981 = vsub.f32 %v1782, %v1955
  %v1982 = vsub.f32 %v1783, %v1955
  %v1983 = vsub.f32 %v1784, %v1955
  %v1984 = vsub.f32 %v1785, %v1955
  %v1985 = vsub.f32 %v1786, %v1955
  %v1986 = vsub.f32 %v1787, %v1955
  %v1987 = vsub.f32 %v1788, %v1955
  %v1988 = vsub.f32 %v1789, %v1955
  %v1989 = vsub.f32 %v1790, %v1955
  %v1990 = vsub.f32 %v1791, %v1955
  %v1991 = vsub.f32 %v1792, %v1955
  %v1992 = vsub.f32 %v1793, %v1955
  %v1993 = vsub.f32 %v1794, %v1955
  %v1994 = vsub.f32 %v1795, %v1955
  %v1995 = vsub.f32 %v1796, %v1955
  %v1996 = vsub.f32 %v1797, %v1955
  %v1997 = vsub.f32 %v1798, %v1955
  %v1998 = vsub.f32 %v1799, %v1955
  %v1999 = vsub.f32 %v1800, %v1955
  %v2000 = vsub.f32 %v1801, %v1955
  %v2001 = vsub.f32 %v1802, %v1955
  %v2002 = vsub.f32 %v1803, %v1955
  %v2003 = vsub.f32 %v1804, %v1955
  %v2004 = vsub.f32 %v1805, %v1955
  %v2005 = vsub.f32 %v1806, %v1955
  %v2006 = vsub.f32 %v1807, %v1955
  %v2007 = vsub.f32 %v1808, %v1955
  %v2008 = vsub.f32 %v1809, %v1955
  %v2009 = vsub.f32 %v1810, %v1955
  %v2010 = vsub.f32 %v1811, %v1955
  %v2011 = vsub.f32 %v1812, %v1955
  %v2012 = vsub.f32 %v1813, %v1955
  %v2013 = vsub.f32 %v1814, %v1955
  %v2014 = vsub.f32 %v1815, %v1955
  %v2015 = vsub.f32 %v1816, %v1955
  %v2016 = vsub.f32 %v1817, %v1955
  %v2017 = vsub.f32 %v1818, %v1955
  %v2018 = vsub.f32 %v1819, %v1955
  %v2019 = vsub.f32 %v1820, %v1955
  %v2020 = vmul.f32 %v1956, %v1956
  %v2021 = vmul.f32 %v1957, %v1957
  %v2022 = vmul.f32 %v1958, %v1958
  %v2023 = vmul.f32 %v1959, %v1959
  %v2024 = vmul.f32 %v1960, %v1960
  %v2025 = vmul.f32 %v1961, %v1961
  %v2026 = vmul.f32 %v1962, %v1962
  %v2027 = vmul.f32 %v1963, %v1963
  %v2028 = vmul.f32 %v1964, %v1964
  %v2029 = vmul.f32 %v1965, %v1965
  %v2030 = vmul.f32 %v1966, %v1966
  %v2031 = vmul.f32 %v1967, %v1967
  %v2032 = vmul.f32 %v1968, %v1968
  %v2033 = vmul.f32 %v1969, %v1969
  %v2034 = vmul.f32 %v1970, %v1970
  %v2035 = vmul.f32 %v1971, %v1971
  %v2036 = vmul.f32 %v1972, %v1972
  %v2037 = vmul.f32 %v1973, %v1973
  %v2038 = vmul.f32 %v1974, %v1974
  %v2039 = vmul.f32 %v1975, %v1975
  %v2040 = vmul.f32 %v1976, %v1976
  %v2041 = vmul.f32 %v1977, %v1977
  %v2042 = vmul.f32 %v1978, %v1978
  %v2043 = vmul.f32 %v1979, %v1979
  %v2044 = vmul.f32 %v1980, %v1980
  %v2045 = vmul.f32 %v1981, %v1981
  %v2046 = vmul.f32 %v1982, %v1982
  %v2047 = vmul.f32 %v1983, %v1983
  %v2048 = vmul.f32 %v1984, %v1984
  %v2049 = vmul.f32 %v1985, %v1985
  %v2050 = vmul.f32 %v1986, %v1986
  %v2051 = vmul.f32 %v1987, %v1987
  %v2052 = vmul.f32 %v1988, %v1988
  %v2053 = vmul.f32 %v1989, %v1989
  %v2054 = vmul.f32 %v1990, %v1990
  %v2055 = vmul.f32 %v1991, %v1991
  %v2056 = vmul.f32 %v1992, %v1992
  %v2057 = vmul.f32 %v1993, %v1993
  %v2058 = vmul.f32 %v1994, %v1994
  %v2059 = vmul.f32 %v1995, %v1995
  %v2060 = vmul.f32 %v1996, %v1996
  %v2061 = vmul.f32 %v1997, %v1997
  %v2062 = vmul.f32 %v1998, %v1998
  %v2063 = vmul.f32 %v1999, %v1999
  %v2064 = vmul.f32 %v2000, %v2000
  %v2065 = vmul.f32 %v2001, %v2001
  %v2066 = vmul.f32 %v2002, %v2002
  %v2067 = vmul.f32 %v2003, %v2003
  %v2068 = vmul.f32 %v2004, %v2004
  %v2069 = vmul.f32 %v2005, %v2005
  %v2070 = vmul.f32 %v2006, %v2006
  %v2071 = vmul.f32 %v2007, %v2007
  %v2072 = vmul.f32 %v2008, %v2008
  %v2073 = vmul.f32 %v2009, %v2009
  %v2074 = vmul.f32 %v2010, %v2010
  %v2075 = vmul.f32 %v2011, %v2011
  %v2076 = vmul.f32 %v2012, %v2012
  %v2077 = vmul.f32 %v2013, %v2013
  %v2078 = vmul.f32 %v2014, %v2014
  %v2079 = vmul.f32 %v2015, %v2015
  %v2080 = vmul.f32 %v2016, %v2016
  %v2081 = vmul.f32 %v2017, %v2017
  %v2082 = vmul.f32 %v2018, %v2018
  %v2083 = vmul.f32 %v2019, %v2019
  %v2084 = vsel %vm1821, %v2020, 0.0
  %v2085 = vsel %vm1821, %v2021, 0.0
  %v2086 = vadd.f32 %v2084, %v2085
  %v2087 = vsel %vm1821, %v2022, 0.0
  %v2088 = vadd.f32 %v2086, %v2087
  %v2089 = vsel %vm1821, %v2023, 0.0
  %v2090 = vadd.f32 %v2088, %v2089
  %v2091 = vsel %vm1821, %v2024, 0.0
  %v2092 = vadd.f32 %v2090, %v2091
  %v2093 = vsel %vm1821, %v2025, 0.0
  %v2094 = vadd.f32 %v2092, %v2093
  %v2095 = vsel %vm1821, %v2026, 0.0
  %v2096 = vadd.f32 %v2094, %v2095
  %v2097 = vsel %vm1821, %v2027, 0.0
  %v2098 = vadd.f32 %v2096, %v2097
  %v2099 = vsel %vm1821, %v2028, 0.0
  %v2100 = vadd.f32 %v2098, %v2099
  %v2101 = vsel %vm1821, %v2029, 0.0
  %v2102 = vadd.f32 %v2100, %v2101
  %v2103 = vsel %vm1821, %v2030, 0.0
  %v2104 = vadd.f32 %v2102, %v2103
  %v2105 = vsel %vm1821, %v2031, 0.0
  %v2106 = vadd.f32 %v2104, %v2105
  %v2107 = vsel %vm1821, %v2032, 0.0
  %v2108 = vadd.f32 %v2106, %v2107
  %v2109 = vsel %vm1821, %v2033, 0.0
  %v2110 = vadd.f32 %v2108, %v2109
  %v2111 = vsel %vm1821, %v2034, 0.0
  %v2112 = vadd.f32 %v2110, %v2111
  %v2113 = vsel %vm1821, %v2035, 0.0
  %v2114 = vadd.f32 %v2112, %v2113
  %v2115 = vsel %vm1821, %v2036, 0.0
  %v2116 = vadd.f32 %v2114, %v2115
  %v2117 = vsel %vm1821, %v2037, 0.0
  %v2118 = vadd.f32 %v2116, %v2117
  %v2119 = vsel %vm1821, %v2038, 0.0
  %v2120 = vadd.f32 %v2118, %v2119
  %v2121 = vsel %vm1821, %v2039, 0.0
  %v2122 = vadd.f32 %v2120, %v2121
  %v2123 = vsel %vm1821, %v2040, 0.0
  %v2124 = vadd.f32 %v2122, %v2123
  %v2125 = vsel %vm1821, %v2041, 0.0
  %v2126 = vadd.f32 %v2124, %v2125
  %v2127 = vsel %vm1821, %v2042, 0.0
  %v2128 = vadd.f32 %v2126, %v2127
  %v2129 = vsel %vm1821, %v2043, 0.0
  %v2130 = vadd.f32 %v2128, %v2129
  %v2131 = vsel %vm1821, %v2044, 0.0
  %v2132 = vadd.f32 %v2130, %v2131
  %v2133 = vsel %vm1821, %v2045, 0.0
  %v2134 = vadd.f32 %v2132, %v2133
  %v2135 = vsel %vm1821, %v2046, 0.0
  %v2136 = vadd.f32 %v2134, %v2135
  %v2137 = vsel %vm1821, %v2047, 0.0
  %v2138 = vadd.f32 %v2136, %v2137
  %v2139 = vsel %vm1821, %v2048, 0.0
  %v2140 = vadd.f32 %v2138, %v2139
  %v2141 = vsel %vm1821, %v2049, 0.0
  %v2142 = vadd.f32 %v2140, %v2141
  %v2143 = vsel %vm1821, %v2050, 0.0
  %v2144 = vadd.f32 %v2142, %v2143
  %v2145 = vsel %vm1821, %v2051, 0.0
  %v2146 = vadd.f32 %v2144, %v2145
  %v2147 = vsel %vm1821, %v2052, 0.0
  %v2148 = vadd.f32 %v2146, %v2147
  %v2149 = vsel %vm1821, %v2053, 0.0
  %v2150 = vadd.f32 %v2148, %v2149
  %v2151 = vsel %vm1821, %v2054, 0.0
  %v2152 = vadd.f32 %v2150, %v2151
  %v2153 = vsel %vm1821, %v2055, 0.0
  %v2154 = vadd.f32 %v2152, %v2153
  %v2155 = vsel %vm1821, %v2056, 0.0
  %v2156 = vadd.f32 %v2154, %v2155
  %v2157 = vsel %vm1821, %v2057, 0.0
  %v2158 = vadd.f32 %v2156, %v2157
  %v2159 = vsel %vm1821, %v2058, 0.0
  %v2160 = vadd.f32 %v2158, %v2159
  %v2161 = vsel %vm1821, %v2059, 0.0
  %v2162 = vadd.f32 %v2160, %v2161
  %v2163 = vsel %vm1821, %v2060, 0.0
  %v2164 = vadd.f32 %v2162, %v2163
  %v2165 = vsel %vm1821, %v2061, 0.0
  %v2166 = vadd.f32 %v2164, %v2165
  %v2167 = vsel %vm1821, %v2062, 0.0
  %v2168 = vadd.f32 %v2166, %v2167
  %v2169 = vsel %vm1821, %v2063, 0.0
  %v2170 = vadd.f32 %v2168, %v2169
  %v2171 = vsel %vm1821, %v2064, 0.0
  %v2172 = vadd.f32 %v2170, %v2171
  %v2173 = vsel %vm1821, %v2065, 0.0
  %v2174 = vadd.f32 %v2172, %v2173
  %v2175 = vsel %vm1821, %v2066, 0.0
  %v2176 = vadd.f32 %v2174, %v2175
  %v2177 = vsel %vm1821, %v2067, 0.0
  %v2178 = vadd.f32 %v2176, %v2177
  %v2179 = vsel %vm1821, %v2068, 0.0
  %v2180 = vadd.f32 %v2178, %v2179
  %v2181 = vsel %vm1821, %v2069, 0.0
  %v2182 = vadd.f32 %v2180, %v2181
  %v2183 = vsel %vm1821, %v2070, 0.0
  %v2184 = vadd.f32 %v2182, %v2183
  %v2185 = vsel %vm1821, %v2071, 0.0
  %v2186 = vadd.f32 %v2184, %v2185
  %v2187 = vsel %vm1821, %v2072, 0.0
  %v2188 = vadd.f32 %v2186, %v2187
  %v2189 = vsel %vm1821, %v2073, 0.0
  %v2190 = vadd.f32 %v2188, %v2189
  %v2191 = vsel %vm1821, %v2074, 0.0
  %v2192 = vadd.f32 %v2190, %v2191
  %v2193 = vsel %vm1821, %v2075, 0.0
  %v2194 = vadd.f32 %v2192, %v2193
  %v2195 = vsel %vm1821, %v2076, 0.0
  %v2196 = vadd.f32 %v2194, %v2195
  %v2197 = vsel %vm1821, %v2077, 0.0
  %v2198 = vadd.f32 %v2196, %v2197
  %v2199 = vsel %vm1821, %v2078, 0.0
  %v2200 = vadd.f32 %v2198, %v2199
  %v2201 = vsel %vm1821, %v2079, 0.0
  %v2202 = vadd.f32 %v2200, %v2201
  %v2203 = vsel %vm1821, %v2080, 0.0
  %v2204 = vadd.f32 %v2202, %v2203
  %v2205 = vsel %vm1821, %v2081, 0.0
  %v2206 = vadd.f32 %v2204, %v2205
  %v2207 = vsel %vm1821, %v2082, 0.0
  %v2208 = vadd.f32 %v2206, %v2207
  %v2209 = vsel %vm1821, %v2083, 0.0
  %v2210 = vadd.f32 %v2208, %v2209
  %v2211 = vrot.slane %v2210, 4
  %v2212 = vadd.f32 %v2210, %v2211
  %v2213 = vrot.slane %v2212, 2
  %v2214 = vadd.f32 %v2212, %v2213
  %v2215 = vrot.slane %v2214, 1
  %v2216 = vadd.f32 %v2214, %v2215
  %v2217 = vmul.f32 %v2216, 0.001953125
  %v2218 = vadd.f32 %v2217, 1e-05
  %v2219 = vrsqrt.pop %v2218
  %v2220 = vmul.f32 %v1956, %v2219
  %v2221 = vmul.f32 %v1957, %v2219
  %v2222 = vmul.f32 %v1958, %v2219
  %v2223 = vmul.f32 %v1959, %v2219
  %v2224 = vmul.f32 %v1960, %v2219
  %v2225 = vmul.f32 %v1961, %v2219
  %v2226 = vmul.f32 %v1962, %v2219
  %v2227 = vmul.f32 %v1963, %v2219
  %v2228 = vmul.f32 %v1964, %v2219
  %v2229 = vmul.f32 %v1965, %v2219
  %v2230 = vmul.f32 %v1966, %v2219
  %v2231 = vmul.f32 %v1967, %v2219
  %v2232 = vmul.f32 %v1968, %v2219
  %v2233 = vmul.f32 %v1969, %v2219
  %v2234 = vmul.f32 %v1970, %v2219
  %v2235 = vmul.f32 %v1971, %v2219
  %v2236 = vmul.f32 %v1972, %v2219
  %v2237 = vmul.f32 %v1973, %v2219
  %v2238 = vmul.f32 %v1974, %v2219
  %v2239 = vmul.f32 %v1975, %v2219
  %v2240 = vmul.f32 %v1976, %v2219
  %v2241 = vmul.f32 %v1977, %v2219
  %v2242 = vmul.f32 %v1978, %v2219
  %v2243 = vmul.f32 %v1979, %v2219
  %v2244 = vmul.f32 %v1980, %v2219
  %v2245 = vmul.f32 %v1981, %v2219
  %v2246 = vmul.f32 %v1982, %v2219
  %v2247 = vmul.f32 %v1983, %v2219
  %v2248 = vmul.f32 %v1984, %v2219
  %v2249 = vmul.f32 %v1985, %v2219
  %v2250 = vmul.f32 %v1986, %v2219
  %v2251 = vmul.f32 %v1987, %v2219
  %v2252 = vmul.f32 %v1988, %v2219
  %v2253 = vmul.f32 %v1989, %v2219
  %v2254 = vmul.f32 %v1990, %v2219
  %v2255 = vmul.f32 %v1991, %v2219
  %v2256 = vmul.f32 %v1992, %v2219
  %v2257 = vmul.f32 %v1993, %v2219
  %v2258 = vmul.f32 %v1994, %v2219
  %v2259 = vmul.f32 %v1995, %v2219
  %v2260 = vmul.f32 %v1996, %v2219
  %v2261 = vmul.f32 %v1997, %v2219
  %v2262 = vmul.f32 %v1998, %v2219
  %v2263 = vmul.f32 %v1999, %v2219
  %v2264 = vmul.f32 %v2000, %v2219
  %v2265 = vmul.f32 %v2001, %v2219
  %v2266 = vmul.f32 %v2002, %v2219
  %v2267 = vmul.f32 %v2003, %v2219
  %v2268 = vmul.f32 %v2004, %v2219
  %v2269 = vmul.f32 %v2005, %v2219
  %v2270 = vmul.f32 %v2006, %v2219
  %v2271 = vmul.f32 %v2007, %v2219
  %v2272 = vmul.f32 %v2008, %v2219
  %v2273 = vmul.f32 %v2009, %v2219
  %v2274 = vmul.f32 %v2010, %v2219
  %v2275 = vmul.f32 %v2011, %v2219
  %v2276 = vmul.f32 %v2012, %v2219
  %v2277 = vmul.f32 %v2013, %v2219
  %v2278 = vmul.f32 %v2014, %v2219
  %v2279 = vmul.f32 %v2015, %v2219
  %v2280 = vmul.f32 %v2016, %v2219
  %v2281 = vmul.f32 %v2017, %v2219
  %v2282 = vmul.f32 %v2018, %v2219
  %v2283 = vmul.f32 %v2019, %v2219
  %v2284 = vld [vmem:[%s2] sm:$0x1]
  %v2286 = vlaneseq
  %v2287 = vshrl.u32 %v2286, 7
  %v2288 = vsub.s32 0, %v2287
  %v2289 = vrot.slane %v2284, %v2288
  %v2291 = vmul.f32 %v2220, %v2289
  %v2292 = vmul.f32 %v2221, %v2289
  %v2293 = vmul.f32 %v2222, %v2289
  %v2294 = vmul.f32 %v2223, %v2289
  %v2295 = vmul.f32 %v2224, %v2289
  %v2296 = vmul.f32 %v2225, %v2289
  %v2297 = vmul.f32 %v2226, %v2289
  %v2298 = vmul.f32 %v2227, %v2289
  %v2299 = vmul.f32 %v2228, %v2289
  %v2300 = vmul.f32 %v2229, %v2289
  %v2301 = vmul.f32 %v2230, %v2289
  %v2302 = vmul.f32 %v2231, %v2289
  %v2303 = vmul.f32 %v2232, %v2289
  %v2304 = vmul.f32 %v2233, %v2289
  %v2305 = vmul.f32 %v2234, %v2289
  %v2306 = vmul.f32 %v2235, %v2289
  %v2307 = vmul.f32 %v2236, %v2289
  %v2308 = vmul.f32 %v2237, %v2289
  %v2309 = vmul.f32 %v2238, %v2289
  %v2310 = vmul.f32 %v2239, %v2289
  %v2311 = vmul.f32 %v2240, %v2289
  %v2312 = vmul.f32 %v2241, %v2289
  %v2313 = vmul.f32 %v2242, %v2289
  %v2314 = vmul.f32 %v2243, %v2289
  %v2315 = vmul.f32 %v2244, %v2289
  %v2316 = vmul.f32 %v2245, %v2289
  %v2317 = vmul.f32 %v2246, %v2289
  %v2318 = vmul.f32 %v2247, %v2289
  %v2319 = vmul.f32 %v2248, %v2289
  %v2320 = vmul.f32 %v2249, %v2289
  %v2321 = vmul.f32 %v2250, %v2289
  %v2322 = vmul.f32 %v2251, %v2289
  %v2323 = vmul.f32 %v2252, %v2289
  %v2324 = vmul.f32 %v2253, %v2289
  %v2325 = vmul.f32 %v2254, %v2289
  %v2326 = vmul.f32 %v2255, %v2289
  %v2327 = vmul.f32 %v2256, %v2289
  %v2328 = vmul.f32 %v2257, %v2289
  %v2329 = vmul.f32 %v2258, %v2289
  %v2330 = vmul.f32 %v2259, %v2289
  %v2331 = vmul.f32 %v2260, %v2289
  %v2332 = vmul.f32 %v2261, %v2289
  %v2333 = vmul.f32 %v2262, %v2289
  %v2334 = vmul.f32 %v2263, %v2289
  %v2335 = vmul.f32 %v2264, %v2289
  %v2336 = vmul.f32 %v2265, %v2289
  %v2337 = vmul.f32 %v2266, %v2289
  %v2338 = vmul.f32 %v2267, %v2289
  %v2339 = vmul.f32 %v2268, %v2289
  %v2340 = vmul.f32 %v2269, %v2289
  %v2341 = vmul.f32 %v2270, %v2289
  %v2342 = vmul.f32 %v2271, %v2289
  %v2343 = vmul.f32 %v2272, %v2289
  %v2344 = vmul.f32 %v2273, %v2289
  %v2345 = vmul.f32 %v2274, %v2289
  %v2346 = vmul.f32 %v2275, %v2289
  %v2347 = vmul.f32 %v2276, %v2289
  %v2348 = vmul.f32 %v2277, %v2289
  %v2349 = vmul.f32 %v2278, %v2289
  %v2350 = vmul.f32 %v2279, %v2289
  %v2351 = vmul.f32 %v2280, %v2289
  %v2352 = vmul.f32 %v2281, %v2289
  %v2353 = vmul.f32 %v2282, %v2289
  %v2354 = vmul.f32 %v2283, %v2289
  %v2355 = vld [vmem:[%s3] sm:$0x1]
  %v2357 = vlaneseq
  %v2358 = vshrl.u32 %v2357, 7
  %v2359 = vsub.s32 0, %v2358
  %v2360 = vrot.slane %v2355, %v2359
  %v2362 = vadd.f32 %v2291, %v2360
  %v2363 = vadd.f32 %v2292, %v2360
  %v2364 = vadd.f32 %v2293, %v2360
  %v2365 = vadd.f32 %v2294, %v2360
  %v2366 = vadd.f32 %v2295, %v2360
  %v2367 = vadd.f32 %v2296, %v2360
  %v2368 = vadd.f32 %v2297, %v2360
  %v2369 = vadd.f32 %v2298, %v2360
  %v2370 = vadd.f32 %v2299, %v2360
  %v2371 = vadd.f32 %v2300, %v2360
  %v2372 = vadd.f32 %v2301, %v2360
  %v2373 = vadd.f32 %v2302, %v2360
  %v2374 = vadd.f32 %v2303, %v2360
  %v2375 = vadd.f32 %v2304, %v2360
  %v2376 = vadd.f32 %v2305, %v2360
  %v2377 = vadd.f32 %v2306, %v2360
  %v2378 = vadd.f32 %v2307, %v2360
  %v2379 = vadd.f32 %v2308, %v2360
  %v2380 = vadd.f32 %v2309, %v2360
  %v2381 = vadd.f32 %v2310, %v2360
  %v2382 = vadd.f32 %v2311, %v2360
  %v2383 = vadd.f32 %v2312, %v2360
  %v2384 = vadd.f32 %v2313, %v2360
  %v2385 = vadd.f32 %v2314, %v2360
  %v2386 = vadd.f32 %v2315, %v2360
  %v2387 = vadd.f32 %v2316, %v2360
  %v2388 = vadd.f32 %v2317, %v2360
  %v2389 = vadd.f32 %v2318, %v2360
  %v2390 = vadd.f32 %v2319, %v2360
  %v2391 = vadd.f32 %v2320, %v2360
  %v2392 = vadd.f32 %v2321, %v2360
  %v2393 = vadd.f32 %v2322, %v2360
  %v2394 = vadd.f32 %v2323, %v2360
  %v2395 = vadd.f32 %v2324, %v2360
  %v2396 = vadd.f32 %v2325, %v2360
  %v2397 = vadd.f32 %v2326, %v2360
  %v2398 = vadd.f32 %v2327, %v2360
  %v2399 = vadd.f32 %v2328, %v2360
  %v2400 = vadd.f32 %v2329, %v2360
  %v2401 = vadd.f32 %v2330, %v2360
  %v2402 = vadd.f32 %v2331, %v2360
  %v2403 = vadd.f32 %v2332, %v2360
  %v2404 = vadd.f32 %v2333, %v2360
  %v2405 = vadd.f32 %v2334, %v2360
  %v2406 = vadd.f32 %v2335, %v2360
  %v2407 = vadd.f32 %v2336, %v2360
  %v2408 = vadd.f32 %v2337, %v2360
  %v2409 = vadd.f32 %v2338, %v2360
  %v2410 = vadd.f32 %v2339, %v2360
  %v2411 = vadd.f32 %v2340, %v2360
  %v2412 = vadd.f32 %v2341, %v2360
  %v2413 = vadd.f32 %v2342, %v2360
  %v2414 = vadd.f32 %v2343, %v2360
  %v2415 = vadd.f32 %v2344, %v2360
  %v2416 = vadd.f32 %v2345, %v2360
  %v2417 = vadd.f32 %v2346, %v2360
  %v2418 = vadd.f32 %v2347, %v2360
  %v2419 = vadd.f32 %v2348, %v2360
  %v2420 = vadd.f32 %v2349, %v2360
  %v2421 = vadd.f32 %v2350, %v2360
  %v2422 = vadd.f32 %v2351, %v2360
  %v2423 = vadd.f32 %v2352, %v2360
  %v2424 = vadd.f32 %v2353, %v2360
  %v2425 = vadd.f32 %v2354, %v2360
  %2426 = vst.msk [vmem:[%s4] sm:$0xff] %vm1821, %v2362
  %2427 = vst.msk [vmem:[%s4 + $0x8] sm:$0xff] %vm1821, %v2363
  %2428 = vst.msk [vmem:[%s4 + $0x10] sm:$0xff] %vm1821, %v2364
  %2429 = vst.msk [vmem:[%s4 + $0x18] sm:$0xff] %vm1821, %v2365
  %2430 = vst.msk [vmem:[%s4 + $0x20] sm:$0xff] %vm1821, %v2366
  %2431 = vst.msk [vmem:[%s4 + $0x28] sm:$0xff] %vm1821, %v2367
  %2432 = vst.msk [vmem:[%s4 + $0x30] sm:$0xff] %vm1821, %v2368
  %2433 = vst.msk [vmem:[%s4 + $0x38] sm:$0xff] %vm1821, %v2369
  %2434 = vst.msk [vmem:[%s4 + $0x40] sm:$0xff] %vm1821, %v2370
  %2435 = vst.msk [vmem:[%s4 + $0x48] sm:$0xff] %vm1821, %v2371
  %2436 = vst.msk [vmem:[%s4 + $0x50] sm:$0xff] %vm1821, %v2372
  %2437 = vst.msk [vmem:[%s4 + $0x58] sm:$0xff] %vm1821, %v2373
  %2438 = vst.msk [vmem:[%s4 + $0x60] sm:$0xff] %vm1821, %v2374
  %2439 = vst.msk [vmem:[%s4 + $0x68] sm:$0xff] %vm1821, %v2375
  %2440 = vst.msk [vmem:[%s4 + $0x70] sm:$0xff] %vm1821, %v2376
  %2441 = vst.msk [vmem:[%s4 + $0x78] sm:$0xff] %vm1821, %v2377
  %2442 = vst.msk [vmem:[%s4 + $0x80] sm:$0xff] %vm1821, %v2378
  %2443 = vst.msk [vmem:[%s4 + $0x88] sm:$0xff] %vm1821, %v2379
  %2444 = vst.msk [vmem:[%s4 + $0x90] sm:$0xff] %vm1821, %v2380
  %2445 = vst.msk [vmem:[%s4 + $0x98] sm:$0xff] %vm1821, %v2381
  %2446 = vst.msk [vmem:[%s4 + $0xa0] sm:$0xff] %vm1821, %v2382
  %2447 = vst.msk [vmem:[%s4 + $0xa8] sm:$0xff] %vm1821, %v2383
  %2448 = vst.msk [vmem:[%s4 + $0xb0] sm:$0xff] %vm1821, %v2384
  %2449 = vst.msk [vmem:[%s4 + $0xb8] sm:$0xff] %vm1821, %v2385
  %2450 = vst.msk [vmem:[%s4 + $0xc0] sm:$0xff] %vm1821, %v2386
  %2451 = vst.msk [vmem:[%s4 + $0xc8] sm:$0xff] %vm1821, %v2387
  %2452 = vst.msk [vmem:[%s4 + $0xd0] sm:$0xff] %vm1821, %v2388
  %2453 = vst.msk [vmem:[%s4 + $0xd8] sm:$0xff] %vm1821, %v2389
  %2454 = vst.msk [vmem:[%s4 + $0xe0] sm:$0xff] %vm1821, %v2390
  %2455 = vst.msk [vmem:[%s4 + $0xe8] sm:$0xff] %vm1821, %v2391
  %2456 = vst.msk [vmem:[%s4 + $0xf0] sm:$0xff] %vm1821, %v2392
  %2457 = vst.msk [vmem:[%s4 + $0xf8] sm:$0xff] %vm1821, %v2393
  %2458 = vst.msk [vmem:[%s4 + $0x100] sm:$0xff] %vm1821, %v2394
  %2459 = vst.msk [vmem:[%s4 + $0x108] sm:$0xff] %vm1821, %v2395
  %2460 = vst.msk [vmem:[%s4 + $0x110] sm:$0xff] %vm1821, %v2396
  %2461 = vst.msk [vmem:[%s4 + $0x118] sm:$0xff] %vm1821, %v2397
  %2462 = vst.msk [vmem:[%s4 + $0x120] sm:$0xff] %vm1821, %v2398
  %2463 = vst.msk [vmem:[%s4 + $0x128] sm:$0xff] %vm1821, %v2399
  %2464 = vst.msk [vmem:[%s4 + $0x130] sm:$0xff] %vm1821, %v2400
  %2465 = vst.msk [vmem:[%s4 + $0x138] sm:$0xff] %vm1821, %v2401
  %2466 = vst.msk [vmem:[%s4 + $0x140] sm:$0xff] %vm1821, %v2402
  %2467 = vst.msk [vmem:[%s4 + $0x148] sm:$0xff] %vm1821, %v2403
  %2468 = vst.msk [vmem:[%s4 + $0x150] sm:$0xff] %vm1821, %v2404
  %2469 = vst.msk [vmem:[%s4 + $0x158] sm:$0xff] %vm1821, %v2405
  %2470 = vst.msk [vmem:[%s4 + $0x160] sm:$0xff] %vm1821, %v2406
  %2471 = vst.msk [vmem:[%s4 + $0x168] sm:$0xff] %vm1821, %v2407
  %2472 = vst.msk [vmem:[%s4 + $0x170] sm:$0xff] %vm1821, %v2408
  %2473 = vst.msk [vmem:[%s4 + $0x178] sm:$0xff] %vm1821, %v2409
  %2474 = vst.msk [vmem:[%s4 + $0x180] sm:$0xff] %vm1821, %v2410
  %2475 = vst.msk [vmem:[%s4 + $0x188] sm:$0xff] %vm1821, %v2411
  %2476 = vst.msk [vmem:[%s4 + $0x190] sm:$0xff] %vm1821, %v2412
  %2477 = vst.msk [vmem:[%s4 + $0x198] sm:$0xff] %vm1821, %v2413
  %2478 = vst.msk [vmem:[%s4 + $0x1a0] sm:$0xff] %vm1821, %v2414
  %2479 = vst.msk [vmem:[%s4 + $0x1a8] sm:$0xff] %vm1821, %v2415
  %2480 = vst.msk [vmem:[%s4 + $0x1b0] sm:$0xff] %vm1821, %v2416
  %2481 = vst.msk [vmem:[%s4 + $0x1b8] sm:$0xff] %vm1821, %v2417
  %2482 = vst.msk [vmem:[%s4 + $0x1c0] sm:$0xff] %vm1821, %v2418
  %2483 = vst.msk [vmem:[%s4 + $0x1c8] sm:$0xff] %vm1821, %v2419
  %2484 = vst.msk [vmem:[%s4 + $0x1d0] sm:$0xff] %vm1821, %v2420
  %2485 = vst.msk [vmem:[%s4 + $0x1d8] sm:$0xff] %vm1821, %v2421
  %2486 = vst.msk [vmem:[%s4 + $0x1e0] sm:$0xff] %vm1821, %v2422
  %2487 = vst.msk [vmem:[%s4 + $0x1e8] sm:$0xff] %vm1821, %v2423
  %2488 = vst.msk [vmem:[%s4 + $0x1f0] sm:$0xff] %vm1821, %v2424
  %2489 = vst.msk [vmem:[%s4 + $0x1f8] sm:$0xff] %vm1821, %v2425
  // Predicated region
  $region18: #{mask_generator_forward.13} parent=0 // pred_check
    _
  $region19: #{mask_generator_forward.13} parent=0 // pred_check_branch
    %2491 = sbr.rel (0) target = $region21
  $region20: #{mask_generator_forward.13} parent=0 // pred_region
    _
  $region21: #{mask_generator_forward.13} parent=0 // pred_fallthru
    _
  // Predicated region
  $region22: #{mask_generator_forward.13} parent=0 // pred_check
    _
  $region23: #{mask_generator_forward.13} parent=0 // pred_check_branch
    %2493 = sbr.rel (0) target = $region25
  $region24: #{mask_generator_forward.13} parent=0 // pred_region
    _
  $region25: #{mask_generator_forward.13} parent=0 // pred_fallthru
    _

// kernel: mask_generator_forward.14
$region0: #{mask_generator_forward.14}
  #allocation0 [shape = 'u32[]', space=smem, size = 0x4, offset = 0x4, fixed_abs, tag = 'smem constant byte address 0x4 - core index']
  #allocation1 [shape = 'u32[144,128]{1,0:T(1,128)}', space=vmem, size = 0x12000, scoped, tag = 'internal scratch']
  %s0 = inlined_call_operand.vmem [shape: f32[512,297], index: 0, kind: input, shape index: {}]
  %s1 = inlined_call_operand.vmem [shape: f32[297,15], index: 1, kind: input, shape index: {}]
  %s2 = inlined_call_operand.vmem [shape: f32[1,15], index: 2, kind: input, shape index: {}]
  %s3 = inlined_call_operand.vmem [shape: f32[1,15], index: 3, kind: input, shape index: {}]
  %s4 = inlined_call_operand.vmem [shape: f32[1,15], index: 4, kind: input, shape index: {}]
  %s5 = inlined_call_operand.vmem [shape: f32[512,15], index: 5, kind: output, shape index: {}]
  %s6 = sld [smem:[#allocation0]]
  $region30: #{mask_generator_forward.14} parent=0
    _
  %s8 = ssub.s32 1, %s6
  %s9 = scalar_select 0, %s8, %s6
  // Predicated region
  $region2: #{mask_generator_forward.14} parent=0 // pred_check
    _
  $region3: #{mask_generator_forward.14} parent=0 // pred_check_branch
    %11 = sbr.rel (0) target = $region5
  $region4: #{mask_generator_forward.14} parent=0 // pred_region
    _
  $region5: #{mask_generator_forward.14} parent=0 // pred_fallthru
    _
  // Predicated region
  $region6: #{mask_generator_forward.14} parent=0 // pred_check
    _
  $region7: #{mask_generator_forward.14} parent=0 // pred_check_branch
    %13 = sbr.rel (0) target = $region9
  $region8: #{mask_generator_forward.14} parent=0 // pred_region
    _
  $region9: #{mask_generator_forward.14} parent=0 // pred_fallthru
    _
  // Predicated region
  $region10: #{mask_generator_forward.14} parent=0 // pred_check
    _
  $region11: #{mask_generator_forward.14} parent=0 // pred_check_branch
    %15 = sbr.rel (0) target = $region13
  $region12: #{mask_generator_forward.14} parent=0 // pred_region
    _
  $region13: #{mask_generator_forward.14} parent=0 // pred_fallthru
    _
  // Predicated region
  $region14: #{mask_generator_forward.14} parent=0 // pred_check
    _
  $region15: #{mask_generator_forward.14} parent=0 // pred_check_branch
    %17 = sbr.rel (0) target = $region17
  $region16: #{mask_generator_forward.14} parent=0 // pred_region
    _
  $region17: #{mask_generator_forward.14} parent=0 // pred_fallthru
    _
  // Predicated region
  $region18: #{mask_generator_forward.14} parent=0 // pred_check
    _
  $region19: #{mask_generator_forward.14} parent=0 // pred_check_branch
    %19 = sbr.rel (0) target = $region21
  $region20: #{mask_generator_forward.14} parent=0 // pred_region
    _
  $region21: #{mask_generator_forward.14} parent=0 // pred_fallthru
    _
  %v20 = vld [vmem:[%s0] sm:$0xff]
  %v21 = vld [vmem:[%s0 + $0x8] sm:$0xff]
  %v22 = vld [vmem:[%s0 + $0x10] sm:$0xff]
  %v23 = vld [vmem:[%s0 + $0x18] sm:$0xff]
  %v24 = vld [vmem:[%s0 + $0x20] sm:$0xff]
  %v25 = vld [vmem:[%s0 + $0x28] sm:$0xff]
  %v26 = vld [vmem:[%s0 + $0x30] sm:$0xff]
  %v27 = vld [vmem:[%s0 + $0x38] sm:$0xff]
  %v28 = vld [vmem:[%s0 + $0x40] sm:$0xff]
  %v29 = vld [vmem:[%s0 + $0x48] sm:$0xff]
  %v30 = vld [vmem:[%s0 + $0x50] sm:$0xff]
  %v31 = vld [vmem:[%s0 + $0x58] sm:$0xff]
  %v32 = vld [vmem:[%s0 + $0x60] sm:$0xff]
  %v33 = vld [vmem:[%s0 + $0x68] sm:$0xff]
  %v34 = vld [vmem:[%s0 + $0x70] sm:$0xff]
  %v35 = vld [vmem:[%s0 + $0x78] sm:$0xff]
  %v36 = vld [vmem:[%s0 + $0x80] sm:$0xff]
  %v37 = vld [vmem:[%s0 + $0x88] sm:$0xff]
  %v38 = vld [vmem:[%s0 + $0x90] sm:$0xff]
  %v39 = vld [vmem:[%s0 + $0x98] sm:$0xff]
  %v40 = vld [vmem:[%s0 + $0xa0] sm:$0xff]
  %v41 = vld [vmem:[%s0 + $0xa8] sm:$0xff]
  %v42 = vld [vmem:[%s0 + $0xb0] sm:$0xff]
  %v43 = vld [vmem:[%s0 + $0xb8] sm:$0xff]
  %v44 = vld [vmem:[%s0 + $0xc0] sm:$0xff]
  %v45 = vld [vmem:[%s0 + $0xc8] sm:$0xff]
  %v46 = vld [vmem:[%s0 + $0xd0] sm:$0xff]
  %v47 = vld [vmem:[%s0 + $0xd8] sm:$0xff]
  %v48 = vld [vmem:[%s0 + $0xe0] sm:$0xff]
  %v49 = vld [vmem:[%s0 + $0xe8] sm:$0xff]
  %v50 = vld [vmem:[%s0 + $0xf0] sm:$0xff]
  %v51 = vld [vmem:[%s0 + $0xf8] sm:$0xff]
  %v52 = vld [vmem:[%s0 + $0x100] sm:$0xff]
  %v53 = vld [vmem:[%s0 + $0x108] sm:$0xff]
  %v54 = vld [vmem:[%s0 + $0x110] sm:$0xff]
  %v55 = vld [vmem:[%s0 + $0x118] sm:$0xff]
  %v56 = vld [vmem:[%s0 + $0x120] sm:$0xff]
  %v57 = vld [vmem:[%s0 + $0x128] sm:$0xff]
  %v58 = vld [vmem:[%s0 + $0x130] sm:$0xff]
  %v59 = vld [vmem:[%s0 + $0x138] sm:$0xff]
  %v60 = vld [vmem:[%s0 + $0x140] sm:$0xff]
  %v61 = vld [vmem:[%s0 + $0x148] sm:$0xff]
  %v62 = vld [vmem:[%s0 + $0x150] sm:$0xff]
  %v63 = vld [vmem:[%s0 + $0x158] sm:$0xff]
  %v64 = vld [vmem:[%s0 + $0x160] sm:$0xff]
  %v65 = vld [vmem:[%s0 + $0x168] sm:$0xff]
  %v66 = vld [vmem:[%s0 + $0x170] sm:$0xff]
  %v67 = vld [vmem:[%s0 + $0x178] sm:$0xff]
  %v68 = vld [vmem:[%s0 + $0x180] sm:$0xff]
  %v69 = vld [vmem:[%s0 + $0x188] sm:$0xff]
  %v70 = vld [vmem:[%s0 + $0x190] sm:$0xff]
  %v71 = vld [vmem:[%s0 + $0x198] sm:$0xff]
  %v72 = vld [vmem:[%s0 + $0x1a0] sm:$0xff]
  %v73 = vld [vmem:[%s0 + $0x1a8] sm:$0xff]
  %v74 = vld [vmem:[%s0 + $0x1b0] sm:$0xff]
  %v75 = vld [vmem:[%s0 + $0x1b8] sm:$0xff]
  %v76 = vld [vmem:[%s0 + $0x1c0] sm:$0xff]
  %v77 = vld [vmem:[%s0 + $0x1c8] sm:$0xff]
  %v78 = vld [vmem:[%s0 + $0x1d0] sm:$0xff]
  %v79 = vld [vmem:[%s0 + $0x1d8] sm:$0xff]
  %v80 = vld [vmem:[%s0 + $0x1e0] sm:$0xff]
  %v81 = vld [vmem:[%s0 + $0x1e8] sm:$0xff]
  %v82 = vld [vmem:[%s0 + $0x1f0] sm:$0xff]
  %v83 = vld [vmem:[%s0 + $0x1f8] sm:$0xff]
  %v84 = vld [vmem:[%s0 + $0x200] sm:$0xff]
  %v85 = vld [vmem:[%s0 + $0x208] sm:$0xff]
  %v86 = vld [vmem:[%s0 + $0x210] sm:$0xff]
  %v87 = vld [vmem:[%s0 + $0x218] sm:$0xff]
  %v88 = vld [vmem:[%s0 + $0x220] sm:$0xff]
  %v89 = vld [vmem:[%s0 + $0x228] sm:$0xff]
  %v90 = vld [vmem:[%s0 + $0x230] sm:$0xff]
  %v91 = vld [vmem:[%s0 + $0x238] sm:$0xff]
  %v92 = vld [vmem:[%s0 + $0x240] sm:$0xff]
  %v93 = vld [vmem:[%s0 + $0x248] sm:$0xff]
  %v94 = vld [vmem:[%s0 + $0x250] sm:$0xff]
  %v95 = vld [vmem:[%s0 + $0x258] sm:$0xff]
  %v96 = vld [vmem:[%s0 + $0x260] sm:$0xff]
  %v97 = vld [vmem:[%s0 + $0x268] sm:$0xff]
  %v98 = vld [vmem:[%s0 + $0x270] sm:$0xff]
  %v99 = vld [vmem:[%s0 + $0x278] sm:$0xff]
  %v100 = vld [vmem:[%s0 + $0x280] sm:$0xff]
  %v101 = vld [vmem:[%s0 + $0x288] sm:$0xff]
  %v102 = vld [vmem:[%s0 + $0x290] sm:$0xff]
  %v103 = vld [vmem:[%s0 + $0x298] sm:$0xff]
  %v104 = vld [vmem:[%s0 + $0x2a0] sm:$0xff]
  %v105 = vld [vmem:[%s0 + $0x2a8] sm:$0xff]
  %v106 = vld [vmem:[%s0 + $0x2b0] sm:$0xff]
  %v107 = vld [vmem:[%s0 + $0x2b8] sm:$0xff]
  %v108 = vld [vmem:[%s0 + $0x2c0] sm:$0xff]
  %v109 = vld [vmem:[%s0 + $0x2c8] sm:$0xff]
  %v110 = vld [vmem:[%s0 + $0x2d0] sm:$0xff]
  %v111 = vld [vmem:[%s0 + $0x2d8] sm:$0xff]
  %v112 = vld [vmem:[%s0 + $0x2e0] sm:$0xff]
  %v113 = vld [vmem:[%s0 + $0x2e8] sm:$0xff]
  %v114 = vld [vmem:[%s0 + $0x2f0] sm:$0xff]
  %v115 = vld [vmem:[%s0 + $0x2f8] sm:$0xff]
  %v116 = vld [vmem:[%s0 + $0x300] sm:$0xff]
  %v117 = vld [vmem:[%s0 + $0x308] sm:$0xff]
  %v118 = vld [vmem:[%s0 + $0x310] sm:$0xff]
  %v119 = vld [vmem:[%s0 + $0x318] sm:$0xff]
  %v120 = vld [vmem:[%s0 + $0x320] sm:$0xff]
  %v121 = vld [vmem:[%s0 + $0x328] sm:$0xff]
  %v122 = vld [vmem:[%s0 + $0x330] sm:$0xff]
  %v123 = vld [vmem:[%s0 + $0x338] sm:$0xff]
  %v124 = vld [vmem:[%s0 + $0x340] sm:$0xff]
  %v125 = vld [vmem:[%s0 + $0x348] sm:$0xff]
  %v126 = vld [vmem:[%s0 + $0x350] sm:$0xff]
  %v127 = vld [vmem:[%s0 + $0x358] sm:$0xff]
  %v128 = vld [vmem:[%s0 + $0x360] sm:$0xff]
  %v129 = vld [vmem:[%s0 + $0x368] sm:$0xff]
  %v130 = vld [vmem:[%s0 + $0x370] sm:$0xff]
  %v131 = vld [vmem:[%s0 + $0x378] sm:$0xff]
  %v132 = vld [vmem:[%s0 + $0x380] sm:$0xff]
  %v133 = vld [vmem:[%s0 + $0x388] sm:$0xff]
  %v134 = vld [vmem:[%s0 + $0x390] sm:$0xff]
  %v135 = vld [vmem:[%s0 + $0x398] sm:$0xff]
  %v136 = vld [vmem:[%s0 + $0x3a0] sm:$0xff]
  %v137 = vld [vmem:[%s0 + $0x3a8] sm:$0xff]
  %v138 = vld [vmem:[%s0 + $0x3b0] sm:$0xff]
  %v139 = vld [vmem:[%s0 + $0x3b8] sm:$0xff]
  %v140 = vld [vmem:[%s0 + $0x3c0] sm:$0xff]
  %v141 = vld [vmem:[%s0 + $0x3c8] sm:$0xff]
  %v142 = vld [vmem:[%s0 + $0x3d0] sm:$0xff]
  %v143 = vld [vmem:[%s0 + $0x3d8] sm:$0xff]
  %v144 = vld [vmem:[%s0 + $0x3e0] sm:$0xff]
  %v145 = vld [vmem:[%s0 + $0x3e8] sm:$0xff]
  %v146 = vld [vmem:[%s0 + $0x3f0] sm:$0xff]
  %v147 = vld [vmem:[%s0 + $0x3f8] sm:$0xff]
  %v148 = vld [vmem:[%s0 + $0x400] sm:$0xff]
  %v149 = vld [vmem:[%s0 + $0x408] sm:$0xff]
  %v150 = vld [vmem:[%s0 + $0x410] sm:$0xff]
  %v151 = vld [vmem:[%s0 + $0x418] sm:$0xff]
  %v152 = vld [vmem:[%s0 + $0x420] sm:$0xff]
  %v153 = vld [vmem:[%s0 + $0x428] sm:$0xff]
  %v154 = vld [vmem:[%s0 + $0x430] sm:$0xff]
  %v155 = vld [vmem:[%s0 + $0x438] sm:$0xff]
  %v156 = vld [vmem:[%s0 + $0x440] sm:$0xff]
  %v157 = vld [vmem:[%s0 + $0x448] sm:$0xff]
  %v158 = vld [vmem:[%s0 + $0x450] sm:$0xff]
  %v159 = vld [vmem:[%s0 + $0x458] sm:$0xff]
  %v160 = vld [vmem:[%s0 + $0x460] sm:$0xff]
  %v161 = vld [vmem:[%s0 + $0x468] sm:$0xff]
  %v162 = vld [vmem:[%s0 + $0x470] sm:$0xff]
  %v163 = vld [vmem:[%s0 + $0x478] sm:$0xff]
  %v164 = vld [vmem:[%s0 + $0x480] sm:$0xff]
  %v165 = vld [vmem:[%s0 + $0x488] sm:$0xff]
  %v166 = vld [vmem:[%s0 + $0x490] sm:$0xff]
  %v167 = vld [vmem:[%s0 + $0x498] sm:$0xff]
  %v168 = vld [vmem:[%s0 + $0x4a0] sm:$0xff]
  %v169 = vld [vmem:[%s0 + $0x4a8] sm:$0xff]
  %v170 = vld [vmem:[%s0 + $0x4b0] sm:$0xff]
  %v171 = vld [vmem:[%s0 + $0x4b8] sm:$0xff]
  %v172 = vld [vmem:[%s0 + $0x4c0] sm:$0xff]
  %v173 = vld [vmem:[%s0 + $0x4c8] sm:$0xff]
  %v174 = vld [vmem:[%s0 + $0x4d0] sm:$0xff]
  %v175 = vld [vmem:[%s0 + $0x4d8] sm:$0xff]
  %v176 = vld [vmem:[%s0 + $0x4e0] sm:$0xff]
  %v177 = vld [vmem:[%s0 + $0x4e8] sm:$0xff]
  %v178 = vld [vmem:[%s0 + $0x4f0] sm:$0xff]
  %v179 = vld [vmem:[%s0 + $0x4f8] sm:$0xff]
  %v180 = vld [vmem:[%s0 + $0x500] sm:$0xff]
  %v181 = vld [vmem:[%s0 + $0x508] sm:$0xff]
  %v182 = vld [vmem:[%s0 + $0x510] sm:$0xff]
  %v183 = vld [vmem:[%s0 + $0x518] sm:$0xff]
  %v184 = vld [vmem:[%s0 + $0x520] sm:$0xff]
  %v185 = vld [vmem:[%s0 + $0x528] sm:$0xff]
  %v186 = vld [vmem:[%s0 + $0x530] sm:$0xff]
  %v187 = vld [vmem:[%s0 + $0x538] sm:$0xff]
  %v188 = vld [vmem:[%s0 + $0x540] sm:$0xff]
  %v189 = vld [vmem:[%s0 + $0x548] sm:$0xff]
  %v190 = vld [vmem:[%s0 + $0x550] sm:$0xff]
  %v191 = vld [vmem:[%s0 + $0x558] sm:$0xff]
  %v192 = vld [vmem:[%s0 + $0x560] sm:$0xff]
  %v193 = vld [vmem:[%s0 + $0x568] sm:$0xff]
  %v194 = vld [vmem:[%s0 + $0x570] sm:$0xff]
  %v195 = vld [vmem:[%s0 + $0x578] sm:$0xff]
  %v196 = vld [vmem:[%s0 + $0x580] sm:$0xff]
  %v197 = vld [vmem:[%s0 + $0x588] sm:$0xff]
  %v198 = vld [vmem:[%s0 + $0x590] sm:$0xff]
  %v199 = vld [vmem:[%s0 + $0x598] sm:$0xff]
  %v200 = vld [vmem:[%s0 + $0x5a0] sm:$0xff]
  %v201 = vld [vmem:[%s0 + $0x5a8] sm:$0xff]
  %v202 = vld [vmem:[%s0 + $0x5b0] sm:$0xff]
  %v203 = vld [vmem:[%s0 + $0x5b8] sm:$0xff]
  %v204 = vld [vmem:[%s0 + $0x5c0] sm:$0xff]
  %v205 = vld [vmem:[%s0 + $0x5c8] sm:$0xff]
  %v206 = vld [vmem:[%s0 + $0x5d0] sm:$0xff]
  %v207 = vld [vmem:[%s0 + $0x5d8] sm:$0xff]
  %v208 = vld [vmem:[%s0 + $0x5e0] sm:$0xff]
  %v209 = vld [vmem:[%s0 + $0x5e8] sm:$0xff]
  %v210 = vld [vmem:[%s0 + $0x5f0] sm:$0xff]
  %v211 = vld [vmem:[%s0 + $0x5f8] sm:$0xff]
  %v212 = vld [vmem:[%s1] sm:$0xff]
  %v213 = vld [vmem:[%s1 + $0x8] sm:$0xff]
  %v214 = vld [vmem:[%s1 + $0x10] sm:$0xff]
  %v215 = vld [vmem:[%s1 + $0x18] sm:$0xff]
  %v216 = vld [vmem:[%s1 + $0x20] sm:$0xff]
  %v217 = vld [vmem:[%s1 + $0x28] sm:$0xff]
  %v218 = vld [vmem:[%s1 + $0x30] sm:$0xff]
  %v219 = vld [vmem:[%s1 + $0x38] sm:$0xff]
  %v220 = vld [vmem:[%s1 + $0x40] sm:$0xff]
  %v221 = vld [vmem:[%s1 + $0x48] sm:$0xff]
  %v222 = vld [vmem:[%s1 + $0x50] sm:$0xff]
  %v223 = vld [vmem:[%s1 + $0x58] sm:$0xff]
  %v224 = vld [vmem:[%s1 + $0x60] sm:$0xff]
  %v225 = vld [vmem:[%s1 + $0x68] sm:$0xff]
  %v226 = vld [vmem:[%s1 + $0x70] sm:$0xff]
  %v227 = vld [vmem:[%s1 + $0x78] sm:$0xff]
  %v228 = vld [vmem:[%s1 + $0x80] sm:$0xff]
  %v229 = vld [vmem:[%s1 + $0x88] sm:$0xff]
  %v230 = vld [vmem:[%s1 + $0x90] sm:$0xff]
  %v231 = vld [vmem:[%s1 + $0x98] sm:$0xff]
  %v232 = vld [vmem:[%s1 + $0xa0] sm:$0xff]
  %v233 = vld [vmem:[%s1 + $0xa8] sm:$0xff]
  %v234 = vld [vmem:[%s1 + $0xb0] sm:$0xff]
  %v235 = vld [vmem:[%s1 + $0xb8] sm:$0xff]
  %v236 = vld [vmem:[%s1 + $0xc0] sm:$0xff]
  %v237 = vld [vmem:[%s1 + $0xc8] sm:$0xff]
  %v238 = vld [vmem:[%s1 + $0xd0] sm:$0xff]
  %v239 = vld [vmem:[%s1 + $0xd8] sm:$0xff]
  %v240 = vld [vmem:[%s1 + $0xe0] sm:$0xff]
  %v241 = vld [vmem:[%s1 + $0xe8] sm:$0xff]
  %v242 = vld [vmem:[%s1 + $0xf0] sm:$0xff]
  %v243 = vld [vmem:[%s1 + $0xf8] sm:$0xff]
  %v244 = vld [vmem:[%s1 + $0x100] sm:$0xff]
  %v245 = vld [vmem:[%s1 + $0x108] sm:$0xff]
  %v246 = vld [vmem:[%s1 + $0x110] sm:$0xff]
  %v247 = vld [vmem:[%s1 + $0x118] sm:$0xff]
  %v248 = vld [vmem:[%s1 + $0x120] sm:$0xff]
  %v249 = vld [vmem:[%s1 + $0x128] sm:$0x1]
  %v250 = vld [vmem:[%s2] sm:$0x1]
  %v252 = vlaneseq
  %v253 = vshrl.u32 %v252, 7
  %v254 = vsub.s32 0, %v253
  %v255 = vrot.slane %v250, %v254
  %vm257 = vcmask 334848
  %v259 = vsel %vm257, %v22, 0
  %v262 = vsel %vm257, %v25, 0
  %v265 = vsel %vm257, %v28, 0
  %v268 = vsel %vm257, %v31, 0
  %v271 = vsel %vm257, %v34, 0
  %v274 = vsel %vm257, %v37, 0
  %v277 = vsel %vm257, %v40, 0
  %v280 = vsel %vm257, %v43, 0
  %v283 = vsel %vm257, %v46, 0
  %v286 = vsel %vm257, %v49, 0
  %v289 = vsel %vm257, %v52, 0
  %v292 = vsel %vm257, %v55, 0
  %v295 = vsel %vm257, %v58, 0
  %v298 = vsel %vm257, %v61, 0
  %v301 = vsel %vm257, %v64, 0
  %v304 = vsel %vm257, %v67, 0
  %v307 = vsel %vm257, %v70, 0
  %v310 = vsel %vm257, %v73, 0
  %v313 = vsel %vm257, %v76, 0
  %v316 = vsel %vm257, %v79, 0
  %v319 = vsel %vm257, %v82, 0
  %v322 = vsel %vm257, %v85, 0
  %v325 = vsel %vm257, %v88, 0
  %v328 = vsel %vm257, %v91, 0
  %v331 = vsel %vm257, %v94, 0
  %v334 = vsel %vm257, %v97, 0
  %v337 = vsel %vm257, %v100, 0
  %v340 = vsel %vm257, %v103, 0
  %v343 = vsel %vm257, %v106, 0
  %v346 = vsel %vm257, %v109, 0
  %v349 = vsel %vm257, %v112, 0
  %v352 = vsel %vm257, %v115, 0
  %v355 = vsel %vm257, %v118, 0
  %v358 = vsel %vm257, %v121, 0
  %v361 = vsel %vm257, %v124, 0
  %v364 = vsel %vm257, %v127, 0
  %v367 = vsel %vm257, %v130, 0
  %v370 = vsel %vm257, %v133, 0
  %v373 = vsel %vm257, %v136, 0
  %v376 = vsel %vm257, %v139, 0
  %v379 = vsel %vm257, %v142, 0
  %v382 = vsel %vm257, %v145, 0
  %v385 = vsel %vm257, %v148, 0
  %v388 = vsel %vm257, %v151, 0
  %v391 = vsel %vm257, %v154, 0
  %v394 = vsel %vm257, %v157, 0
  %v397 = vsel %vm257, %v160, 0
  %v400 = vsel %vm257, %v163, 0
  %v403 = vsel %vm257, %v166, 0
  %v406 = vsel %vm257, %v169, 0
  %v409 = vsel %vm257, %v172, 0
  %v412 = vsel %vm257, %v175, 0
  %v415 = vsel %vm257, %v178, 0
  %v418 = vsel %vm257, %v181, 0
  %v421 = vsel %vm257, %v184, 0
  %v424 = vsel %vm257, %v187, 0
  %v427 = vsel %vm257, %v190, 0
  %v430 = vsel %vm257, %v193, 0
  %v433 = vsel %vm257, %v196, 0
  %v436 = vsel %vm257, %v199, 0
  %v439 = vsel %vm257, %v202, 0
  %v442 = vsel %vm257, %v205, 0
  %v445 = vsel %vm257, %v208, 0
  %v448 = vsel %vm257, %v211, 0
  %vm450 = vcmask 1040384
  %v452 = vsel %vm450, %v249, 0
  %454 = vmatprep.subr.mxu0 0.0
  %455 = vmatpush1.msra.mxu0 %v227
  %456 = vmatprep.subr.mxu0 0.0
  %457 = vmatpush1.msra.mxu0 %v226
  %458 = vmatprep.subr.mxu0 0.0
  %459 = vmatpush1.msra.mxu0 %v225
  %460 = vmatprep.subr.mxu0 0.0
  %461 = vmatpush1.msra.mxu0 %v224
  %462 = vmatprep.subr.mxu0 0.0
  %463 = vmatpush1.msra.mxu0 %v223
  %464 = vmatprep.subr.mxu0 0.0
  %465 = vmatpush1.msra.mxu0 %v222
  %466 = vmatprep.subr.mxu0 0.0
  %467 = vmatpush1.msra.mxu0 %v221
  %468 = vmatprep.subr.mxu0 0.0
  %469 = vmatpush1.msra.mxu0 %v220
  %470 = vmatprep.subr.mxu0 0.0
  %471 = vmatpush1.msra.mxu0 %v219
  %472 = vmatprep.subr.mxu0 0.0
  %473 = vmatpush1.msra.mxu0 %v218
  %474 = vmatprep.subr.mxu0 0.0
  %475 = vmatpush1.msra.mxu0 %v217
  %476 = vmatprep.subr.mxu0 0.0
  %477 = vmatpush1.msra.mxu0 %v216
  %478 = vmatprep.subr.mxu0 0.0
  %479 = vmatpush1.msra.mxu0 %v215
  %480 = vmatprep.subr.mxu0 0.0
  %481 = vmatpush1.msra.mxu0 %v214
  %482 = vmatprep.subr.mxu0 0.0
  %483 = vmatpush1.msra.mxu0 %v213
  %484 = vmatprep.subr.mxu0 0.0
  %485 = vmatpush1.msra.mxu0 %v212
  %486 = vmatprep.subr.mxu0 0.0
  %487 = vmatpush2.msra.mxu0 %v243
  %488 = vmatprep.subr.mxu0 0.0
  %489 = vmatpush2.msra.mxu0 %v242
  %490 = vmatprep.subr.mxu0 0.0
  %491 = vmatpush2.msra.mxu0 %v241
  %492 = vmatprep.subr.mxu0 0.0
  %493 = vmatpush2.msra.mxu0 %v240
  %494 = vmatprep.subr.mxu0 0.0
  %495 = vmatpush2.msra.mxu0 %v239
  %496 = vmatprep.subr.mxu0 0.0
  %497 = vmatpush2.msra.mxu0 %v238
  %498 = vmatprep.subr.mxu0 0.0
  %499 = vmatpush2.msra.mxu0 %v237
  %500 = vmatprep.subr.mxu0 0.0
  %501 = vmatpush2.msra.mxu0 %v236
  %502 = vmatprep.subr.mxu0 0.0
  %503 = vmatpush2.msra.mxu0 %v235
  %504 = vmatprep.subr.mxu0 0.0
  %505 = vmatpush2.msra.mxu0 %v234
  %506 = vmatprep.subr.mxu0 0.0
  %507 = vmatpush2.msra.mxu0 %v233
  %508 = vmatprep.subr.mxu0 0.0
  %509 = vmatpush2.msra.mxu0 %v232
  %510 = vmatprep.subr.mxu0 0.0
  %511 = vmatpush2.msra.mxu0 %v231
  %512 = vmatprep.subr.mxu0 0.0
  %513 = vmatpush2.msra.mxu0 %v230
  %514 = vmatprep.subr.mxu0 0.0
  %515 = vmatpush2.msra.mxu0 %v229
  %516 = vmatprep.subr.mxu0 0.0
  %517 = vmatpush2.msra.mxu0 %v228
  %518 = vmatprep.mubr.f32.mxu0 %v21
  %519 = vmatmul.mubr.f32.gmra.mxu0 %v20
  %v520 = vpop.f32.mrf.mxu0
  %v521 = vadd.f32 %v255, %v520
  %v522 = vpop.f32.mrf.mxu0
  %523 = vmatprep.mubr.f32.mxu0 %v24
  %524 = vmatmul.mubr.f32.gmra.mxu0 %v23
  %v525 = vpop.f32.mrf.mxu0
  %v526 = vadd.f32 %v255, %v525
  %v527 = vpop.f32.mrf.mxu0
  %528 = vmatprep.mubr.f32.mxu0 %v27
  %529 = vmatmul.mubr.f32.gmra.mxu0 %v26
  %v530 = vpop.f32.mrf.mxu0
  %v531 = vadd.f32 %v255, %v530
  %v532 = vpop.f32.mrf.mxu0
  %533 = vmatprep.mubr.f32.mxu0 %v30
  %534 = vmatmul.mubr.f32.gmra.mxu0 %v29
  %v535 = vpop.f32.mrf.mxu0
  %v536 = vadd.f32 %v255, %v535
  %v537 = vpop.f32.mrf.mxu0
  %538 = vmatprep.mubr.f32.mxu0 %v33
  %539 = vmatmul.mubr.f32.gmra.mxu0 %v32
  %v540 = vpop.f32.mrf.mxu0
  %v541 = vadd.f32 %v255, %v540
  %v542 = vpop.f32.mrf.mxu0
  %543 = vmatprep.mubr.f32.mxu0 %v36
  %544 = vmatmul.mubr.f32.gmra.mxu0 %v35
  %v545 = vpop.f32.mrf.mxu0
  %v546 = vadd.f32 %v255, %v545
  %v547 = vpop.f32.mrf.mxu0
  %548 = vmatprep.mubr.f32.mxu0 %v39
  %549 = vmatmul.mubr.f32.gmra.mxu0 %v38
  %v550 = vpop.f32.mrf.mxu0
  %v551 = vadd.f32 %v255, %v550
  %v552 = vpop.f32.mrf.mxu0
  %553 = vmatprep.mubr.f32.mxu0 %v42
  %554 = vmatmul.mubr.f32.gmra.mxu0 %v41
  %v555 = vpop.f32.mrf.mxu0
  %v556 = vadd.f32 %v255, %v555
  %v557 = vpop.f32.mrf.mxu0
  %558 = vmatprep.mubr.f32.mxu0 %v45
  %559 = vmatmul.mubr.f32.gmra.mxu0 %v44
  %v560 = vpop.f32.mrf.mxu0
  %v561 = vadd.f32 %v255, %v560
  %v562 = vpop.f32.mrf.mxu0
  %563 = vmatprep.mubr.f32.mxu0 %v48
  %564 = vmatmul.mubr.f32.gmra.mxu0 %v47
  %v565 = vpop.f32.mrf.mxu0
  %v566 = vadd.f32 %v255, %v565
  %v567 = vpop.f32.mrf.mxu0
  %568 = vmatprep.mubr.f32.mxu0 %v51
  %569 = vmatmul.mubr.f32.gmra.mxu0 %v50
  %v570 = vpop.f32.mrf.mxu0
  %v571 = vadd.f32 %v255, %v570
  %v572 = vpop.f32.mrf.mxu0
  %573 = vmatprep.mubr.f32.mxu0 %v54
  %574 = vmatmul.mubr.f32.gmra.mxu0 %v53
  %v575 = vpop.f32.mrf.mxu0
  %v576 = vadd.f32 %v255, %v575
  %v577 = vpop.f32.mrf.mxu0
  %578 = vmatprep.mubr.f32.mxu0 %v57
  %579 = vmatmul.mubr.f32.gmra.mxu0 %v56
  %v580 = vpop.f32.mrf.mxu0
  %v581 = vadd.f32 %v255, %v580
  %v582 = vpop.f32.mrf.mxu0
  %583 = vmatprep.mubr.f32.mxu0 %v60
  %584 = vmatmul.mubr.f32.gmra.mxu0 %v59
  %v585 = vpop.f32.mrf.mxu0
  %v586 = vadd.f32 %v255, %v585
  %v587 = vpop.f32.mrf.mxu0
  %588 = vmatprep.mubr.f32.mxu0 %v63
  %589 = vmatmul.mubr.f32.gmra.mxu0 %v62
  %v590 = vpop.f32.mrf.mxu0
  %v591 = vadd.f32 %v255, %v590
  %v592 = vpop.f32.mrf.mxu0
  %593 = vmatprep.mubr.f32.mxu0 %v66
  %594 = vmatmul.mubr.f32.gmra.mxu0 %v65
  %v595 = vpop.f32.mrf.mxu0
  %v596 = vadd.f32 %v255, %v595
  %v597 = vpop.f32.mrf.mxu0
  %598 = vmatprep.mubr.f32.mxu0 %v69
  %599 = vmatmul.mubr.f32.gmra.mxu0 %v68
  %v600 = vpop.f32.mrf.mxu0
  %v601 = vadd.f32 %v255, %v600
  %v602 = vpop.f32.mrf.mxu0
  %603 = vmatprep.mubr.f32.mxu0 %v72
  %604 = vmatmul.mubr.f32.gmra.mxu0 %v71
  %v605 = vpop.f32.mrf.mxu0
  %v606 = vadd.f32 %v255, %v605
  %v607 = vpop.f32.mrf.mxu0
  %608 = vmatprep.mubr.f32.mxu0 %v75
  %609 = vmatmul.mubr.f32.gmra.mxu0 %v74
  %v610 = vpop.f32.mrf.mxu0
  %v611 = vadd.f32 %v255, %v610
  %v612 = vpop.f32.mrf.mxu0
  %613 = vmatprep.mubr.f32.mxu0 %v78
  %614 = vmatmul.mubr.f32.gmra.mxu0 %v77
  %v615 = vpop.f32.mrf.mxu0
  %v616 = vadd.f32 %v255, %v615
  %v617 = vpop.f32.mrf.mxu0
  %618 = vmatprep.mubr.f32.mxu0 %v81
  %619 = vmatmul.mubr.f32.gmra.mxu0 %v80
  %v620 = vpop.f32.mrf.mxu0
  %v621 = vadd.f32 %v255, %v620
  %v622 = vpop.f32.mrf.mxu0
  %623 = vmatprep.mubr.f32.mxu0 %v84
  %624 = vmatmul.mubr.f32.gmra.mxu0 %v83
  %v625 = vpop.f32.mrf.mxu0
  %v626 = vadd.f32 %v255, %v625
  %v627 = vpop.f32.mrf.mxu0
  %628 = vmatprep.mubr.f32.mxu0 %v87
  %629 = vmatmul.mubr.f32.gmra.mxu0 %v86
  %v630 = vpop.f32.mrf.mxu0
  %v631 = vadd.f32 %v255, %v630
  %v632 = vpop.f32.mrf.mxu0
  %633 = vmatprep.mubr.f32.mxu0 %v90
  %634 = vmatmul.mubr.f32.gmra.mxu0 %v89
  %v635 = vpop.f32.mrf.mxu0
  %v636 = vadd.f32 %v255, %v635
  %v637 = vpop.f32.mrf.mxu0
  %638 = vmatprep.mubr.f32.mxu0 %v93
  %639 = vmatmul.mubr.f32.gmra.mxu0 %v92
  %v640 = vpop.f32.mrf.mxu0
  %v641 = vadd.f32 %v255, %v640
  %v642 = vpop.f32.mrf.mxu0
  %643 = vmatprep.mubr.f32.mxu0 %v96
  %644 = vmatmul.mubr.f32.gmra.mxu0 %v95
  %v645 = vpop.f32.mrf.mxu0
  %v646 = vadd.f32 %v255, %v645
  %v647 = vpop.f32.mrf.mxu0
  %648 = vmatprep.mubr.f32.mxu0 %v99
  %649 = vmatmul.mubr.f32.gmra.mxu0 %v98
  %v650 = vpop.f32.mrf.mxu0
  %v651 = vadd.f32 %v255, %v650
  %v652 = vpop.f32.mrf.mxu0
  %653 = vmatprep.mubr.f32.mxu0 %v102
  %654 = vmatmul.mubr.f32.gmra.mxu0 %v101
  %v655 = vpop.f32.mrf.mxu0
  %v656 = vadd.f32 %v255, %v655
  %v657 = vpop.f32.mrf.mxu0
  %658 = vmatprep.mubr.f32.mxu0 %v105
  %659 = vmatmul.mubr.f32.gmra.mxu0 %v104
  %v660 = vpop.f32.mrf.mxu0
  %v661 = vadd.f32 %v255, %v660
  %v662 = vpop.f32.mrf.mxu0
  %663 = vmatprep.mubr.f32.mxu0 %v108
  %664 = vmatmul.mubr.f32.gmra.mxu0 %v107
  %v665 = vpop.f32.mrf.mxu0
  %v666 = vadd.f32 %v255, %v665
  %v667 = vpop.f32.mrf.mxu0
  %668 = vmatprep.mubr.f32.mxu0 %v111
  %669 = vmatmul.mubr.f32.gmra.mxu0 %v110
  %v670 = vpop.f32.mrf.mxu0
  %v671 = vadd.f32 %v255, %v670
  %v672 = vpop.f32.mrf.mxu0
  %673 = vmatprep.mubr.f32.mxu0 %v114
  %674 = vmatmul.mubr.f32.gmra.mxu0 %v113
  %v675 = vpop.f32.mrf.mxu0
  %v676 = vadd.f32 %v255, %v675
  %v677 = vpop.f32.mrf.mxu0
  %678 = vmatprep.mubr.f32.mxu0 %v117
  %679 = vmatmul.mubr.f32.gmra.mxu0 %v116
  %v680 = vpop.f32.mrf.mxu0
  %v681 = vadd.f32 %v255, %v680
  %v682 = vpop.f32.mrf.mxu0
  %683 = vmatprep.mubr.f32.mxu0 %v120
  %684 = vmatmul.mubr.f32.gmra.mxu0 %v119
  %v685 = vpop.f32.mrf.mxu0
  %v686 = vadd.f32 %v255, %v685
  %v687 = vpop.f32.mrf.mxu0
  %688 = vmatprep.mubr.f32.mxu0 %v123
  %689 = vmatmul.mubr.f32.gmra.mxu0 %v122
  %v690 = vpop.f32.mrf.mxu0
  %v691 = vadd.f32 %v255, %v690
  %v692 = vpop.f32.mrf.mxu0
  %693 = vmatprep.mubr.f32.mxu0 %v126
  %694 = vmatmul.mubr.f32.gmra.mxu0 %v125
  %v695 = vpop.f32.mrf.mxu0
  %v696 = vadd.f32 %v255, %v695
  %v697 = vpop.f32.mrf.mxu0
  %698 = vmatprep.mubr.f32.mxu0 %v129
  %699 = vmatmul.mubr.f32.gmra.mxu0 %v128
  %v700 = vpop.f32.mrf.mxu0
  %v701 = vadd.f32 %v255, %v700
  %v702 = vpop.f32.mrf.mxu0
  %703 = vmatprep.mubr.f32.mxu0 %v132
  %704 = vmatmul.mubr.f32.gmra.mxu0 %v131
  %v705 = vpop.f32.mrf.mxu0
  %v706 = vadd.f32 %v255, %v705
  %v707 = vpop.f32.mrf.mxu0
  %708 = vmatprep.mubr.f32.mxu0 %v135
  %709 = vmatmul.mubr.f32.gmra.mxu0 %v134
  %v710 = vpop.f32.mrf.mxu0
  %v711 = vadd.f32 %v255, %v710
  %v712 = vpop.f32.mrf.mxu0
  %713 = vmatprep.mubr.f32.mxu0 %v138
  %714 = vmatmul.mubr.f32.gmra.mxu0 %v137
  %v715 = vpop.f32.mrf.mxu0
  %v716 = vadd.f32 %v255, %v715
  %v717 = vpop.f32.mrf.mxu0
  %718 = vmatprep.mubr.f32.mxu0 %v141
  %719 = vmatmul.mubr.f32.gmra.mxu0 %v140
  %v720 = vpop.f32.mrf.mxu0
  %v721 = vadd.f32 %v255, %v720
  %v722 = vpop.f32.mrf.mxu0
  %723 = vmatprep.mubr.f32.mxu0 %v144
  %724 = vmatmul.mubr.f32.gmra.mxu0 %v143
  %v725 = vpop.f32.mrf.mxu0
  %v726 = vadd.f32 %v255, %v725
  %v727 = vpop.f32.mrf.mxu0
  %728 = vmatprep.mubr.f32.mxu0 %v147
  %729 = vmatmul.mubr.f32.gmra.mxu0 %v146
  %v730 = vpop.f32.mrf.mxu0
  %v731 = vadd.f32 %v255, %v730
  %v732 = vpop.f32.mrf.mxu0
  %733 = vmatprep.mubr.f32.mxu0 %v150
  %734 = vmatmul.mubr.f32.gmra.mxu0 %v149
  %v735 = vpop.f32.mrf.mxu0
  %v736 = vadd.f32 %v255, %v735
  %v737 = vpop.f32.mrf.mxu0
  %738 = vmatprep.mubr.f32.mxu0 %v153
  %739 = vmatmul.mubr.f32.gmra.mxu0 %v152
  %v740 = vpop.f32.mrf.mxu0
  %v741 = vadd.f32 %v255, %v740
  %v742 = vpop.f32.mrf.mxu0
  %743 = vmatprep.mubr.f32.mxu0 %v156
  %744 = vmatmul.mubr.f32.gmra.mxu0 %v155
  %v745 = vpop.f32.mrf.mxu0
  %v746 = vadd.f32 %v255, %v745
  %v747 = vpop.f32.mrf.mxu0
  %748 = vmatprep.mubr.f32.mxu0 %v159
  %749 = vmatmul.mubr.f32.gmra.mxu0 %v158
  %v750 = vpop.f32.mrf.mxu0
  %v751 = vadd.f32 %v255, %v750
  %v752 = vpop.f32.mrf.mxu0
  %753 = vmatprep.mubr.f32.mxu0 %v162
  %754 = vmatmul.mubr.f32.gmra.mxu0 %v161
  %v755 = vpop.f32.mrf.mxu0
  %v756 = vadd.f32 %v255, %v755
  %v757 = vpop.f32.mrf.mxu0
  %758 = vmatprep.mubr.f32.mxu0 %v165
  %759 = vmatmul.mubr.f32.gmra.mxu0 %v164
  %v760 = vpop.f32.mrf.mxu0
  %v761 = vadd.f32 %v255, %v760
  %v762 = vpop.f32.mrf.mxu0
  %763 = vmatprep.mubr.f32.mxu0 %v168
  %764 = vmatmul.mubr.f32.gmra.mxu0 %v167
  %v765 = vpop.f32.mrf.mxu0
  %v766 = vadd.f32 %v255, %v765
  %v767 = vpop.f32.mrf.mxu0
  %768 = vmatprep.mubr.f32.mxu0 %v171
  %769 = vmatmul.mubr.f32.gmra.mxu0 %v170
  %v770 = vpop.f32.mrf.mxu0
  %v771 = vadd.f32 %v255, %v770
  %v772 = vpop.f32.mrf.mxu0
  %773 = vmatprep.mubr.f32.mxu0 %v174
  %774 = vmatmul.mubr.f32.gmra.mxu0 %v173
  %v775 = vpop.f32.mrf.mxu0
  %v776 = vadd.f32 %v255, %v775
  %v777 = vpop.f32.mrf.mxu0
  %778 = vmatprep.mubr.f32.mxu0 %v177
  %779 = vmatmul.mubr.f32.gmra.mxu0 %v176
  %v780 = vpop.f32.mrf.mxu0
  %v781 = vadd.f32 %v255, %v780
  %v782 = vpop.f32.mrf.mxu0
  %783 = vmatprep.mubr.f32.mxu0 %v180
  %784 = vmatmul.mubr.f32.gmra.mxu0 %v179
  %v785 = vpop.f32.mrf.mxu0
  %v786 = vadd.f32 %v255, %v785
  %v787 = vpop.f32.mrf.mxu0
  %788 = vmatprep.mubr.f32.mxu0 %v183
  %789 = vmatmul.mubr.f32.gmra.mxu0 %v182
  %v790 = vpop.f32.mrf.mxu0
  %v791 = vadd.f32 %v255, %v790
  %v792 = vpop.f32.mrf.mxu0
  %793 = vmatprep.mubr.f32.mxu0 %v186
  %794 = vmatmul.mubr.f32.gmra.mxu0 %v185
  %v795 = vpop.f32.mrf.mxu0
  %v796 = vadd.f32 %v255, %v795
  %v797 = vpop.f32.mrf.mxu0
  %798 = vmatprep.mubr.f32.mxu0 %v189
  %799 = vmatmul.mubr.f32.gmra.mxu0 %v188
  %v800 = vpop.f32.mrf.mxu0
  %v801 = vadd.f32 %v255, %v800
  %v802 = vpop.f32.mrf.mxu0
  %803 = vmatprep.mubr.f32.mxu0 %v192
  %804 = vmatmul.mubr.f32.gmra.mxu0 %v191
  %v805 = vpop.f32.mrf.mxu0
  %v806 = vadd.f32 %v255, %v805
  %v807 = vpop.f32.mrf.mxu0
  %808 = vmatprep.mubr.f32.mxu0 %v195
  %809 = vmatmul.mubr.f32.gmra.mxu0 %v194
  %v810 = vpop.f32.mrf.mxu0
  %v811 = vadd.f32 %v255, %v810
  %v812 = vpop.f32.mrf.mxu0
  %813 = vmatprep.mubr.f32.mxu0 %v198
  %814 = vmatmul.mubr.f32.gmra.mxu0 %v197
  %v815 = vpop.f32.mrf.mxu0
  %v816 = vadd.f32 %v255, %v815
  %v817 = vpop.f32.mrf.mxu0
  %818 = vmatprep.mubr.f32.mxu0 %v201
  %819 = vmatmul.mubr.f32.gmra.mxu0 %v200
  %v820 = vpop.f32.mrf.mxu0
  %v821 = vadd.f32 %v255, %v820
  %v822 = vpop.f32.mrf.mxu0
  %823 = vmatprep.mubr.f32.mxu0 %v204
  %824 = vmatmul.mubr.f32.gmra.mxu0 %v203
  %v825 = vpop.f32.mrf.mxu0
  %v826 = vadd.f32 %v255, %v825
  %v827 = vpop.f32.mrf.mxu0
  %828 = vmatprep.mubr.f32.mxu0 %v207
  %829 = vmatmul.mubr.f32.gmra.mxu0 %v206
  %v830 = vpop.f32.mrf.mxu0
  %v831 = vadd.f32 %v255, %v830
  %v832 = vpop.f32.mrf.mxu0
  %833 = vmatprep.mubr.f32.mxu0 %v210
  %834 = vmatmul.mubr.f32.gmra.mxu0 %v209
  %v835 = vpop.f32.mrf.mxu0
  %v836 = vadd.f32 %v255, %v835
  %v837 = vpop.f32.mrf.mxu0
  %838 = vdwg.mxu0
  %839 = vmatprep.subr.mxu0 0.0
  %840 = vmatpush1.msra.mxu0 0.0
  %841 = vmatprep.subr.mxu0 0.0
  %842 = vmatpush1.msra.mxu0 0.0
  %843 = vmatprep.subr.mxu0 0.0
  %844 = vmatpush1.msra.mxu0 0.0
  %845 = vmatprep.subr.mxu0 0.0
  %846 = vmatpush1.msra.mxu0 0.0
  %847 = vmatprep.subr.mxu0 0.0
  %848 = vmatpush1.msra.mxu0 0.0
  %849 = vmatprep.subr.mxu0 0.0
  %850 = vmatpush1.msra.mxu0 0.0
  %851 = vmatprep.subr.mxu0 0.0
  %852 = vmatpush1.msra.mxu0 0.0
  %853 = vmatprep.subr.mxu0 0.0
  %854 = vmatpush1.msra.mxu0 0.0
  %855 = vmatprep.subr.mxu0 0.0
  %856 = vmatpush1.msra.mxu0 0.0
  %857 = vmatprep.subr.mxu0 0.0
  %858 = vmatpush1.msra.mxu0 0.0
  %859 = vmatprep.subr.mxu0 0.0
  %860 = vmatpush1.msra.mxu0 %v452
  %861 = vmatprep.subr.mxu0 0.0
  %862 = vmatpush1.msra.mxu0 %v248
  %863 = vmatprep.subr.mxu0 0.0
  %864 = vmatpush1.msra.mxu0 %v247
  %865 = vmatprep.subr.mxu0 0.0
  %866 = vmatpush1.msra.mxu0 %v246
  %867 = vmatprep.subr.mxu0 0.0
  %868 = vmatpush1.msra.mxu0 %v245
  %869 = vmatprep.subr.mxu0 0.0
  %870 = vmatpush1.msra.mxu0 %v244
  %871 = vmatprep.subr.mxu0 0.0
  %872 = vmatpush2.msra.mxu0 0.0
  %873 = vmatprep.subr.mxu0 0.0
  %874 = vmatpush2.msra.mxu0 0.0
  %875 = vmatprep.subr.mxu0 0.0
  %876 = vmatpush2.msra.mxu0 0.0
  %877 = vmatprep.subr.mxu0 0.0
  %878 = vmatpush2.msra.mxu0 0.0
  %879 = vmatprep.subr.mxu0 0.0
  %880 = vmatpush2.msra.mxu0 0.0
  %881 = vmatprep.subr.mxu0 0.0
  %882 = vmatpush2.msra.mxu0 0.0
  %883 = vmatprep.subr.mxu0 0.0
  %884 = vmatpush2.msra.mxu0 0.0
  %885 = vmatprep.subr.mxu0 0.0
  %886 = vmatpush2.msra.mxu0 0.0
  %887 = vmatprep.subr.mxu0 0.0
  %888 = vmatpush2.msra.mxu0 0.0
  %889 = vmatprep.subr.mxu0 0.0
  %890 = vmatpush2.msra.mxu0 0.0
  %891 = vmatprep.subr.mxu0 0.0
  %892 = vmatpush2.msra.mxu0 0.0
  %893 = vmatprep.subr.mxu0 0.0
  %894 = vmatpush2.msra.mxu0 0.0
  %895 = vmatprep.subr.mxu0 0.0
  %896 = vmatpush2.msra.mxu0 0.0
  %897 = vmatprep.subr.mxu0 0.0
  %898 = vmatpush2.msra.mxu0 0.0
  %899 = vmatprep.subr.mxu0 0.0
  %900 = vmatpush2.msra.mxu0 0.0
  %901 = vmatprep.subr.mxu0 0.0
  %902 = vmatpush2.msra.mxu0 0.0
  %903 = vmatprep.mubr.f32.mxu0 0.0
  %904 = vmatmul.mubr.f32.gmra.mxu0 %v259
  %v905 = vpop.f32.mrf.mxu0
  %v906 = vadd.f32 %v521, %v905
  %v907 = vpop.f32.mrf.mxu0
  %908 = vmatprep.mubr.f32.mxu0 0.0
  %909 = vmatmul.mubr.f32.gmra.mxu0 %v262
  %v910 = vpop.f32.mrf.mxu0
  %v911 = vadd.f32 %v526, %v910
  %v912 = vpop.f32.mrf.mxu0
  %913 = vmatprep.mubr.f32.mxu0 0.0
  %914 = vmatmul.mubr.f32.gmra.mxu0 %v265
  %v915 = vpop.f32.mrf.mxu0
  %v916 = vadd.f32 %v531, %v915
  %v917 = vpop.f32.mrf.mxu0
  %918 = vmatprep.mubr.f32.mxu0 0.0
  %919 = vmatmul.mubr.f32.gmra.mxu0 %v268
  %v920 = vpop.f32.mrf.mxu0
  %v921 = vadd.f32 %v536, %v920
  %v922 = vpop.f32.mrf.mxu0
  %923 = vmatprep.mubr.f32.mxu0 0.0
  %924 = vmatmul.mubr.f32.gmra.mxu0 %v271
  %v925 = vpop.f32.mrf.mxu0
  %v926 = vadd.f32 %v541, %v925
  %v927 = vpop.f32.mrf.mxu0
  %928 = vmatprep.mubr.f32.mxu0 0.0
  %929 = vmatmul.mubr.f32.gmra.mxu0 %v274
  %v930 = vpop.f32.mrf.mxu0
  %v931 = vadd.f32 %v546, %v930
  %v932 = vpop.f32.mrf.mxu0
  %933 = vmatprep.mubr.f32.mxu0 0.0
  %934 = vmatmul.mubr.f32.gmra.mxu0 %v277
  %v935 = vpop.f32.mrf.mxu0
  %v936 = vadd.f32 %v551, %v935
  %v937 = vpop.f32.mrf.mxu0
  %938 = vmatprep.mubr.f32.mxu0 0.0
  %939 = vmatmul.mubr.f32.gmra.mxu0 %v280
  %v940 = vpop.f32.mrf.mxu0
  %v941 = vadd.f32 %v556, %v940
  %v942 = vpop.f32.mrf.mxu0
  %943 = vmatprep.mubr.f32.mxu0 0.0
  %944 = vmatmul.mubr.f32.gmra.mxu0 %v283
  %v945 = vpop.f32.mrf.mxu0
  %v946 = vadd.f32 %v561, %v945
  %v947 = vpop.f32.mrf.mxu0
  %948 = vmatprep.mubr.f32.mxu0 0.0
  %949 = vmatmul.mubr.f32.gmra.mxu0 %v286
  %v950 = vpop.f32.mrf.mxu0
  %v951 = vadd.f32 %v566, %v950
  %v952 = vpop.f32.mrf.mxu0
  %953 = vmatprep.mubr.f32.mxu0 0.0
  %954 = vmatmul.mubr.f32.gmra.mxu0 %v289
  %v955 = vpop.f32.mrf.mxu0
  %v956 = vadd.f32 %v571, %v955
  %v957 = vpop.f32.mrf.mxu0
  %958 = vmatprep.mubr.f32.mxu0 0.0
  %959 = vmatmul.mubr.f32.gmra.mxu0 %v292
  %v960 = vpop.f32.mrf.mxu0
  %v961 = vadd.f32 %v576, %v960
  %v962 = vpop.f32.mrf.mxu0
  %963 = vmatprep.mubr.f32.mxu0 0.0
  %964 = vmatmul.mubr.f32.gmra.mxu0 %v295
  %v965 = vpop.f32.mrf.mxu0
  %v966 = vadd.f32 %v581, %v965
  %v967 = vpop.f32.mrf.mxu0
  %968 = vmatprep.mubr.f32.mxu0 0.0
  %969 = vmatmul.mubr.f32.gmra.mxu0 %v298
  %v970 = vpop.f32.mrf.mxu0
  %v971 = vadd.f32 %v586, %v970
  %v972 = vpop.f32.mrf.mxu0
  %973 = vmatprep.mubr.f32.mxu0 0.0
  %974 = vmatmul.mubr.f32.gmra.mxu0 %v301
  %v975 = vpop.f32.mrf.mxu0
  %v976 = vadd.f32 %v591, %v975
  %v977 = vpop.f32.mrf.mxu0
  %978 = vmatprep.mubr.f32.mxu0 0.0
  %979 = vmatmul.mubr.f32.gmra.mxu0 %v304
  %v980 = vpop.f32.mrf.mxu0
  %v981 = vadd.f32 %v596, %v980
  %v982 = vpop.f32.mrf.mxu0
  %983 = vmatprep.mubr.f32.mxu0 0.0
  %984 = vmatmul.mubr.f32.gmra.mxu0 %v307
  %v985 = vpop.f32.mrf.mxu0
  %v986 = vadd.f32 %v601, %v985
  %v987 = vpop.f32.mrf.mxu0
  %988 = vmatprep.mubr.f32.mxu0 0.0
  %989 = vmatmul.mubr.f32.gmra.mxu0 %v310
  %v990 = vpop.f32.mrf.mxu0
  %v991 = vadd.f32 %v606, %v990
  %v992 = vpop.f32.mrf.mxu0
  %993 = vmatprep.mubr.f32.mxu0 0.0
  %994 = vmatmul.mubr.f32.gmra.mxu0 %v313
  %v995 = vpop.f32.mrf.mxu0
  %v996 = vadd.f32 %v611, %v995
  %v997 = vpop.f32.mrf.mxu0
  %998 = vmatprep.mubr.f32.mxu0 0.0
  %999 = vmatmul.mubr.f32.gmra.mxu0 %v316
  %v1000 = vpop.f32.mrf.mxu0
  %v1001 = vadd.f32 %v616, %v1000
  %v1002 = vpop.f32.mrf.mxu0
  %1003 = vmatprep.mubr.f32.mxu0 0.0
  %1004 = vmatmul.mubr.f32.gmra.mxu0 %v319
  %v1005 = vpop.f32.mrf.mxu0
  %v1006 = vadd.f32 %v621, %v1005
  %v1007 = vpop.f32.mrf.mxu0
  %1008 = vmatprep.mubr.f32.mxu0 0.0
  %1009 = vmatmul.mubr.f32.gmra.mxu0 %v322
  %v1010 = vpop.f32.mrf.mxu0
  %v1011 = vadd.f32 %v626, %v1010
  %v1012 = vpop.f32.mrf.mxu0
  %1013 = vmatprep.mubr.f32.mxu0 0.0
  %1014 = vmatmul.mubr.f32.gmra.mxu0 %v325
  %v1015 = vpop.f32.mrf.mxu0
  %v1016 = vadd.f32 %v631, %v1015
  %v1017 = vpop.f32.mrf.mxu0
  %1018 = vmatprep.mubr.f32.mxu0 0.0
  %1019 = vmatmul.mubr.f32.gmra.mxu0 %v328
  %v1020 = vpop.f32.mrf.mxu0
  %v1021 = vadd.f32 %v636, %v1020
  %v1022 = vpop.f32.mrf.mxu0
  %1023 = vmatprep.mubr.f32.mxu0 0.0
  %1024 = vmatmul.mubr.f32.gmra.mxu0 %v331
  %v1025 = vpop.f32.mrf.mxu0
  %v1026 = vadd.f32 %v641, %v1025
  %v1027 = vpop.f32.mrf.mxu0
  %1028 = vmatprep.mubr.f32.mxu0 0.0
  %1029 = vmatmul.mubr.f32.gmra.mxu0 %v334
  %v1030 = vpop.f32.mrf.mxu0
  %v1031 = vadd.f32 %v646, %v1030
  %v1032 = vpop.f32.mrf.mxu0
  %1033 = vmatprep.mubr.f32.mxu0 0.0
  %1034 = vmatmul.mubr.f32.gmra.mxu0 %v337
  %v1035 = vpop.f32.mrf.mxu0
  %v1036 = vadd.f32 %v651, %v1035
  %v1037 = vpop.f32.mrf.mxu0
  %1038 = vmatprep.mubr.f32.mxu0 0.0
  %1039 = vmatmul.mubr.f32.gmra.mxu0 %v340
  %v1040 = vpop.f32.mrf.mxu0
  %v1041 = vadd.f32 %v656, %v1040
  %v1042 = vpop.f32.mrf.mxu0
  %1043 = vmatprep.mubr.f32.mxu0 0.0
  %1044 = vmatmul.mubr.f32.gmra.mxu0 %v343
  %v1045 = vpop.f32.mrf.mxu0
  %v1046 = vadd.f32 %v661, %v1045
  %v1047 = vpop.f32.mrf.mxu0
  %1048 = vmatprep.mubr.f32.mxu0 0.0
  %1049 = vmatmul.mubr.f32.gmra.mxu0 %v346
  %v1050 = vpop.f32.mrf.mxu0
  %v1051 = vadd.f32 %v666, %v1050
  %v1052 = vpop.f32.mrf.mxu0
  %1053 = vmatprep.mubr.f32.mxu0 0.0
  %1054 = vmatmul.mubr.f32.gmra.mxu0 %v349
  %v1055 = vpop.f32.mrf.mxu0
  %v1056 = vadd.f32 %v671, %v1055
  %v1057 = vpop.f32.mrf.mxu0
  %1058 = vmatprep.mubr.f32.mxu0 0.0
  %1059 = vmatmul.mubr.f32.gmra.mxu0 %v352
  %v1060 = vpop.f32.mrf.mxu0
  %v1061 = vadd.f32 %v676, %v1060
  %v1062 = vpop.f32.mrf.mxu0
  %1063 = vmatprep.mubr.f32.mxu0 0.0
  %1064 = vmatmul.mubr.f32.gmra.mxu0 %v355
  %v1065 = vpop.f32.mrf.mxu0
  %v1066 = vadd.f32 %v681, %v1065
  %v1067 = vpop.f32.mrf.mxu0
  %1068 = vmatprep.mubr.f32.mxu0 0.0
  %1069 = vmatmul.mubr.f32.gmra.mxu0 %v358
  %v1070 = vpop.f32.mrf.mxu0
  %v1071 = vadd.f32 %v686, %v1070
  %v1072 = vpop.f32.mrf.mxu0
  %1073 = vmatprep.mubr.f32.mxu0 0.0
  %1074 = vmatmul.mubr.f32.gmra.mxu0 %v361
  %v1075 = vpop.f32.mrf.mxu0
  %v1076 = vadd.f32 %v691, %v1075
  %v1077 = vpop.f32.mrf.mxu0
  %1078 = vmatprep.mubr.f32.mxu0 0.0
  %1079 = vmatmul.mubr.f32.gmra.mxu0 %v364
  %v1080 = vpop.f32.mrf.mxu0
  %v1081 = vadd.f32 %v696, %v1080
  %v1082 = vpop.f32.mrf.mxu0
  %1083 = vmatprep.mubr.f32.mxu0 0.0
  %1084 = vmatmul.mubr.f32.gmra.mxu0 %v367
  %v1085 = vpop.f32.mrf.mxu0
  %v1086 = vadd.f32 %v701, %v1085
  %v1087 = vpop.f32.mrf.mxu0
  %1088 = vmatprep.mubr.f32.mxu0 0.0
  %1089 = vmatmul.mubr.f32.gmra.mxu0 %v370
  %v1090 = vpop.f32.mrf.mxu0
  %v1091 = vadd.f32 %v706, %v1090
  %v1092 = vpop.f32.mrf.mxu0
  %1093 = vmatprep.mubr.f32.mxu0 0.0
  %1094 = vmatmul.mubr.f32.gmra.mxu0 %v373
  %v1095 = vpop.f32.mrf.mxu0
  %v1096 = vadd.f32 %v711, %v1095
  %v1097 = vpop.f32.mrf.mxu0
  %1098 = vmatprep.mubr.f32.mxu0 0.0
  %1099 = vmatmul.mubr.f32.gmra.mxu0 %v376
  %v1100 = vpop.f32.mrf.mxu0
  %v1101 = vadd.f32 %v716, %v1100
  %v1102 = vpop.f32.mrf.mxu0
  %1103 = vmatprep.mubr.f32.mxu0 0.0
  %1104 = vmatmul.mubr.f32.gmra.mxu0 %v379
  %v1105 = vpop.f32.mrf.mxu0
  %v1106 = vadd.f32 %v721, %v1105
  %v1107 = vpop.f32.mrf.mxu0
  %1108 = vmatprep.mubr.f32.mxu0 0.0
  %1109 = vmatmul.mubr.f32.gmra.mxu0 %v382
  %v1110 = vpop.f32.mrf.mxu0
  %v1111 = vadd.f32 %v726, %v1110
  %v1112 = vpop.f32.mrf.mxu0
  %1113 = vmatprep.mubr.f32.mxu0 0.0
  %1114 = vmatmul.mubr.f32.gmra.mxu0 %v385
  %v1115 = vpop.f32.mrf.mxu0
  %v1116 = vadd.f32 %v731, %v1115
  %v1117 = vpop.f32.mrf.mxu0
  %1118 = vmatprep.mubr.f32.mxu0 0.0
  %1119 = vmatmul.mubr.f32.gmra.mxu0 %v388
  %v1120 = vpop.f32.mrf.mxu0
  %v1121 = vadd.f32 %v736, %v1120
  %v1122 = vpop.f32.mrf.mxu0
  %1123 = vmatprep.mubr.f32.mxu0 0.0
  %1124 = vmatmul.mubr.f32.gmra.mxu0 %v391
  %v1125 = vpop.f32.mrf.mxu0
  %v1126 = vadd.f32 %v741, %v1125
  %v1127 = vpop.f32.mrf.mxu0
  %1128 = vmatprep.mubr.f32.mxu0 0.0
  %1129 = vmatmul.mubr.f32.gmra.mxu0 %v394
  %v1130 = vpop.f32.mrf.mxu0
  %v1131 = vadd.f32 %v746, %v1130
  %v1132 = vpop.f32.mrf.mxu0
  %1133 = vmatprep.mubr.f32.mxu0 0.0
  %1134 = vmatmul.mubr.f32.gmra.mxu0 %v397
  %v1135 = vpop.f32.mrf.mxu0
  %v1136 = vadd.f32 %v751, %v1135
  %v1137 = vpop.f32.mrf.mxu0
  %1138 = vmatprep.mubr.f32.mxu0 0.0
  %1139 = vmatmul.mubr.f32.gmra.mxu0 %v400
  %v1140 = vpop.f32.mrf.mxu0
  %v1141 = vadd.f32 %v756, %v1140
  %v1142 = vpop.f32.mrf.mxu0
  %1143 = vmatprep.mubr.f32.mxu0 0.0
  %1144 = vmatmul.mubr.f32.gmra.mxu0 %v403
  %v1145 = vpop.f32.mrf.mxu0
  %v1146 = vadd.f32 %v761, %v1145
  %v1147 = vpop.f32.mrf.mxu0
  %1148 = vmatprep.mubr.f32.mxu0 0.0
  %1149 = vmatmul.mubr.f32.gmra.mxu0 %v406
  %v1150 = vpop.f32.mrf.mxu0
  %v1151 = vadd.f32 %v766, %v1150
  %v1152 = vpop.f32.mrf.mxu0
  %1153 = vmatprep.mubr.f32.mxu0 0.0
  %1154 = vmatmul.mubr.f32.gmra.mxu0 %v409
  %v1155 = vpop.f32.mrf.mxu0
  %v1156 = vadd.f32 %v771, %v1155
  %v1157 = vpop.f32.mrf.mxu0
  %1158 = vmatprep.mubr.f32.mxu0 0.0
  %1159 = vmatmul.mubr.f32.gmra.mxu0 %v412
  %v1160 = vpop.f32.mrf.mxu0
  %v1161 = vadd.f32 %v776, %v1160
  %v1162 = vpop.f32.mrf.mxu0
  %1163 = vmatprep.mubr.f32.mxu0 0.0
  %1164 = vmatmul.mubr.f32.gmra.mxu0 %v415
  %v1165 = vpop.f32.mrf.mxu0
  %v1166 = vadd.f32 %v781, %v1165
  %v1167 = vpop.f32.mrf.mxu0
  %1168 = vmatprep.mubr.f32.mxu0 0.0
  %1169 = vmatmul.mubr.f32.gmra.mxu0 %v418
  %v1170 = vpop.f32.mrf.mxu0
  %v1171 = vadd.f32 %v786, %v1170
  %v1172 = vpop.f32.mrf.mxu0
  %1173 = vmatprep.mubr.f32.mxu0 0.0
  %1174 = vmatmul.mubr.f32.gmra.mxu0 %v421
  %v1175 = vpop.f32.mrf.mxu0
  %v1176 = vadd.f32 %v791, %v1175
  %v1177 = vpop.f32.mrf.mxu0
  %1178 = vmatprep.mubr.f32.mxu0 0.0
  %1179 = vmatmul.mubr.f32.gmra.mxu0 %v424
  %v1180 = vpop.f32.mrf.mxu0
  %v1181 = vadd.f32 %v796, %v1180
  %v1182 = vpop.f32.mrf.mxu0
  %1183 = vmatprep.mubr.f32.mxu0 0.0
  %1184 = vmatmul.mubr.f32.gmra.mxu0 %v427
  %v1185 = vpop.f32.mrf.mxu0
  %v1186 = vadd.f32 %v801, %v1185
  %v1187 = vpop.f32.mrf.mxu0
  %1188 = vmatprep.mubr.f32.mxu0 0.0
  %1189 = vmatmul.mubr.f32.gmra.mxu0 %v430
  %v1190 = vpop.f32.mrf.mxu0
  %v1191 = vadd.f32 %v806, %v1190
  %v1192 = vpop.f32.mrf.mxu0
  %1193 = vmatprep.mubr.f32.mxu0 0.0
  %1194 = vmatmul.mubr.f32.gmra.mxu0 %v433
  %v1195 = vpop.f32.mrf.mxu0
  %v1196 = vadd.f32 %v811, %v1195
  %v1197 = vpop.f32.mrf.mxu0
  %1198 = vmatprep.mubr.f32.mxu0 0.0
  %1199 = vmatmul.mubr.f32.gmra.mxu0 %v436
  %v1200 = vpop.f32.mrf.mxu0
  %v1201 = vadd.f32 %v816, %v1200
  %v1202 = vpop.f32.mrf.mxu0
  %1203 = vmatprep.mubr.f32.mxu0 0.0
  %1204 = vmatmul.mubr.f32.gmra.mxu0 %v439
  %v1205 = vpop.f32.mrf.mxu0
  %v1206 = vadd.f32 %v821, %v1205
  %v1207 = vpop.f32.mrf.mxu0
  %1208 = vmatprep.mubr.f32.mxu0 0.0
  %1209 = vmatmul.mubr.f32.gmra.mxu0 %v442
  %v1210 = vpop.f32.mrf.mxu0
  %v1211 = vadd.f32 %v826, %v1210
  %v1212 = vpop.f32.mrf.mxu0
  %1213 = vmatprep.mubr.f32.mxu0 0.0
  %1214 = vmatmul.mubr.f32.gmra.mxu0 %v445
  %v1215 = vpop.f32.mrf.mxu0
  %v1216 = vadd.f32 %v831, %v1215
  %v1217 = vpop.f32.mrf.mxu0
  %1218 = vmatprep.mubr.f32.mxu0 0.0
  %1219 = vmatmul.mubr.f32.gmra.mxu0 %v448
  %v1220 = vpop.f32.mrf.mxu0
  %v1221 = vadd.f32 %v836, %v1220
  %v1222 = vpop.f32.mrf.mxu0
  %1223 = vdwg.mxu0
  %v1224 = vmax.f32 %v906, 0.0
  %v1225 = vmax.f32 %v911, 0.0
  %v1226 = vmax.f32 %v916, 0.0
  %v1227 = vmax.f32 %v921, 0.0
  %v1228 = vmax.f32 %v926, 0.0
  %v1229 = vmax.f32 %v931, 0.0
  %v1230 = vmax.f32 %v936, 0.0
  %v1231 = vmax.f32 %v941, 0.0
  %v1232 = vmax.f32 %v946, 0.0
  %v1233 = vmax.f32 %v951, 0.0
  %v1234 = vmax.f32 %v956, 0.0
  %v1235 = vmax.f32 %v961, 0.0
  %v1236 = vmax.f32 %v966, 0.0
  %v1237 = vmax.f32 %v971, 0.0
  %v1238 = vmax.f32 %v976, 0.0
  %v1239 = vmax.f32 %v981, 0.0
  %v1240 = vmax.f32 %v986, 0.0
  %v1241 = vmax.f32 %v991, 0.0
  %v1242 = vmax.f32 %v996, 0.0
  %v1243 = vmax.f32 %v1001, 0.0
  %v1244 = vmax.f32 %v1006, 0.0
  %v1245 = vmax.f32 %v1011, 0.0
  %v1246 = vmax.f32 %v1016, 0.0
  %v1247 = vmax.f32 %v1021, 0.0
  %v1248 = vmax.f32 %v1026, 0.0
  %v1249 = vmax.f32 %v1031, 0.0
  %v1250 = vmax.f32 %v1036, 0.0
  %v1251 = vmax.f32 %v1041, 0.0
  %v1252 = vmax.f32 %v1046, 0.0
  %v1253 = vmax.f32 %v1051, 0.0
  %v1254 = vmax.f32 %v1056, 0.0
  %v1255 = vmax.f32 %v1061, 0.0
  %v1256 = vmax.f32 %v1066, 0.0
  %v1257 = vmax.f32 %v1071, 0.0
  %v1258 = vmax.f32 %v1076, 0.0
  %v1259 = vmax.f32 %v1081, 0.0
  %v1260 = vmax.f32 %v1086, 0.0
  %v1261 = vmax.f32 %v1091, 0.0
  %v1262 = vmax.f32 %v1096, 0.0
  %v1263 = vmax.f32 %v1101, 0.0
  %v1264 = vmax.f32 %v1106, 0.0
  %v1265 = vmax.f32 %v1111, 0.0
  %v1266 = vmax.f32 %v1116, 0.0
  %v1267 = vmax.f32 %v1121, 0.0
  %v1268 = vmax.f32 %v1126, 0.0
  %v1269 = vmax.f32 %v1131, 0.0
  %v1270 = vmax.f32 %v1136, 0.0
  %v1271 = vmax.f32 %v1141, 0.0
  %v1272 = vmax.f32 %v1146, 0.0
  %v1273 = vmax.f32 %v1151, 0.0
  %v1274 = vmax.f32 %v1156, 0.0
  %v1275 = vmax.f32 %v1161, 0.0
  %v1276 = vmax.f32 %v1166, 0.0
  %v1277 = vmax.f32 %v1171, 0.0
  %v1278 = vmax.f32 %v1176, 0.0
  %v1279 = vmax.f32 %v1181, 0.0
  %v1280 = vmax.f32 %v1186, 0.0
  %v1281 = vmax.f32 %v1191, 0.0
  %v1282 = vmax.f32 %v1196, 0.0
  %v1283 = vmax.f32 %v1201, 0.0
  %v1284 = vmax.f32 %v1206, 0.0
  %v1285 = vmax.f32 %v1211, 0.0
  %v1286 = vmax.f32 %v1216, 0.0
  %v1287 = vmax.f32 %v1221, 0.0
  %vm1288 = vcmask 121856
  %v1289 = vsel %vm1288, %v1224, 0.0
  %v1290 = vsel %vm1288, %v1225, 0.0
  %v1291 = vadd.f32 %v1289, %v1290
  %v1292 = vsel %vm1288, %v1226, 0.0
  %v1293 = vadd.f32 %v1291, %v1292
  %v1294 = vsel %vm1288, %v1227, 0.0
  %v1295 = vadd.f32 %v1293, %v1294
  %v1296 = vsel %vm1288, %v1228, 0.0
  %v1297 = vadd.f32 %v1295, %v1296
  %v1298 = vsel %vm1288, %v1229, 0.0
  %v1299 = vadd.f32 %v1297, %v1298
  %v1300 = vsel %vm1288, %v1230, 0.0
  %v1301 = vadd.f32 %v1299, %v1300
  %v1302 = vsel %vm1288, %v1231, 0.0
  %v1303 = vadd.f32 %v1301, %v1302
  %v1304 = vsel %vm1288, %v1232, 0.0
  %v1305 = vadd.f32 %v1303, %v1304
  %v1306 = vsel %vm1288, %v1233, 0.0
  %v1307 = vadd.f32 %v1305, %v1306
  %v1308 = vsel %vm1288, %v1234, 0.0
  %v1309 = vadd.f32 %v1307, %v1308
  %v1310 = vsel %vm1288, %v1235, 0.0
  %v1311 = vadd.f32 %v1309, %v1310
  %v1312 = vsel %vm1288, %v1236, 0.0
  %v1313 = vadd.f32 %v1311, %v1312
  %v1314 = vsel %vm1288, %v1237, 0.0
  %v1315 = vadd.f32 %v1313, %v1314
  %v1316 = vsel %vm1288, %v1238, 0.0
  %v1317 = vadd.f32 %v1315, %v1316
  %v1318 = vsel %vm1288, %v1239, 0.0
  %v1319 = vadd.f32 %v1317, %v1318
  %v1320 = vsel %vm1288, %v1240, 0.0
  %v1321 = vadd.f32 %v1319, %v1320
  %v1322 = vsel %vm1288, %v1241, 0.0
  %v1323 = vadd.f32 %v1321, %v1322
  %v1324 = vsel %vm1288, %v1242, 0.0
  %v1325 = vadd.f32 %v1323, %v1324
  %v1326 = vsel %vm1288, %v1243, 0.0
  %v1327 = vadd.f32 %v1325, %v1326
  %v1328 = vsel %vm1288, %v1244, 0.0
  %v1329 = vadd.f32 %v1327, %v1328
  %v1330 = vsel %vm1288, %v1245, 0.0
  %v1331 = vadd.f32 %v1329, %v1330
  %v1332 = vsel %vm1288, %v1246, 0.0
  %v1333 = vadd.f32 %v1331, %v1332
  %v1334 = vsel %vm1288, %v1247, 0.0
  %v1335 = vadd.f32 %v1333, %v1334
  %v1336 = vsel %vm1288, %v1248, 0.0
  %v1337 = vadd.f32 %v1335, %v1336
  %v1338 = vsel %vm1288, %v1249, 0.0
  %v1339 = vadd.f32 %v1337, %v1338
  %v1340 = vsel %vm1288, %v1250, 0.0
  %v1341 = vadd.f32 %v1339, %v1340
  %v1342 = vsel %vm1288, %v1251, 0.0
  %v1343 = vadd.f32 %v1341, %v1342
  %v1344 = vsel %vm1288, %v1252, 0.0
  %v1345 = vadd.f32 %v1343, %v1344
  %v1346 = vsel %vm1288, %v1253, 0.0
  %v1347 = vadd.f32 %v1345, %v1346
  %v1348 = vsel %vm1288, %v1254, 0.0
  %v1349 = vadd.f32 %v1347, %v1348
  %v1350 = vsel %vm1288, %v1255, 0.0
  %v1351 = vadd.f32 %v1349, %v1350
  %v1352 = vsel %vm1288, %v1256, 0.0
  %v1353 = vadd.f32 %v1351, %v1352
  %v1354 = vsel %vm1288, %v1257, 0.0
  %v1355 = vadd.f32 %v1353, %v1354
  %v1356 = vsel %vm1288, %v1258, 0.0
  %v1357 = vadd.f32 %v1355, %v1356
  %v1358 = vsel %vm1288, %v1259, 0.0
  %v1359 = vadd.f32 %v1357, %v1358
  %v1360 = vsel %vm1288, %v1260, 0.0
  %v1361 = vadd.f32 %v1359, %v1360
  %v1362 = vsel %vm1288, %v1261, 0.0
  %v1363 = vadd.f32 %v1361, %v1362
  %v1364 = vsel %vm1288, %v1262, 0.0
  %v1365 = vadd.f32 %v1363, %v1364
  %v1366 = vsel %vm1288, %v1263, 0.0
  %v1367 = vadd.f32 %v1365, %v1366
  %v1368 = vsel %vm1288, %v1264, 0.0
  %v1369 = vadd.f32 %v1367, %v1368
  %v1370 = vsel %vm1288, %v1265, 0.0
  %v1371 = vadd.f32 %v1369, %v1370
  %v1372 = vsel %vm1288, %v1266, 0.0
  %v1373 = vadd.f32 %v1371, %v1372
  %v1374 = vsel %vm1288, %v1267, 0.0
  %v1375 = vadd.f32 %v1373, %v1374
  %v1376 = vsel %vm1288, %v1268, 0.0
  %v1377 = vadd.f32 %v1375, %v1376
  %v1378 = vsel %vm1288, %v1269, 0.0
  %v1379 = vadd.f32 %v1377, %v1378
  %v1380 = vsel %vm1288, %v1270, 0.0
  %v1381 = vadd.f32 %v1379, %v1380
  %v1382 = vsel %vm1288, %v1271, 0.0
  %v1383 = vadd.f32 %v1381, %v1382
  %v1384 = vsel %vm1288, %v1272, 0.0
  %v1385 = vadd.f32 %v1383, %v1384
  %v1386 = vsel %vm1288, %v1273, 0.0
  %v1387 = vadd.f32 %v1385, %v1386
  %v1388 = vsel %vm1288, %v1274, 0.0
  %v1389 = vadd.f32 %v1387, %v1388
  %v1390 = vsel %vm1288, %v1275, 0.0
  %v1391 = vadd.f32 %v1389, %v1390
  %v1392 = vsel %vm1288, %v1276, 0.0
  %v1393 = vadd.f32 %v1391, %v1392
  %v1394 = vsel %vm1288, %v1277, 0.0
  %v1395 = vadd.f32 %v1393, %v1394
  %v1396 = vsel %vm1288, %v1278, 0.0
  %v1397 = vadd.f32 %v1395, %v1396
  %v1398 = vsel %vm1288, %v1279, 0.0
  %v1399 = vadd.f32 %v1397, %v1398
  %v1400 = vsel %vm1288, %v1280, 0.0
  %v1401 = vadd.f32 %v1399, %v1400
  %v1402 = vsel %vm1288, %v1281, 0.0
  %v1403 = vadd.f32 %v1401, %v1402
  %v1404 = vsel %vm1288, %v1282, 0.0
  %v1405 = vadd.f32 %v1403, %v1404
  %v1406 = vsel %vm1288, %v1283, 0.0
  %v1407 = vadd.f32 %v1405, %v1406
  %v1408 = vsel %vm1288, %v1284, 0.0
  %v1409 = vadd.f32 %v1407, %v1408
  %v1410 = vsel %vm1288, %v1285, 0.0
  %v1411 = vadd.f32 %v1409, %v1410
  %v1412 = vsel %vm1288, %v1286, 0.0
  %v1413 = vadd.f32 %v1411, %v1412
  %v1414 = vsel %vm1288, %v1287, 0.0
  %v1415 = vadd.f32 %v1413, %v1414
  %v1416 = vrot.slane %v1415, 4
  %v1417 = vadd.f32 %v1415, %v1416
  %v1418 = vrot.slane %v1417, 2
  %v1419 = vadd.f32 %v1417, %v1418
  %v1420 = vrot.slane %v1419, 1
  %v1421 = vadd.f32 %v1419, %v1420
  %v1422 = vmul.f32 %v1421, 0.001953125
  %v1423 = vsub.f32 %v1224, %v1422
  %v1424 = vsub.f32 %v1225, %v1422
  %v1425 = vsub.f32 %v1226, %v1422
  %v1426 = vsub.f32 %v1227, %v1422
  %v1427 = vsub.f32 %v1228, %v1422
  %v1428 = vsub.f32 %v1229, %v1422
  %v1429 = vsub.f32 %v1230, %v1422
  %v1430 = vsub.f32 %v1231, %v1422
  %v1431 = vsub.f32 %v1232, %v1422
  %v1432 = vsub.f32 %v1233, %v1422
  %v1433 = vsub.f32 %v1234, %v1422
  %v1434 = vsub.f32 %v1235, %v1422
  %v1435 = vsub.f32 %v1236, %v1422
  %v1436 = vsub.f32 %v1237, %v1422
  %v1437 = vsub.f32 %v1238, %v1422
  %v1438 = vsub.f32 %v1239, %v1422
  %v1439 = vsub.f32 %v1240, %v1422
  %v1440 = vsub.f32 %v1241, %v1422
  %v1441 = vsub.f32 %v1242, %v1422
  %v1442 = vsub.f32 %v1243, %v1422
  %v1443 = vsub.f32 %v1244, %v1422
  %v1444 = vsub.f32 %v1245, %v1422
  %v1445 = vsub.f32 %v1246, %v1422
  %v1446 = vsub.f32 %v1247, %v1422
  %v1447 = vsub.f32 %v1248, %v1422
  %v1448 = vsub.f32 %v1249, %v1422
  %v1449 = vsub.f32 %v1250, %v1422
  %v1450 = vsub.f32 %v1251, %v1422
  %v1451 = vsub.f32 %v1252, %v1422
  %v1452 = vsub.f32 %v1253, %v1422
  %v1453 = vsub.f32 %v1254, %v1422
  %v1454 = vsub.f32 %v1255, %v1422
  %v1455 = vsub.f32 %v1256, %v1422
  %v1456 = vsub.f32 %v1257, %v1422
  %v1457 = vsub.f32 %v1258, %v1422
  %v1458 = vsub.f32 %v1259, %v1422
  %v1459 = vsub.f32 %v1260, %v1422
  %v1460 = vsub.f32 %v1261, %v1422
  %v1461 = vsub.f32 %v1262, %v1422
  %v1462 = vsub.f32 %v1263, %v1422
  %v1463 = vsub.f32 %v1264, %v1422
  %v1464 = vsub.f32 %v1265, %v1422
  %v1465 = vsub.f32 %v1266, %v1422
  %v1466 = vsub.f32 %v1267, %v1422
  %v1467 = vsub.f32 %v1268, %v1422
  %v1468 = vsub.f32 %v1269, %v1422
  %v1469 = vsub.f32 %v1270, %v1422
  %v1470 = vsub.f32 %v1271, %v1422
  %v1471 = vsub.f32 %v1272, %v1422
  %v1472 = vsub.f32 %v1273, %v1422
  %v1473 = vsub.f32 %v1274, %v1422
  %v1474 = vsub.f32 %v1275, %v1422
  %v1475 = vsub.f32 %v1276, %v1422
  %v1476 = vsub.f32 %v1277, %v1422
  %v1477 = vsub.f32 %v1278, %v1422
  %v1478 = vsub.f32 %v1279, %v1422
  %v1479 = vsub.f32 %v1280, %v1422
  %v1480 = vsub.f32 %v1281, %v1422
  %v1481 = vsub.f32 %v1282, %v1422
  %v1482 = vsub.f32 %v1283, %v1422
  %v1483 = vsub.f32 %v1284, %v1422
  %v1484 = vsub.f32 %v1285, %v1422
  %v1485 = vsub.f32 %v1286, %v1422
  %v1486 = vsub.f32 %v1287, %v1422
  %v1487 = vmul.f32 %v1423, %v1423
  %v1488 = vmul.f32 %v1424, %v1424
  %v1489 = vmul.f32 %v1425, %v1425
  %v1490 = vmul.f32 %v1426, %v1426
  %v1491 = vmul.f32 %v1427, %v1427
  %v1492 = vmul.f32 %v1428, %v1428
  %v1493 = vmul.f32 %v1429, %v1429
  %v1494 = vmul.f32 %v1430, %v1430
  %v1495 = vmul.f32 %v1431, %v1431
  %v1496 = vmul.f32 %v1432, %v1432
  %v1497 = vmul.f32 %v1433, %v1433
  %v1498 = vmul.f32 %v1434, %v1434
  %v1499 = vmul.f32 %v1435, %v1435
  %v1500 = vmul.f32 %v1436, %v1436
  %v1501 = vmul.f32 %v1437, %v1437
  %v1502 = vmul.f32 %v1438, %v1438
  %v1503 = vmul.f32 %v1439, %v1439
  %v1504 = vmul.f32 %v1440, %v1440
  %v1505 = vmul.f32 %v1441, %v1441
  %v1506 = vmul.f32 %v1442, %v1442
  %v1507 = vmul.f32 %v1443, %v1443
  %v1508 = vmul.f32 %v1444, %v1444
  %v1509 = vmul.f32 %v1445, %v1445
  %v1510 = vmul.f32 %v1446, %v1446
  %v1511 = vmul.f32 %v1447, %v1447
  %v1512 = vmul.f32 %v1448, %v1448
  %v1513 = vmul.f32 %v1449, %v1449
  %v1514 = vmul.f32 %v1450, %v1450
  %v1515 = vmul.f32 %v1451, %v1451
  %v1516 = vmul.f32 %v1452, %v1452
  %v1517 = vmul.f32 %v1453, %v1453
  %v1518 = vmul.f32 %v1454, %v1454
  %v1519 = vmul.f32 %v1455, %v1455
  %v1520 = vmul.f32 %v1456, %v1456
  %v1521 = vmul.f32 %v1457, %v1457
  %v1522 = vmul.f32 %v1458, %v1458
  %v1523 = vmul.f32 %v1459, %v1459
  %v1524 = vmul.f32 %v1460, %v1460
  %v1525 = vmul.f32 %v1461, %v1461
  %v1526 = vmul.f32 %v1462, %v1462
  %v1527 = vmul.f32 %v1463, %v1463
  %v1528 = vmul.f32 %v1464, %v1464
  %v1529 = vmul.f32 %v1465, %v1465
  %v1530 = vmul.f32 %v1466, %v1466
  %v1531 = vmul.f32 %v1467, %v1467
  %v1532 = vmul.f32 %v1468, %v1468
  %v1533 = vmul.f32 %v1469, %v1469
  %v1534 = vmul.f32 %v1470, %v1470
  %v1535 = vmul.f32 %v1471, %v1471
  %v1536 = vmul.f32 %v1472, %v1472
  %v1537 = vmul.f32 %v1473, %v1473
  %v1538 = vmul.f32 %v1474, %v1474
  %v1539 = vmul.f32 %v1475, %v1475
  %v1540 = vmul.f32 %v1476, %v1476
  %v1541 = vmul.f32 %v1477, %v1477
  %v1542 = vmul.f32 %v1478, %v1478
  %v1543 = vmul.f32 %v1479, %v1479
  %v1544 = vmul.f32 %v1480, %v1480
  %v1545 = vmul.f32 %v1481, %v1481
  %v1546 = vmul.f32 %v1482, %v1482
  %v1547 = vmul.f32 %v1483, %v1483
  %v1548 = vmul.f32 %v1484, %v1484
  %v1549 = vmul.f32 %v1485, %v1485
  %v1550 = vmul.f32 %v1486, %v1486
  %v1551 = vsel %vm1288, %v1487, 0.0
  %v1552 = vsel %vm1288, %v1488, 0.0
  %v1553 = vadd.f32 %v1551, %v1552
  %v1554 = vsel %vm1288, %v1489, 0.0
  %v1555 = vadd.f32 %v1553, %v1554
  %v1556 = vsel %vm1288, %v1490, 0.0
  %v1557 = vadd.f32 %v1555, %v1556
  %v1558 = vsel %vm1288, %v1491, 0.0
  %v1559 = vadd.f32 %v1557, %v1558
  %v1560 = vsel %vm1288, %v1492, 0.0
  %v1561 = vadd.f32 %v1559, %v1560
  %v1562 = vsel %vm1288, %v1493, 0.0
  %v1563 = vadd.f32 %v1561, %v1562
  %v1564 = vsel %vm1288, %v1494, 0.0
  %v1565 = vadd.f32 %v1563, %v1564
  %v1566 = vsel %vm1288, %v1495, 0.0
  %v1567 = vadd.f32 %v1565, %v1566
  %v1568 = vsel %vm1288, %v1496, 0.0
  %v1569 = vadd.f32 %v1567, %v1568
  %v1570 = vsel %vm1288, %v1497, 0.0
  %v1571 = vadd.f32 %v1569, %v1570
  %v1572 = vsel %vm1288, %v1498, 0.0
  %v1573 = vadd.f32 %v1571, %v1572
  %v1574 = vsel %vm1288, %v1499, 0.0
  %v1575 = vadd.f32 %v1573, %v1574
  %v1576 = vsel %vm1288, %v1500, 0.0
  %v1577 = vadd.f32 %v1575, %v1576
  %v1578 = vsel %vm1288, %v1501, 0.0
  %v1579 = vadd.f32 %v1577, %v1578
  %v1580 = vsel %vm1288, %v1502, 0.0
  %v1581 = vadd.f32 %v1579, %v1580
  %v1582 = vsel %vm1288, %v1503, 0.0
  %v1583 = vadd.f32 %v1581, %v1582
  %v1584 = vsel %vm1288, %v1504, 0.0
  %v1585 = vadd.f32 %v1583, %v1584
  %v1586 = vsel %vm1288, %v1505, 0.0
  %v1587 = vadd.f32 %v1585, %v1586
  %v1588 = vsel %vm1288, %v1506, 0.0
  %v1589 = vadd.f32 %v1587, %v1588
  %v1590 = vsel %vm1288, %v1507, 0.0
  %v1591 = vadd.f32 %v1589, %v1590
  %v1592 = vsel %vm1288, %v1508, 0.0
  %v1593 = vadd.f32 %v1591, %v1592
  %v1594 = vsel %vm1288, %v1509, 0.0
  %v1595 = vadd.f32 %v1593, %v1594
  %v1596 = vsel %vm1288, %v1510, 0.0
  %v1597 = vadd.f32 %v1595, %v1596
  %v1598 = vsel %vm1288, %v1511, 0.0
  %v1599 = vadd.f32 %v1597, %v1598
  %v1600 = vsel %vm1288, %v1512, 0.0
  %v1601 = vadd.f32 %v1599, %v1600
  %v1602 = vsel %vm1288, %v1513, 0.0
  %v1603 = vadd.f32 %v1601, %v1602
  %v1604 = vsel %vm1288, %v1514, 0.0
  %v1605 = vadd.f32 %v1603, %v1604
  %v1606 = vsel %vm1288, %v1515, 0.0
  %v1607 = vadd.f32 %v1605, %v1606
  %v1608 = vsel %vm1288, %v1516, 0.0
  %v1609 = vadd.f32 %v1607, %v1608
  %v1610 = vsel %vm1288, %v1517, 0.0
  %v1611 = vadd.f32 %v1609, %v1610
  %v1612 = vsel %vm1288, %v1518, 0.0
  %v1613 = vadd.f32 %v1611, %v1612
  %v1614 = vsel %vm1288, %v1519, 0.0
  %v1615 = vadd.f32 %v1613, %v1614
  %v1616 = vsel %vm1288, %v1520, 0.0
  %v1617 = vadd.f32 %v1615, %v1616
  %v1618 = vsel %vm1288, %v1521, 0.0
  %v1619 = vadd.f32 %v1617, %v1618
  %v1620 = vsel %vm1288, %v1522, 0.0
  %v1621 = vadd.f32 %v1619, %v1620
  %v1622 = vsel %vm1288, %v1523, 0.0
  %v1623 = vadd.f32 %v1621, %v1622
  %v1624 = vsel %vm1288, %v1524, 0.0
  %v1625 = vadd.f32 %v1623, %v1624
  %v1626 = vsel %vm1288, %v1525, 0.0
  %v1627 = vadd.f32 %v1625, %v1626
  %v1628 = vsel %vm1288, %v1526, 0.0
  %v1629 = vadd.f32 %v1627, %v1628
  %v1630 = vsel %vm1288, %v1527, 0.0
  %v1631 = vadd.f32 %v1629, %v1630
  %v1632 = vsel %vm1288, %v1528, 0.0
  %v1633 = vadd.f32 %v1631, %v1632
  %v1634 = vsel %vm1288, %v1529, 0.0
  %v1635 = vadd.f32 %v1633, %v1634
  %v1636 = vsel %vm1288, %v1530, 0.0
  %v1637 = vadd.f32 %v1635, %v1636
  %v1638 = vsel %vm1288, %v1531, 0.0
  %v1639 = vadd.f32 %v1637, %v1638
  %v1640 = vsel %vm1288, %v1532, 0.0
  %v1641 = vadd.f32 %v1639, %v1640
  %v1642 = vsel %vm1288, %v1533, 0.0
  %v1643 = vadd.f32 %v1641, %v1642
  %v1644 = vsel %vm1288, %v1534, 0.0
  %v1645 = vadd.f32 %v1643, %v1644
  %v1646 = vsel %vm1288, %v1535, 0.0
  %v1647 = vadd.f32 %v1645, %v1646
  %v1648 = vsel %vm1288, %v1536, 0.0
  %v1649 = vadd.f32 %v1647, %v1648
  %v1650 = vsel %vm1288, %v1537, 0.0
  %v1651 = vadd.f32 %v1649, %v1650
  %v1652 = vsel %vm1288, %v1538, 0.0
  %v1653 = vadd.f32 %v1651, %v1652
  %v1654 = vsel %vm1288, %v1539, 0.0
  %v1655 = vadd.f32 %v1653, %v1654
  %v1656 = vsel %vm1288, %v1540, 0.0
  %v1657 = vadd.f32 %v1655, %v1656
  %v1658 = vsel %vm1288, %v1541, 0.0
  %v1659 = vadd.f32 %v1657, %v1658
  %v1660 = vsel %vm1288, %v1542, 0.0
  %v1661 = vadd.f32 %v1659, %v1660
  %v1662 = vsel %vm1288, %v1543, 0.0
  %v1663 = vadd.f32 %v1661, %v1662
  %v1664 = vsel %vm1288, %v1544, 0.0
  %v1665 = vadd.f32 %v1663, %v1664
  %v1666 = vsel %vm1288, %v1545, 0.0
  %v1667 = vadd.f32 %v1665, %v1666
  %v1668 = vsel %vm1288, %v1546, 0.0
  %v1669 = vadd.f32 %v1667, %v1668
  %v1670 = vsel %vm1288, %v1547, 0.0
  %v1671 = vadd.f32 %v1669, %v1670
  %v1672 = vsel %vm1288, %v1548, 0.0
  %v1673 = vadd.f32 %v1671, %v1672
  %v1674 = vsel %vm1288, %v1549, 0.0
  %v1675 = vadd.f32 %v1673, %v1674
  %v1676 = vsel %vm1288, %v1550, 0.0
  %v1677 = vadd.f32 %v1675, %v1676
  %v1678 = vrot.slane %v1677, 4
  %v1679 = vadd.f32 %v1677, %v1678
  %v1680 = vrot.slane %v1679, 2
  %v1681 = vadd.f32 %v1679, %v1680
  %v1682 = vrot.slane %v1681, 1
  %v1683 = vadd.f32 %v1681, %v1682
  %v1684 = vmul.f32 %v1683, 0.001953125
  %v1685 = vadd.f32 %v1684, 1e-05
  %v1686 = vrsqrt.pop %v1685
  %v1687 = vmul.f32 %v1423, %v1686
  %v1688 = vmul.f32 %v1424, %v1686
  %v1689 = vmul.f32 %v1425, %v1686
  %v1690 = vmul.f32 %v1426, %v1686
  %v1691 = vmul.f32 %v1427, %v1686
  %v1692 = vmul.f32 %v1428, %v1686
  %v1693 = vmul.f32 %v1429, %v1686
  %v1694 = vmul.f32 %v1430, %v1686
  %v1695 = vmul.f32 %v1431, %v1686
  %v1696 = vmul.f32 %v1432, %v1686
  %v1697 = vmul.f32 %v1433, %v1686
  %v1698 = vmul.f32 %v1434, %v1686
  %v1699 = vmul.f32 %v1435, %v1686
  %v1700 = vmul.f32 %v1436, %v1686
  %v1701 = vmul.f32 %v1437, %v1686
  %v1702 = vmul.f32 %v1438, %v1686
  %v1703 = vmul.f32 %v1439, %v1686
  %v1704 = vmul.f32 %v1440, %v1686
  %v1705 = vmul.f32 %v1441, %v1686
  %v1706 = vmul.f32 %v1442, %v1686
  %v1707 = vmul.f32 %v1443, %v1686
  %v1708 = vmul.f32 %v1444, %v1686
  %v1709 = vmul.f32 %v1445, %v1686
  %v1710 = vmul.f32 %v1446, %v1686
  %v1711 = vmul.f32 %v1447, %v1686
  %v1712 = vmul.f32 %v1448, %v1686
  %v1713 = vmul.f32 %v1449, %v1686
  %v1714 = vmul.f32 %v1450, %v1686
  %v1715 = vmul.f32 %v1451, %v1686
  %v1716 = vmul.f32 %v1452, %v1686
  %v1717 = vmul.f32 %v1453, %v1686
  %v1718 = vmul.f32 %v1454, %v1686
  %v1719 = vmul.f32 %v1455, %v1686
  %v1720 = vmul.f32 %v1456, %v1686
  %v1721 = vmul.f32 %v1457, %v1686
  %v1722 = vmul.f32 %v1458, %v1686
  %v1723 = vmul.f32 %v1459, %v1686
  %v1724 = vmul.f32 %v1460, %v1686
  %v1725 = vmul.f32 %v1461, %v1686
  %v1726 = vmul.f32 %v1462, %v1686
  %v1727 = vmul.f32 %v1463, %v1686
  %v1728 = vmul.f32 %v1464, %v1686
  %v1729 = vmul.f32 %v1465, %v1686
  %v1730 = vmul.f32 %v1466, %v1686
  %v1731 = vmul.f32 %v1467, %v1686
  %v1732 = vmul.f32 %v1468, %v1686
  %v1733 = vmul.f32 %v1469, %v1686
  %v1734 = vmul.f32 %v1470, %v1686
  %v1735 = vmul.f32 %v1471, %v1686
  %v1736 = vmul.f32 %v1472, %v1686
  %v1737 = vmul.f32 %v1473, %v1686
  %v1738 = vmul.f32 %v1474, %v1686
  %v1739 = vmul.f32 %v1475, %v1686
  %v1740 = vmul.f32 %v1476, %v1686
  %v1741 = vmul.f32 %v1477, %v1686
  %v1742 = vmul.f32 %v1478, %v1686
  %v1743 = vmul.f32 %v1479, %v1686
  %v1744 = vmul.f32 %v1480, %v1686
  %v1745 = vmul.f32 %v1481, %v1686
  %v1746 = vmul.f32 %v1482, %v1686
  %v1747 = vmul.f32 %v1483, %v1686
  %v1748 = vmul.f32 %v1484, %v1686
  %v1749 = vmul.f32 %v1485, %v1686
  %v1750 = vmul.f32 %v1486, %v1686
  %v1751 = vld [vmem:[%s3] sm:$0x1]
  %v1753 = vlaneseq
  %v1754 = vshrl.u32 %v1753, 7
  %v1755 = vsub.s32 0, %v1754
  %v1756 = vrot.slane %v1751, %v1755
  %v1758 = vmul.f32 %v1687, %v1756
  %v1759 = vmul.f32 %v1688, %v1756
  %v1760 = vmul.f32 %v1689, %v1756
  %v1761 = vmul.f32 %v1690, %v1756
  %v1762 = vmul.f32 %v1691, %v1756
  %v1763 = vmul.f32 %v1692, %v1756
  %v1764 = vmul.f32 %v1693, %v1756
  %v1765 = vmul.f32 %v1694, %v1756
  %v1766 = vmul.f32 %v1695, %v1756
  %v1767 = vmul.f32 %v1696, %v1756
  %v1768 = vmul.f32 %v1697, %v1756
  %v1769 = vmul.f32 %v1698, %v1756
  %v1770 = vmul.f32 %v1699, %v1756
  %v1771 = vmul.f32 %v1700, %v1756
  %v1772 = vmul.f32 %v1701, %v1756
  %v1773 = vmul.f32 %v1702, %v1756
  %v1774 = vmul.f32 %v1703, %v1756
  %v1775 = vmul.f32 %v1704, %v1756
  %v1776 = vmul.f32 %v1705, %v1756
  %v1777 = vmul.f32 %v1706, %v1756
  %v1778 = vmul.f32 %v1707, %v1756
  %v1779 = vmul.f32 %v1708, %v1756
  %v1780 = vmul.f32 %v1709, %v1756
  %v1781 = vmul.f32 %v1710, %v1756
  %v1782 = vmul.f32 %v1711, %v1756
  %v1783 = vmul.f32 %v1712, %v1756
  %v1784 = vmul.f32 %v1713, %v1756
  %v1785 = vmul.f32 %v1714, %v1756
  %v1786 = vmul.f32 %v1715, %v1756
  %v1787 = vmul.f32 %v1716, %v1756
  %v1788 = vmul.f32 %v1717, %v1756
  %v1789 = vmul.f32 %v1718, %v1756
  %v1790 = vmul.f32 %v1719, %v1756
  %v1791 = vmul.f32 %v1720, %v1756
  %v1792 = vmul.f32 %v1721, %v1756
  %v1793 = vmul.f32 %v1722, %v1756
  %v1794 = vmul.f32 %v1723, %v1756
  %v1795 = vmul.f32 %v1724, %v1756
  %v1796 = vmul.f32 %v1725, %v1756
  %v1797 = vmul.f32 %v1726, %v1756
  %v1798 = vmul.f32 %v1727, %v1756
  %v1799 = vmul.f32 %v1728, %v1756
  %v1800 = vmul.f32 %v1729, %v1756
  %v1801 = vmul.f32 %v1730, %v1756
  %v1802 = vmul.f32 %v1731, %v1756
  %v1803 = vmul.f32 %v1732, %v1756
  %v1804 = vmul.f32 %v1733, %v1756
  %v1805 = vmul.f32 %v1734, %v1756
  %v1806 = vmul.f32 %v1735, %v1756
  %v1807 = vmul.f32 %v1736, %v1756
  %v1808 = vmul.f32 %v1737, %v1756
  %v1809 = vmul.f32 %v1738, %v1756
  %v1810 = vmul.f32 %v1739, %v1756
  %v1811 = vmul.f32 %v1740, %v1756
  %v1812 = vmul.f32 %v1741, %v1756
  %v1813 = vmul.f32 %v1742, %v1756
  %v1814 = vmul.f32 %v1743, %v1756
  %v1815 = vmul.f32 %v1744, %v1756
  %v1816 = vmul.f32 %v1745, %v1756
  %v1817 = vmul.f32 %v1746, %v1756
  %v1818 = vmul.f32 %v1747, %v1756
  %v1819 = vmul.f32 %v1748, %v1756
  %v1820 = vmul.f32 %v1749, %v1756
  %v1821 = vmul.f32 %v1750, %v1756
  %v1822 = vld [vmem:[%s4] sm:$0x1]
  %v1824 = vlaneseq
  %v1825 = vshrl.u32 %v1824, 7
  %v1826 = vsub.s32 0, %v1825
  %v1827 = vrot.slane %v1822, %v1826
  %v1829 = vadd.f32 %v1758, %v1827
  %v1830 = vadd.f32 %v1759, %v1827
  %v1831 = vadd.f32 %v1760, %v1827
  %v1832 = vadd.f32 %v1761, %v1827
  %v1833 = vadd.f32 %v1762, %v1827
  %v1834 = vadd.f32 %v1763, %v1827
  %v1835 = vadd.f32 %v1764, %v1827
  %v1836 = vadd.f32 %v1765, %v1827
  %v1837 = vadd.f32 %v1766, %v1827
  %v1838 = vadd.f32 %v1767, %v1827
  %v1839 = vadd.f32 %v1768, %v1827
  %v1840 = vadd.f32 %v1769, %v1827
  %v1841 = vadd.f32 %v1770, %v1827
  %v1842 = vadd.f32 %v1771, %v1827
  %v1843 = vadd.f32 %v1772, %v1827
  %v1844 = vadd.f32 %v1773, %v1827
  %v1845 = vadd.f32 %v1774, %v1827
  %v1846 = vadd.f32 %v1775, %v1827
  %v1847 = vadd.f32 %v1776, %v1827
  %v1848 = vadd.f32 %v1777, %v1827
  %v1849 = vadd.f32 %v1778, %v1827
  %v1850 = vadd.f32 %v1779, %v1827
  %v1851 = vadd.f32 %v1780, %v1827
  %v1852 = vadd.f32 %v1781, %v1827
  %v1853 = vadd.f32 %v1782, %v1827
  %v1854 = vadd.f32 %v1783, %v1827
  %v1855 = vadd.f32 %v1784, %v1827
  %v1856 = vadd.f32 %v1785, %v1827
  %v1857 = vadd.f32 %v1786, %v1827
  %v1858 = vadd.f32 %v1787, %v1827
  %v1859 = vadd.f32 %v1788, %v1827
  %v1860 = vadd.f32 %v1789, %v1827
  %v1861 = vadd.f32 %v1790, %v1827
  %v1862 = vadd.f32 %v1791, %v1827
  %v1863 = vadd.f32 %v1792, %v1827
  %v1864 = vadd.f32 %v1793, %v1827
  %v1865 = vadd.f32 %v1794, %v1827
  %v1866 = vadd.f32 %v1795, %v1827
  %v1867 = vadd.f32 %v1796, %v1827
  %v1868 = vadd.f32 %v1797, %v1827
  %v1869 = vadd.f32 %v1798, %v1827
  %v1870 = vadd.f32 %v1799, %v1827
  %v1871 = vadd.f32 %v1800, %v1827
  %v1872 = vadd.f32 %v1801, %v1827
  %v1873 = vadd.f32 %v1802, %v1827
  %v1874 = vadd.f32 %v1803, %v1827
  %v1875 = vadd.f32 %v1804, %v1827
  %v1876 = vadd.f32 %v1805, %v1827
  %v1877 = vadd.f32 %v1806, %v1827
  %v1878 = vadd.f32 %v1807, %v1827
  %v1879 = vadd.f32 %v1808, %v1827
  %v1880 = vadd.f32 %v1809, %v1827
  %v1881 = vadd.f32 %v1810, %v1827
  %v1882 = vadd.f32 %v1811, %v1827
  %v1883 = vadd.f32 %v1812, %v1827
  %v1884 = vadd.f32 %v1813, %v1827
  %v1885 = vadd.f32 %v1814, %v1827
  %v1886 = vadd.f32 %v1815, %v1827
  %v1887 = vadd.f32 %v1816, %v1827
  %v1888 = vadd.f32 %v1817, %v1827
  %v1889 = vadd.f32 %v1818, %v1827
  %v1890 = vadd.f32 %v1819, %v1827
  %v1891 = vadd.f32 %v1820, %v1827
  %v1892 = vadd.f32 %v1821, %v1827
  %1893 = vst.msk [vmem:[%s5] sm:$0xff] %vm1288, %v1829
  %1894 = vst.msk [vmem:[%s5 + $0x8] sm:$0xff] %vm1288, %v1830
  %1895 = vst.msk [vmem:[%s5 + $0x10] sm:$0xff] %vm1288, %v1831
  %1896 = vst.msk [vmem:[%s5 + $0x18] sm:$0xff] %vm1288, %v1832
  %1897 = vst.msk [vmem:[%s5 + $0x20] sm:$0xff] %vm1288, %v1833
  %1898 = vst.msk [vmem:[%s5 + $0x28] sm:$0xff] %vm1288, %v1834
  %1899 = vst.msk [vmem:[%s5 + $0x30] sm:$0xff] %vm1288, %v1835
  %1900 = vst.msk [vmem:[%s5 + $0x38] sm:$0xff] %vm1288, %v1836
  %1901 = vst.msk [vmem:[%s5 + $0x40] sm:$0xff] %vm1288, %v1837
  %1902 = vst.msk [vmem:[%s5 + $0x48] sm:$0xff] %vm1288, %v1838
  %1903 = vst.msk [vmem:[%s5 + $0x50] sm:$0xff] %vm1288, %v1839
  %1904 = vst.msk [vmem:[%s5 + $0x58] sm:$0xff] %vm1288, %v1840
  %1905 = vst.msk [vmem:[%s5 + $0x60] sm:$0xff] %vm1288, %v1841
  %1906 = vst.msk [vmem:[%s5 + $0x68] sm:$0xff] %vm1288, %v1842
  %1907 = vst.msk [vmem:[%s5 + $0x70] sm:$0xff] %vm1288, %v1843
  %1908 = vst.msk [vmem:[%s5 + $0x78] sm:$0xff] %vm1288, %v1844
  %1909 = vst.msk [vmem:[%s5 + $0x80] sm:$0xff] %vm1288, %v1845
  %1910 = vst.msk [vmem:[%s5 + $0x88] sm:$0xff] %vm1288, %v1846
  %1911 = vst.msk [vmem:[%s5 + $0x90] sm:$0xff] %vm1288, %v1847
  %1912 = vst.msk [vmem:[%s5 + $0x98] sm:$0xff] %vm1288, %v1848
  %1913 = vst.msk [vmem:[%s5 + $0xa0] sm:$0xff] %vm1288, %v1849
  %1914 = vst.msk [vmem:[%s5 + $0xa8] sm:$0xff] %vm1288, %v1850
  %1915 = vst.msk [vmem:[%s5 + $0xb0] sm:$0xff] %vm1288, %v1851
  %1916 = vst.msk [vmem:[%s5 + $0xb8] sm:$0xff] %vm1288, %v1852
  %1917 = vst.msk [vmem:[%s5 + $0xc0] sm:$0xff] %vm1288, %v1853
  %1918 = vst.msk [vmem:[%s5 + $0xc8] sm:$0xff] %vm1288, %v1854
  %1919 = vst.msk [vmem:[%s5 + $0xd0] sm:$0xff] %vm1288, %v1855
  %1920 = vst.msk [vmem:[%s5 + $0xd8] sm:$0xff] %vm1288, %v1856
  %1921 = vst.msk [vmem:[%s5 + $0xe0] sm:$0xff] %vm1288, %v1857
  %1922 = vst.msk [vmem:[%s5 + $0xe8] sm:$0xff] %vm1288, %v1858
  %1923 = vst.msk [vmem:[%s5 + $0xf0] sm:$0xff] %vm1288, %v1859
  %1924 = vst.msk [vmem:[%s5 + $0xf8] sm:$0xff] %vm1288, %v1860
  %1925 = vst.msk [vmem:[%s5 + $0x100] sm:$0xff] %vm1288, %v1861
  %1926 = vst.msk [vmem:[%s5 + $0x108] sm:$0xff] %vm1288, %v1862
  %1927 = vst.msk [vmem:[%s5 + $0x110] sm:$0xff] %vm1288, %v1863
  %1928 = vst.msk [vmem:[%s5 + $0x118] sm:$0xff] %vm1288, %v1864
  %1929 = vst.msk [vmem:[%s5 + $0x120] sm:$0xff] %vm1288, %v1865
  %1930 = vst.msk [vmem:[%s5 + $0x128] sm:$0xff] %vm1288, %v1866
  %1931 = vst.msk [vmem:[%s5 + $0x130] sm:$0xff] %vm1288, %v1867
  %1932 = vst.msk [vmem:[%s5 + $0x138] sm:$0xff] %vm1288, %v1868
  %1933 = vst.msk [vmem:[%s5 + $0x140] sm:$0xff] %vm1288, %v1869
  %1934 = vst.msk [vmem:[%s5 + $0x148] sm:$0xff] %vm1288, %v1870
  %1935 = vst.msk [vmem:[%s5 + $0x150] sm:$0xff] %vm1288, %v1871
  %1936 = vst.msk [vmem:[%s5 + $0x158] sm:$0xff] %vm1288, %v1872
  %1937 = vst.msk [vmem:[%s5 + $0x160] sm:$0xff] %vm1288, %v1873
  %1938 = vst.msk [vmem:[%s5 + $0x168] sm:$0xff] %vm1288, %v1874
  %1939 = vst.msk [vmem:[%s5 + $0x170] sm:$0xff] %vm1288, %v1875
  %1940 = vst.msk [vmem:[%s5 + $0x178] sm:$0xff] %vm1288, %v1876
  %1941 = vst.msk [vmem:[%s5 + $0x180] sm:$0xff] %vm1288, %v1877
  %1942 = vst.msk [vmem:[%s5 + $0x188] sm:$0xff] %vm1288, %v1878
  %1943 = vst.msk [vmem:[%s5 + $0x190] sm:$0xff] %vm1288, %v1879
  %1944 = vst.msk [vmem:[%s5 + $0x198] sm:$0xff] %vm1288, %v1880
  %1945 = vst.msk [vmem:[%s5 + $0x1a0] sm:$0xff] %vm1288, %v1881
  %1946 = vst.msk [vmem:[%s5 + $0x1a8] sm:$0xff] %vm1288, %v1882
  %1947 = vst.msk [vmem:[%s5 + $0x1b0] sm:$0xff] %vm1288, %v1883
  %1948 = vst.msk [vmem:[%s5 + $0x1b8] sm:$0xff] %vm1288, %v1884
  %1949 = vst.msk [vmem:[%s5 + $0x1c0] sm:$0xff] %vm1288, %v1885
  %1950 = vst.msk [vmem:[%s5 + $0x1c8] sm:$0xff] %vm1288, %v1886
  %1951 = vst.msk [vmem:[%s5 + $0x1d0] sm:$0xff] %vm1288, %v1887
  %1952 = vst.msk [vmem:[%s5 + $0x1d8] sm:$0xff] %vm1288, %v1888
  %1953 = vst.msk [vmem:[%s5 + $0x1e0] sm:$0xff] %vm1288, %v1889
  %1954 = vst.msk [vmem:[%s5 + $0x1e8] sm:$0xff] %vm1288, %v1890
  %1955 = vst.msk [vmem:[%s5 + $0x1f0] sm:$0xff] %vm1288, %v1891
  %1956 = vst.msk [vmem:[%s5 + $0x1f8] sm:$0xff] %vm1288, %v1892
  // Predicated region
  $region22: #{mask_generator_forward.14} parent=0 // pred_check
    _
  $region23: #{mask_generator_forward.14} parent=0 // pred_check_branch
    %1958 = sbr.rel (0) target = $region25
  $region24: #{mask_generator_forward.14} parent=0 // pred_region
    _
  $region25: #{mask_generator_forward.14} parent=0 // pred_fallthru
    _
  // Predicated region
  $region26: #{mask_generator_forward.14} parent=0 // pred_check
    _
  $region27: #{mask_generator_forward.14} parent=0 // pred_check_branch
    %1960 = sbr.rel (0) target = $region29
  $region28: #{mask_generator_forward.14} parent=0 // pred_region
    _
  $region29: #{mask_generator_forward.14} parent=0 // pred_fallthru
    _

// kernel: mask_generator_forward.15
$region0: #{mask_generator_forward.15}
  #allocation0 [shape = 'u32[]', space=smem, size = 0x4, offset = 0x4, fixed_abs, tag = 'smem constant byte address 0x4 - core index']
  #allocation1 [shape = 'u32[144,128]{1,0:T(1,128)}', space=vmem, size = 0x12000, scoped, tag = 'internal scratch']
  %s0 = inlined_call_operand.vmem [shape: f32[512,135], index: 0, kind: input, shape index: {}]
  %s1 = inlined_call_operand.vmem [shape: f32[135,4], index: 1, kind: input, shape index: {}]
  %s2 = inlined_call_operand.vmem [shape: f32[1,4], index: 2, kind: input, shape index: {}]
  %s3 = inlined_call_operand.vmem [shape: f32[512,4], index: 3, kind: output, shape index: {}]
  %s4 = sld [smem:[#allocation0]]
  $region22: #{mask_generator_forward.15} parent=0
    _
  %s6 = ssub.s32 1, %s4
  %s7 = scalar_select 0, %s6, %s4
  // Predicated region
  $region2: #{mask_generator_forward.15} parent=0 // pred_check
    _
  $region3: #{mask_generator_forward.15} parent=0 // pred_check_branch
    %9 = sbr.rel (0) target = $region5
  $region4: #{mask_generator_forward.15} parent=0 // pred_region
    _
  $region5: #{mask_generator_forward.15} parent=0 // pred_fallthru
    _
  // Predicated region
  $region6: #{mask_generator_forward.15} parent=0 // pred_check
    _
  $region7: #{mask_generator_forward.15} parent=0 // pred_check_branch
    %11 = sbr.rel (0) target = $region9
  $region8: #{mask_generator_forward.15} parent=0 // pred_region
    _
  $region9: #{mask_generator_forward.15} parent=0 // pred_fallthru
    _
  // Predicated region
  $region10: #{mask_generator_forward.15} parent=0 // pred_check
    _
  $region11: #{mask_generator_forward.15} parent=0 // pred_check_branch
    %13 = sbr.rel (0) target = $region13
  $region12: #{mask_generator_forward.15} parent=0 // pred_region
    _
  $region13: #{mask_generator_forward.15} parent=0 // pred_fallthru
    _
  %v14 = vld [vmem:[%s0] sm:$0xff]
  %v15 = vld [vmem:[%s0 + $0x8] sm:$0xff]
  %v16 = vld [vmem:[%s0 + $0x10] sm:$0xff]
  %v17 = vld [vmem:[%s0 + $0x18] sm:$0xff]
  %v18 = vld [vmem:[%s0 + $0x20] sm:$0xff]
  %v19 = vld [vmem:[%s0 + $0x28] sm:$0xff]
  %v20 = vld [vmem:[%s0 + $0x30] sm:$0xff]
  %v21 = vld [vmem:[%s0 + $0x38] sm:$0xff]
  %v22 = vld [vmem:[%s0 + $0x40] sm:$0xff]
  %v23 = vld [vmem:[%s0 + $0x48] sm:$0xff]
  %v24 = vld [vmem:[%s0 + $0x50] sm:$0xff]
  %v25 = vld [vmem:[%s0 + $0x58] sm:$0xff]
  %v26 = vld [vmem:[%s0 + $0x60] sm:$0xff]
  %v27 = vld [vmem:[%s0 + $0x68] sm:$0xff]
  %v28 = vld [vmem:[%s0 + $0x70] sm:$0xff]
  %v29 = vld [vmem:[%s0 + $0x78] sm:$0xff]
  %v30 = vld [vmem:[%s0 + $0x80] sm:$0xff]
  %v31 = vld [vmem:[%s0 + $0x88] sm:$0xff]
  %v32 = vld [vmem:[%s0 + $0x90] sm:$0xff]
  %v33 = vld [vmem:[%s0 + $0x98] sm:$0xff]
  %v34 = vld [vmem:[%s0 + $0xa0] sm:$0xff]
  %v35 = vld [vmem:[%s0 + $0xa8] sm:$0xff]
  %v36 = vld [vmem:[%s0 + $0xb0] sm:$0xff]
  %v37 = vld [vmem:[%s0 + $0xb8] sm:$0xff]
  %v38 = vld [vmem:[%s0 + $0xc0] sm:$0xff]
  %v39 = vld [vmem:[%s0 + $0xc8] sm:$0xff]
  %v40 = vld [vmem:[%s0 + $0xd0] sm:$0xff]
  %v41 = vld [vmem:[%s0 + $0xd8] sm:$0xff]
  %v42 = vld [vmem:[%s0 + $0xe0] sm:$0xff]
  %v43 = vld [vmem:[%s0 + $0xe8] sm:$0xff]
  %v44 = vld [vmem:[%s0 + $0xf0] sm:$0xff]
  %v45 = vld [vmem:[%s0 + $0xf8] sm:$0xff]
  %v46 = vld [vmem:[%s0 + $0x100] sm:$0xff]
  %v47 = vld [vmem:[%s0 + $0x108] sm:$0xff]
  %v48 = vld [vmem:[%s0 + $0x110] sm:$0xff]
  %v49 = vld [vmem:[%s0 + $0x118] sm:$0xff]
  %v50 = vld [vmem:[%s0 + $0x120] sm:$0xff]
  %v51 = vld [vmem:[%s0 + $0x128] sm:$0xff]
  %v52 = vld [vmem:[%s0 + $0x130] sm:$0xff]
  %v53 = vld [vmem:[%s0 + $0x138] sm:$0xff]
  %v54 = vld [vmem:[%s0 + $0x140] sm:$0xff]
  %v55 = vld [vmem:[%s0 + $0x148] sm:$0xff]
  %v56 = vld [vmem:[%s0 + $0x150] sm:$0xff]
  %v57 = vld [vmem:[%s0 + $0x158] sm:$0xff]
  %v58 = vld [vmem:[%s0 + $0x160] sm:$0xff]
  %v59 = vld [vmem:[%s0 + $0x168] sm:$0xff]
  %v60 = vld [vmem:[%s0 + $0x170] sm:$0xff]
  %v61 = vld [vmem:[%s0 + $0x178] sm:$0xff]
  %v62 = vld [vmem:[%s0 + $0x180] sm:$0xff]
  %v63 = vld [vmem:[%s0 + $0x188] sm:$0xff]
  %v64 = vld [vmem:[%s0 + $0x190] sm:$0xff]
  %v65 = vld [vmem:[%s0 + $0x198] sm:$0xff]
  %v66 = vld [vmem:[%s0 + $0x1a0] sm:$0xff]
  %v67 = vld [vmem:[%s0 + $0x1a8] sm:$0xff]
  %v68 = vld [vmem:[%s0 + $0x1b0] sm:$0xff]
  %v69 = vld [vmem:[%s0 + $0x1b8] sm:$0xff]
  %v70 = vld [vmem:[%s0 + $0x1c0] sm:$0xff]
  %v71 = vld [vmem:[%s0 + $0x1c8] sm:$0xff]
  %v72 = vld [vmem:[%s0 + $0x1d0] sm:$0xff]
  %v73 = vld [vmem:[%s0 + $0x1d8] sm:$0xff]
  %v74 = vld [vmem:[%s0 + $0x1e0] sm:$0xff]
  %v75 = vld [vmem:[%s0 + $0x1e8] sm:$0xff]
  %v76 = vld [vmem:[%s0 + $0x1f0] sm:$0xff]
  %v77 = vld [vmem:[%s0 + $0x1f8] sm:$0xff]
  %v78 = vld [vmem:[%s0 + $0x200] sm:$0xff]
  %v79 = vld [vmem:[%s0 + $0x208] sm:$0xff]
  %v80 = vld [vmem:[%s0 + $0x210] sm:$0xff]
  %v81 = vld [vmem:[%s0 + $0x218] sm:$0xff]
  %v82 = vld [vmem:[%s0 + $0x220] sm:$0xff]
  %v83 = vld [vmem:[%s0 + $0x228] sm:$0xff]
  %v84 = vld [vmem:[%s0 + $0x230] sm:$0xff]
  %v85 = vld [vmem:[%s0 + $0x238] sm:$0xff]
  %v86 = vld [vmem:[%s0 + $0x240] sm:$0xff]
  %v87 = vld [vmem:[%s0 + $0x248] sm:$0xff]
  %v88 = vld [vmem:[%s0 + $0x250] sm:$0xff]
  %v89 = vld [vmem:[%s0 + $0x258] sm:$0xff]
  %v90 = vld [vmem:[%s0 + $0x260] sm:$0xff]
  %v91 = vld [vmem:[%s0 + $0x268] sm:$0xff]
  %v92 = vld [vmem:[%s0 + $0x270] sm:$0xff]
  %v93 = vld [vmem:[%s0 + $0x278] sm:$0xff]
  %v94 = vld [vmem:[%s0 + $0x280] sm:$0xff]
  %v95 = vld [vmem:[%s0 + $0x288] sm:$0xff]
  %v96 = vld [vmem:[%s0 + $0x290] sm:$0xff]
  %v97 = vld [vmem:[%s0 + $0x298] sm:$0xff]
  %v98 = vld [vmem:[%s0 + $0x2a0] sm:$0xff]
  %v99 = vld [vmem:[%s0 + $0x2a8] sm:$0xff]
  %v100 = vld [vmem:[%s0 + $0x2b0] sm:$0xff]
  %v101 = vld [vmem:[%s0 + $0x2b8] sm:$0xff]
  %v102 = vld [vmem:[%s0 + $0x2c0] sm:$0xff]
  %v103 = vld [vmem:[%s0 + $0x2c8] sm:$0xff]
  %v104 = vld [vmem:[%s0 + $0x2d0] sm:$0xff]
  %v105 = vld [vmem:[%s0 + $0x2d8] sm:$0xff]
  %v106 = vld [vmem:[%s0 + $0x2e0] sm:$0xff]
  %v107 = vld [vmem:[%s0 + $0x2e8] sm:$0xff]
  %v108 = vld [vmem:[%s0 + $0x2f0] sm:$0xff]
  %v109 = vld [vmem:[%s0 + $0x2f8] sm:$0xff]
  %v110 = vld [vmem:[%s0 + $0x300] sm:$0xff]
  %v111 = vld [vmem:[%s0 + $0x308] sm:$0xff]
  %v112 = vld [vmem:[%s0 + $0x310] sm:$0xff]
  %v113 = vld [vmem:[%s0 + $0x318] sm:$0xff]
  %v114 = vld [vmem:[%s0 + $0x320] sm:$0xff]
  %v115 = vld [vmem:[%s0 + $0x328] sm:$0xff]
  %v116 = vld [vmem:[%s0 + $0x330] sm:$0xff]
  %v117 = vld [vmem:[%s0 + $0x338] sm:$0xff]
  %v118 = vld [vmem:[%s0 + $0x340] sm:$0xff]
  %v119 = vld [vmem:[%s0 + $0x348] sm:$0xff]
  %v120 = vld [vmem:[%s0 + $0x350] sm:$0xff]
  %v121 = vld [vmem:[%s0 + $0x358] sm:$0xff]
  %v122 = vld [vmem:[%s0 + $0x360] sm:$0xff]
  %v123 = vld [vmem:[%s0 + $0x368] sm:$0xff]
  %v124 = vld [vmem:[%s0 + $0x370] sm:$0xff]
  %v125 = vld [vmem:[%s0 + $0x378] sm:$0xff]
  %v126 = vld [vmem:[%s0 + $0x380] sm:$0xff]
  %v127 = vld [vmem:[%s0 + $0x388] sm:$0xff]
  %v128 = vld [vmem:[%s0 + $0x390] sm:$0xff]
  %v129 = vld [vmem:[%s0 + $0x398] sm:$0xff]
  %v130 = vld [vmem:[%s0 + $0x3a0] sm:$0xff]
  %v131 = vld [vmem:[%s0 + $0x3a8] sm:$0xff]
  %v132 = vld [vmem:[%s0 + $0x3b0] sm:$0xff]
  %v133 = vld [vmem:[%s0 + $0x3b8] sm:$0xff]
  %v134 = vld [vmem:[%s0 + $0x3c0] sm:$0xff]
  %v135 = vld [vmem:[%s0 + $0x3c8] sm:$0xff]
  %v136 = vld [vmem:[%s0 + $0x3d0] sm:$0xff]
  %v137 = vld [vmem:[%s0 + $0x3d8] sm:$0xff]
  %v138 = vld [vmem:[%s0 + $0x3e0] sm:$0xff]
  %v139 = vld [vmem:[%s0 + $0x3e8] sm:$0xff]
  %v140 = vld [vmem:[%s0 + $0x3f0] sm:$0xff]
  %v141 = vld [vmem:[%s0 + $0x3f8] sm:$0xff]
  %v142 = vld [vmem:[%s1] sm:$0xff]
  %v143 = vld [vmem:[%s1 + $0x8] sm:$0xff]
  %v144 = vld [vmem:[%s1 + $0x10] sm:$0xff]
  %v145 = vld [vmem:[%s1 + $0x18] sm:$0xff]
  %v146 = vld [vmem:[%s1 + $0x20] sm:$0xff]
  %v147 = vld [vmem:[%s1 + $0x28] sm:$0xff]
  %v148 = vld [vmem:[%s1 + $0x30] sm:$0xff]
  %v149 = vld [vmem:[%s1 + $0x38] sm:$0xff]
  %v150 = vld [vmem:[%s1 + $0x40] sm:$0xff]
  %v151 = vld [vmem:[%s1 + $0x48] sm:$0xff]
  %v152 = vld [vmem:[%s1 + $0x50] sm:$0xff]
  %v153 = vld [vmem:[%s1 + $0x58] sm:$0xff]
  %v154 = vld [vmem:[%s1 + $0x60] sm:$0xff]
  %v155 = vld [vmem:[%s1 + $0x68] sm:$0xff]
  %v156 = vld [vmem:[%s1 + $0x70] sm:$0xff]
  %v157 = vld [vmem:[%s1 + $0x78] sm:$0xff]
  %v158 = vld [vmem:[%s1 + $0x80] sm:$0x7f]
  %v159 = vld [vmem:[%s2] sm:$0x1]
  %v161 = vlaneseq
  %v162 = vshrl.u32 %v161, 7
  %v163 = vsub.s32 0, %v162
  %v164 = vrot.slane %v159, %v163
  %vm166 = vcmask 56320
  %v168 = vsel %vm166, %v15, 0
  %v171 = vsel %vm166, %v17, 0
  %v174 = vsel %vm166, %v19, 0
  %v177 = vsel %vm166, %v21, 0
  %v180 = vsel %vm166, %v23, 0
  %v183 = vsel %vm166, %v25, 0
  %v186 = vsel %vm166, %v27, 0
  %v189 = vsel %vm166, %v29, 0
  %v192 = vsel %vm166, %v31, 0
  %v195 = vsel %vm166, %v33, 0
  %v198 = vsel %vm166, %v35, 0
  %v201 = vsel %vm166, %v37, 0
  %v204 = vsel %vm166, %v39, 0
  %v207 = vsel %vm166, %v41, 0
  %v210 = vsel %vm166, %v43, 0
  %v213 = vsel %vm166, %v45, 0
  %v216 = vsel %vm166, %v47, 0
  %v219 = vsel %vm166, %v49, 0
  %v222 = vsel %vm166, %v51, 0
  %v225 = vsel %vm166, %v53, 0
  %v228 = vsel %vm166, %v55, 0
  %v231 = vsel %vm166, %v57, 0
  %v234 = vsel %vm166, %v59, 0
  %v237 = vsel %vm166, %v61, 0
  %v240 = vsel %vm166, %v63, 0
  %v243 = vsel %vm166, %v65, 0
  %v246 = vsel %vm166, %v67, 0
  %v249 = vsel %vm166, %v69, 0
  %v252 = vsel %vm166, %v71, 0
  %v255 = vsel %vm166, %v73, 0
  %v258 = vsel %vm166, %v75, 0
  %v261 = vsel %vm166, %v77, 0
  %v264 = vsel %vm166, %v79, 0
  %v267 = vsel %vm166, %v81, 0
  %v270 = vsel %vm166, %v83, 0
  %v273 = vsel %vm166, %v85, 0
  %v276 = vsel %vm166, %v87, 0
  %v279 = vsel %vm166, %v89, 0
  %v282 = vsel %vm166, %v91, 0
  %v285 = vsel %vm166, %v93, 0
  %v288 = vsel %vm166, %v95, 0
  %v291 = vsel %vm166, %v97, 0
  %v294 = vsel %vm166, %v99, 0
  %v297 = vsel %vm166, %v101, 0
  %v300 = vsel %vm166, %v103, 0
  %v303 = vsel %vm166, %v105, 0
  %v306 = vsel %vm166, %v107, 0
  %v309 = vsel %vm166, %v109, 0
  %v312 = vsel %vm166, %v111, 0
  %v315 = vsel %vm166, %v113, 0
  %v318 = vsel %vm166, %v115, 0
  %v321 = vsel %vm166, %v117, 0
  %v324 = vsel %vm166, %v119, 0
  %v327 = vsel %vm166, %v121, 0
  %v330 = vsel %vm166, %v123, 0
  %v333 = vsel %vm166, %v125, 0
  %v336 = vsel %vm166, %v127, 0
  %v339 = vsel %vm166, %v129, 0
  %v342 = vsel %vm166, %v131, 0
  %v345 = vsel %vm166, %v133, 0
  %v348 = vsel %vm166, %v135, 0
  %v351 = vsel %vm166, %v137, 0
  %v354 = vsel %vm166, %v139, 0
  %v357 = vsel %vm166, %v141, 0
  %vm359 = vcmask 1046528
  %v361 = vsel %vm359, %v158, 0
  %363 = vmatprep.subr.mxu0 0.0
  %364 = vmatpush1.msra.mxu0 %v157
  %365 = vmatprep.subr.mxu0 0.0
  %366 = vmatpush1.msra.mxu0 %v156
  %367 = vmatprep.subr.mxu0 0.0
  %368 = vmatpush1.msra.mxu0 %v155
  %369 = vmatprep.subr.mxu0 0.0
  %370 = vmatpush1.msra.mxu0 %v154
  %371 = vmatprep.subr.mxu0 0.0
  %372 = vmatpush1.msra.mxu0 %v153
  %373 = vmatprep.subr.mxu0 0.0
  %374 = vmatpush1.msra.mxu0 %v152
  %375 = vmatprep.subr.mxu0 0.0
  %376 = vmatpush1.msra.mxu0 %v151
  %377 = vmatprep.subr.mxu0 0.0
  %378 = vmatpush1.msra.mxu0 %v150
  %379 = vmatprep.subr.mxu0 0.0
  %380 = vmatpush1.msra.mxu0 %v149
  %381 = vmatprep.subr.mxu0 0.0
  %382 = vmatpush1.msra.mxu0 %v148
  %383 = vmatprep.subr.mxu0 0.0
  %384 = vmatpush1.msra.mxu0 %v147
  %385 = vmatprep.subr.mxu0 0.0
  %386 = vmatpush1.msra.mxu0 %v146
  %387 = vmatprep.subr.mxu0 0.0
  %388 = vmatpush1.msra.mxu0 %v145
  %389 = vmatprep.subr.mxu0 0.0
  %390 = vmatpush1.msra.mxu0 %v144
  %391 = vmatprep.subr.mxu0 0.0
  %392 = vmatpush1.msra.mxu0 %v143
  %393 = vmatprep.subr.mxu0 0.0
  %394 = vmatpush1.msra.mxu0 %v142
  %395 = vmatprep.subr.mxu0 0.0
  %396 = vmatpush2.msra.mxu0 0.0
  %397 = vmatprep.subr.mxu0 0.0
  %398 = vmatpush2.msra.mxu0 0.0
  %399 = vmatprep.subr.mxu0 0.0
  %400 = vmatpush2.msra.mxu0 0.0
  %401 = vmatprep.subr.mxu0 0.0
  %402 = vmatpush2.msra.mxu0 0.0
  %403 = vmatprep.subr.mxu0 0.0
  %404 = vmatpush2.msra.mxu0 0.0
  %405 = vmatprep.subr.mxu0 0.0
  %406 = vmatpush2.msra.mxu0 0.0
  %407 = vmatprep.subr.mxu0 0.0
  %408 = vmatpush2.msra.mxu0 0.0
  %409 = vmatprep.subr.mxu0 0.0
  %410 = vmatpush2.msra.mxu0 0.0
  %411 = vmatprep.subr.mxu0 0.0
  %412 = vmatpush2.msra.mxu0 0.0
  %413 = vmatprep.subr.mxu0 0.0
  %414 = vmatpush2.msra.mxu0 0.0
  %415 = vmatprep.subr.mxu0 0.0
  %416 = vmatpush2.msra.mxu0 0.0
  %417 = vmatprep.subr.mxu0 0.0
  %418 = vmatpush2.msra.mxu0 0.0
  %419 = vmatprep.subr.mxu0 0.0
  %420 = vmatpush2.msra.mxu0 0.0
  %421 = vmatprep.subr.mxu0 0.0
  %422 = vmatpush2.msra.mxu0 0.0
  %423 = vmatprep.subr.mxu0 0.0
  %424 = vmatpush2.msra.mxu0 0.0
  %425 = vmatprep.subr.mxu0 0.0
  %426 = vmatpush2.msra.mxu0 %v361
  %427 = vmatprep.mubr.f32.mxu0 %v168
  %428 = vmatmul.mubr.f32.gmra.mxu0 %v14
  %v429 = vpop.f32.mrf.mxu0
  %v430 = vadd.f32 %v164, %v429
  %v431 = vpop.f32.mrf.mxu0
  %432 = vmatprep.mubr.f32.mxu0 %v171
  %433 = vmatmul.mubr.f32.gmra.mxu0 %v16
  %v434 = vpop.f32.mrf.mxu0
  %v435 = vadd.f32 %v164, %v434
  %v436 = vpop.f32.mrf.mxu0
  %437 = vmatprep.mubr.f32.mxu0 %v174
  %438 = vmatmul.mubr.f32.gmra.mxu0 %v18
  %v439 = vpop.f32.mrf.mxu0
  %v440 = vadd.f32 %v164, %v439
  %v441 = vpop.f32.mrf.mxu0
  %442 = vmatprep.mubr.f32.mxu0 %v177
  %443 = vmatmul.mubr.f32.gmra.mxu0 %v20
  %v444 = vpop.f32.mrf.mxu0
  %v445 = vadd.f32 %v164, %v444
  %v446 = vpop.f32.mrf.mxu0
  %447 = vmatprep.mubr.f32.mxu0 %v180
  %448 = vmatmul.mubr.f32.gmra.mxu0 %v22
  %v449 = vpop.f32.mrf.mxu0
  %v450 = vadd.f32 %v164, %v449
  %v451 = vpop.f32.mrf.mxu0
  %452 = vmatprep.mubr.f32.mxu0 %v183
  %453 = vmatmul.mubr.f32.gmra.mxu0 %v24
  %v454 = vpop.f32.mrf.mxu0
  %v455 = vadd.f32 %v164, %v454
  %v456 = vpop.f32.mrf.mxu0
  %457 = vmatprep.mubr.f32.mxu0 %v186
  %458 = vmatmul.mubr.f32.gmra.mxu0 %v26
  %v459 = vpop.f32.mrf.mxu0
  %v460 = vadd.f32 %v164, %v459
  %v461 = vpop.f32.mrf.mxu0
  %462 = vmatprep.mubr.f32.mxu0 %v189
  %463 = vmatmul.mubr.f32.gmra.mxu0 %v28
  %v464 = vpop.f32.mrf.mxu0
  %v465 = vadd.f32 %v164, %v464
  %v466 = vpop.f32.mrf.mxu0
  %467 = vmatprep.mubr.f32.mxu0 %v192
  %468 = vmatmul.mubr.f32.gmra.mxu0 %v30
  %v469 = vpop.f32.mrf.mxu0
  %v470 = vadd.f32 %v164, %v469
  %v471 = vpop.f32.mrf.mxu0
  %472 = vmatprep.mubr.f32.mxu0 %v195
  %473 = vmatmul.mubr.f32.gmra.mxu0 %v32
  %v474 = vpop.f32.mrf.mxu0
  %v475 = vadd.f32 %v164, %v474
  %v476 = vpop.f32.mrf.mxu0
  %477 = vmatprep.mubr.f32.mxu0 %v198
  %478 = vmatmul.mubr.f32.gmra.mxu0 %v34
  %v479 = vpop.f32.mrf.mxu0
  %v480 = vadd.f32 %v164, %v479
  %v481 = vpop.f32.mrf.mxu0
  %482 = vmatprep.mubr.f32.mxu0 %v201
  %483 = vmatmul.mubr.f32.gmra.mxu0 %v36
  %v484 = vpop.f32.mrf.mxu0
  %v485 = vadd.f32 %v164, %v484
  %v486 = vpop.f32.mrf.mxu0
  %487 = vmatprep.mubr.f32.mxu0 %v204
  %488 = vmatmul.mubr.f32.gmra.mxu0 %v38
  %v489 = vpop.f32.mrf.mxu0
  %v490 = vadd.f32 %v164, %v489
  %v491 = vpop.f32.mrf.mxu0
  %492 = vmatprep.mubr.f32.mxu0 %v207
  %493 = vmatmul.mubr.f32.gmra.mxu0 %v40
  %v494 = vpop.f32.mrf.mxu0
  %v495 = vadd.f32 %v164, %v494
  %v496 = vpop.f32.mrf.mxu0
  %497 = vmatprep.mubr.f32.mxu0 %v210
  %498 = vmatmul.mubr.f32.gmra.mxu0 %v42
  %v499 = vpop.f32.mrf.mxu0
  %v500 = vadd.f32 %v164, %v499
  %v501 = vpop.f32.mrf.mxu0
  %502 = vmatprep.mubr.f32.mxu0 %v213
  %503 = vmatmul.mubr.f32.gmra.mxu0 %v44
  %v504 = vpop.f32.mrf.mxu0
  %v505 = vadd.f32 %v164, %v504
  %v506 = vpop.f32.mrf.mxu0
  %507 = vmatprep.mubr.f32.mxu0 %v216
  %508 = vmatmul.mubr.f32.gmra.mxu0 %v46
  %v509 = vpop.f32.mrf.mxu0
  %v510 = vadd.f32 %v164, %v509
  %v511 = vpop.f32.mrf.mxu0
  %512 = vmatprep.mubr.f32.mxu0 %v219
  %513 = vmatmul.mubr.f32.gmra.mxu0 %v48
  %v514 = vpop.f32.mrf.mxu0
  %v515 = vadd.f32 %v164, %v514
  %v516 = vpop.f32.mrf.mxu0
  %517 = vmatprep.mubr.f32.mxu0 %v222
  %518 = vmatmul.mubr.f32.gmra.mxu0 %v50
  %v519 = vpop.f32.mrf.mxu0
  %v520 = vadd.f32 %v164, %v519
  %v521 = vpop.f32.mrf.mxu0
  %522 = vmatprep.mubr.f32.mxu0 %v225
  %523 = vmatmul.mubr.f32.gmra.mxu0 %v52
  %v524 = vpop.f32.mrf.mxu0
  %v525 = vadd.f32 %v164, %v524
  %v526 = vpop.f32.mrf.mxu0
  %527 = vmatprep.mubr.f32.mxu0 %v228
  %528 = vmatmul.mubr.f32.gmra.mxu0 %v54
  %v529 = vpop.f32.mrf.mxu0
  %v530 = vadd.f32 %v164, %v529
  %v531 = vpop.f32.mrf.mxu0
  %532 = vmatprep.mubr.f32.mxu0 %v231
  %533 = vmatmul.mubr.f32.gmra.mxu0 %v56
  %v534 = vpop.f32.mrf.mxu0
  %v535 = vadd.f32 %v164, %v534
  %v536 = vpop.f32.mrf.mxu0
  %537 = vmatprep.mubr.f32.mxu0 %v234
  %538 = vmatmul.mubr.f32.gmra.mxu0 %v58
  %v539 = vpop.f32.mrf.mxu0
  %v540 = vadd.f32 %v164, %v539
  %v541 = vpop.f32.mrf.mxu0
  %542 = vmatprep.mubr.f32.mxu0 %v237
  %543 = vmatmul.mubr.f32.gmra.mxu0 %v60
  %v544 = vpop.f32.mrf.mxu0
  %v545 = vadd.f32 %v164, %v544
  %v546 = vpop.f32.mrf.mxu0
  %547 = vmatprep.mubr.f32.mxu0 %v240
  %548 = vmatmul.mubr.f32.gmra.mxu0 %v62
  %v549 = vpop.f32.mrf.mxu0
  %v550 = vadd.f32 %v164, %v549
  %v551 = vpop.f32.mrf.mxu0
  %552 = vmatprep.mubr.f32.mxu0 %v243
  %553 = vmatmul.mubr.f32.gmra.mxu0 %v64
  %v554 = vpop.f32.mrf.mxu0
  %v555 = vadd.f32 %v164, %v554
  %v556 = vpop.f32.mrf.mxu0
  %557 = vmatprep.mubr.f32.mxu0 %v246
  %558 = vmatmul.mubr.f32.gmra.mxu0 %v66
  %v559 = vpop.f32.mrf.mxu0
  %v560 = vadd.f32 %v164, %v559
  %v561 = vpop.f32.mrf.mxu0
  %562 = vmatprep.mubr.f32.mxu0 %v249
  %563 = vmatmul.mubr.f32.gmra.mxu0 %v68
  %v564 = vpop.f32.mrf.mxu0
  %v565 = vadd.f32 %v164, %v564
  %v566 = vpop.f32.mrf.mxu0
  %567 = vmatprep.mubr.f32.mxu0 %v252
  %568 = vmatmul.mubr.f32.gmra.mxu0 %v70
  %v569 = vpop.f32.mrf.mxu0
  %v570 = vadd.f32 %v164, %v569
  %v571 = vpop.f32.mrf.mxu0
  %572 = vmatprep.mubr.f32.mxu0 %v255
  %573 = vmatmul.mubr.f32.gmra.mxu0 %v72
  %v574 = vpop.f32.mrf.mxu0
  %v575 = vadd.f32 %v164, %v574
  %v576 = vpop.f32.mrf.mxu0
  %577 = vmatprep.mubr.f32.mxu0 %v258
  %578 = vmatmul.mubr.f32.gmra.mxu0 %v74
  %v579 = vpop.f32.mrf.mxu0
  %v580 = vadd.f32 %v164, %v579
  %v581 = vpop.f32.mrf.mxu0
  %582 = vmatprep.mubr.f32.mxu0 %v261
  %583 = vmatmul.mubr.f32.gmra.mxu0 %v76
  %v584 = vpop.f32.mrf.mxu0
  %v585 = vadd.f32 %v164, %v584
  %v586 = vpop.f32.mrf.mxu0
  %587 = vmatprep.mubr.f32.mxu0 %v264
  %588 = vmatmul.mubr.f32.gmra.mxu0 %v78
  %v589 = vpop.f32.mrf.mxu0
  %v590 = vadd.f32 %v164, %v589
  %v591 = vpop.f32.mrf.mxu0
  %592 = vmatprep.mubr.f32.mxu0 %v267
  %593 = vmatmul.mubr.f32.gmra.mxu0 %v80
  %v594 = vpop.f32.mrf.mxu0
  %v595 = vadd.f32 %v164, %v594
  %v596 = vpop.f32.mrf.mxu0
  %597 = vmatprep.mubr.f32.mxu0 %v270
  %598 = vmatmul.mubr.f32.gmra.mxu0 %v82
  %v599 = vpop.f32.mrf.mxu0
  %v600 = vadd.f32 %v164, %v599
  %v601 = vpop.f32.mrf.mxu0
  %602 = vmatprep.mubr.f32.mxu0 %v273
  %603 = vmatmul.mubr.f32.gmra.mxu0 %v84
  %v604 = vpop.f32.mrf.mxu0
  %v605 = vadd.f32 %v164, %v604
  %v606 = vpop.f32.mrf.mxu0
  %607 = vmatprep.mubr.f32.mxu0 %v276
  %608 = vmatmul.mubr.f32.gmra.mxu0 %v86
  %v609 = vpop.f32.mrf.mxu0
  %v610 = vadd.f32 %v164, %v609
  %v611 = vpop.f32.mrf.mxu0
  %612 = vmatprep.mubr.f32.mxu0 %v279
  %613 = vmatmul.mubr.f32.gmra.mxu0 %v88
  %v614 = vpop.f32.mrf.mxu0
  %v615 = vadd.f32 %v164, %v614
  %v616 = vpop.f32.mrf.mxu0
  %617 = vmatprep.mubr.f32.mxu0 %v282
  %618 = vmatmul.mubr.f32.gmra.mxu0 %v90
  %v619 = vpop.f32.mrf.mxu0
  %v620 = vadd.f32 %v164, %v619
  %v621 = vpop.f32.mrf.mxu0
  %622 = vmatprep.mubr.f32.mxu0 %v285
  %623 = vmatmul.mubr.f32.gmra.mxu0 %v92
  %v624 = vpop.f32.mrf.mxu0
  %v625 = vadd.f32 %v164, %v624
  %v626 = vpop.f32.mrf.mxu0
  %627 = vmatprep.mubr.f32.mxu0 %v288
  %628 = vmatmul.mubr.f32.gmra.mxu0 %v94
  %v629 = vpop.f32.mrf.mxu0
  %v630 = vadd.f32 %v164, %v629
  %v631 = vpop.f32.mrf.mxu0
  %632 = vmatprep.mubr.f32.mxu0 %v291
  %633 = vmatmul.mubr.f32.gmra.mxu0 %v96
  %v634 = vpop.f32.mrf.mxu0
  %v635 = vadd.f32 %v164, %v634
  %v636 = vpop.f32.mrf.mxu0
  %637 = vmatprep.mubr.f32.mxu0 %v294
  %638 = vmatmul.mubr.f32.gmra.mxu0 %v98
  %v639 = vpop.f32.mrf.mxu0
  %v640 = vadd.f32 %v164, %v639
  %v641 = vpop.f32.mrf.mxu0
  %642 = vmatprep.mubr.f32.mxu0 %v297
  %643 = vmatmul.mubr.f32.gmra.mxu0 %v100
  %v644 = vpop.f32.mrf.mxu0
  %v645 = vadd.f32 %v164, %v644
  %v646 = vpop.f32.mrf.mxu0
  %647 = vmatprep.mubr.f32.mxu0 %v300
  %648 = vmatmul.mubr.f32.gmra.mxu0 %v102
  %v649 = vpop.f32.mrf.mxu0
  %v650 = vadd.f32 %v164, %v649
  %v651 = vpop.f32.mrf.mxu0
  %652 = vmatprep.mubr.f32.mxu0 %v303
  %653 = vmatmul.mubr.f32.gmra.mxu0 %v104
  %v654 = vpop.f32.mrf.mxu0
  %v655 = vadd.f32 %v164, %v654
  %v656 = vpop.f32.mrf.mxu0
  %657 = vmatprep.mubr.f32.mxu0 %v306
  %658 = vmatmul.mubr.f32.gmra.mxu0 %v106
  %v659 = vpop.f32.mrf.mxu0
  %v660 = vadd.f32 %v164, %v659
  %v661 = vpop.f32.mrf.mxu0
  %662 = vmatprep.mubr.f32.mxu0 %v309
  %663 = vmatmul.mubr.f32.gmra.mxu0 %v108
  %v664 = vpop.f32.mrf.mxu0
  %v665 = vadd.f32 %v164, %v664
  %v666 = vpop.f32.mrf.mxu0
  %667 = vmatprep.mubr.f32.mxu0 %v312
  %668 = vmatmul.mubr.f32.gmra.mxu0 %v110
  %v669 = vpop.f32.mrf.mxu0
  %v670 = vadd.f32 %v164, %v669
  %v671 = vpop.f32.mrf.mxu0
  %672 = vmatprep.mubr.f32.mxu0 %v315
  %673 = vmatmul.mubr.f32.gmra.mxu0 %v112
  %v674 = vpop.f32.mrf.mxu0
  %v675 = vadd.f32 %v164, %v674
  %v676 = vpop.f32.mrf.mxu0
  %677 = vmatprep.mubr.f32.mxu0 %v318
  %678 = vmatmul.mubr.f32.gmra.mxu0 %v114
  %v679 = vpop.f32.mrf.mxu0
  %v680 = vadd.f32 %v164, %v679
  %v681 = vpop.f32.mrf.mxu0
  %682 = vmatprep.mubr.f32.mxu0 %v321
  %683 = vmatmul.mubr.f32.gmra.mxu0 %v116
  %v684 = vpop.f32.mrf.mxu0
  %v685 = vadd.f32 %v164, %v684
  %v686 = vpop.f32.mrf.mxu0
  %687 = vmatprep.mubr.f32.mxu0 %v324
  %688 = vmatmul.mubr.f32.gmra.mxu0 %v118
  %v689 = vpop.f32.mrf.mxu0
  %v690 = vadd.f32 %v164, %v689
  %v691 = vpop.f32.mrf.mxu0
  %692 = vmatprep.mubr.f32.mxu0 %v327
  %693 = vmatmul.mubr.f32.gmra.mxu0 %v120
  %v694 = vpop.f32.mrf.mxu0
  %v695 = vadd.f32 %v164, %v694
  %v696 = vpop.f32.mrf.mxu0
  %697 = vmatprep.mubr.f32.mxu0 %v330
  %698 = vmatmul.mubr.f32.gmra.mxu0 %v122
  %v699 = vpop.f32.mrf.mxu0
  %v700 = vadd.f32 %v164, %v699
  %v701 = vpop.f32.mrf.mxu0
  %702 = vmatprep.mubr.f32.mxu0 %v333
  %703 = vmatmul.mubr.f32.gmra.mxu0 %v124
  %v704 = vpop.f32.mrf.mxu0
  %v705 = vadd.f32 %v164, %v704
  %v706 = vpop.f32.mrf.mxu0
  %707 = vmatprep.mubr.f32.mxu0 %v336
  %708 = vmatmul.mubr.f32.gmra.mxu0 %v126
  %v709 = vpop.f32.mrf.mxu0
  %v710 = vadd.f32 %v164, %v709
  %v711 = vpop.f32.mrf.mxu0
  %712 = vmatprep.mubr.f32.mxu0 %v339
  %713 = vmatmul.mubr.f32.gmra.mxu0 %v128
  %v714 = vpop.f32.mrf.mxu0
  %v715 = vadd.f32 %v164, %v714
  %v716 = vpop.f32.mrf.mxu0
  %717 = vmatprep.mubr.f32.mxu0 %v342
  %718 = vmatmul.mubr.f32.gmra.mxu0 %v130
  %v719 = vpop.f32.mrf.mxu0
  %v720 = vadd.f32 %v164, %v719
  %v721 = vpop.f32.mrf.mxu0
  %722 = vmatprep.mubr.f32.mxu0 %v345
  %723 = vmatmul.mubr.f32.gmra.mxu0 %v132
  %v724 = vpop.f32.mrf.mxu0
  %v725 = vadd.f32 %v164, %v724
  %v726 = vpop.f32.mrf.mxu0
  %727 = vmatprep.mubr.f32.mxu0 %v348
  %728 = vmatmul.mubr.f32.gmra.mxu0 %v134
  %v729 = vpop.f32.mrf.mxu0
  %v730 = vadd.f32 %v164, %v729
  %v731 = vpop.f32.mrf.mxu0
  %732 = vmatprep.mubr.f32.mxu0 %v351
  %733 = vmatmul.mubr.f32.gmra.mxu0 %v136
  %v734 = vpop.f32.mrf.mxu0
  %v735 = vadd.f32 %v164, %v734
  %v736 = vpop.f32.mrf.mxu0
  %737 = vmatprep.mubr.f32.mxu0 %v354
  %738 = vmatmul.mubr.f32.gmra.mxu0 %v138
  %v739 = vpop.f32.mrf.mxu0
  %v740 = vadd.f32 %v164, %v739
  %v741 = vpop.f32.mrf.mxu0
  %742 = vmatprep.mubr.f32.mxu0 %v357
  %743 = vmatmul.mubr.f32.gmra.mxu0 %v140
  %v744 = vpop.f32.mrf.mxu0
  %v745 = vadd.f32 %v164, %v744
  %v746 = vpop.f32.mrf.mxu0
  %747 = vdwg.mxu0
  %v748 = vxor.u32 %v430, 2147483648
  %v749 = vxor.u32 %v435, 2147483648
  %v750 = vxor.u32 %v440, 2147483648
  %v751 = vxor.u32 %v445, 2147483648
  %v752 = vxor.u32 %v450, 2147483648
  %v753 = vxor.u32 %v455, 2147483648
  %v754 = vxor.u32 %v460, 2147483648
  %v755 = vxor.u32 %v465, 2147483648
  %v756 = vxor.u32 %v470, 2147483648
  %v757 = vxor.u32 %v475, 2147483648
  %v758 = vxor.u32 %v480, 2147483648
  %v759 = vxor.u32 %v485, 2147483648
  %v760 = vxor.u32 %v490, 2147483648
  %v761 = vxor.u32 %v495, 2147483648
  %v762 = vxor.u32 %v500, 2147483648
  %v763 = vxor.u32 %v505, 2147483648
  %v764 = vxor.u32 %v510, 2147483648
  %v765 = vxor.u32 %v515, 2147483648
  %v766 = vxor.u32 %v520, 2147483648
  %v767 = vxor.u32 %v525, 2147483648
  %v768 = vxor.u32 %v530, 2147483648
  %v769 = vxor.u32 %v535, 2147483648
  %v770 = vxor.u32 %v540, 2147483648
  %v771 = vxor.u32 %v545, 2147483648
  %v772 = vxor.u32 %v550, 2147483648
  %v773 = vxor.u32 %v555, 2147483648
  %v774 = vxor.u32 %v560, 2147483648
  %v775 = vxor.u32 %v565, 2147483648
  %v776 = vxor.u32 %v570, 2147483648
  %v777 = vxor.u32 %v575, 2147483648
  %v778 = vxor.u32 %v580, 2147483648
  %v779 = vxor.u32 %v585, 2147483648
  %v780 = vxor.u32 %v590, 2147483648
  %v781 = vxor.u32 %v595, 2147483648
  %v782 = vxor.u32 %v600, 2147483648
  %v783 = vxor.u32 %v605, 2147483648
  %v784 = vxor.u32 %v610, 2147483648
  %v785 = vxor.u32 %v615, 2147483648
  %v786 = vxor.u32 %v620, 2147483648
  %v787 = vxor.u32 %v625, 2147483648
  %v788 = vxor.u32 %v630, 2147483648
  %v789 = vxor.u32 %v635, 2147483648
  %v790 = vxor.u32 %v640, 2147483648
  %v791 = vxor.u32 %v645, 2147483648
  %v792 = vxor.u32 %v650, 2147483648
  %v793 = vxor.u32 %v655, 2147483648
  %v794 = vxor.u32 %v660, 2147483648
  %v795 = vxor.u32 %v665, 2147483648
  %v796 = vxor.u32 %v670, 2147483648
  %v797 = vxor.u32 %v675, 2147483648
  %v798 = vxor.u32 %v680, 2147483648
  %v799 = vxor.u32 %v685, 2147483648
  %v800 = vxor.u32 %v690, 2147483648
  %v801 = vxor.u32 %v695, 2147483648
  %v802 = vxor.u32 %v700, 2147483648
  %v803 = vxor.u32 %v705, 2147483648
  %v804 = vxor.u32 %v710, 2147483648
  %v805 = vxor.u32 %v715, 2147483648
  %v806 = vxor.u32 %v720, 2147483648
  %v807 = vxor.u32 %v725, 2147483648
  %v808 = vxor.u32 %v730, 2147483648
  %v809 = vxor.u32 %v735, 2147483648
  %v810 = vxor.u32 %v740, 2147483648
  %v811 = vxor.u32 %v745, 2147483648
  %v812 = vmul.f32 %v748, 1.442695
  %v813 = vpow.pop %v812
  %v814 = vmul.f32 %v749, 1.442695
  %v815 = vpow.pop %v814
  %v816 = vmul.f32 %v750, 1.442695
  %v817 = vpow.pop %v816
  %v818 = vmul.f32 %v751, 1.442695
  %v819 = vpow.pop %v818
  %v820 = vmul.f32 %v752, 1.442695
  %v821 = vpow.pop %v820
  %v822 = vmul.f32 %v753, 1.442695
  %v823 = vpow.pop %v822
  %v824 = vmul.f32 %v754, 1.442695
  %v825 = vpow.pop %v824
  %v826 = vmul.f32 %v755, 1.442695
  %v827 = vpow.pop %v826
  %v828 = vmul.f32 %v756, 1.442695
  %v829 = vpow.pop %v828
  %v830 = vmul.f32 %v757, 1.442695
  %v831 = vpow.pop %v830
  %v832 = vmul.f32 %v758, 1.442695
  %v833 = vpow.pop %v832
  %v834 = vmul.f32 %v759, 1.442695
  %v835 = vpow.pop %v834
  %v836 = vmul.f32 %v760, 1.442695
  %v837 = vpow.pop %v836
  %v838 = vmul.f32 %v761, 1.442695
  %v839 = vpow.pop %v838
  %v840 = vmul.f32 %v762, 1.442695
  %v841 = vpow.pop %v840
  %v842 = vmul.f32 %v763, 1.442695
  %v843 = vpow.pop %v842
  %v844 = vmul.f32 %v764, 1.442695
  %v845 = vpow.pop %v844
  %v846 = vmul.f32 %v765, 1.442695
  %v847 = vpow.pop %v846
  %v848 = vmul.f32 %v766, 1.442695
  %v849 = vpow.pop %v848
  %v850 = vmul.f32 %v767, 1.442695
  %v851 = vpow.pop %v850
  %v852 = vmul.f32 %v768, 1.442695
  %v853 = vpow.pop %v852
  %v854 = vmul.f32 %v769, 1.442695
  %v855 = vpow.pop %v854
  %v856 = vmul.f32 %v770, 1.442695
  %v857 = vpow.pop %v856
  %v858 = vmul.f32 %v771, 1.442695
  %v859 = vpow.pop %v858
  %v860 = vmul.f32 %v772, 1.442695
  %v861 = vpow.pop %v860
  %v862 = vmul.f32 %v773, 1.442695
  %v863 = vpow.pop %v862
  %v864 = vmul.f32 %v774, 1.442695
  %v865 = vpow.pop %v864
  %v866 = vmul.f32 %v775, 1.442695
  %v867 = vpow.pop %v866
  %v868 = vmul.f32 %v776, 1.442695
  %v869 = vpow.pop %v868
  %v870 = vmul.f32 %v777, 1.442695
  %v871 = vpow.pop %v870
  %v872 = vmul.f32 %v778, 1.442695
  %v873 = vpow.pop %v872
  %v874 = vmul.f32 %v779, 1.442695
  %v875 = vpow.pop %v874
  %v876 = vmul.f32 %v780, 1.442695
  %v877 = vpow.pop %v876
  %v878 = vmul.f32 %v781, 1.442695
  %v879 = vpow.pop %v878
  %v880 = vmul.f32 %v782, 1.442695
  %v881 = vpow.pop %v880
  %v882 = vmul.f32 %v783, 1.442695
  %v883 = vpow.pop %v882
  %v884 = vmul.f32 %v784, 1.442695
  %v885 = vpow.pop %v884
  %v886 = vmul.f32 %v785, 1.442695
  %v887 = vpow.pop %v886
  %v888 = vmul.f32 %v786, 1.442695
  %v889 = vpow.pop %v888
  %v890 = vmul.f32 %v787, 1.442695
  %v891 = vpow.pop %v890
  %v892 = vmul.f32 %v788, 1.442695
  %v893 = vpow.pop %v892
  %v894 = vmul.f32 %v789, 1.442695
  %v895 = vpow.pop %v894
  %v896 = vmul.f32 %v790, 1.442695
  %v897 = vpow.pop %v896
  %v898 = vmul.f32 %v791, 1.442695
  %v899 = vpow.pop %v898
  %v900 = vmul.f32 %v792, 1.442695
  %v901 = vpow.pop %v900
  %v902 = vmul.f32 %v793, 1.442695
  %v903 = vpow.pop %v902
  %v904 = vmul.f32 %v794, 1.442695
  %v905 = vpow.pop %v904
  %v906 = vmul.f32 %v795, 1.442695
  %v907 = vpow.pop %v906
  %v908 = vmul.f32 %v796, 1.442695
  %v909 = vpow.pop %v908
  %v910 = vmul.f32 %v797, 1.442695
  %v911 = vpow.pop %v910
  %v912 = vmul.f32 %v798, 1.442695
  %v913 = vpow.pop %v912
  %v914 = vmul.f32 %v799, 1.442695
  %v915 = vpow.pop %v914
  %v916 = vmul.f32 %v800, 1.442695
  %v917 = vpow.pop %v916
  %v918 = vmul.f32 %v801, 1.442695
  %v919 = vpow.pop %v918
  %v920 = vmul.f32 %v802, 1.442695
  %v921 = vpow.pop %v920
  %v922 = vmul.f32 %v803, 1.442695
  %v923 = vpow.pop %v922
  %v924 = vmul.f32 %v804, 1.442695
  %v925 = vpow.pop %v924
  %v926 = vmul.f32 %v805, 1.442695
  %v927 = vpow.pop %v926
  %v928 = vmul.f32 %v806, 1.442695
  %v929 = vpow.pop %v928
  %v930 = vmul.f32 %v807, 1.442695
  %v931 = vpow.pop %v930
  %v932 = vmul.f32 %v808, 1.442695
  %v933 = vpow.pop %v932
  %v934 = vmul.f32 %v809, 1.442695
  %v935 = vpow.pop %v934
  %v936 = vmul.f32 %v810, 1.442695
  %v937 = vpow.pop %v936
  %v938 = vmul.f32 %v811, 1.442695
  %v939 = vpow.pop %v938
  %v940 = vadd.f32 %v813, 1.0
  %v941 = vadd.f32 %v815, 1.0
  %v942 = vadd.f32 %v817, 1.0
  %v943 = vadd.f32 %v819, 1.0
  %v944 = vadd.f32 %v821, 1.0
  %v945 = vadd.f32 %v823, 1.0
  %v946 = vadd.f32 %v825, 1.0
  %v947 = vadd.f32 %v827, 1.0
  %v948 = vadd.f32 %v829, 1.0
  %v949 = vadd.f32 %v831, 1.0
  %v950 = vadd.f32 %v833, 1.0
  %v951 = vadd.f32 %v835, 1.0
  %v952 = vadd.f32 %v837, 1.0
  %v953 = vadd.f32 %v839, 1.0
  %v954 = vadd.f32 %v841, 1.0
  %v955 = vadd.f32 %v843, 1.0
  %v956 = vadd.f32 %v845, 1.0
  %v957 = vadd.f32 %v847, 1.0
  %v958 = vadd.f32 %v849, 1.0
  %v959 = vadd.f32 %v851, 1.0
  %v960 = vadd.f32 %v853, 1.0
  %v961 = vadd.f32 %v855, 1.0
  %v962 = vadd.f32 %v857, 1.0
  %v963 = vadd.f32 %v859, 1.0
  %v964 = vadd.f32 %v861, 1.0
  %v965 = vadd.f32 %v863, 1.0
  %v966 = vadd.f32 %v865, 1.0
  %v967 = vadd.f32 %v867, 1.0
  %v968 = vadd.f32 %v869, 1.0
  %v969 = vadd.f32 %v871, 1.0
  %v970 = vadd.f32 %v873, 1.0
  %v971 = vadd.f32 %v875, 1.0
  %v972 = vadd.f32 %v877, 1.0
  %v973 = vadd.f32 %v879, 1.0
  %v974 = vadd.f32 %v881, 1.0
  %v975 = vadd.f32 %v883, 1.0
  %v976 = vadd.f32 %v885, 1.0
  %v977 = vadd.f32 %v887, 1.0
  %v978 = vadd.f32 %v889, 1.0
  %v979 = vadd.f32 %v891, 1.0
  %v980 = vadd.f32 %v893, 1.0
  %v981 = vadd.f32 %v895, 1.0
  %v982 = vadd.f32 %v897, 1.0
  %v983 = vadd.f32 %v899, 1.0
  %v984 = vadd.f32 %v901, 1.0
  %v985 = vadd.f32 %v903, 1.0
  %v986 = vadd.f32 %v905, 1.0
  %v987 = vadd.f32 %v907, 1.0
  %v988 = vadd.f32 %v909, 1.0
  %v989 = vadd.f32 %v911, 1.0
  %v990 = vadd.f32 %v913, 1.0
  %v991 = vadd.f32 %v915, 1.0
  %v992 = vadd.f32 %v917, 1.0
  %v993 = vadd.f32 %v919, 1.0
  %v994 = vadd.f32 %v921, 1.0
  %v995 = vadd.f32 %v923, 1.0
  %v996 = vadd.f32 %v925, 1.0
  %v997 = vadd.f32 %v927, 1.0
  %v998 = vadd.f32 %v929, 1.0
  %v999 = vadd.f32 %v931, 1.0
  %v1000 = vadd.f32 %v933, 1.0
  %v1001 = vadd.f32 %v935, 1.0
  %v1002 = vadd.f32 %v937, 1.0
  %v1003 = vadd.f32 %v939, 1.0
  %v1004 = vrcp.pop %v940
  %v1005 = vmul.f32 1.0, %v1004
  %v1006 = vrcp.pop %v941
  %v1007 = vmul.f32 1.0, %v1006
  %v1008 = vrcp.pop %v942
  %v1009 = vmul.f32 1.0, %v1008
  %v1010 = vrcp.pop %v943
  %v1011 = vmul.f32 1.0, %v1010
  %v1012 = vrcp.pop %v944
  %v1013 = vmul.f32 1.0, %v1012
  %v1014 = vrcp.pop %v945
  %v1015 = vmul.f32 1.0, %v1014
  %v1016 = vrcp.pop %v946
  %v1017 = vmul.f32 1.0, %v1016
  %v1018 = vrcp.pop %v947
  %v1019 = vmul.f32 1.0, %v1018
  %v1020 = vrcp.pop %v948
  %v1021 = vmul.f32 1.0, %v1020
  %v1022 = vrcp.pop %v949
  %v1023 = vmul.f32 1.0, %v1022
  %v1024 = vrcp.pop %v950
  %v1025 = vmul.f32 1.0, %v1024
  %v1026 = vrcp.pop %v951
  %v1027 = vmul.f32 1.0, %v1026
  %v1028 = vrcp.pop %v952
  %v1029 = vmul.f32 1.0, %v1028
  %v1030 = vrcp.pop %v953
  %v1031 = vmul.f32 1.0, %v1030
  %v1032 = vrcp.pop %v954
  %v1033 = vmul.f32 1.0, %v1032
  %v1034 = vrcp.pop %v955
  %v1035 = vmul.f32 1.0, %v1034
  %v1036 = vrcp.pop %v956
  %v1037 = vmul.f32 1.0, %v1036
  %v1038 = vrcp.pop %v957
  %v1039 = vmul.f32 1.0, %v1038
  %v1040 = vrcp.pop %v958
  %v1041 = vmul.f32 1.0, %v1040
  %v1042 = vrcp.pop %v959
  %v1043 = vmul.f32 1.0, %v1042
  %v1044 = vrcp.pop %v960
  %v1045 = vmul.f32 1.0, %v1044
  %v1046 = vrcp.pop %v961
  %v1047 = vmul.f32 1.0, %v1046
  %v1048 = vrcp.pop %v962
  %v1049 = vmul.f32 1.0, %v1048
  %v1050 = vrcp.pop %v963
  %v1051 = vmul.f32 1.0, %v1050
  %v1052 = vrcp.pop %v964
  %v1053 = vmul.f32 1.0, %v1052
  %v1054 = vrcp.pop %v965
  %v1055 = vmul.f32 1.0, %v1054
  %v1056 = vrcp.pop %v966
  %v1057 = vmul.f32 1.0, %v1056
  %v1058 = vrcp.pop %v967
  %v1059 = vmul.f32 1.0, %v1058
  %v1060 = vrcp.pop %v968
  %v1061 = vmul.f32 1.0, %v1060
  %v1062 = vrcp.pop %v969
  %v1063 = vmul.f32 1.0, %v1062
  %v1064 = vrcp.pop %v970
  %v1065 = vmul.f32 1.0, %v1064
  %v1066 = vrcp.pop %v971
  %v1067 = vmul.f32 1.0, %v1066
  %v1068 = vrcp.pop %v972
  %v1069 = vmul.f32 1.0, %v1068
  %v1070 = vrcp.pop %v973
  %v1071 = vmul.f32 1.0, %v1070
  %v1072 = vrcp.pop %v974
  %v1073 = vmul.f32 1.0, %v1072
  %v1074 = vrcp.pop %v975
  %v1075 = vmul.f32 1.0, %v1074
  %v1076 = vrcp.pop %v976
  %v1077 = vmul.f32 1.0, %v1076
  %v1078 = vrcp.pop %v977
  %v1079 = vmul.f32 1.0, %v1078
  %v1080 = vrcp.pop %v978
  %v1081 = vmul.f32 1.0, %v1080
  %v1082 = vrcp.pop %v979
  %v1083 = vmul.f32 1.0, %v1082
  %v1084 = vrcp.pop %v980
  %v1085 = vmul.f32 1.0, %v1084
  %v1086 = vrcp.pop %v981
  %v1087 = vmul.f32 1.0, %v1086
  %v1088 = vrcp.pop %v982
  %v1089 = vmul.f32 1.0, %v1088
  %v1090 = vrcp.pop %v983
  %v1091 = vmul.f32 1.0, %v1090
  %v1092 = vrcp.pop %v984
  %v1093 = vmul.f32 1.0, %v1092
  %v1094 = vrcp.pop %v985
  %v1095 = vmul.f32 1.0, %v1094
  %v1096 = vrcp.pop %v986
  %v1097 = vmul.f32 1.0, %v1096
  %v1098 = vrcp.pop %v987
  %v1099 = vmul.f32 1.0, %v1098
  %v1100 = vrcp.pop %v988
  %v1101 = vmul.f32 1.0, %v1100
  %v1102 = vrcp.pop %v989
  %v1103 = vmul.f32 1.0, %v1102
  %v1104 = vrcp.pop %v990
  %v1105 = vmul.f32 1.0, %v1104
  %v1106 = vrcp.pop %v991
  %v1107 = vmul.f32 1.0, %v1106
  %v1108 = vrcp.pop %v992
  %v1109 = vmul.f32 1.0, %v1108
  %v1110 = vrcp.pop %v993
  %v1111 = vmul.f32 1.0, %v1110
  %v1112 = vrcp.pop %v994
  %v1113 = vmul.f32 1.0, %v1112
  %v1114 = vrcp.pop %v995
  %v1115 = vmul.f32 1.0, %v1114
  %v1116 = vrcp.pop %v996
  %v1117 = vmul.f32 1.0, %v1116
  %v1118 = vrcp.pop %v997
  %v1119 = vmul.f32 1.0, %v1118
  %v1120 = vrcp.pop %v998
  %v1121 = vmul.f32 1.0, %v1120
  %v1122 = vrcp.pop %v999
  %v1123 = vmul.f32 1.0, %v1122
  %v1124 = vrcp.pop %v1000
  %v1125 = vmul.f32 1.0, %v1124
  %v1126 = vrcp.pop %v1001
  %v1127 = vmul.f32 1.0, %v1126
  %v1128 = vrcp.pop %v1002
  %v1129 = vmul.f32 1.0, %v1128
  %v1130 = vrcp.pop %v1003
  %v1131 = vmul.f32 1.0, %v1130
  %vm1132 = vcmask 31744
  %1133 = vst.msk [vmem:[%s3] sm:$0xff] %vm1132, %v1005
  %1134 = vst.msk [vmem:[%s3 + $0x8] sm:$0xff] %vm1132, %v1007
  %1135 = vst.msk [vmem:[%s3 + $0x10] sm:$0xff] %vm1132, %v1009
  %1136 = vst.msk [vmem:[%s3 + $0x18] sm:$0xff] %vm1132, %v1011
  %1137 = vst.msk [vmem:[%s3 + $0x20] sm:$0xff] %vm1132, %v1013
  %1138 = vst.msk [vmem:[%s3 + $0x28] sm:$0xff] %vm1132, %v1015
  %1139 = vst.msk [vmem:[%s3 + $0x30] sm:$0xff] %vm1132, %v1017
  %1140 = vst.msk [vmem:[%s3 + $0x38] sm:$0xff] %vm1132, %v1019
  %1141 = vst.msk [vmem:[%s3 + $0x40] sm:$0xff] %vm1132, %v1021
  %1142 = vst.msk [vmem:[%s3 + $0x48] sm:$0xff] %vm1132, %v1023
  %1143 = vst.msk [vmem:[%s3 + $0x50] sm:$0xff] %vm1132, %v1025
  %1144 = vst.msk [vmem:[%s3 + $0x58] sm:$0xff] %vm1132, %v1027
  %1145 = vst.msk [vmem:[%s3 + $0x60] sm:$0xff] %vm1132, %v1029
  %1146 = vst.msk [vmem:[%s3 + $0x68] sm:$0xff] %vm1132, %v1031
  %1147 = vst.msk [vmem:[%s3 + $0x70] sm:$0xff] %vm1132, %v1033
  %1148 = vst.msk [vmem:[%s3 + $0x78] sm:$0xff] %vm1132, %v1035
  %1149 = vst.msk [vmem:[%s3 + $0x80] sm:$0xff] %vm1132, %v1037
  %1150 = vst.msk [vmem:[%s3 + $0x88] sm:$0xff] %vm1132, %v1039
  %1151 = vst.msk [vmem:[%s3 + $0x90] sm:$0xff] %vm1132, %v1041
  %1152 = vst.msk [vmem:[%s3 + $0x98] sm:$0xff] %vm1132, %v1043
  %1153 = vst.msk [vmem:[%s3 + $0xa0] sm:$0xff] %vm1132, %v1045
  %1154 = vst.msk [vmem:[%s3 + $0xa8] sm:$0xff] %vm1132, %v1047
  %1155 = vst.msk [vmem:[%s3 + $0xb0] sm:$0xff] %vm1132, %v1049
  %1156 = vst.msk [vmem:[%s3 + $0xb8] sm:$0xff] %vm1132, %v1051
  %1157 = vst.msk [vmem:[%s3 + $0xc0] sm:$0xff] %vm1132, %v1053
  %1158 = vst.msk [vmem:[%s3 + $0xc8] sm:$0xff] %vm1132, %v1055
  %1159 = vst.msk [vmem:[%s3 + $0xd0] sm:$0xff] %vm1132, %v1057
  %1160 = vst.msk [vmem:[%s3 + $0xd8] sm:$0xff] %vm1132, %v1059
  %1161 = vst.msk [vmem:[%s3 + $0xe0] sm:$0xff] %vm1132, %v1061
  %1162 = vst.msk [vmem:[%s3 + $0xe8] sm:$0xff] %vm1132, %v1063
  %1163 = vst.msk [vmem:[%s3 + $0xf0] sm:$0xff] %vm1132, %v1065
  %1164 = vst.msk [vmem:[%s3 + $0xf8] sm:$0xff] %vm1132, %v1067
  %1165 = vst.msk [vmem:[%s3 + $0x100] sm:$0xff] %vm1132, %v1069
  %1166 = vst.msk [vmem:[%s3 + $0x108] sm:$0xff] %vm1132, %v1071
  %1167 = vst.msk [vmem:[%s3 + $0x110] sm:$0xff] %vm1132, %v1073
  %1168 = vst.msk [vmem:[%s3 + $0x118] sm:$0xff] %vm1132, %v1075
  %1169 = vst.msk [vmem:[%s3 + $0x120] sm:$0xff] %vm1132, %v1077
  %1170 = vst.msk [vmem:[%s3 + $0x128] sm:$0xff] %vm1132, %v1079
  %1171 = vst.msk [vmem:[%s3 + $0x130] sm:$0xff] %vm1132, %v1081
  %1172 = vst.msk [vmem:[%s3 + $0x138] sm:$0xff] %vm1132, %v1083
  %1173 = vst.msk [vmem:[%s3 + $0x140] sm:$0xff] %vm1132, %v1085
  %1174 = vst.msk [vmem:[%s3 + $0x148] sm:$0xff] %vm1132, %v1087
  %1175 = vst.msk [vmem:[%s3 + $0x150] sm:$0xff] %vm1132, %v1089
  %1176 = vst.msk [vmem:[%s3 + $0x158] sm:$0xff] %vm1132, %v1091
  %1177 = vst.msk [vmem:[%s3 + $0x160] sm:$0xff] %vm1132, %v1093
  %1178 = vst.msk [vmem:[%s3 + $0x168] sm:$0xff] %vm1132, %v1095
  %1179 = vst.msk [vmem:[%s3 + $0x170] sm:$0xff] %vm1132, %v1097
  %1180 = vst.msk [vmem:[%s3 + $0x178] sm:$0xff] %vm1132, %v1099
  %1181 = vst.msk [vmem:[%s3 + $0x180] sm:$0xff] %vm1132, %v1101
  %1182 = vst.msk [vmem:[%s3 + $0x188] sm:$0xff] %vm1132, %v1103
  %1183 = vst.msk [vmem:[%s3 + $0x190] sm:$0xff] %vm1132, %v1105
  %1184 = vst.msk [vmem:[%s3 + $0x198] sm:$0xff] %vm1132, %v1107
  %1185 = vst.msk [vmem:[%s3 + $0x1a0] sm:$0xff] %vm1132, %v1109
  %1186 = vst.msk [vmem:[%s3 + $0x1a8] sm:$0xff] %vm1132, %v1111
  %1187 = vst.msk [vmem:[%s3 + $0x1b0] sm:$0xff] %vm1132, %v1113
  %1188 = vst.msk [vmem:[%s3 + $0x1b8] sm:$0xff] %vm1132, %v1115
  %1189 = vst.msk [vmem:[%s3 + $0x1c0] sm:$0xff] %vm1132, %v1117
  %1190 = vst.msk [vmem:[%s3 + $0x1c8] sm:$0xff] %vm1132, %v1119
  %1191 = vst.msk [vmem:[%s3 + $0x1d0] sm:$0xff] %vm1132, %v1121
  %1192 = vst.msk [vmem:[%s3 + $0x1d8] sm:$0xff] %vm1132, %v1123
  %1193 = vst.msk [vmem:[%s3 + $0x1e0] sm:$0xff] %vm1132, %v1125
  %1194 = vst.msk [vmem:[%s3 + $0x1e8] sm:$0xff] %vm1132, %v1127
  %1195 = vst.msk [vmem:[%s3 + $0x1f0] sm:$0xff] %vm1132, %v1129
  %1196 = vst.msk [vmem:[%s3 + $0x1f8] sm:$0xff] %vm1132, %v1131
  // Predicated region
  $region14: #{mask_generator_forward.15} parent=0 // pred_check
    _
  $region15: #{mask_generator_forward.15} parent=0 // pred_check_branch
    %1198 = sbr.rel (0) target = $region17
  $region16: #{mask_generator_forward.15} parent=0 // pred_region
    _
  $region17: #{mask_generator_forward.15} parent=0 // pred_fallthru
    _
  // Predicated region
  $region18: #{mask_generator_forward.15} parent=0 // pred_check
    _
  $region19: #{mask_generator_forward.15} parent=0 // pred_check_branch
    %1200 = sbr.rel (0) target = $region21
  $region20: #{mask_generator_forward.15} parent=0 // pred_region
    _
  $region21: #{mask_generator_forward.15} parent=0 // pred_fallthru
    _

</llo_original>
